<compile_context>
chip_gen: v7x
topology: tpu7x:2x2x1
jax: 0.10.0
libtpu: 0.0.40
codegen_flags: <defaults>
</compile_context>

<pallas_src>
import functools
import math

import jax
import jax.numpy as jnp
from jax import lax
from jax.experimental import pallas as pl
from jax.experimental.pallas import tpu as pltpu

# ---------------- synthetic "equation" constants ----------------
DIM_X = 8
DIM_D = 8
DIM_Y = 1
DIM_H = 32
T_HORIZON = 1.0
MU = 0.05
SIGMA0 = 0.2
R = 0.03
X0_VAL = 1.0


def euler_kernel(W_ref, w1x_ref, w1t_ref, b1_ref, w2_ref, b2_ref,
                 w3_ref, b3_ref, y0_ref,
                 x_out_ref, y_out_ref,
                 *, delta_t, mu, sigma0, r, x0_val, dim_y, dim_d):
    """One (batch-tile, time-chunk) grid step of the Euler scheme.

    Lane-dense layout (batch on lanes):
      W_ref     : (TN, dim_d, BT)  Brownian increments for this chunk
      x_out_ref : (dim_x, BT)      output block, doubles as carried x state
      y_out_ref : (dim_y, BT)      output block, doubles as carried y state
    Weights arrive pre-transposed (out_features first) and pre-cast to bf16.
    """
    TN = W_ref.shape[0]
    BT = W_ref.shape[2]
    dim_x = x_out_ref.shape[0]
    chunk = pl.program_id(1)

    # CORRECTNESS NOTE: carrying (x, y) in the output blocks is only valid
    # because the time axis is the LAST ("arbitrary", innermost) grid axis and
    # the output block index is constant across it, so the blocks stay resident
    # in VMEM between chunks.  Do not reorder the grid.
    @pl.when(chunk == 0)
    def _():
        x_out_ref[...] = jnp.full((dim_x, BT), x0_val, dtype=jnp.float32)
        y_out_ref[...] = jnp.broadcast_to(y0_ref[...], (dim_y, BT)).astype(jnp.float32)

    # Resident weights (tiny; loaded once per grid step).
    w1x = w1x_ref[...]            # (dim_h, dim_x)        bf16
    w2 = w2_ref[...]              # (dim_h, dim_h)        bf16
    w3 = w3_ref[...]              # (dim_y*dim_d, dim_h)  bf16
    w1t = w1t_ref[...]            # (dim_h, 1)            f32
    b1 = b1_ref[...]              # (dim_h, 1)            f32
    b2 = b2_ref[...]              # (dim_h, 1)            f32
    b3 = b3_ref[...]              # (dim_y*dim_d, 1)      f32

    growth = 1.0 + mu * delta_t   # x <- x*(1+mu*dt) + sigma0*x*w
    ydecay = 1.0 + r * delta_t    # y <- y*(1+r*dt)  + z.w
    step0 = chunk * TN

    def body(i, carry):
        x, y = carry                                  # (dim_x, BT), (dim_y, BT) f32
        w_i = W_ref[i]                                # (dim_d, BT) f32

        # Time folded into the layer-1 bias: b1_eff = b1 + t*w1t   (dim_h, 1).
        t_val = (step0 + i).astype(jnp.float32) * delta_t
        b1_eff = b1 + t_val * w1t

        # 3-layer MLP in transposed form (batch on lanes), bf16 MXU + f32 acc.
        h = jnp.dot(w1x, x.astype(jnp.bfloat16), preferred_element_type=jnp.float32)
        h = jnp.maximum(h + b1_eff, 0.0)
        h = jnp.dot(w2, h.astype(jnp.bfloat16), preferred_element_type=jnp.float32)
        h = jnp.maximum(h + b2, 0.0)
        z = jnp.dot(w3, h.astype(jnp.bfloat16), preferred_element_type=jnp.float32) + b3

        # z.w reduced over dim_d (sublane axis); lanes stay fully dense.
        if dim_y == 1:
            zw = jnp.sum(z * w_i, axis=0, keepdims=True)                  # (1, BT)
        else:
            zw = jnp.concatenate(
                [jnp.sum(z[j * dim_d:(j + 1) * dim_d] * w_i, axis=0, keepdims=True)
                 for j in range(dim_y)], axis=0)                          # (dim_y, BT)

        # x <- x + mu*x*dt + sigma0*x*w  ;  y <- y - (-r*y)*dt + z.w  (folded)
        x = x * (growth + sigma0 * w_i)
        y = y * ydecay + zw
        return x, y

    x, y = lax.fori_loop(0, TN, body, (x_out_ref[...], y_out_ref[...]), unroll=True)
    x_out_ref[...] = x
    y_out_ref[...] = y


def model_euler_forward(W_noise, params, *, T=T_HORIZON, mu=MU, sigma0=SIGMA0,
                        r=R, x0_val=X0_VAL, dim_y=DIM_Y, dim_d=DIM_D,
                        time_chunk=32, batch_tile=128):
    """W_noise: (N, dim_d, batch) Brownian increments already scaled by sqrt(dt).

    Returns (x, y) with shapes (batch, dim_x), (batch, dim_y), matching the
    PyTorch module.
    """
    N, wd, batch = W_noise.shape
    assert wd == dim_d
    w1x, w1t, b1, w2, b2, w3, b3, y0 = params
    dim_x, dim_h = w1x.shape
    delta_t = T / N

    TN = min(time_chunk, N)
    BT = min(batch_tile, batch)
    if N % TN != 0 or batch % BT != 0:
        raise ValueError("N must be divisible by time_chunk and batch by batch_tile")

    # Pre-transpose (out_features first -> batch ends up on lanes) and pre-cast
    # the matmul weights to bf16 once, wrapper-side (layout plumbing, no per-step cost).
    w1x_t = jnp.asarray(w1x).T.astype(jnp.bfloat16)           # (dim_h, dim_x)
    w2_t = jnp.asarray(w2).T.astype(jnp.bfloat16)             # (dim_h, dim_h)
    w3_t = jnp.asarray(w3).T.astype(jnp.bfloat16)             # (dim_y*dim_d, dim_h)
    w1t_t = jnp.asarray(w1t).T.astype(jnp.float32)            # (dim_h, 1)
    b1_t = jnp.asarray(b1).T.astype(jnp.float32)              # (dim_h, 1)
    b2_t = jnp.asarray(b2).T.astype(jnp.float32)              # (dim_h, 1)
    b3_t = jnp.asarray(b3).T.astype(jnp.float32)              # (dim_y*dim_d, 1)
    y0_t = jnp.asarray(y0).T.astype(jnp.float32)              # (dim_y, 1)

    kernel = functools.partial(
        euler_kernel, delta_t=delta_t, mu=mu, sigma0=sigma0, r=r,
        x0_val=x0_val, dim_y=dim_y, dim_d=dim_d)

    # (parallel batch tiles, sequential time chunks) — time MUST stay innermost.
    grid = (batch // BT, N // TN)
    const = lambda b, c: (0, 0)

    grid_spec = pltpu.PrefetchScalarGridSpec(
        num_scalar_prefetch=0,
        grid=grid,
        in_specs=[
            pl.BlockSpec((TN, dim_d, BT), lambda b, c: (c, 0, b)),   # W (streamed)
            pl.BlockSpec((dim_h, dim_x), const),                     # w1x^T (resident)
            pl.BlockSpec((dim_h, 1), const),                         # w1t^T
            pl.BlockSpec((dim_h, 1), const),                         # b1^T
            pl.BlockSpec((dim_h, dim_h), const),                     # w2^T
            pl.BlockSpec((dim_h, 1), const),                         # b2^T
            pl.BlockSpec((dim_y * dim_d, dim_h), const),             # w3^T
            pl.BlockSpec((dim_y * dim_d, 1), const),                 # b3^T
            pl.BlockSpec((dim_y, 1), const),                         # y0
        ],
        out_specs=(
            pl.BlockSpec((dim_x, BT), lambda b, c: (0, b)),
            pl.BlockSpec((dim_y, BT), lambda b, c: (0, b)),
        ),
    )

    out_shape = (jax.ShapeDtypeStruct((dim_x, batch), jnp.float32),
                 jax.ShapeDtypeStruct((dim_y, batch), jnp.float32))

    x_t, y_t = pl.pallas_call(
        kernel,
        out_shape=out_shape,
        grid_spec=grid_spec,
        compiler_params=pltpu.CompilerParams(
            dimension_semantics=("parallel", "arbitrary"),
            vmem_limit_bytes=48 * 1024 * 1024),
    )(W_noise, w1x_t, w1t_t, b1_t, w2_t, b2_t, w3_t, b3_t, y0_t)

    # Back to the module's (batch, feature) layout — pure layout plumbing.
    return x_t.T, y_t.T


def reference_forward(W_noise, params, *, T=T_HORIZON, mu=MU, sigma0=SIGMA0,
                      r=R, x0_val=X0_VAL, dim_y=DIM_Y, dim_d=DIM_D,
                      matmul_dtype=jnp.bfloat16):
    """Pure-JAX reference mirroring the PyTorch loop (W in (N, dim_d, batch)).

    matmul_dtype=jnp.bfloat16 matches the kernel's MXU precision (bf16 inputs,
    f32 accumulation); matmul_dtype=None uses full f32 HIGHEST precision.
    """
    N, _, batch = W_noise.shape
    w1x, w1t, b1, w2, b2, w3, b3, y0 = params
    dim_x = w1x.shape[0]
    delta_t = T / N

    if matmul_dtype is None:
        mm = lambda a, w: jnp.dot(a, w, precision=jax.lax.Precision.HIGHEST)
    else:
        mm = lambda a, w: jnp.dot(a.astype(matmul_dtype), w.astype(matmul_dtype),
                                  preferred_element_type=jnp.float32)

    x = jnp.full((batch, dim_x), x0_val, dtype=jnp.float32)
    y = jnp.broadcast_to(y0, (batch, dim_y)).astype(jnp.float32)
    growth = 1.0 + mu * delta_t
    ydecay = 1.0 + r * delta_t
    for i in range(N):
        t = delta_t * i
        h = jnp.maximum(mm(x, w1x) + t * w1t + b1, 0.0)
        h = jnp.maximum(mm(h, w2) + b2, 0.0)
        z = (mm(h, w3) + b3).reshape(batch, dim_y, dim_d)
        w = W_noise[i].T                              # (batch, dim_d)
        # x <- x + mu*x*dt + sigma0*x*w   (folded; algebraically identical)
        x = x * (growth + sigma0 * w)
        zw = jnp.einsum('byd,bd->by', z, w)
        # y <- y - (-r*y)*dt + z @ w
        y = y * ydecay + zw
    return x, y


if __name__ == "__main__":
    batch, N = 256, 64
    delta_t = T_HORIZON / N

    key = jax.random.PRNGKey(0)
    k = jax.random.split(key, 9)

    # Deterministic parameter init (shapes match nn.Linear / nn.Parameter, math layout).
    w1 = jax.random.normal(k[0], (DIM_X + 1, DIM_H), jnp.float32) * 0.1
    w1x, w1t = w1[:DIM_X, :], w1[DIM_X:, :]                      # (DIM_X,H),(1,H)
    b1 = jax.random.normal(k[1], (1, DIM_H), jnp.float32) * 0.1
    w2 = jax.random.normal(k[2], (DIM_H, DIM_H), jnp.float32) * 0.1
    b2 = jax.random.normal(k[3], (1, DIM_H), jnp.float32) * 0.1
    w3 = jax.random.normal(k[4], (DIM_H, DIM_Y * DIM_D), jnp.float32) * 0.1
    b3 = jax.random.normal(k[5], (1, DIM_Y * DIM_D), jnp.float32) * 0.1
    y0 = jax.random.uniform(k[6], (1, DIM_Y), jnp.float32)       # torch.rand(dim_y)
    params = (w1x, w1t, b1, w2, b2, w3, b3, y0)

    # Brownian increments: randn * sqrt(delta_t), time-major with batch on the
    # last (lane) axis.
    # TODO(synk): the PyTorch module draws this noise inside forward(); here it
    # is generated wrapper-side and passed in so results are reproducible.
    W_noise = jax.random.normal(k[7], (N, DIM_D, batch), jnp.float32) * math.sqrt(delta_t)

    x_out, y_out = model_euler_forward(W_noise, params)
    jax.block_until_ready((x_out, y_out))

    assert x_out.shape == (batch, DIM_X) and y_out.shape == (batch, DIM_Y)
    assert bool(jnp.all(jnp.isfinite(x_out))) and bool(jnp.all(jnp.isfinite(y_out)))

    # Tight check vs. precision-matched (bf16-matmul) reference.
    x_ref, y_ref = reference_forward(W_noise, params, matmul_dtype=jnp.bfloat16)
    assert jnp.allclose(x_out, x_ref, rtol=1e-3, atol=1e-3)
    assert jnp.allclose(y_out, y_ref, rtol=1e-3, atol=1e-3)

    # Loose sanity check vs. full-f32 (HIGHEST) reference: bf16 MXU path is accurate.
    x_hi, y_hi = reference_forward(W_noise, params, matmul_dtype=None)
    assert jnp.allclose(x_out, x_hi, rtol=5e-2, atol=5e-2)
    assert jnp.allclose(y_out, y_hi, rtol=5e-2, atol=5e-2)

    print("KERNEL_OK")
</pallas_src>

<mosaic_0001>
module attributes {stable_mosaic.version = 11 : i64} {
  func.func @euler_kernel(%arg0: i32, %arg1: i32, %arg2: memref<32x8x128xf32, #tpu.memory_space<vmem>>, %arg3: memref<32x8xbf16, #tpu.memory_space<vmem>>, %arg4: memref<32x1xf32, #tpu.memory_space<vmem>>, %arg5: memref<32x1xf32, #tpu.memory_space<vmem>>, %arg6: memref<32x32xbf16, #tpu.memory_space<vmem>>, %arg7: memref<32x1xf32, #tpu.memory_space<vmem>>, %arg8: memref<8x32xbf16, #tpu.memory_space<vmem>>, %arg9: memref<8x1xf32, #tpu.memory_space<vmem>>, %arg10: memref<1x1xf32, #tpu.memory_space<vmem>>, %arg11: memref<8x128xf32, #tpu.memory_space<vmem>>, %arg12: memref<1x128xf32, #tpu.memory_space<vmem>>) attributes {dimension_semantics = [#tpu.dimension_semantics<parallel>, #tpu.dimension_semantics<arbitrary>], iteration_bounds = array<i64: 2, 2>, scalar_prefetch = 0 : i64, scratch_operands = 0 : i64, tpu.core_type = #tpu.core_type<tc>, window_params = [{transform_indices = @transform_0, window_bounds = array<i64: 32, 8, 128>}, {pipeline_mode = #tpu.pipeline_mode<synchronous>, transform_indices = @transform_1, window_bounds = array<i64: 32, 8>}, {pipeline_mode = #tpu.pipeline_mode<synchronous>, transform_indices = @transform_2, window_bounds = array<i64: 32, 1>}, {pipeline_mode = #tpu.pipeline_mode<synchronous>, transform_indices = @transform_3, window_bounds = array<i64: 32, 1>}, {pipeline_mode = #tpu.pipeline_mode<synchronous>, transform_indices = @transform_4, window_bounds = array<i64: 32, 32>}, {pipeline_mode = #tpu.pipeline_mode<synchronous>, transform_indices = @transform_5, window_bounds = array<i64: 32, 1>}, {pipeline_mode = #tpu.pipeline_mode<synchronous>, transform_indices = @transform_6, window_bounds = array<i64: 8, 32>}, {pipeline_mode = #tpu.pipeline_mode<synchronous>, transform_indices = @transform_7, window_bounds = array<i64: 8, 1>}, {pipeline_mode = #tpu.pipeline_mode<synchronous>, transform_indices = @transform_8, window_bounds = array<i64: 1, 1>}, {transform_indices = @transform_9, window_bounds = array<i64: 8, 128>}, {transform_indices = @transform_10, window_bounds = array<i64: 1, 128>}]} {
    %c0_i32 = arith.constant 0 : i32
    %0 = arith.cmpi eq, %arg1, %c0_i32 : i32
    %1 = arith.extui %0 : i1 to i32
    %c0_i32_0 = arith.constant 0 : i32
    %2 = arith.cmpi ne, %1, %c0_i32_0 : i32
    scf.if %2 {
      %cst_407 = arith.constant 1.000000e+00 : f32
      %1167 = vector.broadcast %cst_407 : f32 to vector<8x128xf32>
      %c0_408 = arith.constant 0 : index
      %c0_409 = arith.constant 0 : index
      %1168 = vector.load %arg11[%c0_408, %c0_409] : memref<8x128xf32, #tpu.memory_space<vmem>>, vector<8x128xf32>
      tpu.vector_store %arg11[%c0_408, %c0_409], %1167 {strides = array<i32>} : memref<8x128xf32, #tpu.memory_space<vmem>>, vector<8x128xf32>,
      %c0_410 = arith.constant 0 : index
      %c0_411 = arith.constant 0 : index
      %1169 = vector.load %arg10[%c0_410, %c0_411] : memref<1x1xf32, #tpu.memory_space<vmem>>, vector<1x1xf32>
      %1170 = vector.shape_cast %1169 : vector<1x1xf32> to vector<1x1xf32>
      %1171 = vector.broadcast %1170 : vector<1x1xf32> to vector<1x128xf32>
      %c0_412 = arith.constant 0 : index
      %c0_413 = arith.constant 0 : index
      %1172 = vector.load %arg12[%c0_412, %c0_413] : memref<1x128xf32, #tpu.memory_space<vmem>>, vector<1x128xf32>
      tpu.vector_store %arg12[%c0_412, %c0_413], %1171 {strides = array<i32>} : memref<1x128xf32, #tpu.memory_space<vmem>>, vector<1x128xf32>,
    } else {
    }
    %c0 = arith.constant 0 : index
    %c0_1 = arith.constant 0 : index
    %3 = vector.load %arg3[%c0, %c0_1] : memref<32x8xbf16, #tpu.memory_space<vmem>>, vector<32x8xbf16>
    %c0_2 = arith.constant 0 : index
    %c0_3 = arith.constant 0 : index
    %4 = vector.load %arg6[%c0_2, %c0_3] : memref<32x32xbf16, #tpu.memory_space<vmem>>, vector<32x32xbf16>
    %c0_4 = arith.constant 0 : index
    %c0_5 = arith.constant 0 : index
    %5 = vector.load %arg8[%c0_4, %c0_5] : memref<8x32xbf16, #tpu.memory_space<vmem>>, vector<8x32xbf16>
    %c0_6 = arith.constant 0 : index
    %c0_7 = arith.constant 0 : index
    %6 = vector.load %arg4[%c0_6, %c0_7] : memref<32x1xf32, #tpu.memory_space<vmem>>, vector<32x1xf32>
    %c0_8 = arith.constant 0 : index
    %c0_9 = arith.constant 0 : index
    %7 = vector.load %arg5[%c0_8, %c0_9] : memref<32x1xf32, #tpu.memory_space<vmem>>, vector<32x1xf32>
    %c0_10 = arith.constant 0 : index
    %c0_11 = arith.constant 0 : index
    %8 = vector.load %arg7[%c0_10, %c0_11] : memref<32x1xf32, #tpu.memory_space<vmem>>, vector<32x1xf32>
    %c0_12 = arith.constant 0 : index
    %c0_13 = arith.constant 0 : index
    %9 = vector.load %arg9[%c0_12, %c0_13] : memref<8x1xf32, #tpu.memory_space<vmem>>, vector<8x1xf32>
    %c32_i32 = arith.constant 32 : i32
    %10 = arith.muli %arg1, %c32_i32 : i32
    %c0_14 = arith.constant 0 : index
    %c0_15 = arith.constant 0 : index
    %11 = vector.load %arg11[%c0_14, %c0_15] : memref<8x128xf32, #tpu.memory_space<vmem>>, vector<8x128xf32>
    %c0_16 = arith.constant 0 : index
    %c0_17 = arith.constant 0 : index
    %12 = vector.load %arg12[%c0_16, %c0_17] : memref<1x128xf32, #tpu.memory_space<vmem>>, vector<1x128xf32>
    %c0_i32_18 = arith.constant 0 : i32
    %13 = arith.index_cast %c0_i32_18 : i32 to index
    %c0_19 = arith.constant 0 : index
    %c0_20 = arith.constant 0 : index
    %14 = vector.load %arg2[%13, %c0_19, %c0_20] : memref<32x8x128xf32, #tpu.memory_space<vmem>>, vector<1x8x128xf32>
    %15 = vector.shape_cast %14 : vector<1x8x128xf32> to vector<8x128xf32>
    %16 = arith.addi %10, %c0_i32_18 : i32
    %17 = arith.sitofp %16 : i32 to f32
    %cst = arith.constant 1.562500e-02 : f32
    %18 = arith.mulf %17, %cst : f32
    %19 = vector.broadcast %18 : f32 to vector<32x1xf32>
    %20 = arith.mulf %19, %6 : vector<32x1xf32>
    %21 = arith.addf %7, %20 : vector<32x1xf32>
    %22 = arith.truncf %11 : vector<8x128xf32> to vector<8x128xbf16>
    %cst_21 = arith.constant dense<0.000000e+00> : vector<32x128xf32>
    %23 = tpu.matmul %3, %22, %cst_21 {dimension_numbers = #tpu.dot_dimension_numbers<[1], [0], [0], [1], [0, 0, 1, 1], [], []>} : vector<32x8xbf16>, vector<8x128xbf16>, vector<32x128xf32> -> vector<32x128xf32>
    %24 = vector.broadcast %21 : vector<32x1xf32> to vector<32x128xf32>
    %25 = arith.addf %23, %24 : vector<32x128xf32>
    %cst_22 = arith.constant 0.000000e+00 : f32
    %26 = vector.broadcast %cst_22 : f32 to vector<32x128xf32>
    %27 = arith.maximumf %25, %26 : vector<32x128xf32>
    %28 = arith.truncf %27 : vector<32x128xf32> to vector<32x128xbf16>
    %cst_23 = arith.constant dense<0.000000e+00> : vector<32x128xf32>
    %29 = tpu.matmul %4, %28, %cst_23 {dimension_numbers = #tpu.dot_dimension_numbers<[1], [0], [0], [1], [0, 0, 1, 1], [], []>} : vector<32x32xbf16>, vector<32x128xbf16>, vector<32x128xf32> -> vector<32x128xf32>
    %30 = vector.broadcast %8 : vector<32x1xf32> to vector<32x128xf32>
    %31 = arith.addf %29, %30 : vector<32x128xf32>
    %cst_24 = arith.constant 0.000000e+00 : f32
    %32 = vector.broadcast %cst_24 : f32 to vector<32x128xf32>
    %33 = arith.maximumf %31, %32 : vector<32x128xf32>
    %34 = arith.truncf %33 : vector<32x128xf32> to vector<32x128xbf16>
    %cst_25 = arith.constant dense<0.000000e+00> : vector<8x128xf32>
    %35 = tpu.matmul %5, %34, %cst_25 {dimension_numbers = #tpu.dot_dimension_numbers<[1], [0], [0], [1], [0, 0, 1, 1], [], []>} : vector<8x32xbf16>, vector<32x128xbf16>, vector<8x128xf32> -> vector<8x128xf32>
    %36 = vector.broadcast %9 : vector<8x1xf32> to vector<8x128xf32>
    %37 = arith.addf %35, %36 : vector<8x128xf32>
    %38 = arith.mulf %37, %15 : vector<8x128xf32>
    %cst_26 = arith.constant dense<0.000000e+00> : vector<128xf32>
    %39 = vector.multi_reduction <add>, %38, %cst_26 [0] : vector<8x128xf32> to vector<128xf32>
    %40 = vector.shape_cast %39 : vector<128xf32> to vector<1x128xf32>
    %cst_27 = arith.constant 2.000000e-01 : f32
    %41 = vector.broadcast %cst_27 : f32 to vector<8x128xf32>
    %42 = arith.mulf %41, %15 : vector<8x128xf32>
    %cst_28 = arith.constant 1.0007813 : f32
    %43 = vector.broadcast %cst_28 : f32 to vector<8x128xf32>
    %44 = arith.addf %43, %42 : vector<8x128xf32>
    %45 = arith.mulf %11, %44 : vector<8x128xf32>
    %cst_29 = arith.constant 1.00046873 : f32
    %46 = vector.broadcast %cst_29 : f32 to vector<1x128xf32>
    %47 = arith.mulf %12, %46 : vector<1x128xf32>
    %48 = arith.addf %47, %40 : vector<1x128xf32>
    %c1_i32 = arith.constant 1 : i32
    %49 = arith.index_cast %c1_i32 : i32 to index
    %c0_30 = arith.constant 0 : index
    %c0_31 = arith.constant 0 : index
    %50 = vector.load %arg2[%49, %c0_30, %c0_31] : memref<32x8x128xf32, #tpu.memory_space<vmem>>, vector<1x8x128xf32>
    %51 = vector.shape_cast %50 : vector<1x8x128xf32> to vector<8x128xf32>
    %52 = arith.addi %10, %c1_i32 : i32
    %53 = arith.sitofp %52 : i32 to f32
    %cst_32 = arith.constant 1.562500e-02 : f32
    %54 = arith.mulf %53, %cst_32 : f32
    %55 = vector.broadcast %54 : f32 to vector<32x1xf32>
    %56 = arith.mulf %55, %6 : vector<32x1xf32>
    %57 = arith.addf %7, %56 : vector<32x1xf32>
    %58 = arith.truncf %45 : vector<8x128xf32> to vector<8x128xbf16>
    %cst_33 = arith.constant dense<0.000000e+00> : vector<32x128xf32>
    %59 = tpu.matmul %3, %58, %cst_33 {dimension_numbers = #tpu.dot_dimension_numbers<[1], [0], [0], [1], [0, 0, 1, 1], [], []>} : vector<32x8xbf16>, vector<8x128xbf16>, vector<32x128xf32> -> vector<32x128xf32>
    %60 = vector.broadcast %57 : vector<32x1xf32> to vector<32x128xf32>
    %61 = arith.addf %59, %60 : vector<32x128xf32>
    %cst_34 = arith.constant 0.000000e+00 : f32
    %62 = vector.broadcast %cst_34 : f32 to vector<32x128xf32>
    %63 = arith.maximumf %61, %62 : vector<32x128xf32>
    %64 = arith.truncf %63 : vector<32x128xf32> to vector<32x128xbf16>
    %cst_35 = arith.constant dense<0.000000e+00> : vector<32x128xf32>
    %65 = tpu.matmul %4, %64, %cst_35 {dimension_numbers = #tpu.dot_dimension_numbers<[1], [0], [0], [1], [0, 0, 1, 1], [], []>} : vector<32x32xbf16>, vector<32x128xbf16>, vector<32x128xf32> -> vector<32x128xf32>
    %66 = vector.broadcast %8 : vector<32x1xf32> to vector<32x128xf32>
    %67 = arith.addf %65, %66 : vector<32x128xf32>
    %cst_36 = arith.constant 0.000000e+00 : f32
    %68 = vector.broadcast %cst_36 : f32 to vector<32x128xf32>
    %69 = arith.maximumf %67, %68 : vector<32x128xf32>
    %70 = arith.truncf %69 : vector<32x128xf32> to vector<32x128xbf16>
    %cst_37 = arith.constant dense<0.000000e+00> : vector<8x128xf32>
    %71 = tpu.matmul %5, %70, %cst_37 {dimension_numbers = #tpu.dot_dimension_numbers<[1], [0], [0], [1], [0, 0, 1, 1], [], []>} : vector<8x32xbf16>, vector<32x128xbf16>, vector<8x128xf32> -> vector<8x128xf32>
    %72 = vector.broadcast %9 : vector<8x1xf32> to vector<8x128xf32>
    %73 = arith.addf %71, %72 : vector<8x128xf32>
    %74 = arith.mulf %73, %51 : vector<8x128xf32>
    %cst_38 = arith.constant dense<0.000000e+00> : vector<128xf32>
    %75 = vector.multi_reduction <add>, %74, %cst_38 [0] : vector<8x128xf32> to vector<128xf32>
    %76 = vector.shape_cast %75 : vector<128xf32> to vector<1x128xf32>
    %cst_39 = arith.constant 2.000000e-01 : f32
    %77 = vector.broadcast %cst_39 : f32 to vector<8x128xf32>
    %78 = arith.mulf %77, %51 : vector<8x128xf32>
    %cst_40 = arith.constant 1.0007813 : f32
    %79 = vector.broadcast %cst_40 : f32 to vector<8x128xf32>
    %80 = arith.addf %79, %78 : vector<8x128xf32>
    %81 = arith.mulf %45, %80 : vector<8x128xf32>
    %cst_41 = arith.constant 1.00046873 : f32
    %82 = vector.broadcast %cst_41 : f32 to vector<1x128xf32>
    %83 = arith.mulf %48, %82 : vector<1x128xf32>
    %84 = arith.addf %83, %76 : vector<1x128xf32>
    %c2_i32 = arith.constant 2 : i32
    %85 = arith.index_cast %c2_i32 : i32 to index
    %c0_42 = arith.constant 0 : index
    %c0_43 = arith.constant 0 : index
    %86 = vector.load %arg2[%85, %c0_42, %c0_43] : memref<32x8x128xf32, #tpu.memory_space<vmem>>, vector<1x8x128xf32>
    %87 = vector.shape_cast %86 : vector<1x8x128xf32> to vector<8x128xf32>
    %88 = arith.addi %10, %c2_i32 : i32
    %89 = arith.sitofp %88 : i32 to f32
    %cst_44 = arith.constant 1.562500e-02 : f32
    %90 = arith.mulf %89, %cst_44 : f32
    %91 = vector.broadcast %90 : f32 to vector<32x1xf32>
    %92 = arith.mulf %91, %6 : vector<32x1xf32>
    %93 = arith.addf %7, %92 : vector<32x1xf32>
    %94 = arith.truncf %81 : vector<8x128xf32> to vector<8x128xbf16>
    %cst_45 = arith.constant dense<0.000000e+00> : vector<32x128xf32>
    %95 = tpu.matmul %3, %94, %cst_45 {dimension_numbers = #tpu.dot_dimension_numbers<[1], [0], [0], [1], [0, 0, 1, 1], [], []>} : vector<32x8xbf16>, vector<8x128xbf16>, vector<32x128xf32> -> vector<32x128xf32>
    %96 = vector.broadcast %93 : vector<32x1xf32> to vector<32x128xf32>
    %97 = arith.addf %95, %96 : vector<32x128xf32>
    %cst_46 = arith.constant 0.000000e+00 : f32
    %98 = vector.broadcast %cst_46 : f32 to vector<32x128xf32>
    %99 = arith.maximumf %97, %98 : vector<32x128xf32>
    %100 = arith.truncf %99 : vector<32x128xf32> to vector<32x128xbf16>
    %cst_47 = arith.constant dense<0.000000e+00> : vector<32x128xf32>
    %101 = tpu.matmul %4, %100, %cst_47 {dimension_numbers = #tpu.dot_dimension_numbers<[1], [0], [0], [1], [0, 0, 1, 1], [], []>} : vector<32x32xbf16>, vector<32x128xbf16>, vector<32x128xf32> -> vector<32x128xf32>
    %102 = vector.broadcast %8 : vector<32x1xf32> to vector<32x128xf32>
    %103 = arith.addf %101, %102 : vector<32x128xf32>
    %cst_48 = arith.constant 0.000000e+00 : f32
    %104 = vector.broadcast %cst_48 : f32 to vector<32x128xf32>
    %105 = arith.maximumf %103, %104 : vector<32x128xf32>
    %106 = arith.truncf %105 : vector<32x128xf32> to vector<32x128xbf16>
    %cst_49 = arith.constant dense<0.000000e+00> : vector<8x128xf32>
    %107 = tpu.matmul %5, %106, %cst_49 {dimension_numbers = #tpu.dot_dimension_numbers<[1], [0], [0], [1], [0, 0, 1, 1], [], []>} : vector<8x32xbf16>, vector<32x128xbf16>, vector<8x128xf32> -> vector<8x128xf32>
    %108 = vector.broadcast %9 : vector<8x1xf32> to vector<8x128xf32>
    %109 = arith.addf %107, %108 : vector<8x128xf32>
    %110 = arith.mulf %109, %87 : vector<8x128xf32>
    %cst_50 = arith.constant dense<0.000000e+00> : vector<128xf32>
    %111 = vector.multi_reduction <add>, %110, %cst_50 [0] : vector<8x128xf32> to vector<128xf32>
    %112 = vector.shape_cast %111 : vector<128xf32> to vector<1x128xf32>
    %cst_51 = arith.constant 2.000000e-01 : f32
    %113 = vector.broadcast %cst_51 : f32 to vector<8x128xf32>
    %114 = arith.mulf %113, %87 : vector<8x128xf32>
    %cst_52 = arith.constant 1.0007813 : f32
    %115 = vector.broadcast %cst_52 : f32 to vector<8x128xf32>
    %116 = arith.addf %115, %114 : vector<8x128xf32>
    %117 = arith.mulf %81, %116 : vector<8x128xf32>
    %cst_53 = arith.constant 1.00046873 : f32
    %118 = vector.broadcast %cst_53 : f32 to vector<1x128xf32>
    %119 = arith.mulf %84, %118 : vector<1x128xf32>
    %120 = arith.addf %119, %112 : vector<1x128xf32>
    %c3_i32 = arith.constant 3 : i32
    %121 = arith.index_cast %c3_i32 : i32 to index
    %c0_54 = arith.constant 0 : index
    %c0_55 = arith.constant 0 : index
    %122 = vector.load %arg2[%121, %c0_54, %c0_55] : memref<32x8x128xf32, #tpu.memory_space<vmem>>, vector<1x8x128xf32>
    %123 = vector.shape_cast %122 : vector<1x8x128xf32> to vector<8x128xf32>
    %124 = arith.addi %10, %c3_i32 : i32
    %125 = arith.sitofp %124 : i32 to f32
    %cst_56 = arith.constant 1.562500e-02 : f32
    %126 = arith.mulf %125, %cst_56 : f32
    %127 = vector.broadcast %126 : f32 to vector<32x1xf32>
    %128 = arith.mulf %127, %6 : vector<32x1xf32>
    %129 = arith.addf %7, %128 : vector<32x1xf32>
    %130 = arith.truncf %117 : vector<8x128xf32> to vector<8x128xbf16>
    %cst_57 = arith.constant dense<0.000000e+00> : vector<32x128xf32>
    %131 = tpu.matmul %3, %130, %cst_57 {dimension_numbers = #tpu.dot_dimension_numbers<[1], [0], [0], [1], [0, 0, 1, 1], [], []>} : vector<32x8xbf16>, vector<8x128xbf16>, vector<32x128xf32> -> vector<32x128xf32>
    %132 = vector.broadcast %129 : vector<32x1xf32> to vector<32x128xf32>
    %133 = arith.addf %131, %132 : vector<32x128xf32>
    %cst_58 = arith.constant 0.000000e+00 : f32
    %134 = vector.broadcast %cst_58 : f32 to vector<32x128xf32>
    %135 = arith.maximumf %133, %134 : vector<32x128xf32>
    %136 = arith.truncf %135 : vector<32x128xf32> to vector<32x128xbf16>
    %cst_59 = arith.constant dense<0.000000e+00> : vector<32x128xf32>
    %137 = tpu.matmul %4, %136, %cst_59 {dimension_numbers = #tpu.dot_dimension_numbers<[1], [0], [0], [1], [0, 0, 1, 1], [], []>} : vector<32x32xbf16>, vector<32x128xbf16>, vector<32x128xf32> -> vector<32x128xf32>
    %138 = vector.broadcast %8 : vector<32x1xf32> to vector<32x128xf32>
    %139 = arith.addf %137, %138 : vector<32x128xf32>
    %cst_60 = arith.constant 0.000000e+00 : f32
    %140 = vector.broadcast %cst_60 : f32 to vector<32x128xf32>
    %141 = arith.maximumf %139, %140 : vector<32x128xf32>
    %142 = arith.truncf %141 : vector<32x128xf32> to vector<32x128xbf16>
    %cst_61 = arith.constant dense<0.000000e+00> : vector<8x128xf32>
    %143 = tpu.matmul %5, %142, %cst_61 {dimension_numbers = #tpu.dot_dimension_numbers<[1], [0], [0], [1], [0, 0, 1, 1], [], []>} : vector<8x32xbf16>, vector<32x128xbf16>, vector<8x128xf32> -> vector<8x128xf32>
    %144 = vector.broadcast %9 : vector<8x1xf32> to vector<8x128xf32>
    %145 = arith.addf %143, %144 : vector<8x128xf32>
    %146 = arith.mulf %145, %123 : vector<8x128xf32>
    %cst_62 = arith.constant dense<0.000000e+00> : vector<128xf32>
    %147 = vector.multi_reduction <add>, %146, %cst_62 [0] : vector<8x128xf32> to vector<128xf32>
    %148 = vector.shape_cast %147 : vector<128xf32> to vector<1x128xf32>
    %cst_63 = arith.constant 2.000000e-01 : f32
    %149 = vector.broadcast %cst_63 : f32 to vector<8x128xf32>
    %150 = arith.mulf %149, %123 : vector<8x128xf32>
    %cst_64 = arith.constant 1.0007813 : f32
    %151 = vector.broadcast %cst_64 : f32 to vector<8x128xf32>
    %152 = arith.addf %151, %150 : vector<8x128xf32>
    %153 = arith.mulf %117, %152 : vector<8x128xf32>
    %cst_65 = arith.constant 1.00046873 : f32
    %154 = vector.broadcast %cst_65 : f32 to vector<1x128xf32>
    %155 = arith.mulf %120, %154 : vector<1x128xf32>
    %156 = arith.addf %155, %148 : vector<1x128xf32>
    %c4_i32 = arith.constant 4 : i32
    %157 = arith.index_cast %c4_i32 : i32 to index
    %c0_66 = arith.constant 0 : index
    %c0_67 = arith.constant 0 : index
    %158 = vector.load %arg2[%157, %c0_66, %c0_67] : memref<32x8x128xf32, #tpu.memory_space<vmem>>, vector<1x8x128xf32>
    %159 = vector.shape_cast %158 : vector<1x8x128xf32> to vector<8x128xf32>
    %160 = arith.addi %10, %c4_i32 : i32
    %161 = arith.sitofp %160 : i32 to f32
    %cst_68 = arith.constant 1.562500e-02 : f32
    %162 = arith.mulf %161, %cst_68 : f32
    %163 = vector.broadcast %162 : f32 to vector<32x1xf32>
    %164 = arith.mulf %163, %6 : vector<32x1xf32>
    %165 = arith.addf %7, %164 : vector<32x1xf32>
    %166 = arith.truncf %153 : vector<8x128xf32> to vector<8x128xbf16>
    %cst_69 = arith.constant dense<0.000000e+00> : vector<32x128xf32>
    %167 = tpu.matmul %3, %166, %cst_69 {dimension_numbers = #tpu.dot_dimension_numbers<[1], [0], [0], [1], [0, 0, 1, 1], [], []>} : vector<32x8xbf16>, vector<8x128xbf16>, vector<32x128xf32> -> vector<32x128xf32>
    %168 = vector.broadcast %165 : vector<32x1xf32> to vector<32x128xf32>
    %169 = arith.addf %167, %168 : vector<32x128xf32>
    %cst_70 = arith.constant 0.000000e+00 : f32
    %170 = vector.broadcast %cst_70 : f32 to vector<32x128xf32>
    %171 = arith.maximumf %169, %170 : vector<32x128xf32>
    %172 = arith.truncf %171 : vector<32x128xf32> to vector<32x128xbf16>
    %cst_71 = arith.constant dense<0.000000e+00> : vector<32x128xf32>
    %173 = tpu.matmul %4, %172, %cst_71 {dimension_numbers = #tpu.dot_dimension_numbers<[1], [0], [0], [1], [0, 0, 1, 1], [], []>} : vector<32x32xbf16>, vector<32x128xbf16>, vector<32x128xf32> -> vector<32x128xf32>
    %174 = vector.broadcast %8 : vector<32x1xf32> to vector<32x128xf32>
    %175 = arith.addf %173, %174 : vector<32x128xf32>
    %cst_72 = arith.constant 0.000000e+00 : f32
    %176 = vector.broadcast %cst_72 : f32 to vector<32x128xf32>
    %177 = arith.maximumf %175, %176 : vector<32x128xf32>
    %178 = arith.truncf %177 : vector<32x128xf32> to vector<32x128xbf16>
    %cst_73 = arith.constant dense<0.000000e+00> : vector<8x128xf32>
    %179 = tpu.matmul %5, %178, %cst_73 {dimension_numbers = #tpu.dot_dimension_numbers<[1], [0], [0], [1], [0, 0, 1, 1], [], []>} : vector<8x32xbf16>, vector<32x128xbf16>, vector<8x128xf32> -> vector<8x128xf32>
    %180 = vector.broadcast %9 : vector<8x1xf32> to vector<8x128xf32>
    %181 = arith.addf %179, %180 : vector<8x128xf32>
    %182 = arith.mulf %181, %159 : vector<8x128xf32>
    %cst_74 = arith.constant dense<0.000000e+00> : vector<128xf32>
    %183 = vector.multi_reduction <add>, %182, %cst_74 [0] : vector<8x128xf32> to vector<128xf32>
    %184 = vector.shape_cast %183 : vector<128xf32> to vector<1x128xf32>
    %cst_75 = arith.constant 2.000000e-01 : f32
    %185 = vector.broadcast %cst_75 : f32 to vector<8x128xf32>
    %186 = arith.mulf %185, %159 : vector<8x128xf32>
    %cst_76 = arith.constant 1.0007813 : f32
    %187 = vector.broadcast %cst_76 : f32 to vector<8x128xf32>
    %188 = arith.addf %187, %186 : vector<8x128xf32>
    %189 = arith.mulf %153, %188 : vector<8x128xf32>
    %cst_77 = arith.constant 1.00046873 : f32
    %190 = vector.broadcast %cst_77 : f32 to vector<1x128xf32>
    %191 = arith.mulf %156, %190 : vector<1x128xf32>
    %192 = arith.addf %191, %184 : vector<1x128xf32>
    %c5_i32 = arith.constant 5 : i32
    %193 = arith.index_cast %c5_i32 : i32 to index
    %c0_78 = arith.constant 0 : index
    %c0_79 = arith.constant 0 : index
    %194 = vector.load %arg2[%193, %c0_78, %c0_79] : memref<32x8x128xf32, #tpu.memory_space<vmem>>, vector<1x8x128xf32>
    %195 = vector.shape_cast %194 : vector<1x8x128xf32> to vector<8x128xf32>
    %196 = arith.addi %10, %c5_i32 : i32
    %197 = arith.sitofp %196 : i32 to f32
    %cst_80 = arith.constant 1.562500e-02 : f32
    %198 = arith.mulf %197, %cst_80 : f32
    %199 = vector.broadcast %198 : f32 to vector<32x1xf32>
    %200 = arith.mulf %199, %6 : vector<32x1xf32>
    %201 = arith.addf %7, %200 : vector<32x1xf32>
    %202 = arith.truncf %189 : vector<8x128xf32> to vector<8x128xbf16>
    %cst_81 = arith.constant dense<0.000000e+00> : vector<32x128xf32>
    %203 = tpu.matmul %3, %202, %cst_81 {dimension_numbers = #tpu.dot_dimension_numbers<[1], [0], [0], [1], [0, 0, 1, 1], [], []>} : vector<32x8xbf16>, vector<8x128xbf16>, vector<32x128xf32> -> vector<32x128xf32>
    %204 = vector.broadcast %201 : vector<32x1xf32> to vector<32x128xf32>
    %205 = arith.addf %203, %204 : vector<32x128xf32>
    %cst_82 = arith.constant 0.000000e+00 : f32
    %206 = vector.broadcast %cst_82 : f32 to vector<32x128xf32>
    %207 = arith.maximumf %205, %206 : vector<32x128xf32>
    %208 = arith.truncf %207 : vector<32x128xf32> to vector<32x128xbf16>
    %cst_83 = arith.constant dense<0.000000e+00> : vector<32x128xf32>
    %209 = tpu.matmul %4, %208, %cst_83 {dimension_numbers = #tpu.dot_dimension_numbers<[1], [0], [0], [1], [0, 0, 1, 1], [], []>} : vector<32x32xbf16>, vector<32x128xbf16>, vector<32x128xf32> -> vector<32x128xf32>
    %210 = vector.broadcast %8 : vector<32x1xf32> to vector<32x128xf32>
    %211 = arith.addf %209, %210 : vector<32x128xf32>
    %cst_84 = arith.constant 0.000000e+00 : f32
    %212 = vector.broadcast %cst_84 : f32 to vector<32x128xf32>
    %213 = arith.maximumf %211, %212 : vector<32x128xf32>
    %214 = arith.truncf %213 : vector<32x128xf32> to vector<32x128xbf16>
    %cst_85 = arith.constant dense<0.000000e+00> : vector<8x128xf32>
    %215 = tpu.matmul %5, %214, %cst_85 {dimension_numbers = #tpu.dot_dimension_numbers<[1], [0], [0], [1], [0, 0, 1, 1], [], []>} : vector<8x32xbf16>, vector<32x128xbf16>, vector<8x128xf32> -> vector<8x128xf32>
    %216 = vector.broadcast %9 : vector<8x1xf32> to vector<8x128xf32>
    %217 = arith.addf %215, %216 : vector<8x128xf32>
    %218 = arith.mulf %217, %195 : vector<8x128xf32>
    %cst_86 = arith.constant dense<0.000000e+00> : vector<128xf32>
    %219 = vector.multi_reduction <add>, %218, %cst_86 [0] : vector<8x128xf32> to vector<128xf32>
    %220 = vector.shape_cast %219 : vector<128xf32> to vector<1x128xf32>
    %cst_87 = arith.constant 2.000000e-01 : f32
    %221 = vector.broadcast %cst_87 : f32 to vector<8x128xf32>
    %222 = arith.mulf %221, %195 : vector<8x128xf32>
    %cst_88 = arith.constant 1.0007813 : f32
    %223 = vector.broadcast %cst_88 : f32 to vector<8x128xf32>
    %224 = arith.addf %223, %222 : vector<8x128xf32>
    %225 = arith.mulf %189, %224 : vector<8x128xf32>
    %cst_89 = arith.constant 1.00046873 : f32
    %226 = vector.broadcast %cst_89 : f32 to vector<1x128xf32>
    %227 = arith.mulf %192, %226 : vector<1x128xf32>
    %228 = arith.addf %227, %220 : vector<1x128xf32>
    %c6_i32 = arith.constant 6 : i32
    %229 = arith.index_cast %c6_i32 : i32 to index
    %c0_90 = arith.constant 0 : index
    %c0_91 = arith.constant 0 : index
    %230 = vector.load %arg2[%229, %c0_90, %c0_91] : memref<32x8x128xf32, #tpu.memory_space<vmem>>, vector<1x8x128xf32>
    %231 = vector.shape_cast %230 : vector<1x8x128xf32> to vector<8x128xf32>
    %232 = arith.addi %10, %c6_i32 : i32
    %233 = arith.sitofp %232 : i32 to f32
    %cst_92 = arith.constant 1.562500e-02 : f32
    %234 = arith.mulf %233, %cst_92 : f32
    %235 = vector.broadcast %234 : f32 to vector<32x1xf32>
    %236 = arith.mulf %235, %6 : vector<32x1xf32>
    %237 = arith.addf %7, %236 : vector<32x1xf32>
    %238 = arith.truncf %225 : vector<8x128xf32> to vector<8x128xbf16>
    %cst_93 = arith.constant dense<0.000000e+00> : vector<32x128xf32>
    %239 = tpu.matmul %3, %238, %cst_93 {dimension_numbers = #tpu.dot_dimension_numbers<[1], [0], [0], [1], [0, 0, 1, 1], [], []>} : vector<32x8xbf16>, vector<8x128xbf16>, vector<32x128xf32> -> vector<32x128xf32>
    %240 = vector.broadcast %237 : vector<32x1xf32> to vector<32x128xf32>
    %241 = arith.addf %239, %240 : vector<32x128xf32>
    %cst_94 = arith.constant 0.000000e+00 : f32
    %242 = vector.broadcast %cst_94 : f32 to vector<32x128xf32>
    %243 = arith.maximumf %241, %242 : vector<32x128xf32>
    %244 = arith.truncf %243 : vector<32x128xf32> to vector<32x128xbf16>
    %cst_95 = arith.constant dense<0.000000e+00> : vector<32x128xf32>
    %245 = tpu.matmul %4, %244, %cst_95 {dimension_numbers = #tpu.dot_dimension_numbers<[1], [0], [0], [1], [0, 0, 1, 1], [], []>} : vector<32x32xbf16>, vector<32x128xbf16>, vector<32x128xf32> -> vector<32x128xf32>
    %246 = vector.broadcast %8 : vector<32x1xf32> to vector<32x128xf32>
    %247 = arith.addf %245, %246 : vector<32x128xf32>
    %cst_96 = arith.constant 0.000000e+00 : f32
    %248 = vector.broadcast %cst_96 : f32 to vector<32x128xf32>
    %249 = arith.maximumf %247, %248 : vector<32x128xf32>
    %250 = arith.truncf %249 : vector<32x128xf32> to vector<32x128xbf16>
    %cst_97 = arith.constant dense<0.000000e+00> : vector<8x128xf32>
    %251 = tpu.matmul %5, %250, %cst_97 {dimension_numbers = #tpu.dot_dimension_numbers<[1], [0], [0], [1], [0, 0, 1, 1], [], []>} : vector<8x32xbf16>, vector<32x128xbf16>, vector<8x128xf32> -> vector<8x128xf32>
    %252 = vector.broadcast %9 : vector<8x1xf32> to vector<8x128xf32>
    %253 = arith.addf %251, %252 : vector<8x128xf32>
    %254 = arith.mulf %253, %231 : vector<8x128xf32>
    %cst_98 = arith.constant dense<0.000000e+00> : vector<128xf32>
    %255 = vector.multi_reduction <add>, %254, %cst_98 [0] : vector<8x128xf32> to vector<128xf32>
    %256 = vector.shape_cast %255 : vector<128xf32> to vector<1x128xf32>
    %cst_99 = arith.constant 2.000000e-01 : f32
    %257 = vector.broadcast %cst_99 : f32 to vector<8x128xf32>
    %258 = arith.mulf %257, %231 : vector<8x128xf32>
    %cst_100 = arith.constant 1.0007813 : f32
    %259 = vector.broadcast %cst_100 : f32 to vector<8x128xf32>
    %260 = arith.addf %259, %258 : vector<8x128xf32>
    %261 = arith.mulf %225, %260 : vector<8x128xf32>
    %cst_101 = arith.constant 1.00046873 : f32
    %262 = vector.broadcast %cst_101 : f32 to vector<1x128xf32>
    %263 = arith.mulf %228, %262 : vector<1x128xf32>
    %264 = arith.addf %263, %256 : vector<1x128xf32>
    %c7_i32 = arith.constant 7 : i32
    %265 = arith.index_cast %c7_i32 : i32 to index
    %c0_102 = arith.constant 0 : index
    %c0_103 = arith.constant 0 : index
    %266 = vector.load %arg2[%265, %c0_102, %c0_103] : memref<32x8x128xf32, #tpu.memory_space<vmem>>, vector<1x8x128xf32>
    %267 = vector.shape_cast %266 : vector<1x8x128xf32> to vector<8x128xf32>
    %268 = arith.addi %10, %c7_i32 : i32
    %269 = arith.sitofp %268 : i32 to f32
    %cst_104 = arith.constant 1.562500e-02 : f32
    %270 = arith.mulf %269, %cst_104 : f32
    %271 = vector.broadcast %270 : f32 to vector<32x1xf32>
    %272 = arith.mulf %271, %6 : vector<32x1xf32>
    %273 = arith.addf %7, %272 : vector<32x1xf32>
    %274 = arith.truncf %261 : vector<8x128xf32> to vector<8x128xbf16>
    %cst_105 = arith.constant dense<0.000000e+00> : vector<32x128xf32>
    %275 = tpu.matmul %3, %274, %cst_105 {dimension_numbers = #tpu.dot_dimension_numbers<[1], [0], [0], [1], [0, 0, 1, 1], [], []>} : vector<32x8xbf16>, vector<8x128xbf16>, vector<32x128xf32> -> vector<32x128xf32>
    %276 = vector.broadcast %273 : vector<32x1xf32> to vector<32x128xf32>
    %277 = arith.addf %275, %276 : vector<32x128xf32>
    %cst_106 = arith.constant 0.000000e+00 : f32
    %278 = vector.broadcast %cst_106 : f32 to vector<32x128xf32>
    %279 = arith.maximumf %277, %278 : vector<32x128xf32>
    %280 = arith.truncf %279 : vector<32x128xf32> to vector<32x128xbf16>
    %cst_107 = arith.constant dense<0.000000e+00> : vector<32x128xf32>
    %281 = tpu.matmul %4, %280, %cst_107 {dimension_numbers = #tpu.dot_dimension_numbers<[1], [0], [0], [1], [0, 0, 1, 1], [], []>} : vector<32x32xbf16>, vector<32x128xbf16>, vector<32x128xf32> -> vector<32x128xf32>
    %282 = vector.broadcast %8 : vector<32x1xf32> to vector<32x128xf32>
    %283 = arith.addf %281, %282 : vector<32x128xf32>
    %cst_108 = arith.constant 0.000000e+00 : f32
    %284 = vector.broadcast %cst_108 : f32 to vector<32x128xf32>
    %285 = arith.maximumf %283, %284 : vector<32x128xf32>
    %286 = arith.truncf %285 : vector<32x128xf32> to vector<32x128xbf16>
    %cst_109 = arith.constant dense<0.000000e+00> : vector<8x128xf32>
    %287 = tpu.matmul %5, %286, %cst_109 {dimension_numbers = #tpu.dot_dimension_numbers<[1], [0], [0], [1], [0, 0, 1, 1], [], []>} : vector<8x32xbf16>, vector<32x128xbf16>, vector<8x128xf32> -> vector<8x128xf32>
    %288 = vector.broadcast %9 : vector<8x1xf32> to vector<8x128xf32>
    %289 = arith.addf %287, %288 : vector<8x128xf32>
    %290 = arith.mulf %289, %267 : vector<8x128xf32>
    %cst_110 = arith.constant dense<0.000000e+00> : vector<128xf32>
    %291 = vector.multi_reduction <add>, %290, %cst_110 [0] : vector<8x128xf32> to vector<128xf32>
    %292 = vector.shape_cast %291 : vector<128xf32> to vector<1x128xf32>
    %cst_111 = arith.constant 2.000000e-01 : f32
    %293 = vector.broadcast %cst_111 : f32 to vector<8x128xf32>
    %294 = arith.mulf %293, %267 : vector<8x128xf32>
    %cst_112 = arith.constant 1.0007813 : f32
    %295 = vector.broadcast %cst_112 : f32 to vector<8x128xf32>
    %296 = arith.addf %295, %294 : vector<8x128xf32>
    %297 = arith.mulf %261, %296 : vector<8x128xf32>
    %cst_113 = arith.constant 1.00046873 : f32
    %298 = vector.broadcast %cst_113 : f32 to vector<1x128xf32>
    %299 = arith.mulf %264, %298 : vector<1x128xf32>
    %300 = arith.addf %299, %292 : vector<1x128xf32>
    %c8_i32 = arith.constant 8 : i32
    %301 = arith.index_cast %c8_i32 : i32 to index
    %c0_114 = arith.constant 0 : index
    %c0_115 = arith.constant 0 : index
    %302 = vector.load %arg2[%301, %c0_114, %c0_115] : memref<32x8x128xf32, #tpu.memory_space<vmem>>, vector<1x8x128xf32>
    %303 = vector.shape_cast %302 : vector<1x8x128xf32> to vector<8x128xf32>
    %304 = arith.addi %10, %c8_i32 : i32
    %305 = arith.sitofp %304 : i32 to f32
    %cst_116 = arith.constant 1.562500e-02 : f32
    %306 = arith.mulf %305, %cst_116 : f32
    %307 = vector.broadcast %306 : f32 to vector<32x1xf32>
    %308 = arith.mulf %307, %6 : vector<32x1xf32>
    %309 = arith.addf %7, %308 : vector<32x1xf32>
    %310 = arith.truncf %297 : vector<8x128xf32> to vector<8x128xbf16>
    %cst_117 = arith.constant dense<0.000000e+00> : vector<32x128xf32>
    %311 = tpu.matmul %3, %310, %cst_117 {dimension_numbers = #tpu.dot_dimension_numbers<[1], [0], [0], [1], [0, 0, 1, 1], [], []>} : vector<32x8xbf16>, vector<8x128xbf16>, vector<32x128xf32> -> vector<32x128xf32>
    %312 = vector.broadcast %309 : vector<32x1xf32> to vector<32x128xf32>
    %313 = arith.addf %311, %312 : vector<32x128xf32>
    %cst_118 = arith.constant 0.000000e+00 : f32
    %314 = vector.broadcast %cst_118 : f32 to vector<32x128xf32>
    %315 = arith.maximumf %313, %314 : vector<32x128xf32>
    %316 = arith.truncf %315 : vector<32x128xf32> to vector<32x128xbf16>
    %cst_119 = arith.constant dense<0.000000e+00> : vector<32x128xf32>
    %317 = tpu.matmul %4, %316, %cst_119 {dimension_numbers = #tpu.dot_dimension_numbers<[1], [0], [0], [1], [0, 0, 1, 1], [], []>} : vector<32x32xbf16>, vector<32x128xbf16>, vector<32x128xf32> -> vector<32x128xf32>
    %318 = vector.broadcast %8 : vector<32x1xf32> to vector<32x128xf32>
    %319 = arith.addf %317, %318 : vector<32x128xf32>
    %cst_120 = arith.constant 0.000000e+00 : f32
    %320 = vector.broadcast %cst_120 : f32 to vector<32x128xf32>
    %321 = arith.maximumf %319, %320 : vector<32x128xf32>
    %322 = arith.truncf %321 : vector<32x128xf32> to vector<32x128xbf16>
    %cst_121 = arith.constant dense<0.000000e+00> : vector<8x128xf32>
    %323 = tpu.matmul %5, %322, %cst_121 {dimension_numbers = #tpu.dot_dimension_numbers<[1], [0], [0], [1], [0, 0, 1, 1], [], []>} : vector<8x32xbf16>, vector<32x128xbf16>, vector<8x128xf32> -> vector<8x128xf32>
    %324 = vector.broadcast %9 : vector<8x1xf32> to vector<8x128xf32>
    %325 = arith.addf %323, %324 : vector<8x128xf32>
    %326 = arith.mulf %325, %303 : vector<8x128xf32>
    %cst_122 = arith.constant dense<0.000000e+00> : vector<128xf32>
    %327 = vector.multi_reduction <add>, %326, %cst_122 [0] : vector<8x128xf32> to vector<128xf32>
    %328 = vector.shape_cast %327 : vector<128xf32> to vector<1x128xf32>
    %cst_123 = arith.constant 2.000000e-01 : f32
    %329 = vector.broadcast %cst_123 : f32 to vector<8x128xf32>
    %330 = arith.mulf %329, %303 : vector<8x128xf32>
    %cst_124 = arith.constant 1.0007813 : f32
    %331 = vector.broadcast %cst_124 : f32 to vector<8x128xf32>
    %332 = arith.addf %331, %330 : vector<8x128xf32>
    %333 = arith.mulf %297, %332 : vector<8x128xf32>
    %cst_125 = arith.constant 1.00046873 : f32
    %334 = vector.broadcast %cst_125 : f32 to vector<1x128xf32>
    %335 = arith.mulf %300, %334 : vector<1x128xf32>
    %336 = arith.addf %335, %328 : vector<1x128xf32>
    %c9_i32 = arith.constant 9 : i32
    %337 = arith.index_cast %c9_i32 : i32 to index
    %c0_126 = arith.constant 0 : index
    %c0_127 = arith.constant 0 : index
    %338 = vector.load %arg2[%337, %c0_126, %c0_127] : memref<32x8x128xf32, #tpu.memory_space<vmem>>, vector<1x8x128xf32>
    %339 = vector.shape_cast %338 : vector<1x8x128xf32> to vector<8x128xf32>
    %340 = arith.addi %10, %c9_i32 : i32
    %341 = arith.sitofp %340 : i32 to f32
    %cst_128 = arith.constant 1.562500e-02 : f32
    %342 = arith.mulf %341, %cst_128 : f32
    %343 = vector.broadcast %342 : f32 to vector<32x1xf32>
    %344 = arith.mulf %343, %6 : vector<32x1xf32>
    %345 = arith.addf %7, %344 : vector<32x1xf32>
    %346 = arith.truncf %333 : vector<8x128xf32> to vector<8x128xbf16>
    %cst_129 = arith.constant dense<0.000000e+00> : vector<32x128xf32>
    %347 = tpu.matmul %3, %346, %cst_129 {dimension_numbers = #tpu.dot_dimension_numbers<[1], [0], [0], [1], [0, 0, 1, 1], [], []>} : vector<32x8xbf16>, vector<8x128xbf16>, vector<32x128xf32> -> vector<32x128xf32>
    %348 = vector.broadcast %345 : vector<32x1xf32> to vector<32x128xf32>
    %349 = arith.addf %347, %348 : vector<32x128xf32>
    %cst_130 = arith.constant 0.000000e+00 : f32
    %350 = vector.broadcast %cst_130 : f32 to vector<32x128xf32>
    %351 = arith.maximumf %349, %350 : vector<32x128xf32>
    %352 = arith.truncf %351 : vector<32x128xf32> to vector<32x128xbf16>
    %cst_131 = arith.constant dense<0.000000e+00> : vector<32x128xf32>
    %353 = tpu.matmul %4, %352, %cst_131 {dimension_numbers = #tpu.dot_dimension_numbers<[1], [0], [0], [1], [0, 0, 1, 1], [], []>} : vector<32x32xbf16>, vector<32x128xbf16>, vector<32x128xf32> -> vector<32x128xf32>
    %354 = vector.broadcast %8 : vector<32x1xf32> to vector<32x128xf32>
    %355 = arith.addf %353, %354 : vector<32x128xf32>
    %cst_132 = arith.constant 0.000000e+00 : f32
    %356 = vector.broadcast %cst_132 : f32 to vector<32x128xf32>
    %357 = arith.maximumf %355, %356 : vector<32x128xf32>
    %358 = arith.truncf %357 : vector<32x128xf32> to vector<32x128xbf16>
    %cst_133 = arith.constant dense<0.000000e+00> : vector<8x128xf32>
    %359 = tpu.matmul %5, %358, %cst_133 {dimension_numbers = #tpu.dot_dimension_numbers<[1], [0], [0], [1], [0, 0, 1, 1], [], []>} : vector<8x32xbf16>, vector<32x128xbf16>, vector<8x128xf32> -> vector<8x128xf32>
    %360 = vector.broadcast %9 : vector<8x1xf32> to vector<8x128xf32>
    %361 = arith.addf %359, %360 : vector<8x128xf32>
    %362 = arith.mulf %361, %339 : vector<8x128xf32>
    %cst_134 = arith.constant dense<0.000000e+00> : vector<128xf32>
    %363 = vector.multi_reduction <add>, %362, %cst_134 [0] : vector<8x128xf32> to vector<128xf32>
    %364 = vector.shape_cast %363 : vector<128xf32> to vector<1x128xf32>
    %cst_135 = arith.constant 2.000000e-01 : f32
    %365 = vector.broadcast %cst_135 : f32 to vector<8x128xf32>
    %366 = arith.mulf %365, %339 : vector<8x128xf32>
    %cst_136 = arith.constant 1.0007813 : f32
    %367 = vector.broadcast %cst_136 : f32 to vector<8x128xf32>
    %368 = arith.addf %367, %366 : vector<8x128xf32>
    %369 = arith.mulf %333, %368 : vector<8x128xf32>
    %cst_137 = arith.constant 1.00046873 : f32
    %370 = vector.broadcast %cst_137 : f32 to vector<1x128xf32>
    %371 = arith.mulf %336, %370 : vector<1x128xf32>
    %372 = arith.addf %371, %364 : vector<1x128xf32>
    %c10_i32 = arith.constant 10 : i32
    %373 = arith.index_cast %c10_i32 : i32 to index
    %c0_138 = arith.constant 0 : index
    %c0_139 = arith.constant 0 : index
    %374 = vector.load %arg2[%373, %c0_138, %c0_139] : memref<32x8x128xf32, #tpu.memory_space<vmem>>, vector<1x8x128xf32>
    %375 = vector.shape_cast %374 : vector<1x8x128xf32> to vector<8x128xf32>
    %376 = arith.addi %10, %c10_i32 : i32
    %377 = arith.sitofp %376 : i32 to f32
    %cst_140 = arith.constant 1.562500e-02 : f32
    %378 = arith.mulf %377, %cst_140 : f32
    %379 = vector.broadcast %378 : f32 to vector<32x1xf32>
    %380 = arith.mulf %379, %6 : vector<32x1xf32>
    %381 = arith.addf %7, %380 : vector<32x1xf32>
    %382 = arith.truncf %369 : vector<8x128xf32> to vector<8x128xbf16>
    %cst_141 = arith.constant dense<0.000000e+00> : vector<32x128xf32>
    %383 = tpu.matmul %3, %382, %cst_141 {dimension_numbers = #tpu.dot_dimension_numbers<[1], [0], [0], [1], [0, 0, 1, 1], [], []>} : vector<32x8xbf16>, vector<8x128xbf16>, vector<32x128xf32> -> vector<32x128xf32>
    %384 = vector.broadcast %381 : vector<32x1xf32> to vector<32x128xf32>
    %385 = arith.addf %383, %384 : vector<32x128xf32>
    %cst_142 = arith.constant 0.000000e+00 : f32
    %386 = vector.broadcast %cst_142 : f32 to vector<32x128xf32>
    %387 = arith.maximumf %385, %386 : vector<32x128xf32>
    %388 = arith.truncf %387 : vector<32x128xf32> to vector<32x128xbf16>
    %cst_143 = arith.constant dense<0.000000e+00> : vector<32x128xf32>
    %389 = tpu.matmul %4, %388, %cst_143 {dimension_numbers = #tpu.dot_dimension_numbers<[1], [0], [0], [1], [0, 0, 1, 1], [], []>} : vector<32x32xbf16>, vector<32x128xbf16>, vector<32x128xf32> -> vector<32x128xf32>
    %390 = vector.broadcast %8 : vector<32x1xf32> to vector<32x128xf32>
    %391 = arith.addf %389, %390 : vector<32x128xf32>
    %cst_144 = arith.constant 0.000000e+00 : f32
    %392 = vector.broadcast %cst_144 : f32 to vector<32x128xf32>
    %393 = arith.maximumf %391, %392 : vector<32x128xf32>
    %394 = arith.truncf %393 : vector<32x128xf32> to vector<32x128xbf16>
    %cst_145 = arith.constant dense<0.000000e+00> : vector<8x128xf32>
    %395 = tpu.matmul %5, %394, %cst_145 {dimension_numbers = #tpu.dot_dimension_numbers<[1], [0], [0], [1], [0, 0, 1, 1], [], []>} : vector<8x32xbf16>, vector<32x128xbf16>, vector<8x128xf32> -> vector<8x128xf32>
    %396 = vector.broadcast %9 : vector<8x1xf32> to vector<8x128xf32>
    %397 = arith.addf %395, %396 : vector<8x128xf32>
    %398 = arith.mulf %397, %375 : vector<8x128xf32>
    %cst_146 = arith.constant dense<0.000000e+00> : vector<128xf32>
    %399 = vector.multi_reduction <add>, %398, %cst_146 [0] : vector<8x128xf32> to vector<128xf32>
    %400 = vector.shape_cast %399 : vector<128xf32> to vector<1x128xf32>
    %cst_147 = arith.constant 2.000000e-01 : f32
    %401 = vector.broadcast %cst_147 : f32 to vector<8x128xf32>
    %402 = arith.mulf %401, %375 : vector<8x128xf32>
    %cst_148 = arith.constant 1.0007813 : f32
    %403 = vector.broadcast %cst_148 : f32 to vector<8x128xf32>
    %404 = arith.addf %403, %402 : vector<8x128xf32>
    %405 = arith.mulf %369, %404 : vector<8x128xf32>
    %cst_149 = arith.constant 1.00046873 : f32
    %406 = vector.broadcast %cst_149 : f32 to vector<1x128xf32>
    %407 = arith.mulf %372, %406 : vector<1x128xf32>
    %408 = arith.addf %407, %400 : vector<1x128xf32>
    %c11_i32 = arith.constant 11 : i32
    %409 = arith.index_cast %c11_i32 : i32 to index
    %c0_150 = arith.constant 0 : index
    %c0_151 = arith.constant 0 : index
    %410 = vector.load %arg2[%409, %c0_150, %c0_151] : memref<32x8x128xf32, #tpu.memory_space<vmem>>, vector<1x8x128xf32>
    %411 = vector.shape_cast %410 : vector<1x8x128xf32> to vector<8x128xf32>
    %412 = arith.addi %10, %c11_i32 : i32
    %413 = arith.sitofp %412 : i32 to f32
    %cst_152 = arith.constant 1.562500e-02 : f32
    %414 = arith.mulf %413, %cst_152 : f32
    %415 = vector.broadcast %414 : f32 to vector<32x1xf32>
    %416 = arith.mulf %415, %6 : vector<32x1xf32>
    %417 = arith.addf %7, %416 : vector<32x1xf32>
    %418 = arith.truncf %405 : vector<8x128xf32> to vector<8x128xbf16>
    %cst_153 = arith.constant dense<0.000000e+00> : vector<32x128xf32>
    %419 = tpu.matmul %3, %418, %cst_153 {dimension_numbers = #tpu.dot_dimension_numbers<[1], [0], [0], [1], [0, 0, 1, 1], [], []>} : vector<32x8xbf16>, vector<8x128xbf16>, vector<32x128xf32> -> vector<32x128xf32>
    %420 = vector.broadcast %417 : vector<32x1xf32> to vector<32x128xf32>
    %421 = arith.addf %419, %420 : vector<32x128xf32>
    %cst_154 = arith.constant 0.000000e+00 : f32
    %422 = vector.broadcast %cst_154 : f32 to vector<32x128xf32>
    %423 = arith.maximumf %421, %422 : vector<32x128xf32>
    %424 = arith.truncf %423 : vector<32x128xf32> to vector<32x128xbf16>
    %cst_155 = arith.constant dense<0.000000e+00> : vector<32x128xf32>
    %425 = tpu.matmul %4, %424, %cst_155 {dimension_numbers = #tpu.dot_dimension_numbers<[1], [0], [0], [1], [0, 0, 1, 1], [], []>} : vector<32x32xbf16>, vector<32x128xbf16>, vector<32x128xf32> -> vector<32x128xf32>
    %426 = vector.broadcast %8 : vector<32x1xf32> to vector<32x128xf32>
    %427 = arith.addf %425, %426 : vector<32x128xf32>
    %cst_156 = arith.constant 0.000000e+00 : f32
    %428 = vector.broadcast %cst_156 : f32 to vector<32x128xf32>
    %429 = arith.maximumf %427, %428 : vector<32x128xf32>
    %430 = arith.truncf %429 : vector<32x128xf32> to vector<32x128xbf16>
    %cst_157 = arith.constant dense<0.000000e+00> : vector<8x128xf32>
    %431 = tpu.matmul %5, %430, %cst_157 {dimension_numbers = #tpu.dot_dimension_numbers<[1], [0], [0], [1], [0, 0, 1, 1], [], []>} : vector<8x32xbf16>, vector<32x128xbf16>, vector<8x128xf32> -> vector<8x128xf32>
    %432 = vector.broadcast %9 : vector<8x1xf32> to vector<8x128xf32>
    %433 = arith.addf %431, %432 : vector<8x128xf32>
    %434 = arith.mulf %433, %411 : vector<8x128xf32>
    %cst_158 = arith.constant dense<0.000000e+00> : vector<128xf32>
    %435 = vector.multi_reduction <add>, %434, %cst_158 [0] : vector<8x128xf32> to vector<128xf32>
    %436 = vector.shape_cast %435 : vector<128xf32> to vector<1x128xf32>
    %cst_159 = arith.constant 2.000000e-01 : f32
    %437 = vector.broadcast %cst_159 : f32 to vector<8x128xf32>
    %438 = arith.mulf %437, %411 : vector<8x128xf32>
    %cst_160 = arith.constant 1.0007813 : f32
    %439 = vector.broadcast %cst_160 : f32 to vector<8x128xf32>
    %440 = arith.addf %439, %438 : vector<8x128xf32>
    %441 = arith.mulf %405, %440 : vector<8x128xf32>
    %cst_161 = arith.constant 1.00046873 : f32
    %442 = vector.broadcast %cst_161 : f32 to vector<1x128xf32>
    %443 = arith.mulf %408, %442 : vector<1x128xf32>
    %444 = arith.addf %443, %436 : vector<1x128xf32>
    %c12_i32 = arith.constant 12 : i32
    %445 = arith.index_cast %c12_i32 : i32 to index
    %c0_162 = arith.constant 0 : index
    %c0_163 = arith.constant 0 : index
    %446 = vector.load %arg2[%445, %c0_162, %c0_163] : memref<32x8x128xf32, #tpu.memory_space<vmem>>, vector<1x8x128xf32>
    %447 = vector.shape_cast %446 : vector<1x8x128xf32> to vector<8x128xf32>
    %448 = arith.addi %10, %c12_i32 : i32
    %449 = arith.sitofp %448 : i32 to f32
    %cst_164 = arith.constant 1.562500e-02 : f32
    %450 = arith.mulf %449, %cst_164 : f32
    %451 = vector.broadcast %450 : f32 to vector<32x1xf32>
    %452 = arith.mulf %451, %6 : vector<32x1xf32>
    %453 = arith.addf %7, %452 : vector<32x1xf32>
    %454 = arith.truncf %441 : vector<8x128xf32> to vector<8x128xbf16>
    %cst_165 = arith.constant dense<0.000000e+00> : vector<32x128xf32>
    %455 = tpu.matmul %3, %454, %cst_165 {dimension_numbers = #tpu.dot_dimension_numbers<[1], [0], [0], [1], [0, 0, 1, 1], [], []>} : vector<32x8xbf16>, vector<8x128xbf16>, vector<32x128xf32> -> vector<32x128xf32>
    %456 = vector.broadcast %453 : vector<32x1xf32> to vector<32x128xf32>
    %457 = arith.addf %455, %456 : vector<32x128xf32>
    %cst_166 = arith.constant 0.000000e+00 : f32
    %458 = vector.broadcast %cst_166 : f32 to vector<32x128xf32>
    %459 = arith.maximumf %457, %458 : vector<32x128xf32>
    %460 = arith.truncf %459 : vector<32x128xf32> to vector<32x128xbf16>
    %cst_167 = arith.constant dense<0.000000e+00> : vector<32x128xf32>
    %461 = tpu.matmul %4, %460, %cst_167 {dimension_numbers = #tpu.dot_dimension_numbers<[1], [0], [0], [1], [0, 0, 1, 1], [], []>} : vector<32x32xbf16>, vector<32x128xbf16>, vector<32x128xf32> -> vector<32x128xf32>
    %462 = vector.broadcast %8 : vector<32x1xf32> to vector<32x128xf32>
    %463 = arith.addf %461, %462 : vector<32x128xf32>
    %cst_168 = arith.constant 0.000000e+00 : f32
    %464 = vector.broadcast %cst_168 : f32 to vector<32x128xf32>
    %465 = arith.maximumf %463, %464 : vector<32x128xf32>
    %466 = arith.truncf %465 : vector<32x128xf32> to vector<32x128xbf16>
    %cst_169 = arith.constant dense<0.000000e+00> : vector<8x128xf32>
    %467 = tpu.matmul %5, %466, %cst_169 {dimension_numbers = #tpu.dot_dimension_numbers<[1], [0], [0], [1], [0, 0, 1, 1], [], []>} : vector<8x32xbf16>, vector<32x128xbf16>, vector<8x128xf32> -> vector<8x128xf32>
    %468 = vector.broadcast %9 : vector<8x1xf32> to vector<8x128xf32>
    %469 = arith.addf %467, %468 : vector<8x128xf32>
    %470 = arith.mulf %469, %447 : vector<8x128xf32>
    %cst_170 = arith.constant dense<0.000000e+00> : vector<128xf32>
    %471 = vector.multi_reduction <add>, %470, %cst_170 [0] : vector<8x128xf32> to vector<128xf32>
    %472 = vector.shape_cast %471 : vector<128xf32> to vector<1x128xf32>
    %cst_171 = arith.constant 2.000000e-01 : f32
    %473 = vector.broadcast %cst_171 : f32 to vector<8x128xf32>
    %474 = arith.mulf %473, %447 : vector<8x128xf32>
    %cst_172 = arith.constant 1.0007813 : f32
    %475 = vector.broadcast %cst_172 : f32 to vector<8x128xf32>
    %476 = arith.addf %475, %474 : vector<8x128xf32>
    %477 = arith.mulf %441, %476 : vector<8x128xf32>
    %cst_173 = arith.constant 1.00046873 : f32
    %478 = vector.broadcast %cst_173 : f32 to vector<1x128xf32>
    %479 = arith.mulf %444, %478 : vector<1x128xf32>
    %480 = arith.addf %479, %472 : vector<1x128xf32>
    %c13_i32 = arith.constant 13 : i32
    %481 = arith.index_cast %c13_i32 : i32 to index
    %c0_174 = arith.constant 0 : index
    %c0_175 = arith.constant 0 : index
    %482 = vector.load %arg2[%481, %c0_174, %c0_175] : memref<32x8x128xf32, #tpu.memory_space<vmem>>, vector<1x8x128xf32>
    %483 = vector.shape_cast %482 : vector<1x8x128xf32> to vector<8x128xf32>
    %484 = arith.addi %10, %c13_i32 : i32
    %485 = arith.sitofp %484 : i32 to f32
    %cst_176 = arith.constant 1.562500e-02 : f32
    %486 = arith.mulf %485, %cst_176 : f32
    %487 = vector.broadcast %486 : f32 to vector<32x1xf32>
    %488 = arith.mulf %487, %6 : vector<32x1xf32>
    %489 = arith.addf %7, %488 : vector<32x1xf32>
    %490 = arith.truncf %477 : vector<8x128xf32> to vector<8x128xbf16>
    %cst_177 = arith.constant dense<0.000000e+00> : vector<32x128xf32>
    %491 = tpu.matmul %3, %490, %cst_177 {dimension_numbers = #tpu.dot_dimension_numbers<[1], [0], [0], [1], [0, 0, 1, 1], [], []>} : vector<32x8xbf16>, vector<8x128xbf16>, vector<32x128xf32> -> vector<32x128xf32>
    %492 = vector.broadcast %489 : vector<32x1xf32> to vector<32x128xf32>
    %493 = arith.addf %491, %492 : vector<32x128xf32>
    %cst_178 = arith.constant 0.000000e+00 : f32
    %494 = vector.broadcast %cst_178 : f32 to vector<32x128xf32>
    %495 = arith.maximumf %493, %494 : vector<32x128xf32>
    %496 = arith.truncf %495 : vector<32x128xf32> to vector<32x128xbf16>
    %cst_179 = arith.constant dense<0.000000e+00> : vector<32x128xf32>
    %497 = tpu.matmul %4, %496, %cst_179 {dimension_numbers = #tpu.dot_dimension_numbers<[1], [0], [0], [1], [0, 0, 1, 1], [], []>} : vector<32x32xbf16>, vector<32x128xbf16>, vector<32x128xf32> -> vector<32x128xf32>
    %498 = vector.broadcast %8 : vector<32x1xf32> to vector<32x128xf32>
    %499 = arith.addf %497, %498 : vector<32x128xf32>
    %cst_180 = arith.constant 0.000000e+00 : f32
    %500 = vector.broadcast %cst_180 : f32 to vector<32x128xf32>
    %501 = arith.maximumf %499, %500 : vector<32x128xf32>
    %502 = arith.truncf %501 : vector<32x128xf32> to vector<32x128xbf16>
    %cst_181 = arith.constant dense<0.000000e+00> : vector<8x128xf32>
    %503 = tpu.matmul %5, %502, %cst_181 {dimension_numbers = #tpu.dot_dimension_numbers<[1], [0], [0], [1], [0, 0, 1, 1], [], []>} : vector<8x32xbf16>, vector<32x128xbf16>, vector<8x128xf32> -> vector<8x128xf32>
    %504 = vector.broadcast %9 : vector<8x1xf32> to vector<8x128xf32>
    %505 = arith.addf %503, %504 : vector<8x128xf32>
    %506 = arith.mulf %505, %483 : vector<8x128xf32>
    %cst_182 = arith.constant dense<0.000000e+00> : vector<128xf32>
    %507 = vector.multi_reduction <add>, %506, %cst_182 [0] : vector<8x128xf32> to vector<128xf32>
    %508 = vector.shape_cast %507 : vector<128xf32> to vector<1x128xf32>
    %cst_183 = arith.constant 2.000000e-01 : f32
    %509 = vector.broadcast %cst_183 : f32 to vector<8x128xf32>
    %510 = arith.mulf %509, %483 : vector<8x128xf32>
    %cst_184 = arith.constant 1.0007813 : f32
    %511 = vector.broadcast %cst_184 : f32 to vector<8x128xf32>
    %512 = arith.addf %511, %510 : vector<8x128xf32>
    %513 = arith.mulf %477, %512 : vector<8x128xf32>
    %cst_185 = arith.constant 1.00046873 : f32
    %514 = vector.broadcast %cst_185 : f32 to vector<1x128xf32>
    %515 = arith.mulf %480, %514 : vector<1x128xf32>
    %516 = arith.addf %515, %508 : vector<1x128xf32>
    %c14_i32 = arith.constant 14 : i32
    %517 = arith.index_cast %c14_i32 : i32 to index
    %c0_186 = arith.constant 0 : index
    %c0_187 = arith.constant 0 : index
    %518 = vector.load %arg2[%517, %c0_186, %c0_187] : memref<32x8x128xf32, #tpu.memory_space<vmem>>, vector<1x8x128xf32>
    %519 = vector.shape_cast %518 : vector<1x8x128xf32> to vector<8x128xf32>
    %520 = arith.addi %10, %c14_i32 : i32
    %521 = arith.sitofp %520 : i32 to f32
    %cst_188 = arith.constant 1.562500e-02 : f32
    %522 = arith.mulf %521, %cst_188 : f32
    %523 = vector.broadcast %522 : f32 to vector<32x1xf32>
    %524 = arith.mulf %523, %6 : vector<32x1xf32>
    %525 = arith.addf %7, %524 : vector<32x1xf32>
    %526 = arith.truncf %513 : vector<8x128xf32> to vector<8x128xbf16>
    %cst_189 = arith.constant dense<0.000000e+00> : vector<32x128xf32>
    %527 = tpu.matmul %3, %526, %cst_189 {dimension_numbers = #tpu.dot_dimension_numbers<[1], [0], [0], [1], [0, 0, 1, 1], [], []>} : vector<32x8xbf16>, vector<8x128xbf16>, vector<32x128xf32> -> vector<32x128xf32>
    %528 = vector.broadcast %525 : vector<32x1xf32> to vector<32x128xf32>
    %529 = arith.addf %527, %528 : vector<32x128xf32>
    %cst_190 = arith.constant 0.000000e+00 : f32
    %530 = vector.broadcast %cst_190 : f32 to vector<32x128xf32>
    %531 = arith.maximumf %529, %530 : vector<32x128xf32>
    %532 = arith.truncf %531 : vector<32x128xf32> to vector<32x128xbf16>
    %cst_191 = arith.constant dense<0.000000e+00> : vector<32x128xf32>
    %533 = tpu.matmul %4, %532, %cst_191 {dimension_numbers = #tpu.dot_dimension_numbers<[1], [0], [0], [1], [0, 0, 1, 1], [], []>} : vector<32x32xbf16>, vector<32x128xbf16>, vector<32x128xf32> -> vector<32x128xf32>
    %534 = vector.broadcast %8 : vector<32x1xf32> to vector<32x128xf32>
    %535 = arith.addf %533, %534 : vector<32x128xf32>
    %cst_192 = arith.constant 0.000000e+00 : f32
    %536 = vector.broadcast %cst_192 : f32 to vector<32x128xf32>
    %537 = arith.maximumf %535, %536 : vector<32x128xf32>
    %538 = arith.truncf %537 : vector<32x128xf32> to vector<32x128xbf16>
    %cst_193 = arith.constant dense<0.000000e+00> : vector<8x128xf32>
    %539 = tpu.matmul %5, %538, %cst_193 {dimension_numbers = #tpu.dot_dimension_numbers<[1], [0], [0], [1], [0, 0, 1, 1], [], []>} : vector<8x32xbf16>, vector<32x128xbf16>, vector<8x128xf32> -> vector<8x128xf32>
    %540 = vector.broadcast %9 : vector<8x1xf32> to vector<8x128xf32>
    %541 = arith.addf %539, %540 : vector<8x128xf32>
    %542 = arith.mulf %541, %519 : vector<8x128xf32>
    %cst_194 = arith.constant dense<0.000000e+00> : vector<128xf32>
    %543 = vector.multi_reduction <add>, %542, %cst_194 [0] : vector<8x128xf32> to vector<128xf32>
    %544 = vector.shape_cast %543 : vector<128xf32> to vector<1x128xf32>
    %cst_195 = arith.constant 2.000000e-01 : f32
    %545 = vector.broadcast %cst_195 : f32 to vector<8x128xf32>
    %546 = arith.mulf %545, %519 : vector<8x128xf32>
    %cst_196 = arith.constant 1.0007813 : f32
    %547 = vector.broadcast %cst_196 : f32 to vector<8x128xf32>
    %548 = arith.addf %547, %546 : vector<8x128xf32>
    %549 = arith.mulf %513, %548 : vector<8x128xf32>
    %cst_197 = arith.constant 1.00046873 : f32
    %550 = vector.broadcast %cst_197 : f32 to vector<1x128xf32>
    %551 = arith.mulf %516, %550 : vector<1x128xf32>
    %552 = arith.addf %551, %544 : vector<1x128xf32>
    %c15_i32 = arith.constant 15 : i32
    %553 = arith.index_cast %c15_i32 : i32 to index
    %c0_198 = arith.constant 0 : index
    %c0_199 = arith.constant 0 : index
    %554 = vector.load %arg2[%553, %c0_198, %c0_199] : memref<32x8x128xf32, #tpu.memory_space<vmem>>, vector<1x8x128xf32>
    %555 = vector.shape_cast %554 : vector<1x8x128xf32> to vector<8x128xf32>
    %556 = arith.addi %10, %c15_i32 : i32
    %557 = arith.sitofp %556 : i32 to f32
    %cst_200 = arith.constant 1.562500e-02 : f32
    %558 = arith.mulf %557, %cst_200 : f32
    %559 = vector.broadcast %558 : f32 to vector<32x1xf32>
    %560 = arith.mulf %559, %6 : vector<32x1xf32>
    %561 = arith.addf %7, %560 : vector<32x1xf32>
    %562 = arith.truncf %549 : vector<8x128xf32> to vector<8x128xbf16>
    %cst_201 = arith.constant dense<0.000000e+00> : vector<32x128xf32>
    %563 = tpu.matmul %3, %562, %cst_201 {dimension_numbers = #tpu.dot_dimension_numbers<[1], [0], [0], [1], [0, 0, 1, 1], [], []>} : vector<32x8xbf16>, vector<8x128xbf16>, vector<32x128xf32> -> vector<32x128xf32>
    %564 = vector.broadcast %561 : vector<32x1xf32> to vector<32x128xf32>
    %565 = arith.addf %563, %564 : vector<32x128xf32>
    %cst_202 = arith.constant 0.000000e+00 : f32
    %566 = vector.broadcast %cst_202 : f32 to vector<32x128xf32>
    %567 = arith.maximumf %565, %566 : vector<32x128xf32>
    %568 = arith.truncf %567 : vector<32x128xf32> to vector<32x128xbf16>
    %cst_203 = arith.constant dense<0.000000e+00> : vector<32x128xf32>
    %569 = tpu.matmul %4, %568, %cst_203 {dimension_numbers = #tpu.dot_dimension_numbers<[1], [0], [0], [1], [0, 0, 1, 1], [], []>} : vector<32x32xbf16>, vector<32x128xbf16>, vector<32x128xf32> -> vector<32x128xf32>
    %570 = vector.broadcast %8 : vector<32x1xf32> to vector<32x128xf32>
    %571 = arith.addf %569, %570 : vector<32x128xf32>
    %cst_204 = arith.constant 0.000000e+00 : f32
    %572 = vector.broadcast %cst_204 : f32 to vector<32x128xf32>
    %573 = arith.maximumf %571, %572 : vector<32x128xf32>
    %574 = arith.truncf %573 : vector<32x128xf32> to vector<32x128xbf16>
    %cst_205 = arith.constant dense<0.000000e+00> : vector<8x128xf32>
    %575 = tpu.matmul %5, %574, %cst_205 {dimension_numbers = #tpu.dot_dimension_numbers<[1], [0], [0], [1], [0, 0, 1, 1], [], []>} : vector<8x32xbf16>, vector<32x128xbf16>, vector<8x128xf32> -> vector<8x128xf32>
    %576 = vector.broadcast %9 : vector<8x1xf32> to vector<8x128xf32>
    %577 = arith.addf %575, %576 : vector<8x128xf32>
    %578 = arith.mulf %577, %555 : vector<8x128xf32>
    %cst_206 = arith.constant dense<0.000000e+00> : vector<128xf32>
    %579 = vector.multi_reduction <add>, %578, %cst_206 [0] : vector<8x128xf32> to vector<128xf32>
    %580 = vector.shape_cast %579 : vector<128xf32> to vector<1x128xf32>
    %cst_207 = arith.constant 2.000000e-01 : f32
    %581 = vector.broadcast %cst_207 : f32 to vector<8x128xf32>
    %582 = arith.mulf %581, %555 : vector<8x128xf32>
    %cst_208 = arith.constant 1.0007813 : f32
    %583 = vector.broadcast %cst_208 : f32 to vector<8x128xf32>
    %584 = arith.addf %583, %582 : vector<8x128xf32>
    %585 = arith.mulf %549, %584 : vector<8x128xf32>
    %cst_209 = arith.constant 1.00046873 : f32
    %586 = vector.broadcast %cst_209 : f32 to vector<1x128xf32>
    %587 = arith.mulf %552, %586 : vector<1x128xf32>
    %588 = arith.addf %587, %580 : vector<1x128xf32>
    %c16_i32 = arith.constant 16 : i32
    %589 = arith.index_cast %c16_i32 : i32 to index
    %c0_210 = arith.constant 0 : index
    %c0_211 = arith.constant 0 : index
    %590 = vector.load %arg2[%589, %c0_210, %c0_211] : memref<32x8x128xf32, #tpu.memory_space<vmem>>, vector<1x8x128xf32>
    %591 = vector.shape_cast %590 : vector<1x8x128xf32> to vector<8x128xf32>
    %592 = arith.addi %10, %c16_i32 : i32
    %593 = arith.sitofp %592 : i32 to f32
    %cst_212 = arith.constant 1.562500e-02 : f32
    %594 = arith.mulf %593, %cst_212 : f32
    %595 = vector.broadcast %594 : f32 to vector<32x1xf32>
    %596 = arith.mulf %595, %6 : vector<32x1xf32>
    %597 = arith.addf %7, %596 : vector<32x1xf32>
    %598 = arith.truncf %585 : vector<8x128xf32> to vector<8x128xbf16>
    %cst_213 = arith.constant dense<0.000000e+00> : vector<32x128xf32>
    %599 = tpu.matmul %3, %598, %cst_213 {dimension_numbers = #tpu.dot_dimension_numbers<[1], [0], [0], [1], [0, 0, 1, 1], [], []>} : vector<32x8xbf16>, vector<8x128xbf16>, vector<32x128xf32> -> vector<32x128xf32>
    %600 = vector.broadcast %597 : vector<32x1xf32> to vector<32x128xf32>
    %601 = arith.addf %599, %600 : vector<32x128xf32>
    %cst_214 = arith.constant 0.000000e+00 : f32
    %602 = vector.broadcast %cst_214 : f32 to vector<32x128xf32>
    %603 = arith.maximumf %601, %602 : vector<32x128xf32>
    %604 = arith.truncf %603 : vector<32x128xf32> to vector<32x128xbf16>
    %cst_215 = arith.constant dense<0.000000e+00> : vector<32x128xf32>
    %605 = tpu.matmul %4, %604, %cst_215 {dimension_numbers = #tpu.dot_dimension_numbers<[1], [0], [0], [1], [0, 0, 1, 1], [], []>} : vector<32x32xbf16>, vector<32x128xbf16>, vector<32x128xf32> -> vector<32x128xf32>
    %606 = vector.broadcast %8 : vector<32x1xf32> to vector<32x128xf32>
    %607 = arith.addf %605, %606 : vector<32x128xf32>
    %cst_216 = arith.constant 0.000000e+00 : f32
    %608 = vector.broadcast %cst_216 : f32 to vector<32x128xf32>
    %609 = arith.maximumf %607, %608 : vector<32x128xf32>
    %610 = arith.truncf %609 : vector<32x128xf32> to vector<32x128xbf16>
    %cst_217 = arith.constant dense<0.000000e+00> : vector<8x128xf32>
    %611 = tpu.matmul %5, %610, %cst_217 {dimension_numbers = #tpu.dot_dimension_numbers<[1], [0], [0], [1], [0, 0, 1, 1], [], []>} : vector<8x32xbf16>, vector<32x128xbf16>, vector<8x128xf32> -> vector<8x128xf32>
    %612 = vector.broadcast %9 : vector<8x1xf32> to vector<8x128xf32>
    %613 = arith.addf %611, %612 : vector<8x128xf32>
    %614 = arith.mulf %613, %591 : vector<8x128xf32>
    %cst_218 = arith.constant dense<0.000000e+00> : vector<128xf32>
    %615 = vector.multi_reduction <add>, %614, %cst_218 [0] : vector<8x128xf32> to vector<128xf32>
    %616 = vector.shape_cast %615 : vector<128xf32> to vector<1x128xf32>
    %cst_219 = arith.constant 2.000000e-01 : f32
    %617 = vector.broadcast %cst_219 : f32 to vector<8x128xf32>
    %618 = arith.mulf %617, %591 : vector<8x128xf32>
    %cst_220 = arith.constant 1.0007813 : f32
    %619 = vector.broadcast %cst_220 : f32 to vector<8x128xf32>
    %620 = arith.addf %619, %618 : vector<8x128xf32>
    %621 = arith.mulf %585, %620 : vector<8x128xf32>
    %cst_221 = arith.constant 1.00046873 : f32
    %622 = vector.broadcast %cst_221 : f32 to vector<1x128xf32>
    %623 = arith.mulf %588, %622 : vector<1x128xf32>
    %624 = arith.addf %623, %616 : vector<1x128xf32>
    %c17_i32 = arith.constant 17 : i32
    %625 = arith.index_cast %c17_i32 : i32 to index
    %c0_222 = arith.constant 0 : index
    %c0_223 = arith.constant 0 : index
    %626 = vector.load %arg2[%625, %c0_222, %c0_223] : memref<32x8x128xf32, #tpu.memory_space<vmem>>, vector<1x8x128xf32>
    %627 = vector.shape_cast %626 : vector<1x8x128xf32> to vector<8x128xf32>
    %628 = arith.addi %10, %c17_i32 : i32
    %629 = arith.sitofp %628 : i32 to f32
    %cst_224 = arith.constant 1.562500e-02 : f32
    %630 = arith.mulf %629, %cst_224 : f32
    %631 = vector.broadcast %630 : f32 to vector<32x1xf32>
    %632 = arith.mulf %631, %6 : vector<32x1xf32>
    %633 = arith.addf %7, %632 : vector<32x1xf32>
    %634 = arith.truncf %621 : vector<8x128xf32> to vector<8x128xbf16>
    %cst_225 = arith.constant dense<0.000000e+00> : vector<32x128xf32>
    %635 = tpu.matmul %3, %634, %cst_225 {dimension_numbers = #tpu.dot_dimension_numbers<[1], [0], [0], [1], [0, 0, 1, 1], [], []>} : vector<32x8xbf16>, vector<8x128xbf16>, vector<32x128xf32> -> vector<32x128xf32>
    %636 = vector.broadcast %633 : vector<32x1xf32> to vector<32x128xf32>
    %637 = arith.addf %635, %636 : vector<32x128xf32>
    %cst_226 = arith.constant 0.000000e+00 : f32
    %638 = vector.broadcast %cst_226 : f32 to vector<32x128xf32>
    %639 = arith.maximumf %637, %638 : vector<32x128xf32>
    %640 = arith.truncf %639 : vector<32x128xf32> to vector<32x128xbf16>
    %cst_227 = arith.constant dense<0.000000e+00> : vector<32x128xf32>
    %641 = tpu.matmul %4, %640, %cst_227 {dimension_numbers = #tpu.dot_dimension_numbers<[1], [0], [0], [1], [0, 0, 1, 1], [], []>} : vector<32x32xbf16>, vector<32x128xbf16>, vector<32x128xf32> -> vector<32x128xf32>
    %642 = vector.broadcast %8 : vector<32x1xf32> to vector<32x128xf32>
    %643 = arith.addf %641, %642 : vector<32x128xf32>
    %cst_228 = arith.constant 0.000000e+00 : f32
    %644 = vector.broadcast %cst_228 : f32 to vector<32x128xf32>
    %645 = arith.maximumf %643, %644 : vector<32x128xf32>
    %646 = arith.truncf %645 : vector<32x128xf32> to vector<32x128xbf16>
    %cst_229 = arith.constant dense<0.000000e+00> : vector<8x128xf32>
    %647 = tpu.matmul %5, %646, %cst_229 {dimension_numbers = #tpu.dot_dimension_numbers<[1], [0], [0], [1], [0, 0, 1, 1], [], []>} : vector<8x32xbf16>, vector<32x128xbf16>, vector<8x128xf32> -> vector<8x128xf32>
    %648 = vector.broadcast %9 : vector<8x1xf32> to vector<8x128xf32>
    %649 = arith.addf %647, %648 : vector<8x128xf32>
    %650 = arith.mulf %649, %627 : vector<8x128xf32>
    %cst_230 = arith.constant dense<0.000000e+00> : vector<128xf32>
    %651 = vector.multi_reduction <add>, %650, %cst_230 [0] : vector<8x128xf32> to vector<128xf32>
    %652 = vector.shape_cast %651 : vector<128xf32> to vector<1x128xf32>
    %cst_231 = arith.constant 2.000000e-01 : f32
    %653 = vector.broadcast %cst_231 : f32 to vector<8x128xf32>
    %654 = arith.mulf %653, %627 : vector<8x128xf32>
    %cst_232 = arith.constant 1.0007813 : f32
    %655 = vector.broadcast %cst_232 : f32 to vector<8x128xf32>
    %656 = arith.addf %655, %654 : vector<8x128xf32>
    %657 = arith.mulf %621, %656 : vector<8x128xf32>
    %cst_233 = arith.constant 1.00046873 : f32
    %658 = vector.broadcast %cst_233 : f32 to vector<1x128xf32>
    %659 = arith.mulf %624, %658 : vector<1x128xf32>
    %660 = arith.addf %659, %652 : vector<1x128xf32>
    %c18_i32 = arith.constant 18 : i32
    %661 = arith.index_cast %c18_i32 : i32 to index
    %c0_234 = arith.constant 0 : index
    %c0_235 = arith.constant 0 : index
    %662 = vector.load %arg2[%661, %c0_234, %c0_235] : memref<32x8x128xf32, #tpu.memory_space<vmem>>, vector<1x8x128xf32>
    %663 = vector.shape_cast %662 : vector<1x8x128xf32> to vector<8x128xf32>
    %664 = arith.addi %10, %c18_i32 : i32
    %665 = arith.sitofp %664 : i32 to f32
    %cst_236 = arith.constant 1.562500e-02 : f32
    %666 = arith.mulf %665, %cst_236 : f32
    %667 = vector.broadcast %666 : f32 to vector<32x1xf32>
    %668 = arith.mulf %667, %6 : vector<32x1xf32>
    %669 = arith.addf %7, %668 : vector<32x1xf32>
    %670 = arith.truncf %657 : vector<8x128xf32> to vector<8x128xbf16>
    %cst_237 = arith.constant dense<0.000000e+00> : vector<32x128xf32>
    %671 = tpu.matmul %3, %670, %cst_237 {dimension_numbers = #tpu.dot_dimension_numbers<[1], [0], [0], [1], [0, 0, 1, 1], [], []>} : vector<32x8xbf16>, vector<8x128xbf16>, vector<32x128xf32> -> vector<32x128xf32>
    %672 = vector.broadcast %669 : vector<32x1xf32> to vector<32x128xf32>
    %673 = arith.addf %671, %672 : vector<32x128xf32>
    %cst_238 = arith.constant 0.000000e+00 : f32
    %674 = vector.broadcast %cst_238 : f32 to vector<32x128xf32>
    %675 = arith.maximumf %673, %674 : vector<32x128xf32>
    %676 = arith.truncf %675 : vector<32x128xf32> to vector<32x128xbf16>
    %cst_239 = arith.constant dense<0.000000e+00> : vector<32x128xf32>
    %677 = tpu.matmul %4, %676, %cst_239 {dimension_numbers = #tpu.dot_dimension_numbers<[1], [0], [0], [1], [0, 0, 1, 1], [], []>} : vector<32x32xbf16>, vector<32x128xbf16>, vector<32x128xf32> -> vector<32x128xf32>
    %678 = vector.broadcast %8 : vector<32x1xf32> to vector<32x128xf32>
    %679 = arith.addf %677, %678 : vector<32x128xf32>
    %cst_240 = arith.constant 0.000000e+00 : f32
    %680 = vector.broadcast %cst_240 : f32 to vector<32x128xf32>
    %681 = arith.maximumf %679, %680 : vector<32x128xf32>
    %682 = arith.truncf %681 : vector<32x128xf32> to vector<32x128xbf16>
    %cst_241 = arith.constant dense<0.000000e+00> : vector<8x128xf32>
    %683 = tpu.matmul %5, %682, %cst_241 {dimension_numbers = #tpu.dot_dimension_numbers<[1], [0], [0], [1], [0, 0, 1, 1], [], []>} : vector<8x32xbf16>, vector<32x128xbf16>, vector<8x128xf32> -> vector<8x128xf32>
    %684 = vector.broadcast %9 : vector<8x1xf32> to vector<8x128xf32>
    %685 = arith.addf %683, %684 : vector<8x128xf32>
    %686 = arith.mulf %685, %663 : vector<8x128xf32>
    %cst_242 = arith.constant dense<0.000000e+00> : vector<128xf32>
    %687 = vector.multi_reduction <add>, %686, %cst_242 [0] : vector<8x128xf32> to vector<128xf32>
    %688 = vector.shape_cast %687 : vector<128xf32> to vector<1x128xf32>
    %cst_243 = arith.constant 2.000000e-01 : f32
    %689 = vector.broadcast %cst_243 : f32 to vector<8x128xf32>
    %690 = arith.mulf %689, %663 : vector<8x128xf32>
    %cst_244 = arith.constant 1.0007813 : f32
    %691 = vector.broadcast %cst_244 : f32 to vector<8x128xf32>
    %692 = arith.addf %691, %690 : vector<8x128xf32>
    %693 = arith.mulf %657, %692 : vector<8x128xf32>
    %cst_245 = arith.constant 1.00046873 : f32
    %694 = vector.broadcast %cst_245 : f32 to vector<1x128xf32>
    %695 = arith.mulf %660, %694 : vector<1x128xf32>
    %696 = arith.addf %695, %688 : vector<1x128xf32>
    %c19_i32 = arith.constant 19 : i32
    %697 = arith.index_cast %c19_i32 : i32 to index
    %c0_246 = arith.constant 0 : index
    %c0_247 = arith.constant 0 : index
    %698 = vector.load %arg2[%697, %c0_246, %c0_247] : memref<32x8x128xf32, #tpu.memory_space<vmem>>, vector<1x8x128xf32>
    %699 = vector.shape_cast %698 : vector<1x8x128xf32> to vector<8x128xf32>
    %700 = arith.addi %10, %c19_i32 : i32
    %701 = arith.sitofp %700 : i32 to f32
    %cst_248 = arith.constant 1.562500e-02 : f32
    %702 = arith.mulf %701, %cst_248 : f32
    %703 = vector.broadcast %702 : f32 to vector<32x1xf32>
    %704 = arith.mulf %703, %6 : vector<32x1xf32>
    %705 = arith.addf %7, %704 : vector<32x1xf32>
    %706 = arith.truncf %693 : vector<8x128xf32> to vector<8x128xbf16>
    %cst_249 = arith.constant dense<0.000000e+00> : vector<32x128xf32>
    %707 = tpu.matmul %3, %706, %cst_249 {dimension_numbers = #tpu.dot_dimension_numbers<[1], [0], [0], [1], [0, 0, 1, 1], [], []>} : vector<32x8xbf16>, vector<8x128xbf16>, vector<32x128xf32> -> vector<32x128xf32>
    %708 = vector.broadcast %705 : vector<32x1xf32> to vector<32x128xf32>
    %709 = arith.addf %707, %708 : vector<32x128xf32>
    %cst_250 = arith.constant 0.000000e+00 : f32
    %710 = vector.broadcast %cst_250 : f32 to vector<32x128xf32>
    %711 = arith.maximumf %709, %710 : vector<32x128xf32>
    %712 = arith.truncf %711 : vector<32x128xf32> to vector<32x128xbf16>
    %cst_251 = arith.constant dense<0.000000e+00> : vector<32x128xf32>
    %713 = tpu.matmul %4, %712, %cst_251 {dimension_numbers = #tpu.dot_dimension_numbers<[1], [0], [0], [1], [0, 0, 1, 1], [], []>} : vector<32x32xbf16>, vector<32x128xbf16>, vector<32x128xf32> -> vector<32x128xf32>
    %714 = vector.broadcast %8 : vector<32x1xf32> to vector<32x128xf32>
    %715 = arith.addf %713, %714 : vector<32x128xf32>
    %cst_252 = arith.constant 0.000000e+00 : f32
    %716 = vector.broadcast %cst_252 : f32 to vector<32x128xf32>
    %717 = arith.maximumf %715, %716 : vector<32x128xf32>
    %718 = arith.truncf %717 : vector<32x128xf32> to vector<32x128xbf16>
    %cst_253 = arith.constant dense<0.000000e+00> : vector<8x128xf32>
    %719 = tpu.matmul %5, %718, %cst_253 {dimension_numbers = #tpu.dot_dimension_numbers<[1], [0], [0], [1], [0, 0, 1, 1], [], []>} : vector<8x32xbf16>, vector<32x128xbf16>, vector<8x128xf32> -> vector<8x128xf32>
    %720 = vector.broadcast %9 : vector<8x1xf32> to vector<8x128xf32>
    %721 = arith.addf %719, %720 : vector<8x128xf32>
    %722 = arith.mulf %721, %699 : vector<8x128xf32>
    %cst_254 = arith.constant dense<0.000000e+00> : vector<128xf32>
    %723 = vector.multi_reduction <add>, %722, %cst_254 [0] : vector<8x128xf32> to vector<128xf32>
    %724 = vector.shape_cast %723 : vector<128xf32> to vector<1x128xf32>
    %cst_255 = arith.constant 2.000000e-01 : f32
    %725 = vector.broadcast %cst_255 : f32 to vector<8x128xf32>
    %726 = arith.mulf %725, %699 : vector<8x128xf32>
    %cst_256 = arith.constant 1.0007813 : f32
    %727 = vector.broadcast %cst_256 : f32 to vector<8x128xf32>
    %728 = arith.addf %727, %726 : vector<8x128xf32>
    %729 = arith.mulf %693, %728 : vector<8x128xf32>
    %cst_257 = arith.constant 1.00046873 : f32
    %730 = vector.broadcast %cst_257 : f32 to vector<1x128xf32>
    %731 = arith.mulf %696, %730 : vector<1x128xf32>
    %732 = arith.addf %731, %724 : vector<1x128xf32>
    %c20_i32 = arith.constant 20 : i32
    %733 = arith.index_cast %c20_i32 : i32 to index
    %c0_258 = arith.constant 0 : index
    %c0_259 = arith.constant 0 : index
    %734 = vector.load %arg2[%733, %c0_258, %c0_259] : memref<32x8x128xf32, #tpu.memory_space<vmem>>, vector<1x8x128xf32>
    %735 = vector.shape_cast %734 : vector<1x8x128xf32> to vector<8x128xf32>
    %736 = arith.addi %10, %c20_i32 : i32
    %737 = arith.sitofp %736 : i32 to f32
    %cst_260 = arith.constant 1.562500e-02 : f32
    %738 = arith.mulf %737, %cst_260 : f32
    %739 = vector.broadcast %738 : f32 to vector<32x1xf32>
    %740 = arith.mulf %739, %6 : vector<32x1xf32>
    %741 = arith.addf %7, %740 : vector<32x1xf32>
    %742 = arith.truncf %729 : vector<8x128xf32> to vector<8x128xbf16>
    %cst_261 = arith.constant dense<0.000000e+00> : vector<32x128xf32>
    %743 = tpu.matmul %3, %742, %cst_261 {dimension_numbers = #tpu.dot_dimension_numbers<[1], [0], [0], [1], [0, 0, 1, 1], [], []>} : vector<32x8xbf16>, vector<8x128xbf16>, vector<32x128xf32> -> vector<32x128xf32>
    %744 = vector.broadcast %741 : vector<32x1xf32> to vector<32x128xf32>
    %745 = arith.addf %743, %744 : vector<32x128xf32>
    %cst_262 = arith.constant 0.000000e+00 : f32
    %746 = vector.broadcast %cst_262 : f32 to vector<32x128xf32>
    %747 = arith.maximumf %745, %746 : vector<32x128xf32>
    %748 = arith.truncf %747 : vector<32x128xf32> to vector<32x128xbf16>
    %cst_263 = arith.constant dense<0.000000e+00> : vector<32x128xf32>
    %749 = tpu.matmul %4, %748, %cst_263 {dimension_numbers = #tpu.dot_dimension_numbers<[1], [0], [0], [1], [0, 0, 1, 1], [], []>} : vector<32x32xbf16>, vector<32x128xbf16>, vector<32x128xf32> -> vector<32x128xf32>
    %750 = vector.broadcast %8 : vector<32x1xf32> to vector<32x128xf32>
    %751 = arith.addf %749, %750 : vector<32x128xf32>
    %cst_264 = arith.constant 0.000000e+00 : f32
    %752 = vector.broadcast %cst_264 : f32 to vector<32x128xf32>
    %753 = arith.maximumf %751, %752 : vector<32x128xf32>
    %754 = arith.truncf %753 : vector<32x128xf32> to vector<32x128xbf16>
    %cst_265 = arith.constant dense<0.000000e+00> : vector<8x128xf32>
    %755 = tpu.matmul %5, %754, %cst_265 {dimension_numbers = #tpu.dot_dimension_numbers<[1], [0], [0], [1], [0, 0, 1, 1], [], []>} : vector<8x32xbf16>, vector<32x128xbf16>, vector<8x128xf32> -> vector<8x128xf32>
    %756 = vector.broadcast %9 : vector<8x1xf32> to vector<8x128xf32>
    %757 = arith.addf %755, %756 : vector<8x128xf32>
    %758 = arith.mulf %757, %735 : vector<8x128xf32>
    %cst_266 = arith.constant dense<0.000000e+00> : vector<128xf32>
    %759 = vector.multi_reduction <add>, %758, %cst_266 [0] : vector<8x128xf32> to vector<128xf32>
    %760 = vector.shape_cast %759 : vector<128xf32> to vector<1x128xf32>
    %cst_267 = arith.constant 2.000000e-01 : f32
    %761 = vector.broadcast %cst_267 : f32 to vector<8x128xf32>
    %762 = arith.mulf %761, %735 : vector<8x128xf32>
    %cst_268 = arith.constant 1.0007813 : f32
    %763 = vector.broadcast %cst_268 : f32 to vector<8x128xf32>
    %764 = arith.addf %763, %762 : vector<8x128xf32>
    %765 = arith.mulf %729, %764 : vector<8x128xf32>
    %cst_269 = arith.constant 1.00046873 : f32
    %766 = vector.broadcast %cst_269 : f32 to vector<1x128xf32>
    %767 = arith.mulf %732, %766 : vector<1x128xf32>
    %768 = arith.addf %767, %760 : vector<1x128xf32>
    %c21_i32 = arith.constant 21 : i32
    %769 = arith.index_cast %c21_i32 : i32 to index
    %c0_270 = arith.constant 0 : index
    %c0_271 = arith.constant 0 : index
    %770 = vector.load %arg2[%769, %c0_270, %c0_271] : memref<32x8x128xf32, #tpu.memory_space<vmem>>, vector<1x8x128xf32>
    %771 = vector.shape_cast %770 : vector<1x8x128xf32> to vector<8x128xf32>
    %772 = arith.addi %10, %c21_i32 : i32
    %773 = arith.sitofp %772 : i32 to f32
    %cst_272 = arith.constant 1.562500e-02 : f32
    %774 = arith.mulf %773, %cst_272 : f32
    %775 = vector.broadcast %774 : f32 to vector<32x1xf32>
    %776 = arith.mulf %775, %6 : vector<32x1xf32>
    %777 = arith.addf %7, %776 : vector<32x1xf32>
    %778 = arith.truncf %765 : vector<8x128xf32> to vector<8x128xbf16>
    %cst_273 = arith.constant dense<0.000000e+00> : vector<32x128xf32>
    %779 = tpu.matmul %3, %778, %cst_273 {dimension_numbers = #tpu.dot_dimension_numbers<[1], [0], [0], [1], [0, 0, 1, 1], [], []>} : vector<32x8xbf16>, vector<8x128xbf16>, vector<32x128xf32> -> vector<32x128xf32>
    %780 = vector.broadcast %777 : vector<32x1xf32> to vector<32x128xf32>
    %781 = arith.addf %779, %780 : vector<32x128xf32>
    %cst_274 = arith.constant 0.000000e+00 : f32
    %782 = vector.broadcast %cst_274 : f32 to vector<32x128xf32>
    %783 = arith.maximumf %781, %782 : vector<32x128xf32>
    %784 = arith.truncf %783 : vector<32x128xf32> to vector<32x128xbf16>
    %cst_275 = arith.constant dense<0.000000e+00> : vector<32x128xf32>
    %785 = tpu.matmul %4, %784, %cst_275 {dimension_numbers = #tpu.dot_dimension_numbers<[1], [0], [0], [1], [0, 0, 1, 1], [], []>} : vector<32x32xbf16>, vector<32x128xbf16>, vector<32x128xf32> -> vector<32x128xf32>
    %786 = vector.broadcast %8 : vector<32x1xf32> to vector<32x128xf32>
    %787 = arith.addf %785, %786 : vector<32x128xf32>
    %cst_276 = arith.constant 0.000000e+00 : f32
    %788 = vector.broadcast %cst_276 : f32 to vector<32x128xf32>
    %789 = arith.maximumf %787, %788 : vector<32x128xf32>
    %790 = arith.truncf %789 : vector<32x128xf32> to vector<32x128xbf16>
    %cst_277 = arith.constant dense<0.000000e+00> : vector<8x128xf32>
    %791 = tpu.matmul %5, %790, %cst_277 {dimension_numbers = #tpu.dot_dimension_numbers<[1], [0], [0], [1], [0, 0, 1, 1], [], []>} : vector<8x32xbf16>, vector<32x128xbf16>, vector<8x128xf32> -> vector<8x128xf32>
    %792 = vector.broadcast %9 : vector<8x1xf32> to vector<8x128xf32>
    %793 = arith.addf %791, %792 : vector<8x128xf32>
    %794 = arith.mulf %793, %771 : vector<8x128xf32>
    %cst_278 = arith.constant dense<0.000000e+00> : vector<128xf32>
    %795 = vector.multi_reduction <add>, %794, %cst_278 [0] : vector<8x128xf32> to vector<128xf32>
    %796 = vector.shape_cast %795 : vector<128xf32> to vector<1x128xf32>
    %cst_279 = arith.constant 2.000000e-01 : f32
    %797 = vector.broadcast %cst_279 : f32 to vector<8x128xf32>
    %798 = arith.mulf %797, %771 : vector<8x128xf32>
    %cst_280 = arith.constant 1.0007813 : f32
    %799 = vector.broadcast %cst_280 : f32 to vector<8x128xf32>
    %800 = arith.addf %799, %798 : vector<8x128xf32>
    %801 = arith.mulf %765, %800 : vector<8x128xf32>
    %cst_281 = arith.constant 1.00046873 : f32
    %802 = vector.broadcast %cst_281 : f32 to vector<1x128xf32>
    %803 = arith.mulf %768, %802 : vector<1x128xf32>
    %804 = arith.addf %803, %796 : vector<1x128xf32>
    %c22_i32 = arith.constant 22 : i32
    %805 = arith.index_cast %c22_i32 : i32 to index
    %c0_282 = arith.constant 0 : index
    %c0_283 = arith.constant 0 : index
    %806 = vector.load %arg2[%805, %c0_282, %c0_283] : memref<32x8x128xf32, #tpu.memory_space<vmem>>, vector<1x8x128xf32>
    %807 = vector.shape_cast %806 : vector<1x8x128xf32> to vector<8x128xf32>
    %808 = arith.addi %10, %c22_i32 : i32
    %809 = arith.sitofp %808 : i32 to f32
    %cst_284 = arith.constant 1.562500e-02 : f32
    %810 = arith.mulf %809, %cst_284 : f32
    %811 = vector.broadcast %810 : f32 to vector<32x1xf32>
    %812 = arith.mulf %811, %6 : vector<32x1xf32>
    %813 = arith.addf %7, %812 : vector<32x1xf32>
    %814 = arith.truncf %801 : vector<8x128xf32> to vector<8x128xbf16>
    %cst_285 = arith.constant dense<0.000000e+00> : vector<32x128xf32>
    %815 = tpu.matmul %3, %814, %cst_285 {dimension_numbers = #tpu.dot_dimension_numbers<[1], [0], [0], [1], [0, 0, 1, 1], [], []>} : vector<32x8xbf16>, vector<8x128xbf16>, vector<32x128xf32> -> vector<32x128xf32>
    %816 = vector.broadcast %813 : vector<32x1xf32> to vector<32x128xf32>
    %817 = arith.addf %815, %816 : vector<32x128xf32>
    %cst_286 = arith.constant 0.000000e+00 : f32
    %818 = vector.broadcast %cst_286 : f32 to vector<32x128xf32>
    %819 = arith.maximumf %817, %818 : vector<32x128xf32>
    %820 = arith.truncf %819 : vector<32x128xf32> to vector<32x128xbf16>
    %cst_287 = arith.constant dense<0.000000e+00> : vector<32x128xf32>
    %821 = tpu.matmul %4, %820, %cst_287 {dimension_numbers = #tpu.dot_dimension_numbers<[1], [0], [0], [1], [0, 0, 1, 1], [], []>} : vector<32x32xbf16>, vector<32x128xbf16>, vector<32x128xf32> -> vector<32x128xf32>
    %822 = vector.broadcast %8 : vector<32x1xf32> to vector<32x128xf32>
    %823 = arith.addf %821, %822 : vector<32x128xf32>
    %cst_288 = arith.constant 0.000000e+00 : f32
    %824 = vector.broadcast %cst_288 : f32 to vector<32x128xf32>
    %825 = arith.maximumf %823, %824 : vector<32x128xf32>
    %826 = arith.truncf %825 : vector<32x128xf32> to vector<32x128xbf16>
    %cst_289 = arith.constant dense<0.000000e+00> : vector<8x128xf32>
    %827 = tpu.matmul %5, %826, %cst_289 {dimension_numbers = #tpu.dot_dimension_numbers<[1], [0], [0], [1], [0, 0, 1, 1], [], []>} : vector<8x32xbf16>, vector<32x128xbf16>, vector<8x128xf32> -> vector<8x128xf32>
    %828 = vector.broadcast %9 : vector<8x1xf32> to vector<8x128xf32>
    %829 = arith.addf %827, %828 : vector<8x128xf32>
    %830 = arith.mulf %829, %807 : vector<8x128xf32>
    %cst_290 = arith.constant dense<0.000000e+00> : vector<128xf32>
    %831 = vector.multi_reduction <add>, %830, %cst_290 [0] : vector<8x128xf32> to vector<128xf32>
    %832 = vector.shape_cast %831 : vector<128xf32> to vector<1x128xf32>
    %cst_291 = arith.constant 2.000000e-01 : f32
    %833 = vector.broadcast %cst_291 : f32 to vector<8x128xf32>
    %834 = arith.mulf %833, %807 : vector<8x128xf32>
    %cst_292 = arith.constant 1.0007813 : f32
    %835 = vector.broadcast %cst_292 : f32 to vector<8x128xf32>
    %836 = arith.addf %835, %834 : vector<8x128xf32>
    %837 = arith.mulf %801, %836 : vector<8x128xf32>
    %cst_293 = arith.constant 1.00046873 : f32
    %838 = vector.broadcast %cst_293 : f32 to vector<1x128xf32>
    %839 = arith.mulf %804, %838 : vector<1x128xf32>
    %840 = arith.addf %839, %832 : vector<1x128xf32>
    %c23_i32 = arith.constant 23 : i32
    %841 = arith.index_cast %c23_i32 : i32 to index
    %c0_294 = arith.constant 0 : index
    %c0_295 = arith.constant 0 : index
    %842 = vector.load %arg2[%841, %c0_294, %c0_295] : memref<32x8x128xf32, #tpu.memory_space<vmem>>, vector<1x8x128xf32>
    %843 = vector.shape_cast %842 : vector<1x8x128xf32> to vector<8x128xf32>
    %844 = arith.addi %10, %c23_i32 : i32
    %845 = arith.sitofp %844 : i32 to f32
    %cst_296 = arith.constant 1.562500e-02 : f32
    %846 = arith.mulf %845, %cst_296 : f32
    %847 = vector.broadcast %846 : f32 to vector<32x1xf32>
    %848 = arith.mulf %847, %6 : vector<32x1xf32>
    %849 = arith.addf %7, %848 : vector<32x1xf32>
    %850 = arith.truncf %837 : vector<8x128xf32> to vector<8x128xbf16>
    %cst_297 = arith.constant dense<0.000000e+00> : vector<32x128xf32>
    %851 = tpu.matmul %3, %850, %cst_297 {dimension_numbers = #tpu.dot_dimension_numbers<[1], [0], [0], [1], [0, 0, 1, 1], [], []>} : vector<32x8xbf16>, vector<8x128xbf16>, vector<32x128xf32> -> vector<32x128xf32>
    %852 = vector.broadcast %849 : vector<32x1xf32> to vector<32x128xf32>
    %853 = arith.addf %851, %852 : vector<32x128xf32>
    %cst_298 = arith.constant 0.000000e+00 : f32
    %854 = vector.broadcast %cst_298 : f32 to vector<32x128xf32>
    %855 = arith.maximumf %853, %854 : vector<32x128xf32>
    %856 = arith.truncf %855 : vector<32x128xf32> to vector<32x128xbf16>
    %cst_299 = arith.constant dense<0.000000e+00> : vector<32x128xf32>
    %857 = tpu.matmul %4, %856, %cst_299 {dimension_numbers = #tpu.dot_dimension_numbers<[1], [0], [0], [1], [0, 0, 1, 1], [], []>} : vector<32x32xbf16>, vector<32x128xbf16>, vector<32x128xf32> -> vector<32x128xf32>
    %858 = vector.broadcast %8 : vector<32x1xf32> to vector<32x128xf32>
    %859 = arith.addf %857, %858 : vector<32x128xf32>
    %cst_300 = arith.constant 0.000000e+00 : f32
    %860 = vector.broadcast %cst_300 : f32 to vector<32x128xf32>
    %861 = arith.maximumf %859, %860 : vector<32x128xf32>
    %862 = arith.truncf %861 : vector<32x128xf32> to vector<32x128xbf16>
    %cst_301 = arith.constant dense<0.000000e+00> : vector<8x128xf32>
    %863 = tpu.matmul %5, %862, %cst_301 {dimension_numbers = #tpu.dot_dimension_numbers<[1], [0], [0], [1], [0, 0, 1, 1], [], []>} : vector<8x32xbf16>, vector<32x128xbf16>, vector<8x128xf32> -> vector<8x128xf32>
    %864 = vector.broadcast %9 : vector<8x1xf32> to vector<8x128xf32>
    %865 = arith.addf %863, %864 : vector<8x128xf32>
    %866 = arith.mulf %865, %843 : vector<8x128xf32>
    %cst_302 = arith.constant dense<0.000000e+00> : vector<128xf32>
    %867 = vector.multi_reduction <add>, %866, %cst_302 [0] : vector<8x128xf32> to vector<128xf32>
    %868 = vector.shape_cast %867 : vector<128xf32> to vector<1x128xf32>
    %cst_303 = arith.constant 2.000000e-01 : f32
    %869 = vector.broadcast %cst_303 : f32 to vector<8x128xf32>
    %870 = arith.mulf %869, %843 : vector<8x128xf32>
    %cst_304 = arith.constant 1.0007813 : f32
    %871 = vector.broadcast %cst_304 : f32 to vector<8x128xf32>
    %872 = arith.addf %871, %870 : vector<8x128xf32>
    %873 = arith.mulf %837, %872 : vector<8x128xf32>
    %cst_305 = arith.constant 1.00046873 : f32
    %874 = vector.broadcast %cst_305 : f32 to vector<1x128xf32>
    %875 = arith.mulf %840, %874 : vector<1x128xf32>
    %876 = arith.addf %875, %868 : vector<1x128xf32>
    %c24_i32 = arith.constant 24 : i32
    %877 = arith.index_cast %c24_i32 : i32 to index
    %c0_306 = arith.constant 0 : index
    %c0_307 = arith.constant 0 : index
    %878 = vector.load %arg2[%877, %c0_306, %c0_307] : memref<32x8x128xf32, #tpu.memory_space<vmem>>, vector<1x8x128xf32>
    %879 = vector.shape_cast %878 : vector<1x8x128xf32> to vector<8x128xf32>
    %880 = arith.addi %10, %c24_i32 : i32
    %881 = arith.sitofp %880 : i32 to f32
    %cst_308 = arith.constant 1.562500e-02 : f32
    %882 = arith.mulf %881, %cst_308 : f32
    %883 = vector.broadcast %882 : f32 to vector<32x1xf32>
    %884 = arith.mulf %883, %6 : vector<32x1xf32>
    %885 = arith.addf %7, %884 : vector<32x1xf32>
    %886 = arith.truncf %873 : vector<8x128xf32> to vector<8x128xbf16>
    %cst_309 = arith.constant dense<0.000000e+00> : vector<32x128xf32>
    %887 = tpu.matmul %3, %886, %cst_309 {dimension_numbers = #tpu.dot_dimension_numbers<[1], [0], [0], [1], [0, 0, 1, 1], [], []>} : vector<32x8xbf16>, vector<8x128xbf16>, vector<32x128xf32> -> vector<32x128xf32>
    %888 = vector.broadcast %885 : vector<32x1xf32> to vector<32x128xf32>
    %889 = arith.addf %887, %888 : vector<32x128xf32>
    %cst_310 = arith.constant 0.000000e+00 : f32
    %890 = vector.broadcast %cst_310 : f32 to vector<32x128xf32>
    %891 = arith.maximumf %889, %890 : vector<32x128xf32>
    %892 = arith.truncf %891 : vector<32x128xf32> to vector<32x128xbf16>
    %cst_311 = arith.constant dense<0.000000e+00> : vector<32x128xf32>
    %893 = tpu.matmul %4, %892, %cst_311 {dimension_numbers = #tpu.dot_dimension_numbers<[1], [0], [0], [1], [0, 0, 1, 1], [], []>} : vector<32x32xbf16>, vector<32x128xbf16>, vector<32x128xf32> -> vector<32x128xf32>
    %894 = vector.broadcast %8 : vector<32x1xf32> to vector<32x128xf32>
    %895 = arith.addf %893, %894 : vector<32x128xf32>
    %cst_312 = arith.constant 0.000000e+00 : f32
    %896 = vector.broadcast %cst_312 : f32 to vector<32x128xf32>
    %897 = arith.maximumf %895, %896 : vector<32x128xf32>
    %898 = arith.truncf %897 : vector<32x128xf32> to vector<32x128xbf16>
    %cst_313 = arith.constant dense<0.000000e+00> : vector<8x128xf32>
    %899 = tpu.matmul %5, %898, %cst_313 {dimension_numbers = #tpu.dot_dimension_numbers<[1], [0], [0], [1], [0, 0, 1, 1], [], []>} : vector<8x32xbf16>, vector<32x128xbf16>, vector<8x128xf32> -> vector<8x128xf32>
    %900 = vector.broadcast %9 : vector<8x1xf32> to vector<8x128xf32>
    %901 = arith.addf %899, %900 : vector<8x128xf32>
    %902 = arith.mulf %901, %879 : vector<8x128xf32>
    %cst_314 = arith.constant dense<0.000000e+00> : vector<128xf32>
    %903 = vector.multi_reduction <add>, %902, %cst_314 [0] : vector<8x128xf32> to vector<128xf32>
    %904 = vector.shape_cast %903 : vector<128xf32> to vector<1x128xf32>
    %cst_315 = arith.constant 2.000000e-01 : f32
    %905 = vector.broadcast %cst_315 : f32 to vector<8x128xf32>
    %906 = arith.mulf %905, %879 : vector<8x128xf32>
    %cst_316 = arith.constant 1.0007813 : f32
    %907 = vector.broadcast %cst_316 : f32 to vector<8x128xf32>
    %908 = arith.addf %907, %906 : vector<8x128xf32>
    %909 = arith.mulf %873, %908 : vector<8x128xf32>
    %cst_317 = arith.constant 1.00046873 : f32
    %910 = vector.broadcast %cst_317 : f32 to vector<1x128xf32>
    %911 = arith.mulf %876, %910 : vector<1x128xf32>
    %912 = arith.addf %911, %904 : vector<1x128xf32>
    %c25_i32 = arith.constant 25 : i32
    %913 = arith.index_cast %c25_i32 : i32 to index
    %c0_318 = arith.constant 0 : index
    %c0_319 = arith.constant 0 : index
    %914 = vector.load %arg2[%913, %c0_318, %c0_319] : memref<32x8x128xf32, #tpu.memory_space<vmem>>, vector<1x8x128xf32>
    %915 = vector.shape_cast %914 : vector<1x8x128xf32> to vector<8x128xf32>
    %916 = arith.addi %10, %c25_i32 : i32
    %917 = arith.sitofp %916 : i32 to f32
    %cst_320 = arith.constant 1.562500e-02 : f32
    %918 = arith.mulf %917, %cst_320 : f32
    %919 = vector.broadcast %918 : f32 to vector<32x1xf32>
    %920 = arith.mulf %919, %6 : vector<32x1xf32>
    %921 = arith.addf %7, %920 : vector<32x1xf32>
    %922 = arith.truncf %909 : vector<8x128xf32> to vector<8x128xbf16>
    %cst_321 = arith.constant dense<0.000000e+00> : vector<32x128xf32>
    %923 = tpu.matmul %3, %922, %cst_321 {dimension_numbers = #tpu.dot_dimension_numbers<[1], [0], [0], [1], [0, 0, 1, 1], [], []>} : vector<32x8xbf16>, vector<8x128xbf16>, vector<32x128xf32> -> vector<32x128xf32>
    %924 = vector.broadcast %921 : vector<32x1xf32> to vector<32x128xf32>
    %925 = arith.addf %923, %924 : vector<32x128xf32>
    %cst_322 = arith.constant 0.000000e+00 : f32
    %926 = vector.broadcast %cst_322 : f32 to vector<32x128xf32>
    %927 = arith.maximumf %925, %926 : vector<32x128xf32>
    %928 = arith.truncf %927 : vector<32x128xf32> to vector<32x128xbf16>
    %cst_323 = arith.constant dense<0.000000e+00> : vector<32x128xf32>
    %929 = tpu.matmul %4, %928, %cst_323 {dimension_numbers = #tpu.dot_dimension_numbers<[1], [0], [0], [1], [0, 0, 1, 1], [], []>} : vector<32x32xbf16>, vector<32x128xbf16>, vector<32x128xf32> -> vector<32x128xf32>
    %930 = vector.broadcast %8 : vector<32x1xf32> to vector<32x128xf32>
    %931 = arith.addf %929, %930 : vector<32x128xf32>
    %cst_324 = arith.constant 0.000000e+00 : f32
    %932 = vector.broadcast %cst_324 : f32 to vector<32x128xf32>
    %933 = arith.maximumf %931, %932 : vector<32x128xf32>
    %934 = arith.truncf %933 : vector<32x128xf32> to vector<32x128xbf16>
    %cst_325 = arith.constant dense<0.000000e+00> : vector<8x128xf32>
    %935 = tpu.matmul %5, %934, %cst_325 {dimension_numbers = #tpu.dot_dimension_numbers<[1], [0], [0], [1], [0, 0, 1, 1], [], []>} : vector<8x32xbf16>, vector<32x128xbf16>, vector<8x128xf32> -> vector<8x128xf32>
    %936 = vector.broadcast %9 : vector<8x1xf32> to vector<8x128xf32>
    %937 = arith.addf %935, %936 : vector<8x128xf32>
    %938 = arith.mulf %937, %915 : vector<8x128xf32>
    %cst_326 = arith.constant dense<0.000000e+00> : vector<128xf32>
    %939 = vector.multi_reduction <add>, %938, %cst_326 [0] : vector<8x128xf32> to vector<128xf32>
    %940 = vector.shape_cast %939 : vector<128xf32> to vector<1x128xf32>
    %cst_327 = arith.constant 2.000000e-01 : f32
    %941 = vector.broadcast %cst_327 : f32 to vector<8x128xf32>
    %942 = arith.mulf %941, %915 : vector<8x128xf32>
    %cst_328 = arith.constant 1.0007813 : f32
    %943 = vector.broadcast %cst_328 : f32 to vector<8x128xf32>
    %944 = arith.addf %943, %942 : vector<8x128xf32>
    %945 = arith.mulf %909, %944 : vector<8x128xf32>
    %cst_329 = arith.constant 1.00046873 : f32
    %946 = vector.broadcast %cst_329 : f32 to vector<1x128xf32>
    %947 = arith.mulf %912, %946 : vector<1x128xf32>
    %948 = arith.addf %947, %940 : vector<1x128xf32>
    %c26_i32 = arith.constant 26 : i32
    %949 = arith.index_cast %c26_i32 : i32 to index
    %c0_330 = arith.constant 0 : index
    %c0_331 = arith.constant 0 : index
    %950 = vector.load %arg2[%949, %c0_330, %c0_331] : memref<32x8x128xf32, #tpu.memory_space<vmem>>, vector<1x8x128xf32>
    %951 = vector.shape_cast %950 : vector<1x8x128xf32> to vector<8x128xf32>
    %952 = arith.addi %10, %c26_i32 : i32
    %953 = arith.sitofp %952 : i32 to f32
    %cst_332 = arith.constant 1.562500e-02 : f32
    %954 = arith.mulf %953, %cst_332 : f32
    %955 = vector.broadcast %954 : f32 to vector<32x1xf32>
    %956 = arith.mulf %955, %6 : vector<32x1xf32>
    %957 = arith.addf %7, %956 : vector<32x1xf32>
    %958 = arith.truncf %945 : vector<8x128xf32> to vector<8x128xbf16>
    %cst_333 = arith.constant dense<0.000000e+00> : vector<32x128xf32>
    %959 = tpu.matmul %3, %958, %cst_333 {dimension_numbers = #tpu.dot_dimension_numbers<[1], [0], [0], [1], [0, 0, 1, 1], [], []>} : vector<32x8xbf16>, vector<8x128xbf16>, vector<32x128xf32> -> vector<32x128xf32>
    %960 = vector.broadcast %957 : vector<32x1xf32> to vector<32x128xf32>
    %961 = arith.addf %959, %960 : vector<32x128xf32>
    %cst_334 = arith.constant 0.000000e+00 : f32
    %962 = vector.broadcast %cst_334 : f32 to vector<32x128xf32>
    %963 = arith.maximumf %961, %962 : vector<32x128xf32>
    %964 = arith.truncf %963 : vector<32x128xf32> to vector<32x128xbf16>
    %cst_335 = arith.constant dense<0.000000e+00> : vector<32x128xf32>
    %965 = tpu.matmul %4, %964, %cst_335 {dimension_numbers = #tpu.dot_dimension_numbers<[1], [0], [0], [1], [0, 0, 1, 1], [], []>} : vector<32x32xbf16>, vector<32x128xbf16>, vector<32x128xf32> -> vector<32x128xf32>
    %966 = vector.broadcast %8 : vector<32x1xf32> to vector<32x128xf32>
    %967 = arith.addf %965, %966 : vector<32x128xf32>
    %cst_336 = arith.constant 0.000000e+00 : f32
    %968 = vector.broadcast %cst_336 : f32 to vector<32x128xf32>
    %969 = arith.maximumf %967, %968 : vector<32x128xf32>
    %970 = arith.truncf %969 : vector<32x128xf32> to vector<32x128xbf16>
    %cst_337 = arith.constant dense<0.000000e+00> : vector<8x128xf32>
    %971 = tpu.matmul %5, %970, %cst_337 {dimension_numbers = #tpu.dot_dimension_numbers<[1], [0], [0], [1], [0, 0, 1, 1], [], []>} : vector<8x32xbf16>, vector<32x128xbf16>, vector<8x128xf32> -> vector<8x128xf32>
    %972 = vector.broadcast %9 : vector<8x1xf32> to vector<8x128xf32>
    %973 = arith.addf %971, %972 : vector<8x128xf32>
    %974 = arith.mulf %973, %951 : vector<8x128xf32>
    %cst_338 = arith.constant dense<0.000000e+00> : vector<128xf32>
    %975 = vector.multi_reduction <add>, %974, %cst_338 [0] : vector<8x128xf32> to vector<128xf32>
    %976 = vector.shape_cast %975 : vector<128xf32> to vector<1x128xf32>
    %cst_339 = arith.constant 2.000000e-01 : f32
    %977 = vector.broadcast %cst_339 : f32 to vector<8x128xf32>
    %978 = arith.mulf %977, %951 : vector<8x128xf32>
    %cst_340 = arith.constant 1.0007813 : f32
    %979 = vector.broadcast %cst_340 : f32 to vector<8x128xf32>
    %980 = arith.addf %979, %978 : vector<8x128xf32>
    %981 = arith.mulf %945, %980 : vector<8x128xf32>
    %cst_341 = arith.constant 1.00046873 : f32
    %982 = vector.broadcast %cst_341 : f32 to vector<1x128xf32>
    %983 = arith.mulf %948, %982 : vector<1x128xf32>
    %984 = arith.addf %983, %976 : vector<1x128xf32>
    %c27_i32 = arith.constant 27 : i32
    %985 = arith.index_cast %c27_i32 : i32 to index
    %c0_342 = arith.constant 0 : index
    %c0_343 = arith.constant 0 : index
    %986 = vector.load %arg2[%985, %c0_342, %c0_343] : memref<32x8x128xf32, #tpu.memory_space<vmem>>, vector<1x8x128xf32>
    %987 = vector.shape_cast %986 : vector<1x8x128xf32> to vector<8x128xf32>
    %988 = arith.addi %10, %c27_i32 : i32
    %989 = arith.sitofp %988 : i32 to f32
    %cst_344 = arith.constant 1.562500e-02 : f32
    %990 = arith.mulf %989, %cst_344 : f32
    %991 = vector.broadcast %990 : f32 to vector<32x1xf32>
    %992 = arith.mulf %991, %6 : vector<32x1xf32>
    %993 = arith.addf %7, %992 : vector<32x1xf32>
    %994 = arith.truncf %981 : vector<8x128xf32> to vector<8x128xbf16>
    %cst_345 = arith.constant dense<0.000000e+00> : vector<32x128xf32>
    %995 = tpu.matmul %3, %994, %cst_345 {dimension_numbers = #tpu.dot_dimension_numbers<[1], [0], [0], [1], [0, 0, 1, 1], [], []>} : vector<32x8xbf16>, vector<8x128xbf16>, vector<32x128xf32> -> vector<32x128xf32>
    %996 = vector.broadcast %993 : vector<32x1xf32> to vector<32x128xf32>
    %997 = arith.addf %995, %996 : vector<32x128xf32>
    %cst_346 = arith.constant 0.000000e+00 : f32
    %998 = vector.broadcast %cst_346 : f32 to vector<32x128xf32>
    %999 = arith.maximumf %997, %998 : vector<32x128xf32>
    %1000 = arith.truncf %999 : vector<32x128xf32> to vector<32x128xbf16>
    %cst_347 = arith.constant dense<0.000000e+00> : vector<32x128xf32>
    %1001 = tpu.matmul %4, %1000, %cst_347 {dimension_numbers = #tpu.dot_dimension_numbers<[1], [0], [0], [1], [0, 0, 1, 1], [], []>} : vector<32x32xbf16>, vector<32x128xbf16>, vector<32x128xf32> -> vector<32x128xf32>
    %1002 = vector.broadcast %8 : vector<32x1xf32> to vector<32x128xf32>
    %1003 = arith.addf %1001, %1002 : vector<32x128xf32>
    %cst_348 = arith.constant 0.000000e+00 : f32
    %1004 = vector.broadcast %cst_348 : f32 to vector<32x128xf32>
    %1005 = arith.maximumf %1003, %1004 : vector<32x128xf32>
    %1006 = arith.truncf %1005 : vector<32x128xf32> to vector<32x128xbf16>
    %cst_349 = arith.constant dense<0.000000e+00> : vector<8x128xf32>
    %1007 = tpu.matmul %5, %1006, %cst_349 {dimension_numbers = #tpu.dot_dimension_numbers<[1], [0], [0], [1], [0, 0, 1, 1], [], []>} : vector<8x32xbf16>, vector<32x128xbf16>, vector<8x128xf32> -> vector<8x128xf32>
    %1008 = vector.broadcast %9 : vector<8x1xf32> to vector<8x128xf32>
    %1009 = arith.addf %1007, %1008 : vector<8x128xf32>
    %1010 = arith.mulf %1009, %987 : vector<8x128xf32>
    %cst_350 = arith.constant dense<0.000000e+00> : vector<128xf32>
    %1011 = vector.multi_reduction <add>, %1010, %cst_350 [0] : vector<8x128xf32> to vector<128xf32>
    %1012 = vector.shape_cast %1011 : vector<128xf32> to vector<1x128xf32>
    %cst_351 = arith.constant 2.000000e-01 : f32
    %1013 = vector.broadcast %cst_351 : f32 to vector<8x128xf32>
    %1014 = arith.mulf %1013, %987 : vector<8x128xf32>
    %cst_352 = arith.constant 1.0007813 : f32
    %1015 = vector.broadcast %cst_352 : f32 to vector<8x128xf32>
    %1016 = arith.addf %1015, %1014 : vector<8x128xf32>
    %1017 = arith.mulf %981, %1016 : vector<8x128xf32>
    %cst_353 = arith.constant 1.00046873 : f32
    %1018 = vector.broadcast %cst_353 : f32 to vector<1x128xf32>
    %1019 = arith.mulf %984, %1018 : vector<1x128xf32>
    %1020 = arith.addf %1019, %1012 : vector<1x128xf32>
    %c28_i32 = arith.constant 28 : i32
    %1021 = arith.index_cast %c28_i32 : i32 to index
    %c0_354 = arith.constant 0 : index
    %c0_355 = arith.constant 0 : index
    %1022 = vector.load %arg2[%1021, %c0_354, %c0_355] : memref<32x8x128xf32, #tpu.memory_space<vmem>>, vector<1x8x128xf32>
    %1023 = vector.shape_cast %1022 : vector<1x8x128xf32> to vector<8x128xf32>
    %1024 = arith.addi %10, %c28_i32 : i32
    %1025 = arith.sitofp %1024 : i32 to f32
    %cst_356 = arith.constant 1.562500e-02 : f32
    %1026 = arith.mulf %1025, %cst_356 : f32
    %1027 = vector.broadcast %1026 : f32 to vector<32x1xf32>
    %1028 = arith.mulf %1027, %6 : vector<32x1xf32>
    %1029 = arith.addf %7, %1028 : vector<32x1xf32>
    %1030 = arith.truncf %1017 : vector<8x128xf32> to vector<8x128xbf16>
    %cst_357 = arith.constant dense<0.000000e+00> : vector<32x128xf32>
    %1031 = tpu.matmul %3, %1030, %cst_357 {dimension_numbers = #tpu.dot_dimension_numbers<[1], [0], [0], [1], [0, 0, 1, 1], [], []>} : vector<32x8xbf16>, vector<8x128xbf16>, vector<32x128xf32> -> vector<32x128xf32>
    %1032 = vector.broadcast %1029 : vector<32x1xf32> to vector<32x128xf32>
    %1033 = arith.addf %1031, %1032 : vector<32x128xf32>
    %cst_358 = arith.constant 0.000000e+00 : f32
    %1034 = vector.broadcast %cst_358 : f32 to vector<32x128xf32>
    %1035 = arith.maximumf %1033, %1034 : vector<32x128xf32>
    %1036 = arith.truncf %1035 : vector<32x128xf32> to vector<32x128xbf16>
    %cst_359 = arith.constant dense<0.000000e+00> : vector<32x128xf32>
    %1037 = tpu.matmul %4, %1036, %cst_359 {dimension_numbers = #tpu.dot_dimension_numbers<[1], [0], [0], [1], [0, 0, 1, 1], [], []>} : vector<32x32xbf16>, vector<32x128xbf16>, vector<32x128xf32> -> vector<32x128xf32>
    %1038 = vector.broadcast %8 : vector<32x1xf32> to vector<32x128xf32>
    %1039 = arith.addf %1037, %1038 : vector<32x128xf32>
    %cst_360 = arith.constant 0.000000e+00 : f32
    %1040 = vector.broadcast %cst_360 : f32 to vector<32x128xf32>
    %1041 = arith.maximumf %1039, %1040 : vector<32x128xf32>
    %1042 = arith.truncf %1041 : vector<32x128xf32> to vector<32x128xbf16>
    %cst_361 = arith.constant dense<0.000000e+00> : vector<8x128xf32>
    %1043 = tpu.matmul %5, %1042, %cst_361 {dimension_numbers = #tpu.dot_dimension_numbers<[1], [0], [0], [1], [0, 0, 1, 1], [], []>} : vector<8x32xbf16>, vector<32x128xbf16>, vector<8x128xf32> -> vector<8x128xf32>
    %1044 = vector.broadcast %9 : vector<8x1xf32> to vector<8x128xf32>
    %1045 = arith.addf %1043, %1044 : vector<8x128xf32>
    %1046 = arith.mulf %1045, %1023 : vector<8x128xf32>
    %cst_362 = arith.constant dense<0.000000e+00> : vector<128xf32>
    %1047 = vector.multi_reduction <add>, %1046, %cst_362 [0] : vector<8x128xf32> to vector<128xf32>
    %1048 = vector.shape_cast %1047 : vector<128xf32> to vector<1x128xf32>
    %cst_363 = arith.constant 2.000000e-01 : f32
    %1049 = vector.broadcast %cst_363 : f32 to vector<8x128xf32>
    %1050 = arith.mulf %1049, %1023 : vector<8x128xf32>
    %cst_364 = arith.constant 1.0007813 : f32
    %1051 = vector.broadcast %cst_364 : f32 to vector<8x128xf32>
    %1052 = arith.addf %1051, %1050 : vector<8x128xf32>
    %1053 = arith.mulf %1017, %1052 : vector<8x128xf32>
    %cst_365 = arith.constant 1.00046873 : f32
    %1054 = vector.broadcast %cst_365 : f32 to vector<1x128xf32>
    %1055 = arith.mulf %1020, %1054 : vector<1x128xf32>
    %1056 = arith.addf %1055, %1048 : vector<1x128xf32>
    %c29_i32 = arith.constant 29 : i32
    %1057 = arith.index_cast %c29_i32 : i32 to index
    %c0_366 = arith.constant 0 : index
    %c0_367 = arith.constant 0 : index
    %1058 = vector.load %arg2[%1057, %c0_366, %c0_367] : memref<32x8x128xf32, #tpu.memory_space<vmem>>, vector<1x8x128xf32>
    %1059 = vector.shape_cast %1058 : vector<1x8x128xf32> to vector<8x128xf32>
    %1060 = arith.addi %10, %c29_i32 : i32
    %1061 = arith.sitofp %1060 : i32 to f32
    %cst_368 = arith.constant 1.562500e-02 : f32
    %1062 = arith.mulf %1061, %cst_368 : f32
    %1063 = vector.broadcast %1062 : f32 to vector<32x1xf32>
    %1064 = arith.mulf %1063, %6 : vector<32x1xf32>
    %1065 = arith.addf %7, %1064 : vector<32x1xf32>
    %1066 = arith.truncf %1053 : vector<8x128xf32> to vector<8x128xbf16>
    %cst_369 = arith.constant dense<0.000000e+00> : vector<32x128xf32>
    %1067 = tpu.matmul %3, %1066, %cst_369 {dimension_numbers = #tpu.dot_dimension_numbers<[1], [0], [0], [1], [0, 0, 1, 1], [], []>} : vector<32x8xbf16>, vector<8x128xbf16>, vector<32x128xf32> -> vector<32x128xf32>
    %1068 = vector.broadcast %1065 : vector<32x1xf32> to vector<32x128xf32>
    %1069 = arith.addf %1067, %1068 : vector<32x128xf32>
    %cst_370 = arith.constant 0.000000e+00 : f32
    %1070 = vector.broadcast %cst_370 : f32 to vector<32x128xf32>
    %1071 = arith.maximumf %1069, %1070 : vector<32x128xf32>
    %1072 = arith.truncf %1071 : vector<32x128xf32> to vector<32x128xbf16>
    %cst_371 = arith.constant dense<0.000000e+00> : vector<32x128xf32>
    %1073 = tpu.matmul %4, %1072, %cst_371 {dimension_numbers = #tpu.dot_dimension_numbers<[1], [0], [0], [1], [0, 0, 1, 1], [], []>} : vector<32x32xbf16>, vector<32x128xbf16>, vector<32x128xf32> -> vector<32x128xf32>
    %1074 = vector.broadcast %8 : vector<32x1xf32> to vector<32x128xf32>
    %1075 = arith.addf %1073, %1074 : vector<32x128xf32>
    %cst_372 = arith.constant 0.000000e+00 : f32
    %1076 = vector.broadcast %cst_372 : f32 to vector<32x128xf32>
    %1077 = arith.maximumf %1075, %1076 : vector<32x128xf32>
    %1078 = arith.truncf %1077 : vector<32x128xf32> to vector<32x128xbf16>
    %cst_373 = arith.constant dense<0.000000e+00> : vector<8x128xf32>
    %1079 = tpu.matmul %5, %1078, %cst_373 {dimension_numbers = #tpu.dot_dimension_numbers<[1], [0], [0], [1], [0, 0, 1, 1], [], []>} : vector<8x32xbf16>, vector<32x128xbf16>, vector<8x128xf32> -> vector<8x128xf32>
    %1080 = vector.broadcast %9 : vector<8x1xf32> to vector<8x128xf32>
    %1081 = arith.addf %1079, %1080 : vector<8x128xf32>
    %1082 = arith.mulf %1081, %1059 : vector<8x128xf32>
    %cst_374 = arith.constant dense<0.000000e+00> : vector<128xf32>
    %1083 = vector.multi_reduction <add>, %1082, %cst_374 [0] : vector<8x128xf32> to vector<128xf32>
    %1084 = vector.shape_cast %1083 : vector<128xf32> to vector<1x128xf32>
    %cst_375 = arith.constant 2.000000e-01 : f32
    %1085 = vector.broadcast %cst_375 : f32 to vector<8x128xf32>
    %1086 = arith.mulf %1085, %1059 : vector<8x128xf32>
    %cst_376 = arith.constant 1.0007813 : f32
    %1087 = vector.broadcast %cst_376 : f32 to vector<8x128xf32>
    %1088 = arith.addf %1087, %1086 : vector<8x128xf32>
    %1089 = arith.mulf %1053, %1088 : vector<8x128xf32>
    %cst_377 = arith.constant 1.00046873 : f32
    %1090 = vector.broadcast %cst_377 : f32 to vector<1x128xf32>
    %1091 = arith.mulf %1056, %1090 : vector<1x128xf32>
    %1092 = arith.addf %1091, %1084 : vector<1x128xf32>
    %c30_i32 = arith.constant 30 : i32
    %1093 = arith.index_cast %c30_i32 : i32 to index
    %c0_378 = arith.constant 0 : index
    %c0_379 = arith.constant 0 : index
    %1094 = vector.load %arg2[%1093, %c0_378, %c0_379] : memref<32x8x128xf32, #tpu.memory_space<vmem>>, vector<1x8x128xf32>
    %1095 = vector.shape_cast %1094 : vector<1x8x128xf32> to vector<8x128xf32>
    %1096 = arith.addi %10, %c30_i32 : i32
    %1097 = arith.sitofp %1096 : i32 to f32
    %cst_380 = arith.constant 1.562500e-02 : f32
    %1098 = arith.mulf %1097, %cst_380 : f32
    %1099 = vector.broadcast %1098 : f32 to vector<32x1xf32>
    %1100 = arith.mulf %1099, %6 : vector<32x1xf32>
    %1101 = arith.addf %7, %1100 : vector<32x1xf32>
    %1102 = arith.truncf %1089 : vector<8x128xf32> to vector<8x128xbf16>
    %cst_381 = arith.constant dense<0.000000e+00> : vector<32x128xf32>
    %1103 = tpu.matmul %3, %1102, %cst_381 {dimension_numbers = #tpu.dot_dimension_numbers<[1], [0], [0], [1], [0, 0, 1, 1], [], []>} : vector<32x8xbf16>, vector<8x128xbf16>, vector<32x128xf32> -> vector<32x128xf32>
    %1104 = vector.broadcast %1101 : vector<32x1xf32> to vector<32x128xf32>
    %1105 = arith.addf %1103, %1104 : vector<32x128xf32>
    %cst_382 = arith.constant 0.000000e+00 : f32
    %1106 = vector.broadcast %cst_382 : f32 to vector<32x128xf32>
    %1107 = arith.maximumf %1105, %1106 : vector<32x128xf32>
    %1108 = arith.truncf %1107 : vector<32x128xf32> to vector<32x128xbf16>
    %cst_383 = arith.constant dense<0.000000e+00> : vector<32x128xf32>
    %1109 = tpu.matmul %4, %1108, %cst_383 {dimension_numbers = #tpu.dot_dimension_numbers<[1], [0], [0], [1], [0, 0, 1, 1], [], []>} : vector<32x32xbf16>, vector<32x128xbf16>, vector<32x128xf32> -> vector<32x128xf32>
    %1110 = vector.broadcast %8 : vector<32x1xf32> to vector<32x128xf32>
    %1111 = arith.addf %1109, %1110 : vector<32x128xf32>
    %cst_384 = arith.constant 0.000000e+00 : f32
    %1112 = vector.broadcast %cst_384 : f32 to vector<32x128xf32>
    %1113 = arith.maximumf %1111, %1112 : vector<32x128xf32>
    %1114 = arith.truncf %1113 : vector<32x128xf32> to vector<32x128xbf16>
    %cst_385 = arith.constant dense<0.000000e+00> : vector<8x128xf32>
    %1115 = tpu.matmul %5, %1114, %cst_385 {dimension_numbers = #tpu.dot_dimension_numbers<[1], [0], [0], [1], [0, 0, 1, 1], [], []>} : vector<8x32xbf16>, vector<32x128xbf16>, vector<8x128xf32> -> vector<8x128xf32>
    %1116 = vector.broadcast %9 : vector<8x1xf32> to vector<8x128xf32>
    %1117 = arith.addf %1115, %1116 : vector<8x128xf32>
    %1118 = arith.mulf %1117, %1095 : vector<8x128xf32>
    %cst_386 = arith.constant dense<0.000000e+00> : vector<128xf32>
    %1119 = vector.multi_reduction <add>, %1118, %cst_386 [0] : vector<8x128xf32> to vector<128xf32>
    %1120 = vector.shape_cast %1119 : vector<128xf32> to vector<1x128xf32>
    %cst_387 = arith.constant 2.000000e-01 : f32
    %1121 = vector.broadcast %cst_387 : f32 to vector<8x128xf32>
    %1122 = arith.mulf %1121, %1095 : vector<8x128xf32>
    %cst_388 = arith.constant 1.0007813 : f32
    %1123 = vector.broadcast %cst_388 : f32 to vector<8x128xf32>
    %1124 = arith.addf %1123, %1122 : vector<8x128xf32>
    %1125 = arith.mulf %1089, %1124 : vector<8x128xf32>
    %cst_389 = arith.constant 1.00046873 : f32
    %1126 = vector.broadcast %cst_389 : f32 to vector<1x128xf32>
    %1127 = arith.mulf %1092, %1126 : vector<1x128xf32>
    %1128 = arith.addf %1127, %1120 : vector<1x128xf32>
    %c31_i32 = arith.constant 31 : i32
    %1129 = arith.index_cast %c31_i32 : i32 to index
    %c0_390 = arith.constant 0 : index
    %c0_391 = arith.constant 0 : index
    %1130 = vector.load %arg2[%1129, %c0_390, %c0_391] : memref<32x8x128xf32, #tpu.memory_space<vmem>>, vector<1x8x128xf32>
    %1131 = vector.shape_cast %1130 : vector<1x8x128xf32> to vector<8x128xf32>
    %1132 = arith.addi %10, %c31_i32 : i32
    %1133 = arith.sitofp %1132 : i32 to f32
    %cst_392 = arith.constant 1.562500e-02 : f32
    %1134 = arith.mulf %1133, %cst_392 : f32
    %1135 = vector.broadcast %1134 : f32 to vector<32x1xf32>
    %1136 = arith.mulf %1135, %6 : vector<32x1xf32>
    %1137 = arith.addf %7, %1136 : vector<32x1xf32>
    %1138 = arith.truncf %1125 : vector<8x128xf32> to vector<8x128xbf16>
    %cst_393 = arith.constant dense<0.000000e+00> : vector<32x128xf32>
    %1139 = tpu.matmul %3, %1138, %cst_393 {dimension_numbers = #tpu.dot_dimension_numbers<[1], [0], [0], [1], [0, 0, 1, 1], [], []>} : vector<32x8xbf16>, vector<8x128xbf16>, vector<32x128xf32> -> vector<32x128xf32>
    %1140 = vector.broadcast %1137 : vector<32x1xf32> to vector<32x128xf32>
    %1141 = arith.addf %1139, %1140 : vector<32x128xf32>
    %cst_394 = arith.constant 0.000000e+00 : f32
    %1142 = vector.broadcast %cst_394 : f32 to vector<32x128xf32>
    %1143 = arith.maximumf %1141, %1142 : vector<32x128xf32>
    %1144 = arith.truncf %1143 : vector<32x128xf32> to vector<32x128xbf16>
    %cst_395 = arith.constant dense<0.000000e+00> : vector<32x128xf32>
    %1145 = tpu.matmul %4, %1144, %cst_395 {dimension_numbers = #tpu.dot_dimension_numbers<[1], [0], [0], [1], [0, 0, 1, 1], [], []>} : vector<32x32xbf16>, vector<32x128xbf16>, vector<32x128xf32> -> vector<32x128xf32>
    %1146 = vector.broadcast %8 : vector<32x1xf32> to vector<32x128xf32>
    %1147 = arith.addf %1145, %1146 : vector<32x128xf32>
    %cst_396 = arith.constant 0.000000e+00 : f32
    %1148 = vector.broadcast %cst_396 : f32 to vector<32x128xf32>
    %1149 = arith.maximumf %1147, %1148 : vector<32x128xf32>
    %1150 = arith.truncf %1149 : vector<32x128xf32> to vector<32x128xbf16>
    %cst_397 = arith.constant dense<0.000000e+00> : vector<8x128xf32>
    %1151 = tpu.matmul %5, %1150, %cst_397 {dimension_numbers = #tpu.dot_dimension_numbers<[1], [0], [0], [1], [0, 0, 1, 1], [], []>} : vector<8x32xbf16>, vector<32x128xbf16>, vector<8x128xf32> -> vector<8x128xf32>
    %1152 = vector.broadcast %9 : vector<8x1xf32> to vector<8x128xf32>
    %1153 = arith.addf %1151, %1152 : vector<8x128xf32>
    %1154 = arith.mulf %1153, %1131 : vector<8x128xf32>
    %cst_398 = arith.constant dense<0.000000e+00> : vector<128xf32>
    %1155 = vector.multi_reduction <add>, %1154, %cst_398 [0] : vector<8x128xf32> to vector<128xf32>
    %1156 = vector.shape_cast %1155 : vector<128xf32> to vector<1x128xf32>
    %cst_399 = arith.constant 2.000000e-01 : f32
    %1157 = vector.broadcast %cst_399 : f32 to vector<8x128xf32>
    %1158 = arith.mulf %1157, %1131 : vector<8x128xf32>
    %cst_400 = arith.constant 1.0007813 : f32
    %1159 = vector.broadcast %cst_400 : f32 to vector<8x128xf32>
    %1160 = arith.addf %1159, %1158 : vector<8x128xf32>
    %1161 = arith.mulf %1125, %1160 : vector<8x128xf32>
    %cst_401 = arith.constant 1.00046873 : f32
    %1162 = vector.broadcast %cst_401 : f32 to vector<1x128xf32>
    %1163 = arith.mulf %1128, %1162 : vector<1x128xf32>
    %1164 = arith.addf %1163, %1156 : vector<1x128xf32>
    %c32_i32_402 = arith.constant 32 : i32
    %c0_403 = arith.constant 0 : index
    %c0_404 = arith.constant 0 : index
    %1165 = vector.load %arg11[%c0_403, %c0_404] : memref<8x128xf32, #tpu.memory_space<vmem>>, vector<8x128xf32>
    tpu.vector_store %arg11[%c0_403, %c0_404], %1161 {strides = array<i32>} : memref<8x128xf32, #tpu.memory_space<vmem>>, vector<8x128xf32>,
    %c0_405 = arith.constant 0 : index
    %c0_406 = arith.constant 0 : index
    %1166 = vector.load %arg12[%c0_405, %c0_406] : memref<1x128xf32, #tpu.memory_space<vmem>>, vector<1x128xf32>
    tpu.vector_store %arg12[%c0_405, %c0_406], %1164 {strides = array<i32>} : memref<1x128xf32, #tpu.memory_space<vmem>>, vector<1x128xf32>,
    return
  }
  func.func @transform_0(%arg0: i32, %arg1: i32) -> (i32, i32, i32) {
    %c0_i32 = arith.constant 0 : i32
    %c0_i32_0 = arith.constant 0 : i32
    return %arg1, %c0_i32, %arg0 : i32, i32, i32
  }
  func.func @transform_1(%arg0: i32, %arg1: i32) -> (i32, i32) {
    %c0_i32 = arith.constant 0 : i32
    %c0_i32_0 = arith.constant 0 : i32
    %c0_i32_1 = arith.constant 0 : i32
    return %c0_i32, %c0_i32_0 : i32, i32
  }
  func.func @transform_2(%arg0: i32, %arg1: i32) -> (i32, i32) {
    %c0_i32 = arith.constant 0 : i32
    %c0_i32_0 = arith.constant 0 : i32
    %c0_i32_1 = arith.constant 0 : i32
    return %c0_i32, %c0_i32_0 : i32, i32
  }
  func.func @transform_3(%arg0: i32, %arg1: i32) -> (i32, i32) {
    %c0_i32 = arith.constant 0 : i32
    %c0_i32_0 = arith.constant 0 : i32
    %c0_i32_1 = arith.constant 0 : i32
    return %c0_i32, %c0_i32_0 : i32, i32
  }
  func.func @transform_4(%arg0: i32, %arg1: i32) -> (i32, i32) {
    %c0_i32 = arith.constant 0 : i32
    %c0_i32_0 = arith.constant 0 : i32
    %c0_i32_1 = arith.constant 0 : i32
    return %c0_i32, %c0_i32_0 : i32, i32
  }
  func.func @transform_5(%arg0: i32, %arg1: i32) -> (i32, i32) {
    %c0_i32 = arith.constant 0 : i32
    %c0_i32_0 = arith.constant 0 : i32
    %c0_i32_1 = arith.constant 0 : i32
    return %c0_i32, %c0_i32_0 : i32, i32
  }
  func.func @transform_6(%arg0: i32, %arg1: i32) -> (i32, i32) {
    %c0_i32 = arith.constant 0 : i32
    %c0_i32_0 = arith.constant 0 : i32
    %c0_i32_1 = arith.constant 0 : i32
    return %c0_i32, %c0_i32_0 : i32, i32
  }
  func.func @transform_7(%arg0: i32, %arg1: i32) -> (i32, i32) {
    %c0_i32 = arith.constant 0 : i32
    %c0_i32_0 = arith.constant 0 : i32
    %c0_i32_1 = arith.constant 0 : i32
    return %c0_i32, %c0_i32_0 : i32, i32
  }
  func.func @transform_8(%arg0: i32, %arg1: i32) -> (i32, i32) {
    %c0_i32 = arith.constant 0 : i32
    %c0_i32_0 = arith.constant 0 : i32
    %c0_i32_1 = arith.constant 0 : i32
    return %c0_i32, %c0_i32_0 : i32, i32
  }
  func.func @transform_9(%arg0: i32, %arg1: i32) -> (i32, i32) {
    %c0_i32 = arith.constant 0 : i32
    %c0_i32_0 = arith.constant 0 : i32
    return %c0_i32, %arg0 : i32, i32
  }
  func.func @transform_10(%arg0: i32, %arg1: i32) -> (i32, i32) {
    %c0_i32 = arith.constant 0 : i32
    %c0_i32_0 = arith.constant 0 : i32
    return %c0_i32, %arg0 : i32, i32
  }
}

</mosaic_0001>

<llo_original>
// kernel: tpu_custom_call.1
$region0: #{tpu_custom_call.1}
  #allocation0 [shape = 'u32[]', space=smem, size = 0x4, offset = 0x4, fixed_abs, tag = 'smem constant byte address 0x4 - core index']
  #allocation1 [shape = 'u32[144,128]{1,0:T(1,128)}', space=vmem, size = 0x12000, scoped, tag = 'internal scratch']
  #allocation2 [shape = 'f32[1,1]{1,0:T(1,128)S(1)}', space=vmem, size = 0x200, scoped, tag = 'scoped memory for tpu_custom_call.1']
  %s0 = inlined_call_operand.hbm [shape: f32[64,8,256], index: 0, kind: input, shape index: {}]
  %s1 = inlined_call_operand.vmem [shape: bf16[32,8], index: 1, kind: input, shape index: {}]
  %s2 = inlined_call_operand.vmem [shape: f32[32,1], index: 2, kind: input, shape index: {}]
  %s3 = inlined_call_operand.vmem [shape: f32[32,1], index: 3, kind: input, shape index: {}]
  %s4 = inlined_call_operand.vmem [shape: bf16[32,32], index: 4, kind: input, shape index: {}]
  %s5 = inlined_call_operand.vmem [shape: f32[32,1], index: 5, kind: input, shape index: {}]
  %s6 = inlined_call_operand.vmem [shape: bf16[8,32], index: 6, kind: input, shape index: {}]
  %s7 = inlined_call_operand.vmem [shape: f32[8,1], index: 7, kind: input, shape index: {}]
  %s8 = inlined_call_operand.<no memory space> [shape: f32[1,1], index: 8, kind: input, shape index: {}]
  %s9 = inlined_call_operand.hbm [shape: f32[8,256], index: 9, kind: output, shape index: {0}]
  %s10 = inlined_call_operand.hbm [shape: f32[1,256], index: 10, kind: output, shape index: {1}]
  %11 = xla_tuple %s9, %s10
  %s12 = sld [smem:[#allocation0]]
  $region85: #{tpu_custom_call.1} parent=0
    _
  %s14 = ssub.s32 1, %s12
  %s15 = scalar_select 0, %s14, %s12
  %v16 = vstv %s8
  %17 = vst [vmem:[#allocation2] sm:$0x1] %v16
  $region1: #{tpu_custom_call.1} parent=0
    #allocation3 [shape = 'u8[262144]{0}', space=vmem, size = 0x40000, scoped, tag = 'input window, operand 0']
    #allocation4 [shape = 's32[2]{0}', space=sflag, size = 0x8, scoped, tag = 'scoped memory for tpu_custom_call.1']
    #allocation5 [shape = 's32[2]{0}', space=sflag, size = 0x8, scoped, tag = 'scoped memory for tpu_custom_call.1']
    #allocation6 [shape = 'u8[8192]{0}', space=vmem, size = 0x2000, scoped, tag = 'output window, operand 0']
    #allocation7 [shape = 'u8[1024]{0}', space=vmem, size = 0x400, scoped, tag = 'output window, operand 1']
    #allocation8 [shape = 's32[2]{0}', space=sflag, size = 0x8, scoped, tag = 'scoped memory for tpu_custom_call.1']
    %18 = vsyncpa [#allocation4], 0
    %s19 = scalar_lea.sflag [#allocation4], 1
    %20 = vsyncpa %s19, 0
    %21 = vsyncpa [#allocation5], 0
    %s22 = scalar_lea.sflag [#allocation5], 1
    %23 = vsyncpa %s22, 0
    %24 = vsyncpa [#allocation8], 0
    %s25 = scalar_lea.sflag [#allocation8], 1
    %26 = vsyncpa %s25, 0
    loop: start=0, step=1, limit=6
    $region2: #{tpu_custom_call.1} parent=1 // loop_pre_header
      _
    $region3: #{tpu_custom_call.1} parent=1 // loop_header
      %s28 = sphi 0, %s32
      %p29 = scmp.ge.s32.totalorder %s28, 6
      %s35 = sphi 0, %s47
      %s36 = sphi 0, %s43
      %s37 = sphi 0, %s35
      %s38 = sphi 0, %s36
      %s39 = sphi 0, %s37
      %s40 = sphi 0, %s38
      %s52 = sphi 0, %s54
      %s55 = sphi 0, %s52
      %s56 = sphi 0, %s55
      %s72 = sphi 0, %s56
      %s76 = sphi 0, %s76
      %s78 = sphi 0, %s76
      %s79 = sphi 0, %s78
      %s93 = sphi 0, %s79
      %s97 = sphi 0, %s97
      %s99 = sphi 0, %s97
      %s100 = sphi 0, %s99
      %s114 = sphi 0, %s100
      %s118 = sphi 0, %s118
      %s120 = sphi 0, %s118
      %s121 = sphi 0, %s120
      %s135 = sphi 0, %s121
      %s139 = sphi 0, %s139
      %s141 = sphi 0, %s139
      %s142 = sphi 0, %s141
      %s156 = sphi 0, %s142
      %s160 = sphi 0, %s160
      %s162 = sphi 0, %s160
      %s163 = sphi 0, %s162
      %s177 = sphi 0, %s163
      %s181 = sphi 0, %s181
      %s183 = sphi 0, %s181
      %s184 = sphi 0, %s183
      %s198 = sphi 0, %s184
      %s202 = sphi 0, %s202
      %s204 = sphi 0, %s202
      %s205 = sphi 0, %s204
      %s219 = sphi 0, %s205
      %s223 = sphi 0, %s223
      %s225 = sphi 0, %s223
      %s226 = sphi 0, %s225
      %s240 = sphi 0, %s226
      %s246 = sphi 0, %s248
      %s249 = sphi 0, %s246
      %s250 = sphi 0, %s249
      %s266 = sphi 0, %s250
      %s272 = sphi 0, %s274
      %s275 = sphi 0, %s272
      %s276 = sphi 0, %s275
      %s292 = sphi 0, %s276
    $region4: #{tpu_custom_call.1} parent=1 // loop_header_branch
      %31 = sbr.rel (%p29) target = $region8
    $region5: #{tpu_custom_call.1} parent=1 // loop_body
      %s33 = ssub.s32 %s28, 1
      %s34 = ssub.s32 %s28, 2
      %s41 = sadd.s32 1, %s36
      %p42 = scmp.ge.s32.totalorder %s41, 2
      %s43 = scalar_select %p42, 0, %s41
      %s44 = sadd.s32 1, %s35
      %s45 = scalar_select %p42, %s44, %s35
      %p46 = scmp.ge.s32.totalorder %s45, 2
      %s47 = scalar_select %p46, 0, %s45
      %s48 = ssub.s32 %s36, %s43
      %s49 = ssub.s32 %s35, %s47
      %s50 = sor.u32 %s48, %s49
      %p51 = scmp.eq.s32.totalorder %s50, 0
      %s53 = sadd.s32 %s52, 1
      %s54 = scalar_select %p51, %s52, %s53
      %p57 = pneg %p51
      %p58 = scmp.eq.s32.totalorder %s28, 3
      %p59 = por %p57, %p58
      %p60 = scmp.ne.s32.totalorder %s52, %s55
      %p61 = scmp.eq.s32.totalorder %s28, 0
      %p62 = por %p60, %p61
      %p63 = scmp.ne.s32.totalorder %s52, %s55
      %p64 = scmp.eq.s32.totalorder %s33, 3
      %p65 = por %p63, %p64
      %p66 = scmp.ne.s32.totalorder %s55, %s56
      %p67 = scmp.eq.s32.totalorder %s33, 0
      %p68 = por %p66, %p67
      %p69 = scmp.ne.s32.totalorder %s55, %s56
      %p70 = scmp.eq.s32.totalorder %s34, 3
      %p71 = por %p69, %p70
      %p73 = scmp.ne.s32.totalorder %s56, %s72
      %p74 = scmp.eq.s32.totalorder %s34, 0
      %p75 = por %p73, %p74
      %s77 = sadd.s32 %s76, 1
      %p80 = scmp.eq.s32.totalorder %s28, 3
      %p81 = scmp.ne.s32.totalorder %s76, %s78
      %p82 = scmp.eq.s32.totalorder %s28, 0
      %p83 = por %p81, %p82
      %p84 = scmp.ne.s32.totalorder %s76, %s78
      %p85 = scmp.eq.s32.totalorder %s33, 3
      %p86 = por %p84, %p85
      %p87 = scmp.ne.s32.totalorder %s78, %s79
      %p88 = scmp.eq.s32.totalorder %s33, 0
      %p89 = por %p87, %p88
      %p90 = scmp.ne.s32.totalorder %s78, %s79
      %p91 = scmp.eq.s32.totalorder %s34, 3
      %p92 = por %p90, %p91
      %p94 = scmp.ne.s32.totalorder %s79, %s93
      %p95 = scmp.eq.s32.totalorder %s34, 0
      %p96 = por %p94, %p95
      %s98 = sadd.s32 %s97, 1
      %p101 = scmp.eq.s32.totalorder %s28, 3
      %p102 = scmp.ne.s32.totalorder %s97, %s99
      %p103 = scmp.eq.s32.totalorder %s28, 0
      %p104 = por %p102, %p103
      %p105 = scmp.ne.s32.totalorder %s97, %s99
      %p106 = scmp.eq.s32.totalorder %s33, 3
      %p107 = por %p105, %p106
      %p108 = scmp.ne.s32.totalorder %s99, %s100
      %p109 = scmp.eq.s32.totalorder %s33, 0
      %p110 = por %p108, %p109
      %p111 = scmp.ne.s32.totalorder %s99, %s100
      %p112 = scmp.eq.s32.totalorder %s34, 3
      %p113 = por %p111, %p112
      %p115 = scmp.ne.s32.totalorder %s100, %s114
      %p116 = scmp.eq.s32.totalorder %s34, 0
      %p117 = por %p115, %p116
      %s119 = sadd.s32 %s118, 1
      %p122 = scmp.eq.s32.totalorder %s28, 3
      %p123 = scmp.ne.s32.totalorder %s118, %s120
      %p124 = scmp.eq.s32.totalorder %s28, 0
      %p125 = por %p123, %p124
      %p126 = scmp.ne.s32.totalorder %s118, %s120
      %p127 = scmp.eq.s32.totalorder %s33, 3
      %p128 = por %p126, %p127
      %p129 = scmp.ne.s32.totalorder %s120, %s121
      %p130 = scmp.eq.s32.totalorder %s33, 0
      %p131 = por %p129, %p130
      %p132 = scmp.ne.s32.totalorder %s120, %s121
      %p133 = scmp.eq.s32.totalorder %s34, 3
      %p134 = por %p132, %p133
      %p136 = scmp.ne.s32.totalorder %s121, %s135
      %p137 = scmp.eq.s32.totalorder %s34, 0
      %p138 = por %p136, %p137
      %s140 = sadd.s32 %s139, 1
      %p143 = scmp.eq.s32.totalorder %s28, 3
      %p144 = scmp.ne.s32.totalorder %s139, %s141
      %p145 = scmp.eq.s32.totalorder %s28, 0
      %p146 = por %p144, %p145
      %p147 = scmp.ne.s32.totalorder %s139, %s141
      %p148 = scmp.eq.s32.totalorder %s33, 3
      %p149 = por %p147, %p148
      %p150 = scmp.ne.s32.totalorder %s141, %s142
      %p151 = scmp.eq.s32.totalorder %s33, 0
      %p152 = por %p150, %p151
      %p153 = scmp.ne.s32.totalorder %s141, %s142
      %p154 = scmp.eq.s32.totalorder %s34, 3
      %p155 = por %p153, %p154
      %p157 = scmp.ne.s32.totalorder %s142, %s156
      %p158 = scmp.eq.s32.totalorder %s34, 0
      %p159 = por %p157, %p158
      %s161 = sadd.s32 %s160, 1
      %p164 = scmp.eq.s32.totalorder %s28, 3
      %p165 = scmp.ne.s32.totalorder %s160, %s162
      %p166 = scmp.eq.s32.totalorder %s28, 0
      %p167 = por %p165, %p166
      %p168 = scmp.ne.s32.totalorder %s160, %s162
      %p169 = scmp.eq.s32.totalorder %s33, 3
      %p170 = por %p168, %p169
      %p171 = scmp.ne.s32.totalorder %s162, %s163
      %p172 = scmp.eq.s32.totalorder %s33, 0
      %p173 = por %p171, %p172
      %p174 = scmp.ne.s32.totalorder %s162, %s163
      %p175 = scmp.eq.s32.totalorder %s34, 3
      %p176 = por %p174, %p175
      %p178 = scmp.ne.s32.totalorder %s163, %s177
      %p179 = scmp.eq.s32.totalorder %s34, 0
      %p180 = por %p178, %p179
      %s182 = sadd.s32 %s181, 1
      %p185 = scmp.eq.s32.totalorder %s28, 3
      %p186 = scmp.ne.s32.totalorder %s181, %s183
      %p187 = scmp.eq.s32.totalorder %s28, 0
      %p188 = por %p186, %p187
      %p189 = scmp.ne.s32.totalorder %s181, %s183
      %p190 = scmp.eq.s32.totalorder %s33, 3
      %p191 = por %p189, %p190
      %p192 = scmp.ne.s32.totalorder %s183, %s184
      %p193 = scmp.eq.s32.totalorder %s33, 0
      %p194 = por %p192, %p193
      %p195 = scmp.ne.s32.totalorder %s183, %s184
      %p196 = scmp.eq.s32.totalorder %s34, 3
      %p197 = por %p195, %p196
      %p199 = scmp.ne.s32.totalorder %s184, %s198
      %p200 = scmp.eq.s32.totalorder %s34, 0
      %p201 = por %p199, %p200
      %s203 = sadd.s32 %s202, 1
      %p206 = scmp.eq.s32.totalorder %s28, 3
      %p207 = scmp.ne.s32.totalorder %s202, %s204
      %p208 = scmp.eq.s32.totalorder %s28, 0
      %p209 = por %p207, %p208
      %p210 = scmp.ne.s32.totalorder %s202, %s204
      %p211 = scmp.eq.s32.totalorder %s33, 3
      %p212 = por %p210, %p211
      %p213 = scmp.ne.s32.totalorder %s204, %s205
      %p214 = scmp.eq.s32.totalorder %s33, 0
      %p215 = por %p213, %p214
      %p216 = scmp.ne.s32.totalorder %s204, %s205
      %p217 = scmp.eq.s32.totalorder %s34, 3
      %p218 = por %p216, %p217
      %p220 = scmp.ne.s32.totalorder %s205, %s219
      %p221 = scmp.eq.s32.totalorder %s34, 0
      %p222 = por %p220, %p221
      %s224 = sadd.s32 %s223, 1
      %p227 = scmp.eq.s32.totalorder %s28, 3
      %p228 = scmp.ne.s32.totalorder %s223, %s225
      %p229 = scmp.eq.s32.totalorder %s28, 0
      %p230 = por %p228, %p229
      %p231 = scmp.ne.s32.totalorder %s223, %s225
      %p232 = scmp.eq.s32.totalorder %s33, 3
      %p233 = por %p231, %p232
      %p234 = scmp.ne.s32.totalorder %s225, %s226
      %p235 = scmp.eq.s32.totalorder %s33, 0
      %p236 = por %p234, %p235
      %p237 = scmp.ne.s32.totalorder %s225, %s226
      %p238 = scmp.eq.s32.totalorder %s34, 3
      %p239 = por %p237, %p238
      %p241 = scmp.ne.s32.totalorder %s226, %s240
      %p242 = scmp.eq.s32.totalorder %s34, 0
      %p243 = por %p241, %p242
      %s244 = ssub.s32 %s35, %s47
      %p245 = scmp.eq.s32.totalorder %s244, 0
      %s247 = sadd.s32 %s246, 1
      %s248 = scalar_select %p245, %s246, %s247
      %p251 = pneg %p245
      %p252 = scmp.eq.s32.totalorder %s28, 3
      %p253 = por %p251, %p252
      %p254 = scmp.ne.s32.totalorder %s246, %s249
      %p255 = scmp.eq.s32.totalorder %s28, 0
      %p256 = por %p254, %p255
      %p257 = scmp.ne.s32.totalorder %s246, %s249
      %p258 = scmp.eq.s32.totalorder %s33, 3
      %p259 = por %p257, %p258
      %p260 = scmp.ne.s32.totalorder %s249, %s250
      %p261 = scmp.eq.s32.totalorder %s33, 0
      %p262 = por %p260, %p261
      %p263 = scmp.ne.s32.totalorder %s249, %s250
      %p264 = scmp.eq.s32.totalorder %s34, 3
      %p265 = por %p263, %p264
      %p267 = scmp.ne.s32.totalorder %s250, %s266
      %p268 = scmp.eq.s32.totalorder %s34, 0
      %p269 = por %p267, %p268
      %s270 = ssub.s32 %s35, %s47
      %p271 = scmp.eq.s32.totalorder %s270, 0
      %s273 = sadd.s32 %s272, 1
      %s274 = scalar_select %p271, %s272, %s273
      %p277 = pneg %p271
      %p278 = scmp.eq.s32.totalorder %s28, 3
      %p279 = por %p277, %p278
      %p280 = scmp.ne.s32.totalorder %s272, %s275
      %p281 = scmp.eq.s32.totalorder %s28, 0
      %p282 = por %p280, %p281
      %p283 = scmp.ne.s32.totalorder %s272, %s275
      %p284 = scmp.eq.s32.totalorder %s33, 3
      %p285 = por %p283, %p284
      %p286 = scmp.ne.s32.totalorder %s275, %s276
      %p287 = scmp.eq.s32.totalorder %s33, 0
      %p288 = por %p286, %p287
      %p289 = scmp.ne.s32.totalorder %s275, %s276
      %p290 = scmp.eq.s32.totalorder %s34, 3
      %p291 = por %p289, %p290
      %p293 = scmp.ne.s32.totalorder %s276, %s292
      %p294 = scmp.eq.s32.totalorder %s34, 0
      %p295 = por %p293, %p294
      %p296 = scmp.le.s32.totalorder 1, %s28
      %p297 = scmp.lt.s32.totalorder %s28, 5
      %p298 = pnand %p296, %p297
      %p299 = pneg %p298
      // Predicated region
      $region9: #{tpu_custom_call.1} parent=5 // pred_check
        _
      $region10: #{tpu_custom_call.1} parent=5 // pred_check_branch
        %301 = sbr.rel (%p298) target = $region12
      $region11: #{tpu_custom_call.1} parent=5 // pred_region
        %s302 = ssub.s32 %s28, 1
        // Predicated region
        $region13: #{tpu_custom_call.1} parent=11 // pred_check
          %p303 = pneg %p89
        $region14: #{tpu_custom_call.1} parent=11 // pred_check_branch
          %305 = sbr.rel (%p303) target = $region16
        $region15: #{tpu_custom_call.1} parent=11 // pred_region
          _
        $region16: #{tpu_custom_call.1} parent=11 // pred_fallthru
          _
        // Predicated region
        $region17: #{tpu_custom_call.1} parent=11 // pred_check
          %p306 = pneg %p110
        $region18: #{tpu_custom_call.1} parent=11 // pred_check_branch
          %308 = sbr.rel (%p306) target = $region20
        $region19: #{tpu_custom_call.1} parent=11 // pred_region
          _
        $region20: #{tpu_custom_call.1} parent=11 // pred_fallthru
          _
        // Predicated region
        $region21: #{tpu_custom_call.1} parent=11 // pred_check
          %p309 = pneg %p131
        $region22: #{tpu_custom_call.1} parent=11 // pred_check_branch
          %311 = sbr.rel (%p309) target = $region24
        $region23: #{tpu_custom_call.1} parent=11 // pred_region
          _
        $region24: #{tpu_custom_call.1} parent=11 // pred_fallthru
          _
        // Predicated region
        $region25: #{tpu_custom_call.1} parent=11 // pred_check
          %p312 = pneg %p152
        $region26: #{tpu_custom_call.1} parent=11 // pred_check_branch
          %314 = sbr.rel (%p312) target = $region28
        $region27: #{tpu_custom_call.1} parent=11 // pred_region
          _
        $region28: #{tpu_custom_call.1} parent=11 // pred_fallthru
          _
        // Predicated region
        $region29: #{tpu_custom_call.1} parent=11 // pred_check
          %p315 = pneg %p173
        $region30: #{tpu_custom_call.1} parent=11 // pred_check_branch
          %317 = sbr.rel (%p315) target = $region32
        $region31: #{tpu_custom_call.1} parent=11 // pred_region
          _
        $region32: #{tpu_custom_call.1} parent=11 // pred_fallthru
          _
        // Predicated region
        $region33: #{tpu_custom_call.1} parent=11 // pred_check
          %p318 = pneg %p194
        $region34: #{tpu_custom_call.1} parent=11 // pred_check_branch
          %320 = sbr.rel (%p318) target = $region36
        $region35: #{tpu_custom_call.1} parent=11 // pred_region
          _
        $region36: #{tpu_custom_call.1} parent=11 // pred_fallthru
          _
        // Predicated region
        $region37: #{tpu_custom_call.1} parent=11 // pred_check
          %p321 = pneg %p215
        $region38: #{tpu_custom_call.1} parent=11 // pred_check_branch
          %323 = sbr.rel (%p321) target = $region40
        $region39: #{tpu_custom_call.1} parent=11 // pred_region
          _
        $region40: #{tpu_custom_call.1} parent=11 // pred_fallthru
          _
        // Predicated region
        $region41: #{tpu_custom_call.1} parent=11 // pred_check
          %p324 = pneg %p236
        $region42: #{tpu_custom_call.1} parent=11 // pred_check_branch
          %326 = sbr.rel (%p324) target = $region44
        $region43: #{tpu_custom_call.1} parent=11 // pred_region
          _
        $region44: #{tpu_custom_call.1} parent=11 // pred_fallthru
          _
      $region12: #{tpu_custom_call.1} parent=5 // pred_fallthru
        _
      %p327 = scmp.lt.s32.totalorder %s28, 4
      // Predicated region
      $region45: #{tpu_custom_call.1} parent=5 // pred_check
        %p328 = pneg %p327
      $region46: #{tpu_custom_call.1} parent=5 // pred_check_branch
        %330 = sbr.rel (%p328) target = $region48
      $region47: #{tpu_custom_call.1} parent=5 // pred_region
        // Predicated region
        $region49: #{tpu_custom_call.1} parent=47 // pred_check
          %p331 = pneg %p62
        $region50: #{tpu_custom_call.1} parent=47 // pred_check_branch
          %333 = sbr.rel (%p331) target = $region52
        $region51: #{tpu_custom_call.1} parent=47 // pred_region
          %s334 = sand.u32 %s52, 1
          %s335 = scalar_lea.sflag [#allocation4], %s334
          %s336 = sand.u32 %s52, 1
          %s337 = smul.addr %s336, 256
          %s338 = scalar_lea.vmem [#allocation3], %s337
          %s339 = smul.u32 32, %s36
          %s341 = ssub.s32 4096, 4096
          %342 = vsyncadd %s335, %s341
          %s343 = smul.addr %s339, 2
          %s344 = sadd.s32 %s35, %s343
          %s345 = smul.addr %s344, 128
          %s346 = scalar_lea.hbm %s0, %s345
          %s347 = sshll.u32 %s338, 4
          %s348 = int_to_ptr.vmem [resolvable:$true] %s347
          %353 = dma.hbm_to_vmem [thread:$0]  %s346, 4096, %s348, %s335, 256, 128, 8
        $region52: #{tpu_custom_call.1} parent=47 // pred_fallthru
          _
      $region48: #{tpu_custom_call.1} parent=5 // pred_fallthru
        _
      %p354 = scmp.le.s32.totalorder 1, %s28
      %p355 = scmp.lt.s32.totalorder %s28, 5
      %p356 = pnand %p354, %p355
      %p357 = pneg %p356
      // Predicated region
      $region53: #{tpu_custom_call.1} parent=5 // pred_check
        _
      $region54: #{tpu_custom_call.1} parent=5 // pred_check_branch
        %359 = sbr.rel (%p356) target = $region56
      $region55: #{tpu_custom_call.1} parent=5 // pred_region
        %s360 = ssub.s32 %s28, 1
        %s361 = sand.u32 %s55, 1
        %s362 = scalar_lea.sflag [#allocation4], %s361
        %s363 = sand.u32 %s55, 1
        %s364 = smul.addr %s363, 256
        %s365 = scalar_lea.vmem [#allocation3], %s364
        // Predicated region
        $region57: #{tpu_custom_call.1} parent=55 // pred_check
          %p366 = pneg %p68
        $region58: #{tpu_custom_call.1} parent=55 // pred_check_branch
          %368 = sbr.rel (%p366) target = $region60
        $region59: #{tpu_custom_call.1} parent=55 // pred_region
          %369 = dma.done %s362, 4096
        $region60: #{tpu_custom_call.1} parent=55 // pred_fallthru
          _
        %s370 = sand.u32 %s55, 1
        %s371 = scalar_lea.sflag [#allocation4], %s370
        %s372 = sand.u32 %s55, 1
        %s373 = smul.addr %s372, 256
        %s374 = scalar_lea.vmem [#allocation3], %s373
        %p375 = pneg %p68
        %p376 = pneg %p65
        %p377 = pneg %p89
        %p378 = pneg %p86
        %p379 = pneg %p110
        %p380 = pneg %p107
        %p381 = pneg %p131
        %p382 = pneg %p128
        %p383 = pneg %p152
        %p384 = pneg %p149
        %p385 = pneg %p173
        %p386 = pneg %p170
        %p387 = pneg %p194
        %p388 = pneg %p191
        %p389 = pneg %p215
        %p390 = pneg %p212
        %p391 = pneg %p236
        %p392 = pneg %p233
        %p393 = pneg %p262
        %p394 = pneg %p259
        %s395 = sand.u32 %s249, 1
        %s396 = scalar_lea.sflag [#allocation5], %s395
        %s397 = sand.u32 %s249, 1
        %s398 = smul.addr %s397, 8
        %s399 = scalar_lea.vmem [#allocation6], %s398
        %p400 = pneg %p288
        %p401 = pneg %p285
        %s402 = sand.u32 %s275, 1
        %s403 = scalar_lea.sflag [#allocation8], %s402
        %s404 = sand.u32 %s275, 1
        %s405 = scalar_lea.vmem [#allocation7], %s404
        %s406 = smul.u32 32, %s38
        %p408 = scmp.eq.s32.totalorder %s38, 0
        // Predicated region
        $region61: #{tpu_custom_call.1} parent=55 // pred_check
          %p409 = pneg %p408
        $region62: #{tpu_custom_call.1} parent=55 // pred_check_branch
          %411 = sbr.rel (%p409) target = $region64
        $region63: #{tpu_custom_call.1} parent=55 // pred_region
          %412 = vst [vmem:[%s399] sm:$0xff] 1.0
          %v413 = vld [vmem:[#allocation2] sm:$0x1]
          %415 = vset.pattern.permute.xlu0 0
          %416 = vperm.xlu0 %415, %v413
          %v417 = vpop.permute.xlu0 %416
          %v419 = vlaneseq
          %v420 = vshrl.u32 %v419, 7
          %v421 = vsub.s32 0, %v420
          %v422 = vrot.slane %v417, %v421
          %423 = vst [vmem:[%s405] sm:$0x1] %v422
        $region64: #{tpu_custom_call.1} parent=55 // pred_fallthru
          _
        %v424 = vld [vmem:[%s1] sm:$0xf]
        %v425 = vld [vmem:[%s1 + $0x4] sm:$0xf]
        %v426 = vld [vmem:[%s1 + $0x8] sm:$0xf]
        %v427 = vld [vmem:[%s1 + $0xc] sm:$0xf]
        %v428 = vld [vmem:[%s4] sm:$0xf]
        %v429 = vld [vmem:[%s4 + $0x4] sm:$0xf]
        %v430 = vld [vmem:[%s4 + $0x8] sm:$0xf]
        %v431 = vld [vmem:[%s4 + $0xc] sm:$0xf]
        %v432 = vld [vmem:[%s6] sm:$0xf]
        %v433 = vld [vmem:[%s2] sm:$0xff]
        %v434 = vld [vmem:[%s2 + $0x8] sm:$0xff]
        %v435 = vld [vmem:[%s2 + $0x10] sm:$0xff]
        %v436 = vld [vmem:[%s2 + $0x18] sm:$0xff]
        %v437 = vld [vmem:[%s3] sm:$0xff]
        %v438 = vld [vmem:[%s3 + $0x8] sm:$0xff]
        %v439 = vld [vmem:[%s3 + $0x10] sm:$0xff]
        %v440 = vld [vmem:[%s3 + $0x18] sm:$0xff]
        %v441 = vld [vmem:[%s5] sm:$0xff]
        %v442 = vld [vmem:[%s5 + $0x8] sm:$0xff]
        %v443 = vld [vmem:[%s5 + $0x10] sm:$0xff]
        %v444 = vld [vmem:[%s5 + $0x18] sm:$0xff]
        %v445 = vld [vmem:[%s7] sm:$0xff]
        %s446 = smul.u32 %s38, 32
        %v447 = vld [vmem:[%s399] sm:$0xff]
        %v448 = vld [vmem:[%s405] sm:$0x1]
        %v449 = vld [vmem:[%s365] sm:$0xff]
        %s450 = scvt.s32.f32 %s446
        %s451 = smul.f32 %s450, 0.015625
        %v452 = vstv %s451
        %v453 = vmul.f32 %v452, %v433
        %v454 = vmul.f32 %v452, %v434
        %v455 = vmul.f32 %v452, %v435
        %v456 = vmul.f32 %v452, %v436
        %v457 = vadd.f32 %v437, %v453
        %v458 = vadd.f32 %v438, %v454
        %v459 = vadd.f32 %v439, %v455
        %v460 = vadd.f32 %v440, %v456
        %v461 = vpack.c.bf16 %v447, %v447
        %463 = vset.pattern.permute.xlu0 0
        %464 = vperm.xlu0 %463, %v457
        %v465 = vpop.permute.xlu0 %464
        %468 = vset.pattern.permute.xlu0 0
        %469 = vperm.xlu0 %468, %v458
        %v470 = vpop.permute.xlu0 %469
        %473 = vset.pattern.permute.xlu0 0
        %474 = vperm.xlu0 %473, %v459
        %v475 = vpop.permute.xlu0 %474
        %478 = vset.pattern.permute.xlu0 0
        %479 = vperm.xlu0 %478, %v460
        %v480 = vpop.permute.xlu0 %479
        %v486 = vunpack.c.l.b16 %v424
        %v487 = vunpack.c.l.b16 %v425
        %v488 = vunpack.c.l.b16 %v426
        %v489 = vunpack.c.l.b16 %v427
        %v490 = vpack.c.b16 %v487, %v486
        %v491 = vpack.c.b16 %v489, %v488
        %vm492 = vcmask 64512
        %v494 = vsel %vm492, %v490, 0
        %v497 = vsel %vm492, %v491, 0
        %vm499 = vcmask 1043456
        %v501 = vsel %vm499, %v461, 0
        %503 = vmatprep.subr.bf16.mxu0 0
        %504 = vmatpush1.bf16.msra.mxu0 %v501
        %505 = vmatprep.subr.bf16.mxu0 0
        %506 = vmatpush1.bf16.msra.mxu0 0
        %507 = vmatprep.subr.bf16.mxu0 0
        %508 = vmatpush1.bf16.msra.mxu0 0
        %509 = vmatprep.subr.bf16.mxu0 0
        %510 = vmatpush1.bf16.msra.mxu0 0
        %511 = vmatprep.subr.bf16.mxu0 0
        %512 = vmatpush1.bf16.msra.mxu0 0
        %513 = vmatprep.subr.bf16.mxu0 0
        %514 = vmatpush1.bf16.msra.mxu0 0
        %515 = vmatprep.subr.bf16.mxu0 0
        %516 = vmatpush1.bf16.msra.mxu0 0
        %517 = vmatprep.subr.bf16.mxu0 0
        %518 = vmatpush1.bf16.msra.mxu0 0
        %519 = vmatprep.subr.bf16.mxu0 0
        %520 = vmatpush1.bf16.msra.mxu0 0
        %521 = vmatprep.subr.bf16.mxu0 0
        %522 = vmatpush1.bf16.msra.mxu0 0
        %523 = vmatprep.subr.bf16.mxu0 0
        %524 = vmatpush1.bf16.msra.mxu0 0
        %525 = vmatprep.subr.bf16.mxu0 0
        %526 = vmatpush1.bf16.msra.mxu0 0
        %527 = vmatprep.subr.bf16.mxu0 0
        %528 = vmatpush1.bf16.msra.mxu0 0
        %529 = vmatprep.subr.bf16.mxu0 0
        %530 = vmatpush1.bf16.msra.mxu0 0
        %531 = vmatprep.subr.bf16.mxu0 0
        %532 = vmatpush1.bf16.msra.mxu0 0
        %533 = vmatprep.subr.bf16.mxu0 0
        %534 = vmatpush1.bf16.msra.mxu0 0
        %535 = vmatprep.mubr.bf16.mxu0 0
        %536 = vmatmul.mubr.bf16.gmra.mrb[0].mxu0 %v494
        %v537 = vpop.f32.mrb[0].mxu0
        %v538 = vadd.f32 %v465, %v537
        %v539 = vpop.f32.mrb[0].mxu0
        %v540 = vpop.f32.mrb[0].mxu0
        %v541 = vadd.f32 %v470, %v540
        %v542 = vpop.f32.mrb[0].mxu0
        %543 = vmatprep.mubr.bf16.mxu0 0
        %544 = vmatmul.mubr.bf16.gmra.mrb[0].mxu0 %v497
        %v545 = vpop.f32.mrb[0].mxu0
        %v546 = vadd.f32 %v475, %v545
        %v547 = vpop.f32.mrb[0].mxu0
        %v548 = vpop.f32.mrb[0].mxu0
        %v549 = vadd.f32 %v480, %v548
        %v550 = vpop.f32.mrb[0].mxu0
        %551 = vdwg.mxu0
        %v552 = vmax.f32 %v538, 0.0
        %v553 = vmax.f32 %v541, 0.0
        %v554 = vmax.f32 %v546, 0.0
        %v555 = vmax.f32 %v549, 0.0
        %v556 = vpack.c.bf16 %v553, %v552
        %v557 = vpack.c.bf16 %v555, %v554
        %559 = vset.pattern.permute.xlu0 0
        %560 = vperm.xlu0 %559, %v441
        %v561 = vpop.permute.xlu0 %560
        %564 = vset.pattern.permute.xlu0 0
        %565 = vperm.xlu0 %564, %v442
        %v566 = vpop.permute.xlu0 %565
        %569 = vset.pattern.permute.xlu0 0
        %570 = vperm.xlu0 %569, %v443
        %v571 = vpop.permute.xlu0 %570
        %574 = vset.pattern.permute.xlu0 0
        %575 = vperm.xlu0 %574, %v444
        %v576 = vpop.permute.xlu0 %575
        %v582 = vunpack.c.l.b16 %v428
        %v583 = vunpack.c.l.b16 %v429
        %v584 = vunpack.c.l.b16 %v430
        %v585 = vunpack.c.l.b16 %v431
        %v586 = vpack.c.b16 %v583, %v582
        %v587 = vpack.c.b16 %v585, %v584
        %vm588 = vcmask 261120
        %v590 = vsel %vm588, %v586, 0
        %v593 = vsel %vm588, %v587, 0
        %595 = vmatprep.subr.bf16.mxu0 0
        %596 = vmatpush1.bf16.msra.mxu0 %v556
        %597 = vmatprep.subr.bf16.mxu0 0
        %598 = vmatpush1.bf16.msra.mxu0 %v557
        %599 = vmatprep.subr.bf16.mxu0 0
        %600 = vmatpush1.bf16.msra.mxu0 0
        %601 = vmatprep.subr.bf16.mxu0 0
        %602 = vmatpush1.bf16.msra.mxu0 0
        %603 = vmatprep.subr.bf16.mxu0 0
        %604 = vmatpush1.bf16.msra.mxu0 0
        %605 = vmatprep.subr.bf16.mxu0 0
        %606 = vmatpush1.bf16.msra.mxu0 0
        %607 = vmatprep.subr.bf16.mxu0 0
        %608 = vmatpush1.bf16.msra.mxu0 0
        %609 = vmatprep.subr.bf16.mxu0 0
        %610 = vmatpush1.bf16.msra.mxu0 0
        %611 = vmatprep.subr.bf16.mxu0 0
        %612 = vmatpush1.bf16.msra.mxu0 0
        %613 = vmatprep.subr.bf16.mxu0 0
        %614 = vmatpush1.bf16.msra.mxu0 0
        %615 = vmatprep.subr.bf16.mxu0 0
        %616 = vmatpush1.bf16.msra.mxu0 0
        %617 = vmatprep.subr.bf16.mxu0 0
        %618 = vmatpush1.bf16.msra.mxu0 0
        %619 = vmatprep.subr.bf16.mxu0 0
        %620 = vmatpush1.bf16.msra.mxu0 0
        %621 = vmatprep.subr.bf16.mxu0 0
        %622 = vmatpush1.bf16.msra.mxu0 0
        %623 = vmatprep.subr.bf16.mxu0 0
        %624 = vmatpush1.bf16.msra.mxu0 0
        %625 = vmatprep.subr.bf16.mxu0 0
        %626 = vmatpush1.bf16.msra.mxu0 0
        %627 = vmatprep.mubr.bf16.mxu0 0
        %628 = vmatmul.mubr.bf16.gmra.mrb[0].mxu0 %v590
        %v629 = vpop.f32.mrb[0].mxu0
        %v630 = vadd.f32 %v561, %v629
        %v631 = vpop.f32.mrb[0].mxu0
        %v632 = vpop.f32.mrb[0].mxu0
        %v633 = vadd.f32 %v566, %v632
        %v634 = vpop.f32.mrb[0].mxu0
        %635 = vmatprep.mubr.bf16.mxu0 0
        %636 = vmatmul.mubr.bf16.gmra.mrb[0].mxu0 %v593
        %v637 = vpop.f32.mrb[0].mxu0
        %v638 = vadd.f32 %v571, %v637
        %v639 = vpop.f32.mrb[0].mxu0
        %v640 = vpop.f32.mrb[0].mxu0
        %v641 = vadd.f32 %v576, %v640
        %v642 = vpop.f32.mrb[0].mxu0
        %643 = vdwg.mxu0
        %v644 = vmax.f32 %v630, 0.0
        %v645 = vmax.f32 %v633, 0.0
        %v646 = vmax.f32 %v638, 0.0
        %v647 = vmax.f32 %v641, 0.0
        %v648 = vpack.c.bf16 %v645, %v644
        %v649 = vpack.c.bf16 %v647, %v646
        %651 = vset.pattern.permute.xlu0 0
        %652 = vperm.xlu0 %651, %v445
        %v653 = vpop.permute.xlu0 %652
        %v656 = vsel %vm588, %v432, 0
        %658 = vmatprep.subr.bf16.mxu0 0
        %659 = vmatpush1.bf16.msra.mxu0 %v648
        %660 = vmatprep.subr.bf16.mxu0 0
        %661 = vmatpush1.bf16.msra.mxu0 %v649
        %662 = vmatprep.subr.bf16.mxu0 0
        %663 = vmatpush1.bf16.msra.mxu0 0
        %664 = vmatprep.subr.bf16.mxu0 0
        %665 = vmatpush1.bf16.msra.mxu0 0
        %666 = vmatprep.subr.bf16.mxu0 0
        %667 = vmatpush1.bf16.msra.mxu0 0
        %668 = vmatprep.subr.bf16.mxu0 0
        %669 = vmatpush1.bf16.msra.mxu0 0
        %670 = vmatprep.subr.bf16.mxu0 0
        %671 = vmatpush1.bf16.msra.mxu0 0
        %672 = vmatprep.subr.bf16.mxu0 0
        %673 = vmatpush1.bf16.msra.mxu0 0
        %674 = vmatprep.subr.bf16.mxu0 0
        %675 = vmatpush1.bf16.msra.mxu0 0
        %676 = vmatprep.subr.bf16.mxu0 0
        %677 = vmatpush1.bf16.msra.mxu0 0
        %678 = vmatprep.subr.bf16.mxu0 0
        %679 = vmatpush1.bf16.msra.mxu0 0
        %680 = vmatprep.subr.bf16.mxu0 0
        %681 = vmatpush1.bf16.msra.mxu0 0
        %682 = vmatprep.subr.bf16.mxu0 0
        %683 = vmatpush1.bf16.msra.mxu0 0
        %684 = vmatprep.subr.bf16.mxu0 0
        %685 = vmatpush1.bf16.msra.mxu0 0
        %686 = vmatprep.subr.bf16.mxu0 0
        %687 = vmatpush1.bf16.msra.mxu0 0
        %688 = vmatprep.subr.bf16.mxu0 0
        %689 = vmatpush1.bf16.msra.mxu0 0
        %690 = vmatprep.mubr.bf16.mxu0 0
        %691 = vmatmul.mubr.bf16.gmra.mrb[0].mxu0 %v656
        %v692 = vpop.f32.mrb[0].mxu0
        %v693 = vadd.f32 %v653, %v692
        %v694 = vpop.f32.mrb[0].mxu0
        %v695 = vpop.f32.mrb[0].mxu0
        %v696 = vpop.f32.mrb[0].mxu0
        %697 = vdwg.mxu0
        %v698 = vmul.f32 %v693, %v449
        %v699 = vrot.slane %v698, 4
        %v700 = vadd.f32 %v698, %v699
        %v701 = vrot.slane %v700, 2
        %v702 = vadd.f32 %v700, %v701
        %v703 = vrot.slane %v702, 1
        %v704 = vadd.f32 %v702, %v703
        %v705 = vmul.f32 %v449, 0.2
        %v706 = vadd.f32 %v705, 1.0007813
        %v707 = vmul.f32 %v447, %v706
        %v708 = vmul.f32 %v448, 1.0004687
        %v709 = vadd.f32 %v708, %v704
        %s710 = scalar_lea.vmem %s365, 8 [#allocation3]
        %v711 = vld [vmem:[%s710] sm:$0xff]
        %s712 = sadd.s32 %s446, 1
        %s713 = scvt.s32.f32 %s712
        %s714 = smul.f32 %s713, 0.015625
        %v715 = vstv %s714
        %v716 = vmul.f32 %v715, %v433
        %v717 = vmul.f32 %v715, %v434
        %v718 = vmul.f32 %v715, %v435
        %v719 = vmul.f32 %v715, %v436
        %v720 = vadd.f32 %v437, %v716
        %v721 = vadd.f32 %v438, %v717
        %v722 = vadd.f32 %v439, %v718
        %v723 = vadd.f32 %v440, %v719
        %v724 = vpack.c.bf16 %v707, %v707
        %726 = vset.pattern.permute.xlu0 0
        %727 = vperm.xlu0 %726, %v720
        %v728 = vpop.permute.xlu0 %727
        %731 = vset.pattern.permute.xlu0 0
        %732 = vperm.xlu0 %731, %v721
        %v733 = vpop.permute.xlu0 %732
        %736 = vset.pattern.permute.xlu0 0
        %737 = vperm.xlu0 %736, %v722
        %v738 = vpop.permute.xlu0 %737
        %741 = vset.pattern.permute.xlu0 0
        %742 = vperm.xlu0 %741, %v723
        %v743 = vpop.permute.xlu0 %742
        %v746 = vsel %vm499, %v724, 0
        %748 = vmatprep.subr.bf16.mxu0 0
        %749 = vmatpush1.bf16.msra.mxu0 %v746
        %750 = vmatprep.subr.bf16.mxu0 0
        %751 = vmatpush1.bf16.msra.mxu0 0
        %752 = vmatprep.subr.bf16.mxu0 0
        %753 = vmatpush1.bf16.msra.mxu0 0
        %754 = vmatprep.subr.bf16.mxu0 0
        %755 = vmatpush1.bf16.msra.mxu0 0
        %756 = vmatprep.subr.bf16.mxu0 0
        %757 = vmatpush1.bf16.msra.mxu0 0
        %758 = vmatprep.subr.bf16.mxu0 0
        %759 = vmatpush1.bf16.msra.mxu0 0
        %760 = vmatprep.subr.bf16.mxu0 0
        %761 = vmatpush1.bf16.msra.mxu0 0
        %762 = vmatprep.subr.bf16.mxu0 0
        %763 = vmatpush1.bf16.msra.mxu0 0
        %764 = vmatprep.subr.bf16.mxu0 0
        %765 = vmatpush1.bf16.msra.mxu0 0
        %766 = vmatprep.subr.bf16.mxu0 0
        %767 = vmatpush1.bf16.msra.mxu0 0
        %768 = vmatprep.subr.bf16.mxu0 0
        %769 = vmatpush1.bf16.msra.mxu0 0
        %770 = vmatprep.subr.bf16.mxu0 0
        %771 = vmatpush1.bf16.msra.mxu0 0
        %772 = vmatprep.subr.bf16.mxu0 0
        %773 = vmatpush1.bf16.msra.mxu0 0
        %774 = vmatprep.subr.bf16.mxu0 0
        %775 = vmatpush1.bf16.msra.mxu0 0
        %776 = vmatprep.subr.bf16.mxu0 0
        %777 = vmatpush1.bf16.msra.mxu0 0
        %778 = vmatprep.subr.bf16.mxu0 0
        %779 = vmatpush1.bf16.msra.mxu0 0
        %780 = vmatprep.mubr.bf16.mxu0 0
        %781 = vmatmul.mubr.bf16.gmra.mrb[0].mxu0 %v494
        %v782 = vpop.f32.mrb[0].mxu0
        %v783 = vadd.f32 %v728, %v782
        %v784 = vpop.f32.mrb[0].mxu0
        %v785 = vpop.f32.mrb[0].mxu0
        %v786 = vadd.f32 %v733, %v785
        %v787 = vpop.f32.mrb[0].mxu0
        %788 = vmatprep.mubr.bf16.mxu0 0
        %789 = vmatmul.mubr.bf16.gmra.mrb[0].mxu0 %v497
        %v790 = vpop.f32.mrb[0].mxu0
        %v791 = vadd.f32 %v738, %v790
        %v792 = vpop.f32.mrb[0].mxu0
        %v793 = vpop.f32.mrb[0].mxu0
        %v794 = vadd.f32 %v743, %v793
        %v795 = vpop.f32.mrb[0].mxu0
        %796 = vdwg.mxu0
        %v797 = vmax.f32 %v783, 0.0
        %v798 = vmax.f32 %v786, 0.0
        %v799 = vmax.f32 %v791, 0.0
        %v800 = vmax.f32 %v794, 0.0
        %v801 = vpack.c.bf16 %v798, %v797
        %v802 = vpack.c.bf16 %v800, %v799
        %803 = vmatprep.subr.bf16.mxu0 0
        %804 = vmatpush1.bf16.msra.mxu0 %v801
        %805 = vmatprep.subr.bf16.mxu0 0
        %806 = vmatpush1.bf16.msra.mxu0 %v802
        %807 = vmatprep.subr.bf16.mxu0 0
        %808 = vmatpush1.bf16.msra.mxu0 0
        %809 = vmatprep.subr.bf16.mxu0 0
        %810 = vmatpush1.bf16.msra.mxu0 0
        %811 = vmatprep.subr.bf16.mxu0 0
        %812 = vmatpush1.bf16.msra.mxu0 0
        %813 = vmatprep.subr.bf16.mxu0 0
        %814 = vmatpush1.bf16.msra.mxu0 0
        %815 = vmatprep.subr.bf16.mxu0 0
        %816 = vmatpush1.bf16.msra.mxu0 0
        %817 = vmatprep.subr.bf16.mxu0 0
        %818 = vmatpush1.bf16.msra.mxu0 0
        %819 = vmatprep.subr.bf16.mxu0 0
        %820 = vmatpush1.bf16.msra.mxu0 0
        %821 = vmatprep.subr.bf16.mxu0 0
        %822 = vmatpush1.bf16.msra.mxu0 0
        %823 = vmatprep.subr.bf16.mxu0 0
        %824 = vmatpush1.bf16.msra.mxu0 0
        %825 = vmatprep.subr.bf16.mxu0 0
        %826 = vmatpush1.bf16.msra.mxu0 0
        %827 = vmatprep.subr.bf16.mxu0 0
        %828 = vmatpush1.bf16.msra.mxu0 0
        %829 = vmatprep.subr.bf16.mxu0 0
        %830 = vmatpush1.bf16.msra.mxu0 0
        %831 = vmatprep.subr.bf16.mxu0 0
        %832 = vmatpush1.bf16.msra.mxu0 0
        %833 = vmatprep.subr.bf16.mxu0 0
        %834 = vmatpush1.bf16.msra.mxu0 0
        %835 = vmatprep.mubr.bf16.mxu0 0
        %836 = vmatmul.mubr.bf16.gmra.mrb[0].mxu0 %v590
        %v837 = vpop.f32.mrb[0].mxu0
        %v838 = vadd.f32 %v561, %v837
        %v839 = vpop.f32.mrb[0].mxu0
        %v840 = vpop.f32.mrb[0].mxu0
        %v841 = vadd.f32 %v566, %v840
        %v842 = vpop.f32.mrb[0].mxu0
        %843 = vmatprep.mubr.bf16.mxu0 0
        %844 = vmatmul.mubr.bf16.gmra.mrb[0].mxu0 %v593
        %v845 = vpop.f32.mrb[0].mxu0
        %v846 = vadd.f32 %v571, %v845
        %v847 = vpop.f32.mrb[0].mxu0
        %v848 = vpop.f32.mrb[0].mxu0
        %v849 = vadd.f32 %v576, %v848
        %v850 = vpop.f32.mrb[0].mxu0
        %851 = vdwg.mxu0
        %v852 = vmax.f32 %v838, 0.0
        %v853 = vmax.f32 %v841, 0.0
        %v854 = vmax.f32 %v846, 0.0
        %v855 = vmax.f32 %v849, 0.0
        %v856 = vpack.c.bf16 %v853, %v852
        %v857 = vpack.c.bf16 %v855, %v854
        %858 = vmatprep.subr.bf16.mxu0 0
        %859 = vmatpush1.bf16.msra.mxu0 %v856
        %860 = vmatprep.subr.bf16.mxu0 0
        %861 = vmatpush1.bf16.msra.mxu0 %v857
        %862 = vmatprep.subr.bf16.mxu0 0
        %863 = vmatpush1.bf16.msra.mxu0 0
        %864 = vmatprep.subr.bf16.mxu0 0
        %865 = vmatpush1.bf16.msra.mxu0 0
        %866 = vmatprep.subr.bf16.mxu0 0
        %867 = vmatpush1.bf16.msra.mxu0 0
        %868 = vmatprep.subr.bf16.mxu0 0
        %869 = vmatpush1.bf16.msra.mxu0 0
        %870 = vmatprep.subr.bf16.mxu0 0
        %871 = vmatpush1.bf16.msra.mxu0 0
        %872 = vmatprep.subr.bf16.mxu0 0
        %873 = vmatpush1.bf16.msra.mxu0 0
        %874 = vmatprep.subr.bf16.mxu0 0
        %875 = vmatpush1.bf16.msra.mxu0 0
        %876 = vmatprep.subr.bf16.mxu0 0
        %877 = vmatpush1.bf16.msra.mxu0 0
        %878 = vmatprep.subr.bf16.mxu0 0
        %879 = vmatpush1.bf16.msra.mxu0 0
        %880 = vmatprep.subr.bf16.mxu0 0
        %881 = vmatpush1.bf16.msra.mxu0 0
        %882 = vmatprep.subr.bf16.mxu0 0
        %883 = vmatpush1.bf16.msra.mxu0 0
        %884 = vmatprep.subr.bf16.mxu0 0
        %885 = vmatpush1.bf16.msra.mxu0 0
        %886 = vmatprep.subr.bf16.mxu0 0
        %887 = vmatpush1.bf16.msra.mxu0 0
        %888 = vmatprep.subr.bf16.mxu0 0
        %889 = vmatpush1.bf16.msra.mxu0 0
        %890 = vmatprep.mubr.bf16.mxu0 0
        %891 = vmatmul.mubr.bf16.gmra.mrb[0].mxu0 %v656
        %v892 = vpop.f32.mrb[0].mxu0
        %v893 = vadd.f32 %v653, %v892
        %v894 = vpop.f32.mrb[0].mxu0
        %v895 = vpop.f32.mrb[0].mxu0
        %v896 = vpop.f32.mrb[0].mxu0
        %897 = vdwg.mxu0
        %v898 = vmul.f32 %v893, %v711
        %v899 = vrot.slane %v898, 4
        %v900 = vadd.f32 %v898, %v899
        %v901 = vrot.slane %v900, 2
        %v902 = vadd.f32 %v900, %v901
        %v903 = vrot.slane %v902, 1
        %v904 = vadd.f32 %v902, %v903
        %v905 = vmul.f32 %v711, 0.2
        %v906 = vadd.f32 %v905, 1.0007813
        %v907 = vmul.f32 %v707, %v906
        %v908 = vmul.f32 %v709, 1.0004687
        %v909 = vadd.f32 %v908, %v904
        %s910 = scalar_lea.vmem %s365, 16 [#allocation3]
        %v911 = vld [vmem:[%s910] sm:$0xff]
        %s912 = sadd.s32 %s446, 2
        %s913 = scvt.s32.f32 %s912
        %s914 = smul.f32 %s913, 0.015625
        %v915 = vstv %s914
        %v916 = vmul.f32 %v915, %v433
        %v917 = vmul.f32 %v915, %v434
        %v918 = vmul.f32 %v915, %v435
        %v919 = vmul.f32 %v915, %v436
        %v920 = vadd.f32 %v437, %v916
        %v921 = vadd.f32 %v438, %v917
        %v922 = vadd.f32 %v439, %v918
        %v923 = vadd.f32 %v440, %v919
        %v924 = vpack.c.bf16 %v907, %v907
        %926 = vset.pattern.permute.xlu0 0
        %927 = vperm.xlu0 %926, %v920
        %v928 = vpop.permute.xlu0 %927
        %931 = vset.pattern.permute.xlu0 0
        %932 = vperm.xlu0 %931, %v921
        %v933 = vpop.permute.xlu0 %932
        %936 = vset.pattern.permute.xlu0 0
        %937 = vperm.xlu0 %936, %v922
        %v938 = vpop.permute.xlu0 %937
        %941 = vset.pattern.permute.xlu0 0
        %942 = vperm.xlu0 %941, %v923
        %v943 = vpop.permute.xlu0 %942
        %v946 = vsel %vm499, %v924, 0
        %948 = vmatprep.subr.bf16.mxu0 0
        %949 = vmatpush1.bf16.msra.mxu0 %v946
        %950 = vmatprep.subr.bf16.mxu0 0
        %951 = vmatpush1.bf16.msra.mxu0 0
        %952 = vmatprep.subr.bf16.mxu0 0
        %953 = vmatpush1.bf16.msra.mxu0 0
        %954 = vmatprep.subr.bf16.mxu0 0
        %955 = vmatpush1.bf16.msra.mxu0 0
        %956 = vmatprep.subr.bf16.mxu0 0
        %957 = vmatpush1.bf16.msra.mxu0 0
        %958 = vmatprep.subr.bf16.mxu0 0
        %959 = vmatpush1.bf16.msra.mxu0 0
        %960 = vmatprep.subr.bf16.mxu0 0
        %961 = vmatpush1.bf16.msra.mxu0 0
        %962 = vmatprep.subr.bf16.mxu0 0
        %963 = vmatpush1.bf16.msra.mxu0 0
        %964 = vmatprep.subr.bf16.mxu0 0
        %965 = vmatpush1.bf16.msra.mxu0 0
        %966 = vmatprep.subr.bf16.mxu0 0
        %967 = vmatpush1.bf16.msra.mxu0 0
        %968 = vmatprep.subr.bf16.mxu0 0
        %969 = vmatpush1.bf16.msra.mxu0 0
        %970 = vmatprep.subr.bf16.mxu0 0
        %971 = vmatpush1.bf16.msra.mxu0 0
        %972 = vmatprep.subr.bf16.mxu0 0
        %973 = vmatpush1.bf16.msra.mxu0 0
        %974 = vmatprep.subr.bf16.mxu0 0
        %975 = vmatpush1.bf16.msra.mxu0 0
        %976 = vmatprep.subr.bf16.mxu0 0
        %977 = vmatpush1.bf16.msra.mxu0 0
        %978 = vmatprep.subr.bf16.mxu0 0
        %979 = vmatpush1.bf16.msra.mxu0 0
        %980 = vmatprep.mubr.bf16.mxu0 0
        %981 = vmatmul.mubr.bf16.gmra.mrb[0].mxu0 %v494
        %v982 = vpop.f32.mrb[0].mxu0
        %v983 = vadd.f32 %v928, %v982
        %v984 = vpop.f32.mrb[0].mxu0
        %v985 = vpop.f32.mrb[0].mxu0
        %v986 = vadd.f32 %v933, %v985
        %v987 = vpop.f32.mrb[0].mxu0
        %988 = vmatprep.mubr.bf16.mxu0 0
        %989 = vmatmul.mubr.bf16.gmra.mrb[0].mxu0 %v497
        %v990 = vpop.f32.mrb[0].mxu0
        %v991 = vadd.f32 %v938, %v990
        %v992 = vpop.f32.mrb[0].mxu0
        %v993 = vpop.f32.mrb[0].mxu0
        %v994 = vadd.f32 %v943, %v993
        %v995 = vpop.f32.mrb[0].mxu0
        %996 = vdwg.mxu0
        %v997 = vmax.f32 %v983, 0.0
        %v998 = vmax.f32 %v986, 0.0
        %v999 = vmax.f32 %v991, 0.0
        %v1000 = vmax.f32 %v994, 0.0
        %v1001 = vpack.c.bf16 %v998, %v997
        %v1002 = vpack.c.bf16 %v1000, %v999
        %1003 = vmatprep.subr.bf16.mxu0 0
        %1004 = vmatpush1.bf16.msra.mxu0 %v1001
        %1005 = vmatprep.subr.bf16.mxu0 0
        %1006 = vmatpush1.bf16.msra.mxu0 %v1002
        %1007 = vmatprep.subr.bf16.mxu0 0
        %1008 = vmatpush1.bf16.msra.mxu0 0
        %1009 = vmatprep.subr.bf16.mxu0 0
        %1010 = vmatpush1.bf16.msra.mxu0 0
        %1011 = vmatprep.subr.bf16.mxu0 0
        %1012 = vmatpush1.bf16.msra.mxu0 0
        %1013 = vmatprep.subr.bf16.mxu0 0
        %1014 = vmatpush1.bf16.msra.mxu0 0
        %1015 = vmatprep.subr.bf16.mxu0 0
        %1016 = vmatpush1.bf16.msra.mxu0 0
        %1017 = vmatprep.subr.bf16.mxu0 0
        %1018 = vmatpush1.bf16.msra.mxu0 0
        %1019 = vmatprep.subr.bf16.mxu0 0
        %1020 = vmatpush1.bf16.msra.mxu0 0
        %1021 = vmatprep.subr.bf16.mxu0 0
        %1022 = vmatpush1.bf16.msra.mxu0 0
        %1023 = vmatprep.subr.bf16.mxu0 0
        %1024 = vmatpush1.bf16.msra.mxu0 0
        %1025 = vmatprep.subr.bf16.mxu0 0
        %1026 = vmatpush1.bf16.msra.mxu0 0
        %1027 = vmatprep.subr.bf16.mxu0 0
        %1028 = vmatpush1.bf16.msra.mxu0 0
        %1029 = vmatprep.subr.bf16.mxu0 0
        %1030 = vmatpush1.bf16.msra.mxu0 0
        %1031 = vmatprep.subr.bf16.mxu0 0
        %1032 = vmatpush1.bf16.msra.mxu0 0
        %1033 = vmatprep.subr.bf16.mxu0 0
        %1034 = vmatpush1.bf16.msra.mxu0 0
        %1035 = vmatprep.mubr.bf16.mxu0 0
        %1036 = vmatmul.mubr.bf16.gmra.mrb[0].mxu0 %v590
        %v1037 = vpop.f32.mrb[0].mxu0
        %v1038 = vadd.f32 %v561, %v1037
        %v1039 = vpop.f32.mrb[0].mxu0
        %v1040 = vpop.f32.mrb[0].mxu0
        %v1041 = vadd.f32 %v566, %v1040
        %v1042 = vpop.f32.mrb[0].mxu0
        %1043 = vmatprep.mubr.bf16.mxu0 0
        %1044 = vmatmul.mubr.bf16.gmra.mrb[0].mxu0 %v593
        %v1045 = vpop.f32.mrb[0].mxu0
        %v1046 = vadd.f32 %v571, %v1045
        %v1047 = vpop.f32.mrb[0].mxu0
        %v1048 = vpop.f32.mrb[0].mxu0
        %v1049 = vadd.f32 %v576, %v1048
        %v1050 = vpop.f32.mrb[0].mxu0
        %1051 = vdwg.mxu0
        %v1052 = vmax.f32 %v1038, 0.0
        %v1053 = vmax.f32 %v1041, 0.0
        %v1054 = vmax.f32 %v1046, 0.0
        %v1055 = vmax.f32 %v1049, 0.0
        %v1056 = vpack.c.bf16 %v1053, %v1052
        %v1057 = vpack.c.bf16 %v1055, %v1054
        %1058 = vmatprep.subr.bf16.mxu0 0
        %1059 = vmatpush1.bf16.msra.mxu0 %v1056
        %1060 = vmatprep.subr.bf16.mxu0 0
        %1061 = vmatpush1.bf16.msra.mxu0 %v1057
        %1062 = vmatprep.subr.bf16.mxu0 0
        %1063 = vmatpush1.bf16.msra.mxu0 0
        %1064 = vmatprep.subr.bf16.mxu0 0
        %1065 = vmatpush1.bf16.msra.mxu0 0
        %1066 = vmatprep.subr.bf16.mxu0 0
        %1067 = vmatpush1.bf16.msra.mxu0 0
        %1068 = vmatprep.subr.bf16.mxu0 0
        %1069 = vmatpush1.bf16.msra.mxu0 0
        %1070 = vmatprep.subr.bf16.mxu0 0
        %1071 = vmatpush1.bf16.msra.mxu0 0
        %1072 = vmatprep.subr.bf16.mxu0 0
        %1073 = vmatpush1.bf16.msra.mxu0 0
        %1074 = vmatprep.subr.bf16.mxu0 0
        %1075 = vmatpush1.bf16.msra.mxu0 0
        %1076 = vmatprep.subr.bf16.mxu0 0
        %1077 = vmatpush1.bf16.msra.mxu0 0
        %1078 = vmatprep.subr.bf16.mxu0 0
        %1079 = vmatpush1.bf16.msra.mxu0 0
        %1080 = vmatprep.subr.bf16.mxu0 0
        %1081 = vmatpush1.bf16.msra.mxu0 0
        %1082 = vmatprep.subr.bf16.mxu0 0
        %1083 = vmatpush1.bf16.msra.mxu0 0
        %1084 = vmatprep.subr.bf16.mxu0 0
        %1085 = vmatpush1.bf16.msra.mxu0 0
        %1086 = vmatprep.subr.bf16.mxu0 0
        %1087 = vmatpush1.bf16.msra.mxu0 0
        %1088 = vmatprep.subr.bf16.mxu0 0
        %1089 = vmatpush1.bf16.msra.mxu0 0
        %1090 = vmatprep.mubr.bf16.mxu0 0
        %1091 = vmatmul.mubr.bf16.gmra.mrb[0].mxu0 %v656
        %v1092 = vpop.f32.mrb[0].mxu0
        %v1093 = vadd.f32 %v653, %v1092
        %v1094 = vpop.f32.mrb[0].mxu0
        %v1095 = vpop.f32.mrb[0].mxu0
        %v1096 = vpop.f32.mrb[0].mxu0
        %1097 = vdwg.mxu0
        %v1098 = vmul.f32 %v1093, %v911
        %v1099 = vrot.slane %v1098, 4
        %v1100 = vadd.f32 %v1098, %v1099
        %v1101 = vrot.slane %v1100, 2
        %v1102 = vadd.f32 %v1100, %v1101
        %v1103 = vrot.slane %v1102, 1
        %v1104 = vadd.f32 %v1102, %v1103
        %v1105 = vmul.f32 %v911, 0.2
        %v1106 = vadd.f32 %v1105, 1.0007813
        %v1107 = vmul.f32 %v907, %v1106
        %v1108 = vmul.f32 %v909, 1.0004687
        %v1109 = vadd.f32 %v1108, %v1104
        %s1110 = scalar_lea.vmem %s365, 24 [#allocation3]
        %v1111 = vld [vmem:[%s1110] sm:$0xff]
        %s1112 = sadd.s32 %s446, 3
        %s1113 = scvt.s32.f32 %s1112
        %s1114 = smul.f32 %s1113, 0.015625
        %v1115 = vstv %s1114
        %v1116 = vmul.f32 %v1115, %v433
        %v1117 = vmul.f32 %v1115, %v434
        %v1118 = vmul.f32 %v1115, %v435
        %v1119 = vmul.f32 %v1115, %v436
        %v1120 = vadd.f32 %v437, %v1116
        %v1121 = vadd.f32 %v438, %v1117
        %v1122 = vadd.f32 %v439, %v1118
        %v1123 = vadd.f32 %v440, %v1119
        %v1124 = vpack.c.bf16 %v1107, %v1107
        %1126 = vset.pattern.permute.xlu0 0
        %1127 = vperm.xlu0 %1126, %v1120
        %v1128 = vpop.permute.xlu0 %1127
        %1131 = vset.pattern.permute.xlu0 0
        %1132 = vperm.xlu0 %1131, %v1121
        %v1133 = vpop.permute.xlu0 %1132
        %1136 = vset.pattern.permute.xlu0 0
        %1137 = vperm.xlu0 %1136, %v1122
        %v1138 = vpop.permute.xlu0 %1137
        %1141 = vset.pattern.permute.xlu0 0
        %1142 = vperm.xlu0 %1141, %v1123
        %v1143 = vpop.permute.xlu0 %1142
        %v1146 = vsel %vm499, %v1124, 0
        %1148 = vmatprep.subr.bf16.mxu0 0
        %1149 = vmatpush1.bf16.msra.mxu0 %v1146
        %1150 = vmatprep.subr.bf16.mxu0 0
        %1151 = vmatpush1.bf16.msra.mxu0 0
        %1152 = vmatprep.subr.bf16.mxu0 0
        %1153 = vmatpush1.bf16.msra.mxu0 0
        %1154 = vmatprep.subr.bf16.mxu0 0
        %1155 = vmatpush1.bf16.msra.mxu0 0
        %1156 = vmatprep.subr.bf16.mxu0 0
        %1157 = vmatpush1.bf16.msra.mxu0 0
        %1158 = vmatprep.subr.bf16.mxu0 0
        %1159 = vmatpush1.bf16.msra.mxu0 0
        %1160 = vmatprep.subr.bf16.mxu0 0
        %1161 = vmatpush1.bf16.msra.mxu0 0
        %1162 = vmatprep.subr.bf16.mxu0 0
        %1163 = vmatpush1.bf16.msra.mxu0 0
        %1164 = vmatprep.subr.bf16.mxu0 0
        %1165 = vmatpush1.bf16.msra.mxu0 0
        %1166 = vmatprep.subr.bf16.mxu0 0
        %1167 = vmatpush1.bf16.msra.mxu0 0
        %1168 = vmatprep.subr.bf16.mxu0 0
        %1169 = vmatpush1.bf16.msra.mxu0 0
        %1170 = vmatprep.subr.bf16.mxu0 0
        %1171 = vmatpush1.bf16.msra.mxu0 0
        %1172 = vmatprep.subr.bf16.mxu0 0
        %1173 = vmatpush1.bf16.msra.mxu0 0
        %1174 = vmatprep.subr.bf16.mxu0 0
        %1175 = vmatpush1.bf16.msra.mxu0 0
        %1176 = vmatprep.subr.bf16.mxu0 0
        %1177 = vmatpush1.bf16.msra.mxu0 0
        %1178 = vmatprep.subr.bf16.mxu0 0
        %1179 = vmatpush1.bf16.msra.mxu0 0
        %1180 = vmatprep.mubr.bf16.mxu0 0
        %1181 = vmatmul.mubr.bf16.gmra.mrb[0].mxu0 %v494
        %v1182 = vpop.f32.mrb[0].mxu0
        %v1183 = vadd.f32 %v1128, %v1182
        %v1184 = vpop.f32.mrb[0].mxu0
        %v1185 = vpop.f32.mrb[0].mxu0
        %v1186 = vadd.f32 %v1133, %v1185
        %v1187 = vpop.f32.mrb[0].mxu0
        %1188 = vmatprep.mubr.bf16.mxu0 0
        %1189 = vmatmul.mubr.bf16.gmra.mrb[0].mxu0 %v497
        %v1190 = vpop.f32.mrb[0].mxu0
        %v1191 = vadd.f32 %v1138, %v1190
        %v1192 = vpop.f32.mrb[0].mxu0
        %v1193 = vpop.f32.mrb[0].mxu0
        %v1194 = vadd.f32 %v1143, %v1193
        %v1195 = vpop.f32.mrb[0].mxu0
        %1196 = vdwg.mxu0
        %v1197 = vmax.f32 %v1183, 0.0
        %v1198 = vmax.f32 %v1186, 0.0
        %v1199 = vmax.f32 %v1191, 0.0
        %v1200 = vmax.f32 %v1194, 0.0
        %v1201 = vpack.c.bf16 %v1198, %v1197
        %v1202 = vpack.c.bf16 %v1200, %v1199
        %1203 = vmatprep.subr.bf16.mxu0 0
        %1204 = vmatpush1.bf16.msra.mxu0 %v1201
        %1205 = vmatprep.subr.bf16.mxu0 0
        %1206 = vmatpush1.bf16.msra.mxu0 %v1202
        %1207 = vmatprep.subr.bf16.mxu0 0
        %1208 = vmatpush1.bf16.msra.mxu0 0
        %1209 = vmatprep.subr.bf16.mxu0 0
        %1210 = vmatpush1.bf16.msra.mxu0 0
        %1211 = vmatprep.subr.bf16.mxu0 0
        %1212 = vmatpush1.bf16.msra.mxu0 0
        %1213 = vmatprep.subr.bf16.mxu0 0
        %1214 = vmatpush1.bf16.msra.mxu0 0
        %1215 = vmatprep.subr.bf16.mxu0 0
        %1216 = vmatpush1.bf16.msra.mxu0 0
        %1217 = vmatprep.subr.bf16.mxu0 0
        %1218 = vmatpush1.bf16.msra.mxu0 0
        %1219 = vmatprep.subr.bf16.mxu0 0
        %1220 = vmatpush1.bf16.msra.mxu0 0
        %1221 = vmatprep.subr.bf16.mxu0 0
        %1222 = vmatpush1.bf16.msra.mxu0 0
        %1223 = vmatprep.subr.bf16.mxu0 0
        %1224 = vmatpush1.bf16.msra.mxu0 0
        %1225 = vmatprep.subr.bf16.mxu0 0
        %1226 = vmatpush1.bf16.msra.mxu0 0
        %1227 = vmatprep.subr.bf16.mxu0 0
        %1228 = vmatpush1.bf16.msra.mxu0 0
        %1229 = vmatprep.subr.bf16.mxu0 0
        %1230 = vmatpush1.bf16.msra.mxu0 0
        %1231 = vmatprep.subr.bf16.mxu0 0
        %1232 = vmatpush1.bf16.msra.mxu0 0
        %1233 = vmatprep.subr.bf16.mxu0 0
        %1234 = vmatpush1.bf16.msra.mxu0 0
        %1235 = vmatprep.mubr.bf16.mxu0 0
        %1236 = vmatmul.mubr.bf16.gmra.mrb[0].mxu0 %v590
        %v1237 = vpop.f32.mrb[0].mxu0
        %v1238 = vadd.f32 %v561, %v1237
        %v1239 = vpop.f32.mrb[0].mxu0
        %v1240 = vpop.f32.mrb[0].mxu0
        %v1241 = vadd.f32 %v566, %v1240
        %v1242 = vpop.f32.mrb[0].mxu0
        %1243 = vmatprep.mubr.bf16.mxu0 0
        %1244 = vmatmul.mubr.bf16.gmra.mrb[0].mxu0 %v593
        %v1245 = vpop.f32.mrb[0].mxu0
        %v1246 = vadd.f32 %v571, %v1245
        %v1247 = vpop.f32.mrb[0].mxu0
        %v1248 = vpop.f32.mrb[0].mxu0
        %v1249 = vadd.f32 %v576, %v1248
        %v1250 = vpop.f32.mrb[0].mxu0
        %1251 = vdwg.mxu0
        %v1252 = vmax.f32 %v1238, 0.0
        %v1253 = vmax.f32 %v1241, 0.0
        %v1254 = vmax.f32 %v1246, 0.0
        %v1255 = vmax.f32 %v1249, 0.0
        %v1256 = vpack.c.bf16 %v1253, %v1252
        %v1257 = vpack.c.bf16 %v1255, %v1254
        %1258 = vmatprep.subr.bf16.mxu0 0
        %1259 = vmatpush1.bf16.msra.mxu0 %v1256
        %1260 = vmatprep.subr.bf16.mxu0 0
        %1261 = vmatpush1.bf16.msra.mxu0 %v1257
        %1262 = vmatprep.subr.bf16.mxu0 0
        %1263 = vmatpush1.bf16.msra.mxu0 0
        %1264 = vmatprep.subr.bf16.mxu0 0
        %1265 = vmatpush1.bf16.msra.mxu0 0
        %1266 = vmatprep.subr.bf16.mxu0 0
        %1267 = vmatpush1.bf16.msra.mxu0 0
        %1268 = vmatprep.subr.bf16.mxu0 0
        %1269 = vmatpush1.bf16.msra.mxu0 0
        %1270 = vmatprep.subr.bf16.mxu0 0
        %1271 = vmatpush1.bf16.msra.mxu0 0
        %1272 = vmatprep.subr.bf16.mxu0 0
        %1273 = vmatpush1.bf16.msra.mxu0 0
        %1274 = vmatprep.subr.bf16.mxu0 0
        %1275 = vmatpush1.bf16.msra.mxu0 0
        %1276 = vmatprep.subr.bf16.mxu0 0
        %1277 = vmatpush1.bf16.msra.mxu0 0
        %1278 = vmatprep.subr.bf16.mxu0 0
        %1279 = vmatpush1.bf16.msra.mxu0 0
        %1280 = vmatprep.subr.bf16.mxu0 0
        %1281 = vmatpush1.bf16.msra.mxu0 0
        %1282 = vmatprep.subr.bf16.mxu0 0
        %1283 = vmatpush1.bf16.msra.mxu0 0
        %1284 = vmatprep.subr.bf16.mxu0 0
        %1285 = vmatpush1.bf16.msra.mxu0 0
        %1286 = vmatprep.subr.bf16.mxu0 0
        %1287 = vmatpush1.bf16.msra.mxu0 0
        %1288 = vmatprep.subr.bf16.mxu0 0
        %1289 = vmatpush1.bf16.msra.mxu0 0
        %1290 = vmatprep.mubr.bf16.mxu0 0
        %1291 = vmatmul.mubr.bf16.gmra.mrb[0].mxu0 %v656
        %v1292 = vpop.f32.mrb[0].mxu0
        %v1293 = vadd.f32 %v653, %v1292
        %v1294 = vpop.f32.mrb[0].mxu0
        %v1295 = vpop.f32.mrb[0].mxu0
        %v1296 = vpop.f32.mrb[0].mxu0
        %1297 = vdwg.mxu0
        %v1298 = vmul.f32 %v1293, %v1111
        %v1299 = vrot.slane %v1298, 4
        %v1300 = vadd.f32 %v1298, %v1299
        %v1301 = vrot.slane %v1300, 2
        %v1302 = vadd.f32 %v1300, %v1301
        %v1303 = vrot.slane %v1302, 1
        %v1304 = vadd.f32 %v1302, %v1303
        %v1305 = vmul.f32 %v1111, 0.2
        %v1306 = vadd.f32 %v1305, 1.0007813
        %v1307 = vmul.f32 %v1107, %v1306
        %v1308 = vmul.f32 %v1109, 1.0004687
        %v1309 = vadd.f32 %v1308, %v1304
        %s1310 = scalar_lea.vmem %s365, 32 [#allocation3]
        %v1311 = vld [vmem:[%s1310] sm:$0xff]
        %s1312 = sadd.s32 %s446, 4
        %s1313 = scvt.s32.f32 %s1312
        %s1314 = smul.f32 %s1313, 0.015625
        %v1315 = vstv %s1314
        %v1316 = vmul.f32 %v1315, %v433
        %v1317 = vmul.f32 %v1315, %v434
        %v1318 = vmul.f32 %v1315, %v435
        %v1319 = vmul.f32 %v1315, %v436
        %v1320 = vadd.f32 %v437, %v1316
        %v1321 = vadd.f32 %v438, %v1317
        %v1322 = vadd.f32 %v439, %v1318
        %v1323 = vadd.f32 %v440, %v1319
        %v1324 = vpack.c.bf16 %v1307, %v1307
        %1326 = vset.pattern.permute.xlu0 0
        %1327 = vperm.xlu0 %1326, %v1320
        %v1328 = vpop.permute.xlu0 %1327
        %1331 = vset.pattern.permute.xlu0 0
        %1332 = vperm.xlu0 %1331, %v1321
        %v1333 = vpop.permute.xlu0 %1332
        %1336 = vset.pattern.permute.xlu0 0
        %1337 = vperm.xlu0 %1336, %v1322
        %v1338 = vpop.permute.xlu0 %1337
        %1341 = vset.pattern.permute.xlu0 0
        %1342 = vperm.xlu0 %1341, %v1323
        %v1343 = vpop.permute.xlu0 %1342
        %v1346 = vsel %vm499, %v1324, 0
        %1348 = vmatprep.subr.bf16.mxu0 0
        %1349 = vmatpush1.bf16.msra.mxu0 %v1346
        %1350 = vmatprep.subr.bf16.mxu0 0
        %1351 = vmatpush1.bf16.msra.mxu0 0
        %1352 = vmatprep.subr.bf16.mxu0 0
        %1353 = vmatpush1.bf16.msra.mxu0 0
        %1354 = vmatprep.subr.bf16.mxu0 0
        %1355 = vmatpush1.bf16.msra.mxu0 0
        %1356 = vmatprep.subr.bf16.mxu0 0
        %1357 = vmatpush1.bf16.msra.mxu0 0
        %1358 = vmatprep.subr.bf16.mxu0 0
        %1359 = vmatpush1.bf16.msra.mxu0 0
        %1360 = vmatprep.subr.bf16.mxu0 0
        %1361 = vmatpush1.bf16.msra.mxu0 0
        %1362 = vmatprep.subr.bf16.mxu0 0
        %1363 = vmatpush1.bf16.msra.mxu0 0
        %1364 = vmatprep.subr.bf16.mxu0 0
        %1365 = vmatpush1.bf16.msra.mxu0 0
        %1366 = vmatprep.subr.bf16.mxu0 0
        %1367 = vmatpush1.bf16.msra.mxu0 0
        %1368 = vmatprep.subr.bf16.mxu0 0
        %1369 = vmatpush1.bf16.msra.mxu0 0
        %1370 = vmatprep.subr.bf16.mxu0 0
        %1371 = vmatpush1.bf16.msra.mxu0 0
        %1372 = vmatprep.subr.bf16.mxu0 0
        %1373 = vmatpush1.bf16.msra.mxu0 0
        %1374 = vmatprep.subr.bf16.mxu0 0
        %1375 = vmatpush1.bf16.msra.mxu0 0
        %1376 = vmatprep.subr.bf16.mxu0 0
        %1377 = vmatpush1.bf16.msra.mxu0 0
        %1378 = vmatprep.subr.bf16.mxu0 0
        %1379 = vmatpush1.bf16.msra.mxu0 0
        %1380 = vmatprep.mubr.bf16.mxu0 0
        %1381 = vmatmul.mubr.bf16.gmra.mrb[0].mxu0 %v494
        %v1382 = vpop.f32.mrb[0].mxu0
        %v1383 = vadd.f32 %v1328, %v1382
        %v1384 = vpop.f32.mrb[0].mxu0
        %v1385 = vpop.f32.mrb[0].mxu0
        %v1386 = vadd.f32 %v1333, %v1385
        %v1387 = vpop.f32.mrb[0].mxu0
        %1388 = vmatprep.mubr.bf16.mxu0 0
        %1389 = vmatmul.mubr.bf16.gmra.mrb[0].mxu0 %v497
        %v1390 = vpop.f32.mrb[0].mxu0
        %v1391 = vadd.f32 %v1338, %v1390
        %v1392 = vpop.f32.mrb[0].mxu0
        %v1393 = vpop.f32.mrb[0].mxu0
        %v1394 = vadd.f32 %v1343, %v1393
        %v1395 = vpop.f32.mrb[0].mxu0
        %1396 = vdwg.mxu0
        %v1397 = vmax.f32 %v1383, 0.0
        %v1398 = vmax.f32 %v1386, 0.0
        %v1399 = vmax.f32 %v1391, 0.0
        %v1400 = vmax.f32 %v1394, 0.0
        %v1401 = vpack.c.bf16 %v1398, %v1397
        %v1402 = vpack.c.bf16 %v1400, %v1399
        %1403 = vmatprep.subr.bf16.mxu0 0
        %1404 = vmatpush1.bf16.msra.mxu0 %v1401
        %1405 = vmatprep.subr.bf16.mxu0 0
        %1406 = vmatpush1.bf16.msra.mxu0 %v1402
        %1407 = vmatprep.subr.bf16.mxu0 0
        %1408 = vmatpush1.bf16.msra.mxu0 0
        %1409 = vmatprep.subr.bf16.mxu0 0
        %1410 = vmatpush1.bf16.msra.mxu0 0
        %1411 = vmatprep.subr.bf16.mxu0 0
        %1412 = vmatpush1.bf16.msra.mxu0 0
        %1413 = vmatprep.subr.bf16.mxu0 0
        %1414 = vmatpush1.bf16.msra.mxu0 0
        %1415 = vmatprep.subr.bf16.mxu0 0
        %1416 = vmatpush1.bf16.msra.mxu0 0
        %1417 = vmatprep.subr.bf16.mxu0 0
        %1418 = vmatpush1.bf16.msra.mxu0 0
        %1419 = vmatprep.subr.bf16.mxu0 0
        %1420 = vmatpush1.bf16.msra.mxu0 0
        %1421 = vmatprep.subr.bf16.mxu0 0
        %1422 = vmatpush1.bf16.msra.mxu0 0
        %1423 = vmatprep.subr.bf16.mxu0 0
        %1424 = vmatpush1.bf16.msra.mxu0 0
        %1425 = vmatprep.subr.bf16.mxu0 0
        %1426 = vmatpush1.bf16.msra.mxu0 0
        %1427 = vmatprep.subr.bf16.mxu0 0
        %1428 = vmatpush1.bf16.msra.mxu0 0
        %1429 = vmatprep.subr.bf16.mxu0 0
        %1430 = vmatpush1.bf16.msra.mxu0 0
        %1431 = vmatprep.subr.bf16.mxu0 0
        %1432 = vmatpush1.bf16.msra.mxu0 0
        %1433 = vmatprep.subr.bf16.mxu0 0
        %1434 = vmatpush1.bf16.msra.mxu0 0
        %1435 = vmatprep.mubr.bf16.mxu0 0
        %1436 = vmatmul.mubr.bf16.gmra.mrb[0].mxu0 %v590
        %v1437 = vpop.f32.mrb[0].mxu0
        %v1438 = vadd.f32 %v561, %v1437
        %v1439 = vpop.f32.mrb[0].mxu0
        %v1440 = vpop.f32.mrb[0].mxu0
        %v1441 = vadd.f32 %v566, %v1440
        %v1442 = vpop.f32.mrb[0].mxu0
        %1443 = vmatprep.mubr.bf16.mxu0 0
        %1444 = vmatmul.mubr.bf16.gmra.mrb[0].mxu0 %v593
        %v1445 = vpop.f32.mrb[0].mxu0
        %v1446 = vadd.f32 %v571, %v1445
        %v1447 = vpop.f32.mrb[0].mxu0
        %v1448 = vpop.f32.mrb[0].mxu0
        %v1449 = vadd.f32 %v576, %v1448
        %v1450 = vpop.f32.mrb[0].mxu0
        %1451 = vdwg.mxu0
        %v1452 = vmax.f32 %v1438, 0.0
        %v1453 = vmax.f32 %v1441, 0.0
        %v1454 = vmax.f32 %v1446, 0.0
        %v1455 = vmax.f32 %v1449, 0.0
        %v1456 = vpack.c.bf16 %v1453, %v1452
        %v1457 = vpack.c.bf16 %v1455, %v1454
        %1458 = vmatprep.subr.bf16.mxu0 0
        %1459 = vmatpush1.bf16.msra.mxu0 %v1456
        %1460 = vmatprep.subr.bf16.mxu0 0
        %1461 = vmatpush1.bf16.msra.mxu0 %v1457
        %1462 = vmatprep.subr.bf16.mxu0 0
        %1463 = vmatpush1.bf16.msra.mxu0 0
        %1464 = vmatprep.subr.bf16.mxu0 0
        %1465 = vmatpush1.bf16.msra.mxu0 0
        %1466 = vmatprep.subr.bf16.mxu0 0
        %1467 = vmatpush1.bf16.msra.mxu0 0
        %1468 = vmatprep.subr.bf16.mxu0 0
        %1469 = vmatpush1.bf16.msra.mxu0 0
        %1470 = vmatprep.subr.bf16.mxu0 0
        %1471 = vmatpush1.bf16.msra.mxu0 0
        %1472 = vmatprep.subr.bf16.mxu0 0
        %1473 = vmatpush1.bf16.msra.mxu0 0
        %1474 = vmatprep.subr.bf16.mxu0 0
        %1475 = vmatpush1.bf16.msra.mxu0 0
        %1476 = vmatprep.subr.bf16.mxu0 0
        %1477 = vmatpush1.bf16.msra.mxu0 0
        %1478 = vmatprep.subr.bf16.mxu0 0
        %1479 = vmatpush1.bf16.msra.mxu0 0
        %1480 = vmatprep.subr.bf16.mxu0 0
        %1481 = vmatpush1.bf16.msra.mxu0 0
        %1482 = vmatprep.subr.bf16.mxu0 0
        %1483 = vmatpush1.bf16.msra.mxu0 0
        %1484 = vmatprep.subr.bf16.mxu0 0
        %1485 = vmatpush1.bf16.msra.mxu0 0
        %1486 = vmatprep.subr.bf16.mxu0 0
        %1487 = vmatpush1.bf16.msra.mxu0 0
        %1488 = vmatprep.subr.bf16.mxu0 0
        %1489 = vmatpush1.bf16.msra.mxu0 0
        %1490 = vmatprep.mubr.bf16.mxu0 0
        %1491 = vmatmul.mubr.bf16.gmra.mrb[0].mxu0 %v656
        %v1492 = vpop.f32.mrb[0].mxu0
        %v1493 = vadd.f32 %v653, %v1492
        %v1494 = vpop.f32.mrb[0].mxu0
        %v1495 = vpop.f32.mrb[0].mxu0
        %v1496 = vpop.f32.mrb[0].mxu0
        %1497 = vdwg.mxu0
        %v1498 = vmul.f32 %v1493, %v1311
        %v1499 = vrot.slane %v1498, 4
        %v1500 = vadd.f32 %v1498, %v1499
        %v1501 = vrot.slane %v1500, 2
        %v1502 = vadd.f32 %v1500, %v1501
        %v1503 = vrot.slane %v1502, 1
        %v1504 = vadd.f32 %v1502, %v1503
        %v1505 = vmul.f32 %v1311, 0.2
        %v1506 = vadd.f32 %v1505, 1.0007813
        %v1507 = vmul.f32 %v1307, %v1506
        %v1508 = vmul.f32 %v1309, 1.0004687
        %v1509 = vadd.f32 %v1508, %v1504
        %s1510 = scalar_lea.vmem %s365, 40 [#allocation3]
        %v1511 = vld [vmem:[%s1510] sm:$0xff]
        %s1512 = sadd.s32 %s446, 5
        %s1513 = scvt.s32.f32 %s1512
        %s1514 = smul.f32 %s1513, 0.015625
        %v1515 = vstv %s1514
        %v1516 = vmul.f32 %v1515, %v433
        %v1517 = vmul.f32 %v1515, %v434
        %v1518 = vmul.f32 %v1515, %v435
        %v1519 = vmul.f32 %v1515, %v436
        %v1520 = vadd.f32 %v437, %v1516
        %v1521 = vadd.f32 %v438, %v1517
        %v1522 = vadd.f32 %v439, %v1518
        %v1523 = vadd.f32 %v440, %v1519
        %v1524 = vpack.c.bf16 %v1507, %v1507
        %1526 = vset.pattern.permute.xlu0 0
        %1527 = vperm.xlu0 %1526, %v1520
        %v1528 = vpop.permute.xlu0 %1527
        %1531 = vset.pattern.permute.xlu0 0
        %1532 = vperm.xlu0 %1531, %v1521
        %v1533 = vpop.permute.xlu0 %1532
        %1536 = vset.pattern.permute.xlu0 0
        %1537 = vperm.xlu0 %1536, %v1522
        %v1538 = vpop.permute.xlu0 %1537
        %1541 = vset.pattern.permute.xlu0 0
        %1542 = vperm.xlu0 %1541, %v1523
        %v1543 = vpop.permute.xlu0 %1542
        %v1546 = vsel %vm499, %v1524, 0
        %1548 = vmatprep.subr.bf16.mxu0 0
        %1549 = vmatpush1.bf16.msra.mxu0 %v1546
        %1550 = vmatprep.subr.bf16.mxu0 0
        %1551 = vmatpush1.bf16.msra.mxu0 0
        %1552 = vmatprep.subr.bf16.mxu0 0
        %1553 = vmatpush1.bf16.msra.mxu0 0
        %1554 = vmatprep.subr.bf16.mxu0 0
        %1555 = vmatpush1.bf16.msra.mxu0 0
        %1556 = vmatprep.subr.bf16.mxu0 0
        %1557 = vmatpush1.bf16.msra.mxu0 0
        %1558 = vmatprep.subr.bf16.mxu0 0
        %1559 = vmatpush1.bf16.msra.mxu0 0
        %1560 = vmatprep.subr.bf16.mxu0 0
        %1561 = vmatpush1.bf16.msra.mxu0 0
        %1562 = vmatprep.subr.bf16.mxu0 0
        %1563 = vmatpush1.bf16.msra.mxu0 0
        %1564 = vmatprep.subr.bf16.mxu0 0
        %1565 = vmatpush1.bf16.msra.mxu0 0
        %1566 = vmatprep.subr.bf16.mxu0 0
        %1567 = vmatpush1.bf16.msra.mxu0 0
        %1568 = vmatprep.subr.bf16.mxu0 0
        %1569 = vmatpush1.bf16.msra.mxu0 0
        %1570 = vmatprep.subr.bf16.mxu0 0
        %1571 = vmatpush1.bf16.msra.mxu0 0
        %1572 = vmatprep.subr.bf16.mxu0 0
        %1573 = vmatpush1.bf16.msra.mxu0 0
        %1574 = vmatprep.subr.bf16.mxu0 0
        %1575 = vmatpush1.bf16.msra.mxu0 0
        %1576 = vmatprep.subr.bf16.mxu0 0
        %1577 = vmatpush1.bf16.msra.mxu0 0
        %1578 = vmatprep.subr.bf16.mxu0 0
        %1579 = vmatpush1.bf16.msra.mxu0 0
        %1580 = vmatprep.mubr.bf16.mxu0 0
        %1581 = vmatmul.mubr.bf16.gmra.mrb[0].mxu0 %v494
        %v1582 = vpop.f32.mrb[0].mxu0
        %v1583 = vadd.f32 %v1528, %v1582
        %v1584 = vpop.f32.mrb[0].mxu0
        %v1585 = vpop.f32.mrb[0].mxu0
        %v1586 = vadd.f32 %v1533, %v1585
        %v1587 = vpop.f32.mrb[0].mxu0
        %1588 = vmatprep.mubr.bf16.mxu0 0
        %1589 = vmatmul.mubr.bf16.gmra.mrb[0].mxu0 %v497
        %v1590 = vpop.f32.mrb[0].mxu0
        %v1591 = vadd.f32 %v1538, %v1590
        %v1592 = vpop.f32.mrb[0].mxu0
        %v1593 = vpop.f32.mrb[0].mxu0
        %v1594 = vadd.f32 %v1543, %v1593
        %v1595 = vpop.f32.mrb[0].mxu0
        %1596 = vdwg.mxu0
        %v1597 = vmax.f32 %v1583, 0.0
        %v1598 = vmax.f32 %v1586, 0.0
        %v1599 = vmax.f32 %v1591, 0.0
        %v1600 = vmax.f32 %v1594, 0.0
        %v1601 = vpack.c.bf16 %v1598, %v1597
        %v1602 = vpack.c.bf16 %v1600, %v1599
        %1603 = vmatprep.subr.bf16.mxu0 0
        %1604 = vmatpush1.bf16.msra.mxu0 %v1601
        %1605 = vmatprep.subr.bf16.mxu0 0
        %1606 = vmatpush1.bf16.msra.mxu0 %v1602
        %1607 = vmatprep.subr.bf16.mxu0 0
        %1608 = vmatpush1.bf16.msra.mxu0 0
        %1609 = vmatprep.subr.bf16.mxu0 0
        %1610 = vmatpush1.bf16.msra.mxu0 0
        %1611 = vmatprep.subr.bf16.mxu0 0
        %1612 = vmatpush1.bf16.msra.mxu0 0
        %1613 = vmatprep.subr.bf16.mxu0 0
        %1614 = vmatpush1.bf16.msra.mxu0 0
        %1615 = vmatprep.subr.bf16.mxu0 0
        %1616 = vmatpush1.bf16.msra.mxu0 0
        %1617 = vmatprep.subr.bf16.mxu0 0
        %1618 = vmatpush1.bf16.msra.mxu0 0
        %1619 = vmatprep.subr.bf16.mxu0 0
        %1620 = vmatpush1.bf16.msra.mxu0 0
        %1621 = vmatprep.subr.bf16.mxu0 0
        %1622 = vmatpush1.bf16.msra.mxu0 0
        %1623 = vmatprep.subr.bf16.mxu0 0
        %1624 = vmatpush1.bf16.msra.mxu0 0
        %1625 = vmatprep.subr.bf16.mxu0 0
        %1626 = vmatpush1.bf16.msra.mxu0 0
        %1627 = vmatprep.subr.bf16.mxu0 0
        %1628 = vmatpush1.bf16.msra.mxu0 0
        %1629 = vmatprep.subr.bf16.mxu0 0
        %1630 = vmatpush1.bf16.msra.mxu0 0
        %1631 = vmatprep.subr.bf16.mxu0 0
        %1632 = vmatpush1.bf16.msra.mxu0 0
        %1633 = vmatprep.subr.bf16.mxu0 0
        %1634 = vmatpush1.bf16.msra.mxu0 0
        %1635 = vmatprep.mubr.bf16.mxu0 0
        %1636 = vmatmul.mubr.bf16.gmra.mrb[0].mxu0 %v590
        %v1637 = vpop.f32.mrb[0].mxu0
        %v1638 = vadd.f32 %v561, %v1637
        %v1639 = vpop.f32.mrb[0].mxu0
        %v1640 = vpop.f32.mrb[0].mxu0
        %v1641 = vadd.f32 %v566, %v1640
        %v1642 = vpop.f32.mrb[0].mxu0
        %1643 = vmatprep.mubr.bf16.mxu0 0
        %1644 = vmatmul.mubr.bf16.gmra.mrb[0].mxu0 %v593
        %v1645 = vpop.f32.mrb[0].mxu0
        %v1646 = vadd.f32 %v571, %v1645
        %v1647 = vpop.f32.mrb[0].mxu0
        %v1648 = vpop.f32.mrb[0].mxu0
        %v1649 = vadd.f32 %v576, %v1648
        %v1650 = vpop.f32.mrb[0].mxu0
        %1651 = vdwg.mxu0
        %v1652 = vmax.f32 %v1638, 0.0
        %v1653 = vmax.f32 %v1641, 0.0
        %v1654 = vmax.f32 %v1646, 0.0
        %v1655 = vmax.f32 %v1649, 0.0
        %v1656 = vpack.c.bf16 %v1653, %v1652
        %v1657 = vpack.c.bf16 %v1655, %v1654
        %1658 = vmatprep.subr.bf16.mxu0 0
        %1659 = vmatpush1.bf16.msra.mxu0 %v1656
        %1660 = vmatprep.subr.bf16.mxu0 0
        %1661 = vmatpush1.bf16.msra.mxu0 %v1657
        %1662 = vmatprep.subr.bf16.mxu0 0
        %1663 = vmatpush1.bf16.msra.mxu0 0
        %1664 = vmatprep.subr.bf16.mxu0 0
        %1665 = vmatpush1.bf16.msra.mxu0 0
        %1666 = vmatprep.subr.bf16.mxu0 0
        %1667 = vmatpush1.bf16.msra.mxu0 0
        %1668 = vmatprep.subr.bf16.mxu0 0
        %1669 = vmatpush1.bf16.msra.mxu0 0
        %1670 = vmatprep.subr.bf16.mxu0 0
        %1671 = vmatpush1.bf16.msra.mxu0 0
        %1672 = vmatprep.subr.bf16.mxu0 0
        %1673 = vmatpush1.bf16.msra.mxu0 0
        %1674 = vmatprep.subr.bf16.mxu0 0
        %1675 = vmatpush1.bf16.msra.mxu0 0
        %1676 = vmatprep.subr.bf16.mxu0 0
        %1677 = vmatpush1.bf16.msra.mxu0 0
        %1678 = vmatprep.subr.bf16.mxu0 0
        %1679 = vmatpush1.bf16.msra.mxu0 0
        %1680 = vmatprep.subr.bf16.mxu0 0
        %1681 = vmatpush1.bf16.msra.mxu0 0
        %1682 = vmatprep.subr.bf16.mxu0 0
        %1683 = vmatpush1.bf16.msra.mxu0 0
        %1684 = vmatprep.subr.bf16.mxu0 0
        %1685 = vmatpush1.bf16.msra.mxu0 0
        %1686 = vmatprep.subr.bf16.mxu0 0
        %1687 = vmatpush1.bf16.msra.mxu0 0
        %1688 = vmatprep.subr.bf16.mxu0 0
        %1689 = vmatpush1.bf16.msra.mxu0 0
        %1690 = vmatprep.mubr.bf16.mxu0 0
        %1691 = vmatmul.mubr.bf16.gmra.mrb[0].mxu0 %v656
        %v1692 = vpop.f32.mrb[0].mxu0
        %v1693 = vadd.f32 %v653, %v1692
        %v1694 = vpop.f32.mrb[0].mxu0
        %v1695 = vpop.f32.mrb[0].mxu0
        %v1696 = vpop.f32.mrb[0].mxu0
        %1697 = vdwg.mxu0
        %v1698 = vmul.f32 %v1693, %v1511
        %v1699 = vrot.slane %v1698, 4
        %v1700 = vadd.f32 %v1698, %v1699
        %v1701 = vrot.slane %v1700, 2
        %v1702 = vadd.f32 %v1700, %v1701
        %v1703 = vrot.slane %v1702, 1
        %v1704 = vadd.f32 %v1702, %v1703
        %v1705 = vmul.f32 %v1511, 0.2
        %v1706 = vadd.f32 %v1705, 1.0007813
        %v1707 = vmul.f32 %v1507, %v1706
        %v1708 = vmul.f32 %v1509, 1.0004687
        %v1709 = vadd.f32 %v1708, %v1704
        %s1710 = scalar_lea.vmem %s365, 48 [#allocation3]
        %v1711 = vld [vmem:[%s1710] sm:$0xff]
        %s1712 = sadd.s32 %s446, 6
        %s1713 = scvt.s32.f32 %s1712
        %s1714 = smul.f32 %s1713, 0.015625
        %v1715 = vstv %s1714
        %v1716 = vmul.f32 %v1715, %v433
        %v1717 = vmul.f32 %v1715, %v434
        %v1718 = vmul.f32 %v1715, %v435
        %v1719 = vmul.f32 %v1715, %v436
        %v1720 = vadd.f32 %v437, %v1716
        %v1721 = vadd.f32 %v438, %v1717
        %v1722 = vadd.f32 %v439, %v1718
        %v1723 = vadd.f32 %v440, %v1719
        %v1724 = vpack.c.bf16 %v1707, %v1707
        %1726 = vset.pattern.permute.xlu0 0
        %1727 = vperm.xlu0 %1726, %v1720
        %v1728 = vpop.permute.xlu0 %1727
        %1731 = vset.pattern.permute.xlu0 0
        %1732 = vperm.xlu0 %1731, %v1721
        %v1733 = vpop.permute.xlu0 %1732
        %1736 = vset.pattern.permute.xlu0 0
        %1737 = vperm.xlu0 %1736, %v1722
        %v1738 = vpop.permute.xlu0 %1737
        %1741 = vset.pattern.permute.xlu0 0
        %1742 = vperm.xlu0 %1741, %v1723
        %v1743 = vpop.permute.xlu0 %1742
        %v1746 = vsel %vm499, %v1724, 0
        %1748 = vmatprep.subr.bf16.mxu0 0
        %1749 = vmatpush1.bf16.msra.mxu0 %v1746
        %1750 = vmatprep.subr.bf16.mxu0 0
        %1751 = vmatpush1.bf16.msra.mxu0 0
        %1752 = vmatprep.subr.bf16.mxu0 0
        %1753 = vmatpush1.bf16.msra.mxu0 0
        %1754 = vmatprep.subr.bf16.mxu0 0
        %1755 = vmatpush1.bf16.msra.mxu0 0
        %1756 = vmatprep.subr.bf16.mxu0 0
        %1757 = vmatpush1.bf16.msra.mxu0 0
        %1758 = vmatprep.subr.bf16.mxu0 0
        %1759 = vmatpush1.bf16.msra.mxu0 0
        %1760 = vmatprep.subr.bf16.mxu0 0
        %1761 = vmatpush1.bf16.msra.mxu0 0
        %1762 = vmatprep.subr.bf16.mxu0 0
        %1763 = vmatpush1.bf16.msra.mxu0 0
        %1764 = vmatprep.subr.bf16.mxu0 0
        %1765 = vmatpush1.bf16.msra.mxu0 0
        %1766 = vmatprep.subr.bf16.mxu0 0
        %1767 = vmatpush1.bf16.msra.mxu0 0
        %1768 = vmatprep.subr.bf16.mxu0 0
        %1769 = vmatpush1.bf16.msra.mxu0 0
        %1770 = vmatprep.subr.bf16.mxu0 0
        %1771 = vmatpush1.bf16.msra.mxu0 0
        %1772 = vmatprep.subr.bf16.mxu0 0
        %1773 = vmatpush1.bf16.msra.mxu0 0
        %1774 = vmatprep.subr.bf16.mxu0 0
        %1775 = vmatpush1.bf16.msra.mxu0 0
        %1776 = vmatprep.subr.bf16.mxu0 0
        %1777 = vmatpush1.bf16.msra.mxu0 0
        %1778 = vmatprep.subr.bf16.mxu0 0
        %1779 = vmatpush1.bf16.msra.mxu0 0
        %1780 = vmatprep.mubr.bf16.mxu0 0
        %1781 = vmatmul.mubr.bf16.gmra.mrb[0].mxu0 %v494
        %v1782 = vpop.f32.mrb[0].mxu0
        %v1783 = vadd.f32 %v1728, %v1782
        %v1784 = vpop.f32.mrb[0].mxu0
        %v1785 = vpop.f32.mrb[0].mxu0
        %v1786 = vadd.f32 %v1733, %v1785
        %v1787 = vpop.f32.mrb[0].mxu0
        %1788 = vmatprep.mubr.bf16.mxu0 0
        %1789 = vmatmul.mubr.bf16.gmra.mrb[0].mxu0 %v497
        %v1790 = vpop.f32.mrb[0].mxu0
        %v1791 = vadd.f32 %v1738, %v1790
        %v1792 = vpop.f32.mrb[0].mxu0
        %v1793 = vpop.f32.mrb[0].mxu0
        %v1794 = vadd.f32 %v1743, %v1793
        %v1795 = vpop.f32.mrb[0].mxu0
        %1796 = vdwg.mxu0
        %v1797 = vmax.f32 %v1783, 0.0
        %v1798 = vmax.f32 %v1786, 0.0
        %v1799 = vmax.f32 %v1791, 0.0
        %v1800 = vmax.f32 %v1794, 0.0
        %v1801 = vpack.c.bf16 %v1798, %v1797
        %v1802 = vpack.c.bf16 %v1800, %v1799
        %1803 = vmatprep.subr.bf16.mxu0 0
        %1804 = vmatpush1.bf16.msra.mxu0 %v1801
        %1805 = vmatprep.subr.bf16.mxu0 0
        %1806 = vmatpush1.bf16.msra.mxu0 %v1802
        %1807 = vmatprep.subr.bf16.mxu0 0
        %1808 = vmatpush1.bf16.msra.mxu0 0
        %1809 = vmatprep.subr.bf16.mxu0 0
        %1810 = vmatpush1.bf16.msra.mxu0 0
        %1811 = vmatprep.subr.bf16.mxu0 0
        %1812 = vmatpush1.bf16.msra.mxu0 0
        %1813 = vmatprep.subr.bf16.mxu0 0
        %1814 = vmatpush1.bf16.msra.mxu0 0
        %1815 = vmatprep.subr.bf16.mxu0 0
        %1816 = vmatpush1.bf16.msra.mxu0 0
        %1817 = vmatprep.subr.bf16.mxu0 0
        %1818 = vmatpush1.bf16.msra.mxu0 0
        %1819 = vmatprep.subr.bf16.mxu0 0
        %1820 = vmatpush1.bf16.msra.mxu0 0
        %1821 = vmatprep.subr.bf16.mxu0 0
        %1822 = vmatpush1.bf16.msra.mxu0 0
        %1823 = vmatprep.subr.bf16.mxu0 0
        %1824 = vmatpush1.bf16.msra.mxu0 0
        %1825 = vmatprep.subr.bf16.mxu0 0
        %1826 = vmatpush1.bf16.msra.mxu0 0
        %1827 = vmatprep.subr.bf16.mxu0 0
        %1828 = vmatpush1.bf16.msra.mxu0 0
        %1829 = vmatprep.subr.bf16.mxu0 0
        %1830 = vmatpush1.bf16.msra.mxu0 0
        %1831 = vmatprep.subr.bf16.mxu0 0
        %1832 = vmatpush1.bf16.msra.mxu0 0
        %1833 = vmatprep.subr.bf16.mxu0 0
        %1834 = vmatpush1.bf16.msra.mxu0 0
        %1835 = vmatprep.mubr.bf16.mxu0 0
        %1836 = vmatmul.mubr.bf16.gmra.mrb[0].mxu0 %v590
        %v1837 = vpop.f32.mrb[0].mxu0
        %v1838 = vadd.f32 %v561, %v1837
        %v1839 = vpop.f32.mrb[0].mxu0
        %v1840 = vpop.f32.mrb[0].mxu0
        %v1841 = vadd.f32 %v566, %v1840
        %v1842 = vpop.f32.mrb[0].mxu0
        %1843 = vmatprep.mubr.bf16.mxu0 0
        %1844 = vmatmul.mubr.bf16.gmra.mrb[0].mxu0 %v593
        %v1845 = vpop.f32.mrb[0].mxu0
        %v1846 = vadd.f32 %v571, %v1845
        %v1847 = vpop.f32.mrb[0].mxu0
        %v1848 = vpop.f32.mrb[0].mxu0
        %v1849 = vadd.f32 %v576, %v1848
        %v1850 = vpop.f32.mrb[0].mxu0
        %1851 = vdwg.mxu0
        %v1852 = vmax.f32 %v1838, 0.0
        %v1853 = vmax.f32 %v1841, 0.0
        %v1854 = vmax.f32 %v1846, 0.0
        %v1855 = vmax.f32 %v1849, 0.0
        %v1856 = vpack.c.bf16 %v1853, %v1852
        %v1857 = vpack.c.bf16 %v1855, %v1854
        %1858 = vmatprep.subr.bf16.mxu0 0
        %1859 = vmatpush1.bf16.msra.mxu0 %v1856
        %1860 = vmatprep.subr.bf16.mxu0 0
        %1861 = vmatpush1.bf16.msra.mxu0 %v1857
        %1862 = vmatprep.subr.bf16.mxu0 0
        %1863 = vmatpush1.bf16.msra.mxu0 0
        %1864 = vmatprep.subr.bf16.mxu0 0
        %1865 = vmatpush1.bf16.msra.mxu0 0
        %1866 = vmatprep.subr.bf16.mxu0 0
        %1867 = vmatpush1.bf16.msra.mxu0 0
        %1868 = vmatprep.subr.bf16.mxu0 0
        %1869 = vmatpush1.bf16.msra.mxu0 0
        %1870 = vmatprep.subr.bf16.mxu0 0
        %1871 = vmatpush1.bf16.msra.mxu0 0
        %1872 = vmatprep.subr.bf16.mxu0 0
        %1873 = vmatpush1.bf16.msra.mxu0 0
        %1874 = vmatprep.subr.bf16.mxu0 0
        %1875 = vmatpush1.bf16.msra.mxu0 0
        %1876 = vmatprep.subr.bf16.mxu0 0
        %1877 = vmatpush1.bf16.msra.mxu0 0
        %1878 = vmatprep.subr.bf16.mxu0 0
        %1879 = vmatpush1.bf16.msra.mxu0 0
        %1880 = vmatprep.subr.bf16.mxu0 0
        %1881 = vmatpush1.bf16.msra.mxu0 0
        %1882 = vmatprep.subr.bf16.mxu0 0
        %1883 = vmatpush1.bf16.msra.mxu0 0
        %1884 = vmatprep.subr.bf16.mxu0 0
        %1885 = vmatpush1.bf16.msra.mxu0 0
        %1886 = vmatprep.subr.bf16.mxu0 0
        %1887 = vmatpush1.bf16.msra.mxu0 0
        %1888 = vmatprep.subr.bf16.mxu0 0
        %1889 = vmatpush1.bf16.msra.mxu0 0
        %1890 = vmatprep.mubr.bf16.mxu0 0
        %1891 = vmatmul.mubr.bf16.gmra.mrb[0].mxu0 %v656
        %v1892 = vpop.f32.mrb[0].mxu0
        %v1893 = vadd.f32 %v653, %v1892
        %v1894 = vpop.f32.mrb[0].mxu0
        %v1895 = vpop.f32.mrb[0].mxu0
        %v1896 = vpop.f32.mrb[0].mxu0
        %1897 = vdwg.mxu0
        %v1898 = vmul.f32 %v1893, %v1711
        %v1899 = vrot.slane %v1898, 4
        %v1900 = vadd.f32 %v1898, %v1899
        %v1901 = vrot.slane %v1900, 2
        %v1902 = vadd.f32 %v1900, %v1901
        %v1903 = vrot.slane %v1902, 1
        %v1904 = vadd.f32 %v1902, %v1903
        %v1905 = vmul.f32 %v1711, 0.2
        %v1906 = vadd.f32 %v1905, 1.0007813
        %v1907 = vmul.f32 %v1707, %v1906
        %v1908 = vmul.f32 %v1709, 1.0004687
        %v1909 = vadd.f32 %v1908, %v1904
        %s1910 = scalar_lea.vmem %s365, 56 [#allocation3]
        %v1911 = vld [vmem:[%s1910] sm:$0xff]
        %s1912 = sadd.s32 %s446, 7
        %s1913 = scvt.s32.f32 %s1912
        %s1914 = smul.f32 %s1913, 0.015625
        %v1915 = vstv %s1914
        %v1916 = vmul.f32 %v1915, %v433
        %v1917 = vmul.f32 %v1915, %v434
        %v1918 = vmul.f32 %v1915, %v435
        %v1919 = vmul.f32 %v1915, %v436
        %v1920 = vadd.f32 %v437, %v1916
        %v1921 = vadd.f32 %v438, %v1917
        %v1922 = vadd.f32 %v439, %v1918
        %v1923 = vadd.f32 %v440, %v1919
        %v1924 = vpack.c.bf16 %v1907, %v1907
        %1926 = vset.pattern.permute.xlu0 0
        %1927 = vperm.xlu0 %1926, %v1920
        %v1928 = vpop.permute.xlu0 %1927
        %1931 = vset.pattern.permute.xlu0 0
        %1932 = vperm.xlu0 %1931, %v1921
        %v1933 = vpop.permute.xlu0 %1932
        %1936 = vset.pattern.permute.xlu0 0
        %1937 = vperm.xlu0 %1936, %v1922
        %v1938 = vpop.permute.xlu0 %1937
        %1941 = vset.pattern.permute.xlu0 0
        %1942 = vperm.xlu0 %1941, %v1923
        %v1943 = vpop.permute.xlu0 %1942
        %v1946 = vsel %vm499, %v1924, 0
        %1948 = vmatprep.subr.bf16.mxu0 0
        %1949 = vmatpush1.bf16.msra.mxu0 %v1946
        %1950 = vmatprep.subr.bf16.mxu0 0
        %1951 = vmatpush1.bf16.msra.mxu0 0
        %1952 = vmatprep.subr.bf16.mxu0 0
        %1953 = vmatpush1.bf16.msra.mxu0 0
        %1954 = vmatprep.subr.bf16.mxu0 0
        %1955 = vmatpush1.bf16.msra.mxu0 0
        %1956 = vmatprep.subr.bf16.mxu0 0
        %1957 = vmatpush1.bf16.msra.mxu0 0
        %1958 = vmatprep.subr.bf16.mxu0 0
        %1959 = vmatpush1.bf16.msra.mxu0 0
        %1960 = vmatprep.subr.bf16.mxu0 0
        %1961 = vmatpush1.bf16.msra.mxu0 0
        %1962 = vmatprep.subr.bf16.mxu0 0
        %1963 = vmatpush1.bf16.msra.mxu0 0
        %1964 = vmatprep.subr.bf16.mxu0 0
        %1965 = vmatpush1.bf16.msra.mxu0 0
        %1966 = vmatprep.subr.bf16.mxu0 0
        %1967 = vmatpush1.bf16.msra.mxu0 0
        %1968 = vmatprep.subr.bf16.mxu0 0
        %1969 = vmatpush1.bf16.msra.mxu0 0
        %1970 = vmatprep.subr.bf16.mxu0 0
        %1971 = vmatpush1.bf16.msra.mxu0 0
        %1972 = vmatprep.subr.bf16.mxu0 0
        %1973 = vmatpush1.bf16.msra.mxu0 0
        %1974 = vmatprep.subr.bf16.mxu0 0
        %1975 = vmatpush1.bf16.msra.mxu0 0
        %1976 = vmatprep.subr.bf16.mxu0 0
        %1977 = vmatpush1.bf16.msra.mxu0 0
        %1978 = vmatprep.subr.bf16.mxu0 0
        %1979 = vmatpush1.bf16.msra.mxu0 0
        %1980 = vmatprep.mubr.bf16.mxu0 0
        %1981 = vmatmul.mubr.bf16.gmra.mrb[0].mxu0 %v494
        %v1982 = vpop.f32.mrb[0].mxu0
        %v1983 = vadd.f32 %v1928, %v1982
        %v1984 = vpop.f32.mrb[0].mxu0
        %v1985 = vpop.f32.mrb[0].mxu0
        %v1986 = vadd.f32 %v1933, %v1985
        %v1987 = vpop.f32.mrb[0].mxu0
        %1988 = vmatprep.mubr.bf16.mxu0 0
        %1989 = vmatmul.mubr.bf16.gmra.mrb[0].mxu0 %v497
        %v1990 = vpop.f32.mrb[0].mxu0
        %v1991 = vadd.f32 %v1938, %v1990
        %v1992 = vpop.f32.mrb[0].mxu0
        %v1993 = vpop.f32.mrb[0].mxu0
        %v1994 = vadd.f32 %v1943, %v1993
        %v1995 = vpop.f32.mrb[0].mxu0
        %1996 = vdwg.mxu0
        %v1997 = vmax.f32 %v1983, 0.0
        %v1998 = vmax.f32 %v1986, 0.0
        %v1999 = vmax.f32 %v1991, 0.0
        %v2000 = vmax.f32 %v1994, 0.0
        %v2001 = vpack.c.bf16 %v1998, %v1997
        %v2002 = vpack.c.bf16 %v2000, %v1999
        %2003 = vmatprep.subr.bf16.mxu0 0
        %2004 = vmatpush1.bf16.msra.mxu0 %v2001
        %2005 = vmatprep.subr.bf16.mxu0 0
        %2006 = vmatpush1.bf16.msra.mxu0 %v2002
        %2007 = vmatprep.subr.bf16.mxu0 0
        %2008 = vmatpush1.bf16.msra.mxu0 0
        %2009 = vmatprep.subr.bf16.mxu0 0
        %2010 = vmatpush1.bf16.msra.mxu0 0
        %2011 = vmatprep.subr.bf16.mxu0 0
        %2012 = vmatpush1.bf16.msra.mxu0 0
        %2013 = vmatprep.subr.bf16.mxu0 0
        %2014 = vmatpush1.bf16.msra.mxu0 0
        %2015 = vmatprep.subr.bf16.mxu0 0
        %2016 = vmatpush1.bf16.msra.mxu0 0
        %2017 = vmatprep.subr.bf16.mxu0 0
        %2018 = vmatpush1.bf16.msra.mxu0 0
        %2019 = vmatprep.subr.bf16.mxu0 0
        %2020 = vmatpush1.bf16.msra.mxu0 0
        %2021 = vmatprep.subr.bf16.mxu0 0
        %2022 = vmatpush1.bf16.msra.mxu0 0
        %2023 = vmatprep.subr.bf16.mxu0 0
        %2024 = vmatpush1.bf16.msra.mxu0 0
        %2025 = vmatprep.subr.bf16.mxu0 0
        %2026 = vmatpush1.bf16.msra.mxu0 0
        %2027 = vmatprep.subr.bf16.mxu0 0
        %2028 = vmatpush1.bf16.msra.mxu0 0
        %2029 = vmatprep.subr.bf16.mxu0 0
        %2030 = vmatpush1.bf16.msra.mxu0 0
        %2031 = vmatprep.subr.bf16.mxu0 0
        %2032 = vmatpush1.bf16.msra.mxu0 0
        %2033 = vmatprep.subr.bf16.mxu0 0
        %2034 = vmatpush1.bf16.msra.mxu0 0
        %2035 = vmatprep.mubr.bf16.mxu0 0
        %2036 = vmatmul.mubr.bf16.gmra.mrb[0].mxu0 %v590
        %v2037 = vpop.f32.mrb[0].mxu0
        %v2038 = vadd.f32 %v561, %v2037
        %v2039 = vpop.f32.mrb[0].mxu0
        %v2040 = vpop.f32.mrb[0].mxu0
        %v2041 = vadd.f32 %v566, %v2040
        %v2042 = vpop.f32.mrb[0].mxu0
        %2043 = vmatprep.mubr.bf16.mxu0 0
        %2044 = vmatmul.mubr.bf16.gmra.mrb[0].mxu0 %v593
        %v2045 = vpop.f32.mrb[0].mxu0
        %v2046 = vadd.f32 %v571, %v2045
        %v2047 = vpop.f32.mrb[0].mxu0
        %v2048 = vpop.f32.mrb[0].mxu0
        %v2049 = vadd.f32 %v576, %v2048
        %v2050 = vpop.f32.mrb[0].mxu0
        %2051 = vdwg.mxu0
        %v2052 = vmax.f32 %v2038, 0.0
        %v2053 = vmax.f32 %v2041, 0.0
        %v2054 = vmax.f32 %v2046, 0.0
        %v2055 = vmax.f32 %v2049, 0.0
        %v2056 = vpack.c.bf16 %v2053, %v2052
        %v2057 = vpack.c.bf16 %v2055, %v2054
        %2058 = vmatprep.subr.bf16.mxu0 0
        %2059 = vmatpush1.bf16.msra.mxu0 %v2056
        %2060 = vmatprep.subr.bf16.mxu0 0
        %2061 = vmatpush1.bf16.msra.mxu0 %v2057
        %2062 = vmatprep.subr.bf16.mxu0 0
        %2063 = vmatpush1.bf16.msra.mxu0 0
        %2064 = vmatprep.subr.bf16.mxu0 0
        %2065 = vmatpush1.bf16.msra.mxu0 0
        %2066 = vmatprep.subr.bf16.mxu0 0
        %2067 = vmatpush1.bf16.msra.mxu0 0
        %2068 = vmatprep.subr.bf16.mxu0 0
        %2069 = vmatpush1.bf16.msra.mxu0 0
        %2070 = vmatprep.subr.bf16.mxu0 0
        %2071 = vmatpush1.bf16.msra.mxu0 0
        %2072 = vmatprep.subr.bf16.mxu0 0
        %2073 = vmatpush1.bf16.msra.mxu0 0
        %2074 = vmatprep.subr.bf16.mxu0 0
        %2075 = vmatpush1.bf16.msra.mxu0 0
        %2076 = vmatprep.subr.bf16.mxu0 0
        %2077 = vmatpush1.bf16.msra.mxu0 0
        %2078 = vmatprep.subr.bf16.mxu0 0
        %2079 = vmatpush1.bf16.msra.mxu0 0
        %2080 = vmatprep.subr.bf16.mxu0 0
        %2081 = vmatpush1.bf16.msra.mxu0 0
        %2082 = vmatprep.subr.bf16.mxu0 0
        %2083 = vmatpush1.bf16.msra.mxu0 0
        %2084 = vmatprep.subr.bf16.mxu0 0
        %2085 = vmatpush1.bf16.msra.mxu0 0
        %2086 = vmatprep.subr.bf16.mxu0 0
        %2087 = vmatpush1.bf16.msra.mxu0 0
        %2088 = vmatprep.subr.bf16.mxu0 0
        %2089 = vmatpush1.bf16.msra.mxu0 0
        %2090 = vmatprep.mubr.bf16.mxu0 0
        %2091 = vmatmul.mubr.bf16.gmra.mrb[0].mxu0 %v656
        %v2092 = vpop.f32.mrb[0].mxu0
        %v2093 = vadd.f32 %v653, %v2092
        %v2094 = vpop.f32.mrb[0].mxu0
        %v2095 = vpop.f32.mrb[0].mxu0
        %v2096 = vpop.f32.mrb[0].mxu0
        %2097 = vdwg.mxu0
        %v2098 = vmul.f32 %v2093, %v1911
        %v2099 = vrot.slane %v2098, 4
        %v2100 = vadd.f32 %v2098, %v2099
        %v2101 = vrot.slane %v2100, 2
        %v2102 = vadd.f32 %v2100, %v2101
        %v2103 = vrot.slane %v2102, 1
        %v2104 = vadd.f32 %v2102, %v2103
        %v2105 = vmul.f32 %v1911, 0.2
        %v2106 = vadd.f32 %v2105, 1.0007813
        %v2107 = vmul.f32 %v1907, %v2106
        %v2108 = vmul.f32 %v1909, 1.0004687
        %v2109 = vadd.f32 %v2108, %v2104
        %s2110 = scalar_lea.vmem %s365, 64 [#allocation3]
        %v2111 = vld [vmem:[%s2110] sm:$0xff]
        %s2112 = sadd.s32 %s446, 8
        %s2113 = scvt.s32.f32 %s2112
        %s2114 = smul.f32 %s2113, 0.015625
        %v2115 = vstv %s2114
        %v2116 = vmul.f32 %v2115, %v433
        %v2117 = vmul.f32 %v2115, %v434
        %v2118 = vmul.f32 %v2115, %v435
        %v2119 = vmul.f32 %v2115, %v436
        %v2120 = vadd.f32 %v437, %v2116
        %v2121 = vadd.f32 %v438, %v2117
        %v2122 = vadd.f32 %v439, %v2118
        %v2123 = vadd.f32 %v440, %v2119
        %v2124 = vpack.c.bf16 %v2107, %v2107
        %2126 = vset.pattern.permute.xlu0 0
        %2127 = vperm.xlu0 %2126, %v2120
        %v2128 = vpop.permute.xlu0 %2127
        %2131 = vset.pattern.permute.xlu0 0
        %2132 = vperm.xlu0 %2131, %v2121
        %v2133 = vpop.permute.xlu0 %2132
        %2136 = vset.pattern.permute.xlu0 0
        %2137 = vperm.xlu0 %2136, %v2122
        %v2138 = vpop.permute.xlu0 %2137
        %2141 = vset.pattern.permute.xlu0 0
        %2142 = vperm.xlu0 %2141, %v2123
        %v2143 = vpop.permute.xlu0 %2142
        %v2146 = vsel %vm499, %v2124, 0
        %2148 = vmatprep.subr.bf16.mxu0 0
        %2149 = vmatpush1.bf16.msra.mxu0 %v2146
        %2150 = vmatprep.subr.bf16.mxu0 0
        %2151 = vmatpush1.bf16.msra.mxu0 0
        %2152 = vmatprep.subr.bf16.mxu0 0
        %2153 = vmatpush1.bf16.msra.mxu0 0
        %2154 = vmatprep.subr.bf16.mxu0 0
        %2155 = vmatpush1.bf16.msra.mxu0 0
        %2156 = vmatprep.subr.bf16.mxu0 0
        %2157 = vmatpush1.bf16.msra.mxu0 0
        %2158 = vmatprep.subr.bf16.mxu0 0
        %2159 = vmatpush1.bf16.msra.mxu0 0
        %2160 = vmatprep.subr.bf16.mxu0 0
        %2161 = vmatpush1.bf16.msra.mxu0 0
        %2162 = vmatprep.subr.bf16.mxu0 0
        %2163 = vmatpush1.bf16.msra.mxu0 0
        %2164 = vmatprep.subr.bf16.mxu0 0
        %2165 = vmatpush1.bf16.msra.mxu0 0
        %2166 = vmatprep.subr.bf16.mxu0 0
        %2167 = vmatpush1.bf16.msra.mxu0 0
        %2168 = vmatprep.subr.bf16.mxu0 0
        %2169 = vmatpush1.bf16.msra.mxu0 0
        %2170 = vmatprep.subr.bf16.mxu0 0
        %2171 = vmatpush1.bf16.msra.mxu0 0
        %2172 = vmatprep.subr.bf16.mxu0 0
        %2173 = vmatpush1.bf16.msra.mxu0 0
        %2174 = vmatprep.subr.bf16.mxu0 0
        %2175 = vmatpush1.bf16.msra.mxu0 0
        %2176 = vmatprep.subr.bf16.mxu0 0
        %2177 = vmatpush1.bf16.msra.mxu0 0
        %2178 = vmatprep.subr.bf16.mxu0 0
        %2179 = vmatpush1.bf16.msra.mxu0 0
        %2180 = vmatprep.mubr.bf16.mxu0 0
        %2181 = vmatmul.mubr.bf16.gmra.mrb[0].mxu0 %v494
        %v2182 = vpop.f32.mrb[0].mxu0
        %v2183 = vadd.f32 %v2128, %v2182
        %v2184 = vpop.f32.mrb[0].mxu0
        %v2185 = vpop.f32.mrb[0].mxu0
        %v2186 = vadd.f32 %v2133, %v2185
        %v2187 = vpop.f32.mrb[0].mxu0
        %2188 = vmatprep.mubr.bf16.mxu0 0
        %2189 = vmatmul.mubr.bf16.gmra.mrb[0].mxu0 %v497
        %v2190 = vpop.f32.mrb[0].mxu0
        %v2191 = vadd.f32 %v2138, %v2190
        %v2192 = vpop.f32.mrb[0].mxu0
        %v2193 = vpop.f32.mrb[0].mxu0
        %v2194 = vadd.f32 %v2143, %v2193
        %v2195 = vpop.f32.mrb[0].mxu0
        %2196 = vdwg.mxu0
        %v2197 = vmax.f32 %v2183, 0.0
        %v2198 = vmax.f32 %v2186, 0.0
        %v2199 = vmax.f32 %v2191, 0.0
        %v2200 = vmax.f32 %v2194, 0.0
        %v2201 = vpack.c.bf16 %v2198, %v2197
        %v2202 = vpack.c.bf16 %v2200, %v2199
        %2203 = vmatprep.subr.bf16.mxu0 0
        %2204 = vmatpush1.bf16.msra.mxu0 %v2201
        %2205 = vmatprep.subr.bf16.mxu0 0
        %2206 = vmatpush1.bf16.msra.mxu0 %v2202
        %2207 = vmatprep.subr.bf16.mxu0 0
        %2208 = vmatpush1.bf16.msra.mxu0 0
        %2209 = vmatprep.subr.bf16.mxu0 0
        %2210 = vmatpush1.bf16.msra.mxu0 0
        %2211 = vmatprep.subr.bf16.mxu0 0
        %2212 = vmatpush1.bf16.msra.mxu0 0
        %2213 = vmatprep.subr.bf16.mxu0 0
        %2214 = vmatpush1.bf16.msra.mxu0 0
        %2215 = vmatprep.subr.bf16.mxu0 0
        %2216 = vmatpush1.bf16.msra.mxu0 0
        %2217 = vmatprep.subr.bf16.mxu0 0
        %2218 = vmatpush1.bf16.msra.mxu0 0
        %2219 = vmatprep.subr.bf16.mxu0 0
        %2220 = vmatpush1.bf16.msra.mxu0 0
        %2221 = vmatprep.subr.bf16.mxu0 0
        %2222 = vmatpush1.bf16.msra.mxu0 0
        %2223 = vmatprep.subr.bf16.mxu0 0
        %2224 = vmatpush1.bf16.msra.mxu0 0
        %2225 = vmatprep.subr.bf16.mxu0 0
        %2226 = vmatpush1.bf16.msra.mxu0 0
        %2227 = vmatprep.subr.bf16.mxu0 0
        %2228 = vmatpush1.bf16.msra.mxu0 0
        %2229 = vmatprep.subr.bf16.mxu0 0
        %2230 = vmatpush1.bf16.msra.mxu0 0
        %2231 = vmatprep.subr.bf16.mxu0 0
        %2232 = vmatpush1.bf16.msra.mxu0 0
        %2233 = vmatprep.subr.bf16.mxu0 0
        %2234 = vmatpush1.bf16.msra.mxu0 0
        %2235 = vmatprep.mubr.bf16.mxu0 0
        %2236 = vmatmul.mubr.bf16.gmra.mrb[0].mxu0 %v590
        %v2237 = vpop.f32.mrb[0].mxu0
        %v2238 = vadd.f32 %v561, %v2237
        %v2239 = vpop.f32.mrb[0].mxu0
        %v2240 = vpop.f32.mrb[0].mxu0
        %v2241 = vadd.f32 %v566, %v2240
        %v2242 = vpop.f32.mrb[0].mxu0
        %2243 = vmatprep.mubr.bf16.mxu0 0
        %2244 = vmatmul.mubr.bf16.gmra.mrb[0].mxu0 %v593
        %v2245 = vpop.f32.mrb[0].mxu0
        %v2246 = vadd.f32 %v571, %v2245
        %v2247 = vpop.f32.mrb[0].mxu0
        %v2248 = vpop.f32.mrb[0].mxu0
        %v2249 = vadd.f32 %v576, %v2248
        %v2250 = vpop.f32.mrb[0].mxu0
        %2251 = vdwg.mxu0
        %v2252 = vmax.f32 %v2238, 0.0
        %v2253 = vmax.f32 %v2241, 0.0
        %v2254 = vmax.f32 %v2246, 0.0
        %v2255 = vmax.f32 %v2249, 0.0
        %v2256 = vpack.c.bf16 %v2253, %v2252
        %v2257 = vpack.c.bf16 %v2255, %v2254
        %2258 = vmatprep.subr.bf16.mxu0 0
        %2259 = vmatpush1.bf16.msra.mxu0 %v2256
        %2260 = vmatprep.subr.bf16.mxu0 0
        %2261 = vmatpush1.bf16.msra.mxu0 %v2257
        %2262 = vmatprep.subr.bf16.mxu0 0
        %2263 = vmatpush1.bf16.msra.mxu0 0
        %2264 = vmatprep.subr.bf16.mxu0 0
        %2265 = vmatpush1.bf16.msra.mxu0 0
        %2266 = vmatprep.subr.bf16.mxu0 0
        %2267 = vmatpush1.bf16.msra.mxu0 0
        %2268 = vmatprep.subr.bf16.mxu0 0
        %2269 = vmatpush1.bf16.msra.mxu0 0
        %2270 = vmatprep.subr.bf16.mxu0 0
        %2271 = vmatpush1.bf16.msra.mxu0 0
        %2272 = vmatprep.subr.bf16.mxu0 0
        %2273 = vmatpush1.bf16.msra.mxu0 0
        %2274 = vmatprep.subr.bf16.mxu0 0
        %2275 = vmatpush1.bf16.msra.mxu0 0
        %2276 = vmatprep.subr.bf16.mxu0 0
        %2277 = vmatpush1.bf16.msra.mxu0 0
        %2278 = vmatprep.subr.bf16.mxu0 0
        %2279 = vmatpush1.bf16.msra.mxu0 0
        %2280 = vmatprep.subr.bf16.mxu0 0
        %2281 = vmatpush1.bf16.msra.mxu0 0
        %2282 = vmatprep.subr.bf16.mxu0 0
        %2283 = vmatpush1.bf16.msra.mxu0 0
        %2284 = vmatprep.subr.bf16.mxu0 0
        %2285 = vmatpush1.bf16.msra.mxu0 0
        %2286 = vmatprep.subr.bf16.mxu0 0
        %2287 = vmatpush1.bf16.msra.mxu0 0
        %2288 = vmatprep.subr.bf16.mxu0 0
        %2289 = vmatpush1.bf16.msra.mxu0 0
        %2290 = vmatprep.mubr.bf16.mxu0 0
        %2291 = vmatmul.mubr.bf16.gmra.mrb[0].mxu0 %v656
        %v2292 = vpop.f32.mrb[0].mxu0
        %v2293 = vadd.f32 %v653, %v2292
        %v2294 = vpop.f32.mrb[0].mxu0
        %v2295 = vpop.f32.mrb[0].mxu0
        %v2296 = vpop.f32.mrb[0].mxu0
        %2297 = vdwg.mxu0
        %v2298 = vmul.f32 %v2293, %v2111
        %v2299 = vrot.slane %v2298, 4
        %v2300 = vadd.f32 %v2298, %v2299
        %v2301 = vrot.slane %v2300, 2
        %v2302 = vadd.f32 %v2300, %v2301
        %v2303 = vrot.slane %v2302, 1
        %v2304 = vadd.f32 %v2302, %v2303
        %v2305 = vmul.f32 %v2111, 0.2
        %v2306 = vadd.f32 %v2305, 1.0007813
        %v2307 = vmul.f32 %v2107, %v2306
        %v2308 = vmul.f32 %v2109, 1.0004687
        %v2309 = vadd.f32 %v2308, %v2304
        %s2310 = scalar_lea.vmem %s365, 72 [#allocation3]
        %v2311 = vld [vmem:[%s2310] sm:$0xff]
        %s2312 = sadd.s32 %s446, 9
        %s2313 = scvt.s32.f32 %s2312
        %s2314 = smul.f32 %s2313, 0.015625
        %v2315 = vstv %s2314
        %v2316 = vmul.f32 %v2315, %v433
        %v2317 = vmul.f32 %v2315, %v434
        %v2318 = vmul.f32 %v2315, %v435
        %v2319 = vmul.f32 %v2315, %v436
        %v2320 = vadd.f32 %v437, %v2316
        %v2321 = vadd.f32 %v438, %v2317
        %v2322 = vadd.f32 %v439, %v2318
        %v2323 = vadd.f32 %v440, %v2319
        %v2324 = vpack.c.bf16 %v2307, %v2307
        %2326 = vset.pattern.permute.xlu0 0
        %2327 = vperm.xlu0 %2326, %v2320
        %v2328 = vpop.permute.xlu0 %2327
        %2331 = vset.pattern.permute.xlu0 0
        %2332 = vperm.xlu0 %2331, %v2321
        %v2333 = vpop.permute.xlu0 %2332
        %2336 = vset.pattern.permute.xlu0 0
        %2337 = vperm.xlu0 %2336, %v2322
        %v2338 = vpop.permute.xlu0 %2337
        %2341 = vset.pattern.permute.xlu0 0
        %2342 = vperm.xlu0 %2341, %v2323
        %v2343 = vpop.permute.xlu0 %2342
        %v2346 = vsel %vm499, %v2324, 0
        %2348 = vmatprep.subr.bf16.mxu0 0
        %2349 = vmatpush1.bf16.msra.mxu0 %v2346
        %2350 = vmatprep.subr.bf16.mxu0 0
        %2351 = vmatpush1.bf16.msra.mxu0 0
        %2352 = vmatprep.subr.bf16.mxu0 0
        %2353 = vmatpush1.bf16.msra.mxu0 0
        %2354 = vmatprep.subr.bf16.mxu0 0
        %2355 = vmatpush1.bf16.msra.mxu0 0
        %2356 = vmatprep.subr.bf16.mxu0 0
        %2357 = vmatpush1.bf16.msra.mxu0 0
        %2358 = vmatprep.subr.bf16.mxu0 0
        %2359 = vmatpush1.bf16.msra.mxu0 0
        %2360 = vmatprep.subr.bf16.mxu0 0
        %2361 = vmatpush1.bf16.msra.mxu0 0
        %2362 = vmatprep.subr.bf16.mxu0 0
        %2363 = vmatpush1.bf16.msra.mxu0 0
        %2364 = vmatprep.subr.bf16.mxu0 0
        %2365 = vmatpush1.bf16.msra.mxu0 0
        %2366 = vmatprep.subr.bf16.mxu0 0
        %2367 = vmatpush1.bf16.msra.mxu0 0
        %2368 = vmatprep.subr.bf16.mxu0 0
        %2369 = vmatpush1.bf16.msra.mxu0 0
        %2370 = vmatprep.subr.bf16.mxu0 0
        %2371 = vmatpush1.bf16.msra.mxu0 0
        %2372 = vmatprep.subr.bf16.mxu0 0
        %2373 = vmatpush1.bf16.msra.mxu0 0
        %2374 = vmatprep.subr.bf16.mxu0 0
        %2375 = vmatpush1.bf16.msra.mxu0 0
        %2376 = vmatprep.subr.bf16.mxu0 0
        %2377 = vmatpush1.bf16.msra.mxu0 0
        %2378 = vmatprep.subr.bf16.mxu0 0
        %2379 = vmatpush1.bf16.msra.mxu0 0
        %2380 = vmatprep.mubr.bf16.mxu0 0
        %2381 = vmatmul.mubr.bf16.gmra.mrb[0].mxu0 %v494
        %v2382 = vpop.f32.mrb[0].mxu0
        %v2383 = vadd.f32 %v2328, %v2382
        %v2384 = vpop.f32.mrb[0].mxu0
        %v2385 = vpop.f32.mrb[0].mxu0
        %v2386 = vadd.f32 %v2333, %v2385
        %v2387 = vpop.f32.mrb[0].mxu0
        %2388 = vmatprep.mubr.bf16.mxu0 0
        %2389 = vmatmul.mubr.bf16.gmra.mrb[0].mxu0 %v497
        %v2390 = vpop.f32.mrb[0].mxu0
        %v2391 = vadd.f32 %v2338, %v2390
        %v2392 = vpop.f32.mrb[0].mxu0
        %v2393 = vpop.f32.mrb[0].mxu0
        %v2394 = vadd.f32 %v2343, %v2393
        %v2395 = vpop.f32.mrb[0].mxu0
        %2396 = vdwg.mxu0
        %v2397 = vmax.f32 %v2383, 0.0
        %v2398 = vmax.f32 %v2386, 0.0
        %v2399 = vmax.f32 %v2391, 0.0
        %v2400 = vmax.f32 %v2394, 0.0
        %v2401 = vpack.c.bf16 %v2398, %v2397
        %v2402 = vpack.c.bf16 %v2400, %v2399
        %2403 = vmatprep.subr.bf16.mxu0 0
        %2404 = vmatpush1.bf16.msra.mxu0 %v2401
        %2405 = vmatprep.subr.bf16.mxu0 0
        %2406 = vmatpush1.bf16.msra.mxu0 %v2402
        %2407 = vmatprep.subr.bf16.mxu0 0
        %2408 = vmatpush1.bf16.msra.mxu0 0
        %2409 = vmatprep.subr.bf16.mxu0 0
        %2410 = vmatpush1.bf16.msra.mxu0 0
        %2411 = vmatprep.subr.bf16.mxu0 0
        %2412 = vmatpush1.bf16.msra.mxu0 0
        %2413 = vmatprep.subr.bf16.mxu0 0
        %2414 = vmatpush1.bf16.msra.mxu0 0
        %2415 = vmatprep.subr.bf16.mxu0 0
        %2416 = vmatpush1.bf16.msra.mxu0 0
        %2417 = vmatprep.subr.bf16.mxu0 0
        %2418 = vmatpush1.bf16.msra.mxu0 0
        %2419 = vmatprep.subr.bf16.mxu0 0
        %2420 = vmatpush1.bf16.msra.mxu0 0
        %2421 = vmatprep.subr.bf16.mxu0 0
        %2422 = vmatpush1.bf16.msra.mxu0 0
        %2423 = vmatprep.subr.bf16.mxu0 0
        %2424 = vmatpush1.bf16.msra.mxu0 0
        %2425 = vmatprep.subr.bf16.mxu0 0
        %2426 = vmatpush1.bf16.msra.mxu0 0
        %2427 = vmatprep.subr.bf16.mxu0 0
        %2428 = vmatpush1.bf16.msra.mxu0 0
        %2429 = vmatprep.subr.bf16.mxu0 0
        %2430 = vmatpush1.bf16.msra.mxu0 0
        %2431 = vmatprep.subr.bf16.mxu0 0
        %2432 = vmatpush1.bf16.msra.mxu0 0
        %2433 = vmatprep.subr.bf16.mxu0 0
        %2434 = vmatpush1.bf16.msra.mxu0 0
        %2435 = vmatprep.mubr.bf16.mxu0 0
        %2436 = vmatmul.mubr.bf16.gmra.mrb[0].mxu0 %v590
        %v2437 = vpop.f32.mrb[0].mxu0
        %v2438 = vadd.f32 %v561, %v2437
        %v2439 = vpop.f32.mrb[0].mxu0
        %v2440 = vpop.f32.mrb[0].mxu0
        %v2441 = vadd.f32 %v566, %v2440
        %v2442 = vpop.f32.mrb[0].mxu0
        %2443 = vmatprep.mubr.bf16.mxu0 0
        %2444 = vmatmul.mubr.bf16.gmra.mrb[0].mxu0 %v593
        %v2445 = vpop.f32.mrb[0].mxu0
        %v2446 = vadd.f32 %v571, %v2445
        %v2447 = vpop.f32.mrb[0].mxu0
        %v2448 = vpop.f32.mrb[0].mxu0
        %v2449 = vadd.f32 %v576, %v2448
        %v2450 = vpop.f32.mrb[0].mxu0
        %2451 = vdwg.mxu0
        %v2452 = vmax.f32 %v2438, 0.0
        %v2453 = vmax.f32 %v2441, 0.0
        %v2454 = vmax.f32 %v2446, 0.0
        %v2455 = vmax.f32 %v2449, 0.0
        %v2456 = vpack.c.bf16 %v2453, %v2452
        %v2457 = vpack.c.bf16 %v2455, %v2454
        %2458 = vmatprep.subr.bf16.mxu0 0
        %2459 = vmatpush1.bf16.msra.mxu0 %v2456
        %2460 = vmatprep.subr.bf16.mxu0 0
        %2461 = vmatpush1.bf16.msra.mxu0 %v2457
        %2462 = vmatprep.subr.bf16.mxu0 0
        %2463 = vmatpush1.bf16.msra.mxu0 0
        %2464 = vmatprep.subr.bf16.mxu0 0
        %2465 = vmatpush1.bf16.msra.mxu0 0
        %2466 = vmatprep.subr.bf16.mxu0 0
        %2467 = vmatpush1.bf16.msra.mxu0 0
        %2468 = vmatprep.subr.bf16.mxu0 0
        %2469 = vmatpush1.bf16.msra.mxu0 0
        %2470 = vmatprep.subr.bf16.mxu0 0
        %2471 = vmatpush1.bf16.msra.mxu0 0
        %2472 = vmatprep.subr.bf16.mxu0 0
        %2473 = vmatpush1.bf16.msra.mxu0 0
        %2474 = vmatprep.subr.bf16.mxu0 0
        %2475 = vmatpush1.bf16.msra.mxu0 0
        %2476 = vmatprep.subr.bf16.mxu0 0
        %2477 = vmatpush1.bf16.msra.mxu0 0
        %2478 = vmatprep.subr.bf16.mxu0 0
        %2479 = vmatpush1.bf16.msra.mxu0 0
        %2480 = vmatprep.subr.bf16.mxu0 0
        %2481 = vmatpush1.bf16.msra.mxu0 0
        %2482 = vmatprep.subr.bf16.mxu0 0
        %2483 = vmatpush1.bf16.msra.mxu0 0
        %2484 = vmatprep.subr.bf16.mxu0 0
        %2485 = vmatpush1.bf16.msra.mxu0 0
        %2486 = vmatprep.subr.bf16.mxu0 0
        %2487 = vmatpush1.bf16.msra.mxu0 0
        %2488 = vmatprep.subr.bf16.mxu0 0
        %2489 = vmatpush1.bf16.msra.mxu0 0
        %2490 = vmatprep.mubr.bf16.mxu0 0
        %2491 = vmatmul.mubr.bf16.gmra.mrb[0].mxu0 %v656
        %v2492 = vpop.f32.mrb[0].mxu0
        %v2493 = vadd.f32 %v653, %v2492
        %v2494 = vpop.f32.mrb[0].mxu0
        %v2495 = vpop.f32.mrb[0].mxu0
        %v2496 = vpop.f32.mrb[0].mxu0
        %2497 = vdwg.mxu0
        %v2498 = vmul.f32 %v2493, %v2311
        %v2499 = vrot.slane %v2498, 4
        %v2500 = vadd.f32 %v2498, %v2499
        %v2501 = vrot.slane %v2500, 2
        %v2502 = vadd.f32 %v2500, %v2501
        %v2503 = vrot.slane %v2502, 1
        %v2504 = vadd.f32 %v2502, %v2503
        %v2505 = vmul.f32 %v2311, 0.2
        %v2506 = vadd.f32 %v2505, 1.0007813
        %v2507 = vmul.f32 %v2307, %v2506
        %v2508 = vmul.f32 %v2309, 1.0004687
        %v2509 = vadd.f32 %v2508, %v2504
        %s2510 = scalar_lea.vmem %s365, 80 [#allocation3]
        %v2511 = vld [vmem:[%s2510] sm:$0xff]
        %s2512 = sadd.s32 %s446, 10
        %s2513 = scvt.s32.f32 %s2512
        %s2514 = smul.f32 %s2513, 0.015625
        %v2515 = vstv %s2514
        %v2516 = vmul.f32 %v2515, %v433
        %v2517 = vmul.f32 %v2515, %v434
        %v2518 = vmul.f32 %v2515, %v435
        %v2519 = vmul.f32 %v2515, %v436
        %v2520 = vadd.f32 %v437, %v2516
        %v2521 = vadd.f32 %v438, %v2517
        %v2522 = vadd.f32 %v439, %v2518
        %v2523 = vadd.f32 %v440, %v2519
        %v2524 = vpack.c.bf16 %v2507, %v2507
        %2526 = vset.pattern.permute.xlu0 0
        %2527 = vperm.xlu0 %2526, %v2520
        %v2528 = vpop.permute.xlu0 %2527
        %2531 = vset.pattern.permute.xlu0 0
        %2532 = vperm.xlu0 %2531, %v2521
        %v2533 = vpop.permute.xlu0 %2532
        %2536 = vset.pattern.permute.xlu0 0
        %2537 = vperm.xlu0 %2536, %v2522
        %v2538 = vpop.permute.xlu0 %2537
        %2541 = vset.pattern.permute.xlu0 0
        %2542 = vperm.xlu0 %2541, %v2523
        %v2543 = vpop.permute.xlu0 %2542
        %v2546 = vsel %vm499, %v2524, 0
        %2548 = vmatprep.subr.bf16.mxu0 0
        %2549 = vmatpush1.bf16.msra.mxu0 %v2546
        %2550 = vmatprep.subr.bf16.mxu0 0
        %2551 = vmatpush1.bf16.msra.mxu0 0
        %2552 = vmatprep.subr.bf16.mxu0 0
        %2553 = vmatpush1.bf16.msra.mxu0 0
        %2554 = vmatprep.subr.bf16.mxu0 0
        %2555 = vmatpush1.bf16.msra.mxu0 0
        %2556 = vmatprep.subr.bf16.mxu0 0
        %2557 = vmatpush1.bf16.msra.mxu0 0
        %2558 = vmatprep.subr.bf16.mxu0 0
        %2559 = vmatpush1.bf16.msra.mxu0 0
        %2560 = vmatprep.subr.bf16.mxu0 0
        %2561 = vmatpush1.bf16.msra.mxu0 0
        %2562 = vmatprep.subr.bf16.mxu0 0
        %2563 = vmatpush1.bf16.msra.mxu0 0
        %2564 = vmatprep.subr.bf16.mxu0 0
        %2565 = vmatpush1.bf16.msra.mxu0 0
        %2566 = vmatprep.subr.bf16.mxu0 0
        %2567 = vmatpush1.bf16.msra.mxu0 0
        %2568 = vmatprep.subr.bf16.mxu0 0
        %2569 = vmatpush1.bf16.msra.mxu0 0
        %2570 = vmatprep.subr.bf16.mxu0 0
        %2571 = vmatpush1.bf16.msra.mxu0 0
        %2572 = vmatprep.subr.bf16.mxu0 0
        %2573 = vmatpush1.bf16.msra.mxu0 0
        %2574 = vmatprep.subr.bf16.mxu0 0
        %2575 = vmatpush1.bf16.msra.mxu0 0
        %2576 = vmatprep.subr.bf16.mxu0 0
        %2577 = vmatpush1.bf16.msra.mxu0 0
        %2578 = vmatprep.subr.bf16.mxu0 0
        %2579 = vmatpush1.bf16.msra.mxu0 0
        %2580 = vmatprep.mubr.bf16.mxu0 0
        %2581 = vmatmul.mubr.bf16.gmra.mrb[0].mxu0 %v494
        %v2582 = vpop.f32.mrb[0].mxu0
        %v2583 = vadd.f32 %v2528, %v2582
        %v2584 = vpop.f32.mrb[0].mxu0
        %v2585 = vpop.f32.mrb[0].mxu0
        %v2586 = vadd.f32 %v2533, %v2585
        %v2587 = vpop.f32.mrb[0].mxu0
        %2588 = vmatprep.mubr.bf16.mxu0 0
        %2589 = vmatmul.mubr.bf16.gmra.mrb[0].mxu0 %v497
        %v2590 = vpop.f32.mrb[0].mxu0
        %v2591 = vadd.f32 %v2538, %v2590
        %v2592 = vpop.f32.mrb[0].mxu0
        %v2593 = vpop.f32.mrb[0].mxu0
        %v2594 = vadd.f32 %v2543, %v2593
        %v2595 = vpop.f32.mrb[0].mxu0
        %2596 = vdwg.mxu0
        %v2597 = vmax.f32 %v2583, 0.0
        %v2598 = vmax.f32 %v2586, 0.0
        %v2599 = vmax.f32 %v2591, 0.0
        %v2600 = vmax.f32 %v2594, 0.0
        %v2601 = vpack.c.bf16 %v2598, %v2597
        %v2602 = vpack.c.bf16 %v2600, %v2599
        %2603 = vmatprep.subr.bf16.mxu0 0
        %2604 = vmatpush1.bf16.msra.mxu0 %v2601
        %2605 = vmatprep.subr.bf16.mxu0 0
        %2606 = vmatpush1.bf16.msra.mxu0 %v2602
        %2607 = vmatprep.subr.bf16.mxu0 0
        %2608 = vmatpush1.bf16.msra.mxu0 0
        %2609 = vmatprep.subr.bf16.mxu0 0
        %2610 = vmatpush1.bf16.msra.mxu0 0
        %2611 = vmatprep.subr.bf16.mxu0 0
        %2612 = vmatpush1.bf16.msra.mxu0 0
        %2613 = vmatprep.subr.bf16.mxu0 0
        %2614 = vmatpush1.bf16.msra.mxu0 0
        %2615 = vmatprep.subr.bf16.mxu0 0
        %2616 = vmatpush1.bf16.msra.mxu0 0
        %2617 = vmatprep.subr.bf16.mxu0 0
        %2618 = vmatpush1.bf16.msra.mxu0 0
        %2619 = vmatprep.subr.bf16.mxu0 0
        %2620 = vmatpush1.bf16.msra.mxu0 0
        %2621 = vmatprep.subr.bf16.mxu0 0
        %2622 = vmatpush1.bf16.msra.mxu0 0
        %2623 = vmatprep.subr.bf16.mxu0 0
        %2624 = vmatpush1.bf16.msra.mxu0 0
        %2625 = vmatprep.subr.bf16.mxu0 0
        %2626 = vmatpush1.bf16.msra.mxu0 0
        %2627 = vmatprep.subr.bf16.mxu0 0
        %2628 = vmatpush1.bf16.msra.mxu0 0
        %2629 = vmatprep.subr.bf16.mxu0 0
        %2630 = vmatpush1.bf16.msra.mxu0 0
        %2631 = vmatprep.subr.bf16.mxu0 0
        %2632 = vmatpush1.bf16.msra.mxu0 0
        %2633 = vmatprep.subr.bf16.mxu0 0
        %2634 = vmatpush1.bf16.msra.mxu0 0
        %2635 = vmatprep.mubr.bf16.mxu0 0
        %2636 = vmatmul.mubr.bf16.gmra.mrb[0].mxu0 %v590
        %v2637 = vpop.f32.mrb[0].mxu0
        %v2638 = vadd.f32 %v561, %v2637
        %v2639 = vpop.f32.mrb[0].mxu0
        %v2640 = vpop.f32.mrb[0].mxu0
        %v2641 = vadd.f32 %v566, %v2640
        %v2642 = vpop.f32.mrb[0].mxu0
        %2643 = vmatprep.mubr.bf16.mxu0 0
        %2644 = vmatmul.mubr.bf16.gmra.mrb[0].mxu0 %v593
        %v2645 = vpop.f32.mrb[0].mxu0
        %v2646 = vadd.f32 %v571, %v2645
        %v2647 = vpop.f32.mrb[0].mxu0
        %v2648 = vpop.f32.mrb[0].mxu0
        %v2649 = vadd.f32 %v576, %v2648
        %v2650 = vpop.f32.mrb[0].mxu0
        %2651 = vdwg.mxu0
        %v2652 = vmax.f32 %v2638, 0.0
        %v2653 = vmax.f32 %v2641, 0.0
        %v2654 = vmax.f32 %v2646, 0.0
        %v2655 = vmax.f32 %v2649, 0.0
        %v2656 = vpack.c.bf16 %v2653, %v2652
        %v2657 = vpack.c.bf16 %v2655, %v2654
        %2658 = vmatprep.subr.bf16.mxu0 0
        %2659 = vmatpush1.bf16.msra.mxu0 %v2656
        %2660 = vmatprep.subr.bf16.mxu0 0
        %2661 = vmatpush1.bf16.msra.mxu0 %v2657
        %2662 = vmatprep.subr.bf16.mxu0 0
        %2663 = vmatpush1.bf16.msra.mxu0 0
        %2664 = vmatprep.subr.bf16.mxu0 0
        %2665 = vmatpush1.bf16.msra.mxu0 0
        %2666 = vmatprep.subr.bf16.mxu0 0
        %2667 = vmatpush1.bf16.msra.mxu0 0
        %2668 = vmatprep.subr.bf16.mxu0 0
        %2669 = vmatpush1.bf16.msra.mxu0 0
        %2670 = vmatprep.subr.bf16.mxu0 0
        %2671 = vmatpush1.bf16.msra.mxu0 0
        %2672 = vmatprep.subr.bf16.mxu0 0
        %2673 = vmatpush1.bf16.msra.mxu0 0
        %2674 = vmatprep.subr.bf16.mxu0 0
        %2675 = vmatpush1.bf16.msra.mxu0 0
        %2676 = vmatprep.subr.bf16.mxu0 0
        %2677 = vmatpush1.bf16.msra.mxu0 0
        %2678 = vmatprep.subr.bf16.mxu0 0
        %2679 = vmatpush1.bf16.msra.mxu0 0
        %2680 = vmatprep.subr.bf16.mxu0 0
        %2681 = vmatpush1.bf16.msra.mxu0 0
        %2682 = vmatprep.subr.bf16.mxu0 0
        %2683 = vmatpush1.bf16.msra.mxu0 0
        %2684 = vmatprep.subr.bf16.mxu0 0
        %2685 = vmatpush1.bf16.msra.mxu0 0
        %2686 = vmatprep.subr.bf16.mxu0 0
        %2687 = vmatpush1.bf16.msra.mxu0 0
        %2688 = vmatprep.subr.bf16.mxu0 0
        %2689 = vmatpush1.bf16.msra.mxu0 0
        %2690 = vmatprep.mubr.bf16.mxu0 0
        %2691 = vmatmul.mubr.bf16.gmra.mrb[0].mxu0 %v656
        %v2692 = vpop.f32.mrb[0].mxu0
        %v2693 = vadd.f32 %v653, %v2692
        %v2694 = vpop.f32.mrb[0].mxu0
        %v2695 = vpop.f32.mrb[0].mxu0
        %v2696 = vpop.f32.mrb[0].mxu0
        %2697 = vdwg.mxu0
        %v2698 = vmul.f32 %v2693, %v2511
        %v2699 = vrot.slane %v2698, 4
        %v2700 = vadd.f32 %v2698, %v2699
        %v2701 = vrot.slane %v2700, 2
        %v2702 = vadd.f32 %v2700, %v2701
        %v2703 = vrot.slane %v2702, 1
        %v2704 = vadd.f32 %v2702, %v2703
        %v2705 = vmul.f32 %v2511, 0.2
        %v2706 = vadd.f32 %v2705, 1.0007813
        %v2707 = vmul.f32 %v2507, %v2706
        %v2708 = vmul.f32 %v2509, 1.0004687
        %v2709 = vadd.f32 %v2708, %v2704
        %s2710 = scalar_lea.vmem %s365, 88 [#allocation3]
        %v2711 = vld [vmem:[%s2710] sm:$0xff]
        %s2712 = sadd.s32 %s446, 11
        %s2713 = scvt.s32.f32 %s2712
        %s2714 = smul.f32 %s2713, 0.015625
        %v2715 = vstv %s2714
        %v2716 = vmul.f32 %v2715, %v433
        %v2717 = vmul.f32 %v2715, %v434
        %v2718 = vmul.f32 %v2715, %v435
        %v2719 = vmul.f32 %v2715, %v436
        %v2720 = vadd.f32 %v437, %v2716
        %v2721 = vadd.f32 %v438, %v2717
        %v2722 = vadd.f32 %v439, %v2718
        %v2723 = vadd.f32 %v440, %v2719
        %v2724 = vpack.c.bf16 %v2707, %v2707
        %2726 = vset.pattern.permute.xlu0 0
        %2727 = vperm.xlu0 %2726, %v2720
        %v2728 = vpop.permute.xlu0 %2727
        %2731 = vset.pattern.permute.xlu0 0
        %2732 = vperm.xlu0 %2731, %v2721
        %v2733 = vpop.permute.xlu0 %2732
        %2736 = vset.pattern.permute.xlu0 0
        %2737 = vperm.xlu0 %2736, %v2722
        %v2738 = vpop.permute.xlu0 %2737
        %2741 = vset.pattern.permute.xlu0 0
        %2742 = vperm.xlu0 %2741, %v2723
        %v2743 = vpop.permute.xlu0 %2742
        %v2746 = vsel %vm499, %v2724, 0
        %2748 = vmatprep.subr.bf16.mxu0 0
        %2749 = vmatpush1.bf16.msra.mxu0 %v2746
        %2750 = vmatprep.subr.bf16.mxu0 0
        %2751 = vmatpush1.bf16.msra.mxu0 0
        %2752 = vmatprep.subr.bf16.mxu0 0
        %2753 = vmatpush1.bf16.msra.mxu0 0
        %2754 = vmatprep.subr.bf16.mxu0 0
        %2755 = vmatpush1.bf16.msra.mxu0 0
        %2756 = vmatprep.subr.bf16.mxu0 0
        %2757 = vmatpush1.bf16.msra.mxu0 0
        %2758 = vmatprep.subr.bf16.mxu0 0
        %2759 = vmatpush1.bf16.msra.mxu0 0
        %2760 = vmatprep.subr.bf16.mxu0 0
        %2761 = vmatpush1.bf16.msra.mxu0 0
        %2762 = vmatprep.subr.bf16.mxu0 0
        %2763 = vmatpush1.bf16.msra.mxu0 0
        %2764 = vmatprep.subr.bf16.mxu0 0
        %2765 = vmatpush1.bf16.msra.mxu0 0
        %2766 = vmatprep.subr.bf16.mxu0 0
        %2767 = vmatpush1.bf16.msra.mxu0 0
        %2768 = vmatprep.subr.bf16.mxu0 0
        %2769 = vmatpush1.bf16.msra.mxu0 0
        %2770 = vmatprep.subr.bf16.mxu0 0
        %2771 = vmatpush1.bf16.msra.mxu0 0
        %2772 = vmatprep.subr.bf16.mxu0 0
        %2773 = vmatpush1.bf16.msra.mxu0 0
        %2774 = vmatprep.subr.bf16.mxu0 0
        %2775 = vmatpush1.bf16.msra.mxu0 0
        %2776 = vmatprep.subr.bf16.mxu0 0
        %2777 = vmatpush1.bf16.msra.mxu0 0
        %2778 = vmatprep.subr.bf16.mxu0 0
        %2779 = vmatpush1.bf16.msra.mxu0 0
        %2780 = vmatprep.mubr.bf16.mxu0 0
        %2781 = vmatmul.mubr.bf16.gmra.mrb[0].mxu0 %v494
        %v2782 = vpop.f32.mrb[0].mxu0
        %v2783 = vadd.f32 %v2728, %v2782
        %v2784 = vpop.f32.mrb[0].mxu0
        %v2785 = vpop.f32.mrb[0].mxu0
        %v2786 = vadd.f32 %v2733, %v2785
        %v2787 = vpop.f32.mrb[0].mxu0
        %2788 = vmatprep.mubr.bf16.mxu0 0
        %2789 = vmatmul.mubr.bf16.gmra.mrb[0].mxu0 %v497
        %v2790 = vpop.f32.mrb[0].mxu0
        %v2791 = vadd.f32 %v2738, %v2790
        %v2792 = vpop.f32.mrb[0].mxu0
        %v2793 = vpop.f32.mrb[0].mxu0
        %v2794 = vadd.f32 %v2743, %v2793
        %v2795 = vpop.f32.mrb[0].mxu0
        %2796 = vdwg.mxu0
        %v2797 = vmax.f32 %v2783, 0.0
        %v2798 = vmax.f32 %v2786, 0.0
        %v2799 = vmax.f32 %v2791, 0.0
        %v2800 = vmax.f32 %v2794, 0.0
        %v2801 = vpack.c.bf16 %v2798, %v2797
        %v2802 = vpack.c.bf16 %v2800, %v2799
        %2803 = vmatprep.subr.bf16.mxu0 0
        %2804 = vmatpush1.bf16.msra.mxu0 %v2801
        %2805 = vmatprep.subr.bf16.mxu0 0
        %2806 = vmatpush1.bf16.msra.mxu0 %v2802
        %2807 = vmatprep.subr.bf16.mxu0 0
        %2808 = vmatpush1.bf16.msra.mxu0 0
        %2809 = vmatprep.subr.bf16.mxu0 0
        %2810 = vmatpush1.bf16.msra.mxu0 0
        %2811 = vmatprep.subr.bf16.mxu0 0
        %2812 = vmatpush1.bf16.msra.mxu0 0
        %2813 = vmatprep.subr.bf16.mxu0 0
        %2814 = vmatpush1.bf16.msra.mxu0 0
        %2815 = vmatprep.subr.bf16.mxu0 0
        %2816 = vmatpush1.bf16.msra.mxu0 0
        %2817 = vmatprep.subr.bf16.mxu0 0
        %2818 = vmatpush1.bf16.msra.mxu0 0
        %2819 = vmatprep.subr.bf16.mxu0 0
        %2820 = vmatpush1.bf16.msra.mxu0 0
        %2821 = vmatprep.subr.bf16.mxu0 0
        %2822 = vmatpush1.bf16.msra.mxu0 0
        %2823 = vmatprep.subr.bf16.mxu0 0
        %2824 = vmatpush1.bf16.msra.mxu0 0
        %2825 = vmatprep.subr.bf16.mxu0 0
        %2826 = vmatpush1.bf16.msra.mxu0 0
        %2827 = vmatprep.subr.bf16.mxu0 0
        %2828 = vmatpush1.bf16.msra.mxu0 0
        %2829 = vmatprep.subr.bf16.mxu0 0
        %2830 = vmatpush1.bf16.msra.mxu0 0
        %2831 = vmatprep.subr.bf16.mxu0 0
        %2832 = vmatpush1.bf16.msra.mxu0 0
        %2833 = vmatprep.subr.bf16.mxu0 0
        %2834 = vmatpush1.bf16.msra.mxu0 0
        %2835 = vmatprep.mubr.bf16.mxu0 0
        %2836 = vmatmul.mubr.bf16.gmra.mrb[0].mxu0 %v590
        %v2837 = vpop.f32.mrb[0].mxu0
        %v2838 = vadd.f32 %v561, %v2837
        %v2839 = vpop.f32.mrb[0].mxu0
        %v2840 = vpop.f32.mrb[0].mxu0
        %v2841 = vadd.f32 %v566, %v2840
        %v2842 = vpop.f32.mrb[0].mxu0
        %2843 = vmatprep.mubr.bf16.mxu0 0
        %2844 = vmatmul.mubr.bf16.gmra.mrb[0].mxu0 %v593
        %v2845 = vpop.f32.mrb[0].mxu0
        %v2846 = vadd.f32 %v571, %v2845
        %v2847 = vpop.f32.mrb[0].mxu0
        %v2848 = vpop.f32.mrb[0].mxu0
        %v2849 = vadd.f32 %v576, %v2848
        %v2850 = vpop.f32.mrb[0].mxu0
        %2851 = vdwg.mxu0
        %v2852 = vmax.f32 %v2838, 0.0
        %v2853 = vmax.f32 %v2841, 0.0
        %v2854 = vmax.f32 %v2846, 0.0
        %v2855 = vmax.f32 %v2849, 0.0
        %v2856 = vpack.c.bf16 %v2853, %v2852
        %v2857 = vpack.c.bf16 %v2855, %v2854
        %2858 = vmatprep.subr.bf16.mxu0 0
        %2859 = vmatpush1.bf16.msra.mxu0 %v2856
        %2860 = vmatprep.subr.bf16.mxu0 0
        %2861 = vmatpush1.bf16.msra.mxu0 %v2857
        %2862 = vmatprep.subr.bf16.mxu0 0
        %2863 = vmatpush1.bf16.msra.mxu0 0
        %2864 = vmatprep.subr.bf16.mxu0 0
        %2865 = vmatpush1.bf16.msra.mxu0 0
        %2866 = vmatprep.subr.bf16.mxu0 0
        %2867 = vmatpush1.bf16.msra.mxu0 0
        %2868 = vmatprep.subr.bf16.mxu0 0
        %2869 = vmatpush1.bf16.msra.mxu0 0
        %2870 = vmatprep.subr.bf16.mxu0 0
        %2871 = vmatpush1.bf16.msra.mxu0 0
        %2872 = vmatprep.subr.bf16.mxu0 0
        %2873 = vmatpush1.bf16.msra.mxu0 0
        %2874 = vmatprep.subr.bf16.mxu0 0
        %2875 = vmatpush1.bf16.msra.mxu0 0
        %2876 = vmatprep.subr.bf16.mxu0 0
        %2877 = vmatpush1.bf16.msra.mxu0 0
        %2878 = vmatprep.subr.bf16.mxu0 0
        %2879 = vmatpush1.bf16.msra.mxu0 0
        %2880 = vmatprep.subr.bf16.mxu0 0
        %2881 = vmatpush1.bf16.msra.mxu0 0
        %2882 = vmatprep.subr.bf16.mxu0 0
        %2883 = vmatpush1.bf16.msra.mxu0 0
        %2884 = vmatprep.subr.bf16.mxu0 0
        %2885 = vmatpush1.bf16.msra.mxu0 0
        %2886 = vmatprep.subr.bf16.mxu0 0
        %2887 = vmatpush1.bf16.msra.mxu0 0
        %2888 = vmatprep.subr.bf16.mxu0 0
        %2889 = vmatpush1.bf16.msra.mxu0 0
        %2890 = vmatprep.mubr.bf16.mxu0 0
        %2891 = vmatmul.mubr.bf16.gmra.mrb[0].mxu0 %v656
        %v2892 = vpop.f32.mrb[0].mxu0
        %v2893 = vadd.f32 %v653, %v2892
        %v2894 = vpop.f32.mrb[0].mxu0
        %v2895 = vpop.f32.mrb[0].mxu0
        %v2896 = vpop.f32.mrb[0].mxu0
        %2897 = vdwg.mxu0
        %v2898 = vmul.f32 %v2893, %v2711
        %v2899 = vrot.slane %v2898, 4
        %v2900 = vadd.f32 %v2898, %v2899
        %v2901 = vrot.slane %v2900, 2
        %v2902 = vadd.f32 %v2900, %v2901
        %v2903 = vrot.slane %v2902, 1
        %v2904 = vadd.f32 %v2902, %v2903
        %v2905 = vmul.f32 %v2711, 0.2
        %v2906 = vadd.f32 %v2905, 1.0007813
        %v2907 = vmul.f32 %v2707, %v2906
        %v2908 = vmul.f32 %v2709, 1.0004687
        %v2909 = vadd.f32 %v2908, %v2904
        %s2910 = scalar_lea.vmem %s365, 96 [#allocation3]
        %v2911 = vld [vmem:[%s2910] sm:$0xff]
        %s2912 = sadd.s32 %s446, 12
        %s2913 = scvt.s32.f32 %s2912
        %s2914 = smul.f32 %s2913, 0.015625
        %v2915 = vstv %s2914
        %v2916 = vmul.f32 %v2915, %v433
        %v2917 = vmul.f32 %v2915, %v434
        %v2918 = vmul.f32 %v2915, %v435
        %v2919 = vmul.f32 %v2915, %v436
        %v2920 = vadd.f32 %v437, %v2916
        %v2921 = vadd.f32 %v438, %v2917
        %v2922 = vadd.f32 %v439, %v2918
        %v2923 = vadd.f32 %v440, %v2919
        %v2924 = vpack.c.bf16 %v2907, %v2907
        %2926 = vset.pattern.permute.xlu0 0
        %2927 = vperm.xlu0 %2926, %v2920
        %v2928 = vpop.permute.xlu0 %2927
        %2931 = vset.pattern.permute.xlu0 0
        %2932 = vperm.xlu0 %2931, %v2921
        %v2933 = vpop.permute.xlu0 %2932
        %2936 = vset.pattern.permute.xlu0 0
        %2937 = vperm.xlu0 %2936, %v2922
        %v2938 = vpop.permute.xlu0 %2937
        %2941 = vset.pattern.permute.xlu0 0
        %2942 = vperm.xlu0 %2941, %v2923
        %v2943 = vpop.permute.xlu0 %2942
        %v2946 = vsel %vm499, %v2924, 0
        %2948 = vmatprep.subr.bf16.mxu0 0
        %2949 = vmatpush1.bf16.msra.mxu0 %v2946
        %2950 = vmatprep.subr.bf16.mxu0 0
        %2951 = vmatpush1.bf16.msra.mxu0 0
        %2952 = vmatprep.subr.bf16.mxu0 0
        %2953 = vmatpush1.bf16.msra.mxu0 0
        %2954 = vmatprep.subr.bf16.mxu0 0
        %2955 = vmatpush1.bf16.msra.mxu0 0
        %2956 = vmatprep.subr.bf16.mxu0 0
        %2957 = vmatpush1.bf16.msra.mxu0 0
        %2958 = vmatprep.subr.bf16.mxu0 0
        %2959 = vmatpush1.bf16.msra.mxu0 0
        %2960 = vmatprep.subr.bf16.mxu0 0
        %2961 = vmatpush1.bf16.msra.mxu0 0
        %2962 = vmatprep.subr.bf16.mxu0 0
        %2963 = vmatpush1.bf16.msra.mxu0 0
        %2964 = vmatprep.subr.bf16.mxu0 0
        %2965 = vmatpush1.bf16.msra.mxu0 0
        %2966 = vmatprep.subr.bf16.mxu0 0
        %2967 = vmatpush1.bf16.msra.mxu0 0
        %2968 = vmatprep.subr.bf16.mxu0 0
        %2969 = vmatpush1.bf16.msra.mxu0 0
        %2970 = vmatprep.subr.bf16.mxu0 0
        %2971 = vmatpush1.bf16.msra.mxu0 0
        %2972 = vmatprep.subr.bf16.mxu0 0
        %2973 = vmatpush1.bf16.msra.mxu0 0
        %2974 = vmatprep.subr.bf16.mxu0 0
        %2975 = vmatpush1.bf16.msra.mxu0 0
        %2976 = vmatprep.subr.bf16.mxu0 0
        %2977 = vmatpush1.bf16.msra.mxu0 0
        %2978 = vmatprep.subr.bf16.mxu0 0
        %2979 = vmatpush1.bf16.msra.mxu0 0
        %2980 = vmatprep.mubr.bf16.mxu0 0
        %2981 = vmatmul.mubr.bf16.gmra.mrb[0].mxu0 %v494
        %v2982 = vpop.f32.mrb[0].mxu0
        %v2983 = vadd.f32 %v2928, %v2982
        %v2984 = vpop.f32.mrb[0].mxu0
        %v2985 = vpop.f32.mrb[0].mxu0
        %v2986 = vadd.f32 %v2933, %v2985
        %v2987 = vpop.f32.mrb[0].mxu0
        %2988 = vmatprep.mubr.bf16.mxu0 0
        %2989 = vmatmul.mubr.bf16.gmra.mrb[0].mxu0 %v497
        %v2990 = vpop.f32.mrb[0].mxu0
        %v2991 = vadd.f32 %v2938, %v2990
        %v2992 = vpop.f32.mrb[0].mxu0
        %v2993 = vpop.f32.mrb[0].mxu0
        %v2994 = vadd.f32 %v2943, %v2993
        %v2995 = vpop.f32.mrb[0].mxu0
        %2996 = vdwg.mxu0
        %v2997 = vmax.f32 %v2983, 0.0
        %v2998 = vmax.f32 %v2986, 0.0
        %v2999 = vmax.f32 %v2991, 0.0
        %v3000 = vmax.f32 %v2994, 0.0
        %v3001 = vpack.c.bf16 %v2998, %v2997
        %v3002 = vpack.c.bf16 %v3000, %v2999
        %3003 = vmatprep.subr.bf16.mxu0 0
        %3004 = vmatpush1.bf16.msra.mxu0 %v3001
        %3005 = vmatprep.subr.bf16.mxu0 0
        %3006 = vmatpush1.bf16.msra.mxu0 %v3002
        %3007 = vmatprep.subr.bf16.mxu0 0
        %3008 = vmatpush1.bf16.msra.mxu0 0
        %3009 = vmatprep.subr.bf16.mxu0 0
        %3010 = vmatpush1.bf16.msra.mxu0 0
        %3011 = vmatprep.subr.bf16.mxu0 0
        %3012 = vmatpush1.bf16.msra.mxu0 0
        %3013 = vmatprep.subr.bf16.mxu0 0
        %3014 = vmatpush1.bf16.msra.mxu0 0
        %3015 = vmatprep.subr.bf16.mxu0 0
        %3016 = vmatpush1.bf16.msra.mxu0 0
        %3017 = vmatprep.subr.bf16.mxu0 0
        %3018 = vmatpush1.bf16.msra.mxu0 0
        %3019 = vmatprep.subr.bf16.mxu0 0
        %3020 = vmatpush1.bf16.msra.mxu0 0
        %3021 = vmatprep.subr.bf16.mxu0 0
        %3022 = vmatpush1.bf16.msra.mxu0 0
        %3023 = vmatprep.subr.bf16.mxu0 0
        %3024 = vmatpush1.bf16.msra.mxu0 0
        %3025 = vmatprep.subr.bf16.mxu0 0
        %3026 = vmatpush1.bf16.msra.mxu0 0
        %3027 = vmatprep.subr.bf16.mxu0 0
        %3028 = vmatpush1.bf16.msra.mxu0 0
        %3029 = vmatprep.subr.bf16.mxu0 0
        %3030 = vmatpush1.bf16.msra.mxu0 0
        %3031 = vmatprep.subr.bf16.mxu0 0
        %3032 = vmatpush1.bf16.msra.mxu0 0
        %3033 = vmatprep.subr.bf16.mxu0 0
        %3034 = vmatpush1.bf16.msra.mxu0 0
        %3035 = vmatprep.mubr.bf16.mxu0 0
        %3036 = vmatmul.mubr.bf16.gmra.mrb[0].mxu0 %v590
        %v3037 = vpop.f32.mrb[0].mxu0
        %v3038 = vadd.f32 %v561, %v3037
        %v3039 = vpop.f32.mrb[0].mxu0
        %v3040 = vpop.f32.mrb[0].mxu0
        %v3041 = vadd.f32 %v566, %v3040
        %v3042 = vpop.f32.mrb[0].mxu0
        %3043 = vmatprep.mubr.bf16.mxu0 0
        %3044 = vmatmul.mubr.bf16.gmra.mrb[0].mxu0 %v593
        %v3045 = vpop.f32.mrb[0].mxu0
        %v3046 = vadd.f32 %v571, %v3045
        %v3047 = vpop.f32.mrb[0].mxu0
        %v3048 = vpop.f32.mrb[0].mxu0
        %v3049 = vadd.f32 %v576, %v3048
        %v3050 = vpop.f32.mrb[0].mxu0
        %3051 = vdwg.mxu0
        %v3052 = vmax.f32 %v3038, 0.0
        %v3053 = vmax.f32 %v3041, 0.0
        %v3054 = vmax.f32 %v3046, 0.0
        %v3055 = vmax.f32 %v3049, 0.0
        %v3056 = vpack.c.bf16 %v3053, %v3052
        %v3057 = vpack.c.bf16 %v3055, %v3054
        %3058 = vmatprep.subr.bf16.mxu0 0
        %3059 = vmatpush1.bf16.msra.mxu0 %v3056
        %3060 = vmatprep.subr.bf16.mxu0 0
        %3061 = vmatpush1.bf16.msra.mxu0 %v3057
        %3062 = vmatprep.subr.bf16.mxu0 0
        %3063 = vmatpush1.bf16.msra.mxu0 0
        %3064 = vmatprep.subr.bf16.mxu0 0
        %3065 = vmatpush1.bf16.msra.mxu0 0
        %3066 = vmatprep.subr.bf16.mxu0 0
        %3067 = vmatpush1.bf16.msra.mxu0 0
        %3068 = vmatprep.subr.bf16.mxu0 0
        %3069 = vmatpush1.bf16.msra.mxu0 0
        %3070 = vmatprep.subr.bf16.mxu0 0
        %3071 = vmatpush1.bf16.msra.mxu0 0
        %3072 = vmatprep.subr.bf16.mxu0 0
        %3073 = vmatpush1.bf16.msra.mxu0 0
        %3074 = vmatprep.subr.bf16.mxu0 0
        %3075 = vmatpush1.bf16.msra.mxu0 0
        %3076 = vmatprep.subr.bf16.mxu0 0
        %3077 = vmatpush1.bf16.msra.mxu0 0
        %3078 = vmatprep.subr.bf16.mxu0 0
        %3079 = vmatpush1.bf16.msra.mxu0 0
        %3080 = vmatprep.subr.bf16.mxu0 0
        %3081 = vmatpush1.bf16.msra.mxu0 0
        %3082 = vmatprep.subr.bf16.mxu0 0
        %3083 = vmatpush1.bf16.msra.mxu0 0
        %3084 = vmatprep.subr.bf16.mxu0 0
        %3085 = vmatpush1.bf16.msra.mxu0 0
        %3086 = vmatprep.subr.bf16.mxu0 0
        %3087 = vmatpush1.bf16.msra.mxu0 0
        %3088 = vmatprep.subr.bf16.mxu0 0
        %3089 = vmatpush1.bf16.msra.mxu0 0
        %3090 = vmatprep.mubr.bf16.mxu0 0
        %3091 = vmatmul.mubr.bf16.gmra.mrb[0].mxu0 %v656
        %v3092 = vpop.f32.mrb[0].mxu0
        %v3093 = vadd.f32 %v653, %v3092
        %v3094 = vpop.f32.mrb[0].mxu0
        %v3095 = vpop.f32.mrb[0].mxu0
        %v3096 = vpop.f32.mrb[0].mxu0
        %3097 = vdwg.mxu0
        %v3098 = vmul.f32 %v3093, %v2911
        %v3099 = vrot.slane %v3098, 4
        %v3100 = vadd.f32 %v3098, %v3099
        %v3101 = vrot.slane %v3100, 2
        %v3102 = vadd.f32 %v3100, %v3101
        %v3103 = vrot.slane %v3102, 1
        %v3104 = vadd.f32 %v3102, %v3103
        %v3105 = vmul.f32 %v2911, 0.2
        %v3106 = vadd.f32 %v3105, 1.0007813
        %v3107 = vmul.f32 %v2907, %v3106
        %v3108 = vmul.f32 %v2909, 1.0004687
        %v3109 = vadd.f32 %v3108, %v3104
        %s3110 = scalar_lea.vmem %s365, 104 [#allocation3]
        %v3111 = vld [vmem:[%s3110] sm:$0xff]
        %s3112 = sadd.s32 %s446, 13
        %s3113 = scvt.s32.f32 %s3112
        %s3114 = smul.f32 %s3113, 0.015625
        %v3115 = vstv %s3114
        %v3116 = vmul.f32 %v3115, %v433
        %v3117 = vmul.f32 %v3115, %v434
        %v3118 = vmul.f32 %v3115, %v435
        %v3119 = vmul.f32 %v3115, %v436
        %v3120 = vadd.f32 %v437, %v3116
        %v3121 = vadd.f32 %v438, %v3117
        %v3122 = vadd.f32 %v439, %v3118
        %v3123 = vadd.f32 %v440, %v3119
        %v3124 = vpack.c.bf16 %v3107, %v3107
        %3126 = vset.pattern.permute.xlu0 0
        %3127 = vperm.xlu0 %3126, %v3120
        %v3128 = vpop.permute.xlu0 %3127
        %3131 = vset.pattern.permute.xlu0 0
        %3132 = vperm.xlu0 %3131, %v3121
        %v3133 = vpop.permute.xlu0 %3132
        %3136 = vset.pattern.permute.xlu0 0
        %3137 = vperm.xlu0 %3136, %v3122
        %v3138 = vpop.permute.xlu0 %3137
        %3141 = vset.pattern.permute.xlu0 0
        %3142 = vperm.xlu0 %3141, %v3123
        %v3143 = vpop.permute.xlu0 %3142
        %v3146 = vsel %vm499, %v3124, 0
        %3148 = vmatprep.subr.bf16.mxu0 0
        %3149 = vmatpush1.bf16.msra.mxu0 %v3146
        %3150 = vmatprep.subr.bf16.mxu0 0
        %3151 = vmatpush1.bf16.msra.mxu0 0
        %3152 = vmatprep.subr.bf16.mxu0 0
        %3153 = vmatpush1.bf16.msra.mxu0 0
        %3154 = vmatprep.subr.bf16.mxu0 0
        %3155 = vmatpush1.bf16.msra.mxu0 0
        %3156 = vmatprep.subr.bf16.mxu0 0
        %3157 = vmatpush1.bf16.msra.mxu0 0
        %3158 = vmatprep.subr.bf16.mxu0 0
        %3159 = vmatpush1.bf16.msra.mxu0 0
        %3160 = vmatprep.subr.bf16.mxu0 0
        %3161 = vmatpush1.bf16.msra.mxu0 0
        %3162 = vmatprep.subr.bf16.mxu0 0
        %3163 = vmatpush1.bf16.msra.mxu0 0
        %3164 = vmatprep.subr.bf16.mxu0 0
        %3165 = vmatpush1.bf16.msra.mxu0 0
        %3166 = vmatprep.subr.bf16.mxu0 0
        %3167 = vmatpush1.bf16.msra.mxu0 0
        %3168 = vmatprep.subr.bf16.mxu0 0
        %3169 = vmatpush1.bf16.msra.mxu0 0
        %3170 = vmatprep.subr.bf16.mxu0 0
        %3171 = vmatpush1.bf16.msra.mxu0 0
        %3172 = vmatprep.subr.bf16.mxu0 0
        %3173 = vmatpush1.bf16.msra.mxu0 0
        %3174 = vmatprep.subr.bf16.mxu0 0
        %3175 = vmatpush1.bf16.msra.mxu0 0
        %3176 = vmatprep.subr.bf16.mxu0 0
        %3177 = vmatpush1.bf16.msra.mxu0 0
        %3178 = vmatprep.subr.bf16.mxu0 0
        %3179 = vmatpush1.bf16.msra.mxu0 0
        %3180 = vmatprep.mubr.bf16.mxu0 0
        %3181 = vmatmul.mubr.bf16.gmra.mrb[0].mxu0 %v494
        %v3182 = vpop.f32.mrb[0].mxu0
        %v3183 = vadd.f32 %v3128, %v3182
        %v3184 = vpop.f32.mrb[0].mxu0
        %v3185 = vpop.f32.mrb[0].mxu0
        %v3186 = vadd.f32 %v3133, %v3185
        %v3187 = vpop.f32.mrb[0].mxu0
        %3188 = vmatprep.mubr.bf16.mxu0 0
        %3189 = vmatmul.mubr.bf16.gmra.mrb[0].mxu0 %v497
        %v3190 = vpop.f32.mrb[0].mxu0
        %v3191 = vadd.f32 %v3138, %v3190
        %v3192 = vpop.f32.mrb[0].mxu0
        %v3193 = vpop.f32.mrb[0].mxu0
        %v3194 = vadd.f32 %v3143, %v3193
        %v3195 = vpop.f32.mrb[0].mxu0
        %3196 = vdwg.mxu0
        %v3197 = vmax.f32 %v3183, 0.0
        %v3198 = vmax.f32 %v3186, 0.0
        %v3199 = vmax.f32 %v3191, 0.0
        %v3200 = vmax.f32 %v3194, 0.0
        %v3201 = vpack.c.bf16 %v3198, %v3197
        %v3202 = vpack.c.bf16 %v3200, %v3199
        %3203 = vmatprep.subr.bf16.mxu0 0
        %3204 = vmatpush1.bf16.msra.mxu0 %v3201
        %3205 = vmatprep.subr.bf16.mxu0 0
        %3206 = vmatpush1.bf16.msra.mxu0 %v3202
        %3207 = vmatprep.subr.bf16.mxu0 0
        %3208 = vmatpush1.bf16.msra.mxu0 0
        %3209 = vmatprep.subr.bf16.mxu0 0
        %3210 = vmatpush1.bf16.msra.mxu0 0
        %3211 = vmatprep.subr.bf16.mxu0 0
        %3212 = vmatpush1.bf16.msra.mxu0 0
        %3213 = vmatprep.subr.bf16.mxu0 0
        %3214 = vmatpush1.bf16.msra.mxu0 0
        %3215 = vmatprep.subr.bf16.mxu0 0
        %3216 = vmatpush1.bf16.msra.mxu0 0
        %3217 = vmatprep.subr.bf16.mxu0 0
        %3218 = vmatpush1.bf16.msra.mxu0 0
        %3219 = vmatprep.subr.bf16.mxu0 0
        %3220 = vmatpush1.bf16.msra.mxu0 0
        %3221 = vmatprep.subr.bf16.mxu0 0
        %3222 = vmatpush1.bf16.msra.mxu0 0
        %3223 = vmatprep.subr.bf16.mxu0 0
        %3224 = vmatpush1.bf16.msra.mxu0 0
        %3225 = vmatprep.subr.bf16.mxu0 0
        %3226 = vmatpush1.bf16.msra.mxu0 0
        %3227 = vmatprep.subr.bf16.mxu0 0
        %3228 = vmatpush1.bf16.msra.mxu0 0
        %3229 = vmatprep.subr.bf16.mxu0 0
        %3230 = vmatpush1.bf16.msra.mxu0 0
        %3231 = vmatprep.subr.bf16.mxu0 0
        %3232 = vmatpush1.bf16.msra.mxu0 0
        %3233 = vmatprep.subr.bf16.mxu0 0
        %3234 = vmatpush1.bf16.msra.mxu0 0
        %3235 = vmatprep.mubr.bf16.mxu0 0
        %3236 = vmatmul.mubr.bf16.gmra.mrb[0].mxu0 %v590
        %v3237 = vpop.f32.mrb[0].mxu0
        %v3238 = vadd.f32 %v561, %v3237
        %v3239 = vpop.f32.mrb[0].mxu0
        %v3240 = vpop.f32.mrb[0].mxu0
        %v3241 = vadd.f32 %v566, %v3240
        %v3242 = vpop.f32.mrb[0].mxu0
        %3243 = vmatprep.mubr.bf16.mxu0 0
        %3244 = vmatmul.mubr.bf16.gmra.mrb[0].mxu0 %v593
        %v3245 = vpop.f32.mrb[0].mxu0
        %v3246 = vadd.f32 %v571, %v3245
        %v3247 = vpop.f32.mrb[0].mxu0
        %v3248 = vpop.f32.mrb[0].mxu0
        %v3249 = vadd.f32 %v576, %v3248
        %v3250 = vpop.f32.mrb[0].mxu0
        %3251 = vdwg.mxu0
        %v3252 = vmax.f32 %v3238, 0.0
        %v3253 = vmax.f32 %v3241, 0.0
        %v3254 = vmax.f32 %v3246, 0.0
        %v3255 = vmax.f32 %v3249, 0.0
        %v3256 = vpack.c.bf16 %v3253, %v3252
        %v3257 = vpack.c.bf16 %v3255, %v3254
        %3258 = vmatprep.subr.bf16.mxu0 0
        %3259 = vmatpush1.bf16.msra.mxu0 %v3256
        %3260 = vmatprep.subr.bf16.mxu0 0
        %3261 = vmatpush1.bf16.msra.mxu0 %v3257
        %3262 = vmatprep.subr.bf16.mxu0 0
        %3263 = vmatpush1.bf16.msra.mxu0 0
        %3264 = vmatprep.subr.bf16.mxu0 0
        %3265 = vmatpush1.bf16.msra.mxu0 0
        %3266 = vmatprep.subr.bf16.mxu0 0
        %3267 = vmatpush1.bf16.msra.mxu0 0
        %3268 = vmatprep.subr.bf16.mxu0 0
        %3269 = vmatpush1.bf16.msra.mxu0 0
        %3270 = vmatprep.subr.bf16.mxu0 0
        %3271 = vmatpush1.bf16.msra.mxu0 0
        %3272 = vmatprep.subr.bf16.mxu0 0
        %3273 = vmatpush1.bf16.msra.mxu0 0
        %3274 = vmatprep.subr.bf16.mxu0 0
        %3275 = vmatpush1.bf16.msra.mxu0 0
        %3276 = vmatprep.subr.bf16.mxu0 0
        %3277 = vmatpush1.bf16.msra.mxu0 0
        %3278 = vmatprep.subr.bf16.mxu0 0
        %3279 = vmatpush1.bf16.msra.mxu0 0
        %3280 = vmatprep.subr.bf16.mxu0 0
        %3281 = vmatpush1.bf16.msra.mxu0 0
        %3282 = vmatprep.subr.bf16.mxu0 0
        %3283 = vmatpush1.bf16.msra.mxu0 0
        %3284 = vmatprep.subr.bf16.mxu0 0
        %3285 = vmatpush1.bf16.msra.mxu0 0
        %3286 = vmatprep.subr.bf16.mxu0 0
        %3287 = vmatpush1.bf16.msra.mxu0 0
        %3288 = vmatprep.subr.bf16.mxu0 0
        %3289 = vmatpush1.bf16.msra.mxu0 0
        %3290 = vmatprep.mubr.bf16.mxu0 0
        %3291 = vmatmul.mubr.bf16.gmra.mrb[0].mxu0 %v656
        %v3292 = vpop.f32.mrb[0].mxu0
        %v3293 = vadd.f32 %v653, %v3292
        %v3294 = vpop.f32.mrb[0].mxu0
        %v3295 = vpop.f32.mrb[0].mxu0
        %v3296 = vpop.f32.mrb[0].mxu0
        %3297 = vdwg.mxu0
        %v3298 = vmul.f32 %v3293, %v3111
        %v3299 = vrot.slane %v3298, 4
        %v3300 = vadd.f32 %v3298, %v3299
        %v3301 = vrot.slane %v3300, 2
        %v3302 = vadd.f32 %v3300, %v3301
        %v3303 = vrot.slane %v3302, 1
        %v3304 = vadd.f32 %v3302, %v3303
        %v3305 = vmul.f32 %v3111, 0.2
        %v3306 = vadd.f32 %v3305, 1.0007813
        %v3307 = vmul.f32 %v3107, %v3306
        %v3308 = vmul.f32 %v3109, 1.0004687
        %v3309 = vadd.f32 %v3308, %v3304
        %s3310 = scalar_lea.vmem %s365, 112 [#allocation3]
        %v3311 = vld [vmem:[%s3310] sm:$0xff]
        %s3312 = sadd.s32 %s446, 14
        %s3313 = scvt.s32.f32 %s3312
        %s3314 = smul.f32 %s3313, 0.015625
        %v3315 = vstv %s3314
        %v3316 = vmul.f32 %v3315, %v433
        %v3317 = vmul.f32 %v3315, %v434
        %v3318 = vmul.f32 %v3315, %v435
        %v3319 = vmul.f32 %v3315, %v436
        %v3320 = vadd.f32 %v437, %v3316
        %v3321 = vadd.f32 %v438, %v3317
        %v3322 = vadd.f32 %v439, %v3318
        %v3323 = vadd.f32 %v440, %v3319
        %v3324 = vpack.c.bf16 %v3307, %v3307
        %3326 = vset.pattern.permute.xlu0 0
        %3327 = vperm.xlu0 %3326, %v3320
        %v3328 = vpop.permute.xlu0 %3327
        %3331 = vset.pattern.permute.xlu0 0
        %3332 = vperm.xlu0 %3331, %v3321
        %v3333 = vpop.permute.xlu0 %3332
        %3336 = vset.pattern.permute.xlu0 0
        %3337 = vperm.xlu0 %3336, %v3322
        %v3338 = vpop.permute.xlu0 %3337
        %3341 = vset.pattern.permute.xlu0 0
        %3342 = vperm.xlu0 %3341, %v3323
        %v3343 = vpop.permute.xlu0 %3342
        %v3346 = vsel %vm499, %v3324, 0
        %3348 = vmatprep.subr.bf16.mxu0 0
        %3349 = vmatpush1.bf16.msra.mxu0 %v3346
        %3350 = vmatprep.subr.bf16.mxu0 0
        %3351 = vmatpush1.bf16.msra.mxu0 0
        %3352 = vmatprep.subr.bf16.mxu0 0
        %3353 = vmatpush1.bf16.msra.mxu0 0
        %3354 = vmatprep.subr.bf16.mxu0 0
        %3355 = vmatpush1.bf16.msra.mxu0 0
        %3356 = vmatprep.subr.bf16.mxu0 0
        %3357 = vmatpush1.bf16.msra.mxu0 0
        %3358 = vmatprep.subr.bf16.mxu0 0
        %3359 = vmatpush1.bf16.msra.mxu0 0
        %3360 = vmatprep.subr.bf16.mxu0 0
        %3361 = vmatpush1.bf16.msra.mxu0 0
        %3362 = vmatprep.subr.bf16.mxu0 0
        %3363 = vmatpush1.bf16.msra.mxu0 0
        %3364 = vmatprep.subr.bf16.mxu0 0
        %3365 = vmatpush1.bf16.msra.mxu0 0
        %3366 = vmatprep.subr.bf16.mxu0 0
        %3367 = vmatpush1.bf16.msra.mxu0 0
        %3368 = vmatprep.subr.bf16.mxu0 0
        %3369 = vmatpush1.bf16.msra.mxu0 0
        %3370 = vmatprep.subr.bf16.mxu0 0
        %3371 = vmatpush1.bf16.msra.mxu0 0
        %3372 = vmatprep.subr.bf16.mxu0 0
        %3373 = vmatpush1.bf16.msra.mxu0 0
        %3374 = vmatprep.subr.bf16.mxu0 0
        %3375 = vmatpush1.bf16.msra.mxu0 0
        %3376 = vmatprep.subr.bf16.mxu0 0
        %3377 = vmatpush1.bf16.msra.mxu0 0
        %3378 = vmatprep.subr.bf16.mxu0 0
        %3379 = vmatpush1.bf16.msra.mxu0 0
        %3380 = vmatprep.mubr.bf16.mxu0 0
        %3381 = vmatmul.mubr.bf16.gmra.mrb[0].mxu0 %v494
        %v3382 = vpop.f32.mrb[0].mxu0
        %v3383 = vadd.f32 %v3328, %v3382
        %v3384 = vpop.f32.mrb[0].mxu0
        %v3385 = vpop.f32.mrb[0].mxu0
        %v3386 = vadd.f32 %v3333, %v3385
        %v3387 = vpop.f32.mrb[0].mxu0
        %3388 = vmatprep.mubr.bf16.mxu0 0
        %3389 = vmatmul.mubr.bf16.gmra.mrb[0].mxu0 %v497
        %v3390 = vpop.f32.mrb[0].mxu0
        %v3391 = vadd.f32 %v3338, %v3390
        %v3392 = vpop.f32.mrb[0].mxu0
        %v3393 = vpop.f32.mrb[0].mxu0
        %v3394 = vadd.f32 %v3343, %v3393
        %v3395 = vpop.f32.mrb[0].mxu0
        %3396 = vdwg.mxu0
        %v3397 = vmax.f32 %v3383, 0.0
        %v3398 = vmax.f32 %v3386, 0.0
        %v3399 = vmax.f32 %v3391, 0.0
        %v3400 = vmax.f32 %v3394, 0.0
        %v3401 = vpack.c.bf16 %v3398, %v3397
        %v3402 = vpack.c.bf16 %v3400, %v3399
        %3403 = vmatprep.subr.bf16.mxu0 0
        %3404 = vmatpush1.bf16.msra.mxu0 %v3401
        %3405 = vmatprep.subr.bf16.mxu0 0
        %3406 = vmatpush1.bf16.msra.mxu0 %v3402
        %3407 = vmatprep.subr.bf16.mxu0 0
        %3408 = vmatpush1.bf16.msra.mxu0 0
        %3409 = vmatprep.subr.bf16.mxu0 0
        %3410 = vmatpush1.bf16.msra.mxu0 0
        %3411 = vmatprep.subr.bf16.mxu0 0
        %3412 = vmatpush1.bf16.msra.mxu0 0
        %3413 = vmatprep.subr.bf16.mxu0 0
        %3414 = vmatpush1.bf16.msra.mxu0 0
        %3415 = vmatprep.subr.bf16.mxu0 0
        %3416 = vmatpush1.bf16.msra.mxu0 0
        %3417 = vmatprep.subr.bf16.mxu0 0
        %3418 = vmatpush1.bf16.msra.mxu0 0
        %3419 = vmatprep.subr.bf16.mxu0 0
        %3420 = vmatpush1.bf16.msra.mxu0 0
        %3421 = vmatprep.subr.bf16.mxu0 0
        %3422 = vmatpush1.bf16.msra.mxu0 0
        %3423 = vmatprep.subr.bf16.mxu0 0
        %3424 = vmatpush1.bf16.msra.mxu0 0
        %3425 = vmatprep.subr.bf16.mxu0 0
        %3426 = vmatpush1.bf16.msra.mxu0 0
        %3427 = vmatprep.subr.bf16.mxu0 0
        %3428 = vmatpush1.bf16.msra.mxu0 0
        %3429 = vmatprep.subr.bf16.mxu0 0
        %3430 = vmatpush1.bf16.msra.mxu0 0
        %3431 = vmatprep.subr.bf16.mxu0 0
        %3432 = vmatpush1.bf16.msra.mxu0 0
        %3433 = vmatprep.subr.bf16.mxu0 0
        %3434 = vmatpush1.bf16.msra.mxu0 0
        %3435 = vmatprep.mubr.bf16.mxu0 0
        %3436 = vmatmul.mubr.bf16.gmra.mrb[0].mxu0 %v590
        %v3437 = vpop.f32.mrb[0].mxu0
        %v3438 = vadd.f32 %v561, %v3437
        %v3439 = vpop.f32.mrb[0].mxu0
        %v3440 = vpop.f32.mrb[0].mxu0
        %v3441 = vadd.f32 %v566, %v3440
        %v3442 = vpop.f32.mrb[0].mxu0
        %3443 = vmatprep.mubr.bf16.mxu0 0
        %3444 = vmatmul.mubr.bf16.gmra.mrb[0].mxu0 %v593
        %v3445 = vpop.f32.mrb[0].mxu0
        %v3446 = vadd.f32 %v571, %v3445
        %v3447 = vpop.f32.mrb[0].mxu0
        %v3448 = vpop.f32.mrb[0].mxu0
        %v3449 = vadd.f32 %v576, %v3448
        %v3450 = vpop.f32.mrb[0].mxu0
        %3451 = vdwg.mxu0
        %v3452 = vmax.f32 %v3438, 0.0
        %v3453 = vmax.f32 %v3441, 0.0
        %v3454 = vmax.f32 %v3446, 0.0
        %v3455 = vmax.f32 %v3449, 0.0
        %v3456 = vpack.c.bf16 %v3453, %v3452
        %v3457 = vpack.c.bf16 %v3455, %v3454
        %3458 = vmatprep.subr.bf16.mxu0 0
        %3459 = vmatpush1.bf16.msra.mxu0 %v3456
        %3460 = vmatprep.subr.bf16.mxu0 0
        %3461 = vmatpush1.bf16.msra.mxu0 %v3457
        %3462 = vmatprep.subr.bf16.mxu0 0
        %3463 = vmatpush1.bf16.msra.mxu0 0
        %3464 = vmatprep.subr.bf16.mxu0 0
        %3465 = vmatpush1.bf16.msra.mxu0 0
        %3466 = vmatprep.subr.bf16.mxu0 0
        %3467 = vmatpush1.bf16.msra.mxu0 0
        %3468 = vmatprep.subr.bf16.mxu0 0
        %3469 = vmatpush1.bf16.msra.mxu0 0
        %3470 = vmatprep.subr.bf16.mxu0 0
        %3471 = vmatpush1.bf16.msra.mxu0 0
        %3472 = vmatprep.subr.bf16.mxu0 0
        %3473 = vmatpush1.bf16.msra.mxu0 0
        %3474 = vmatprep.subr.bf16.mxu0 0
        %3475 = vmatpush1.bf16.msra.mxu0 0
        %3476 = vmatprep.subr.bf16.mxu0 0
        %3477 = vmatpush1.bf16.msra.mxu0 0
        %3478 = vmatprep.subr.bf16.mxu0 0
        %3479 = vmatpush1.bf16.msra.mxu0 0
        %3480 = vmatprep.subr.bf16.mxu0 0
        %3481 = vmatpush1.bf16.msra.mxu0 0
        %3482 = vmatprep.subr.bf16.mxu0 0
        %3483 = vmatpush1.bf16.msra.mxu0 0
        %3484 = vmatprep.subr.bf16.mxu0 0
        %3485 = vmatpush1.bf16.msra.mxu0 0
        %3486 = vmatprep.subr.bf16.mxu0 0
        %3487 = vmatpush1.bf16.msra.mxu0 0
        %3488 = vmatprep.subr.bf16.mxu0 0
        %3489 = vmatpush1.bf16.msra.mxu0 0
        %3490 = vmatprep.mubr.bf16.mxu0 0
        %3491 = vmatmul.mubr.bf16.gmra.mrb[0].mxu0 %v656
        %v3492 = vpop.f32.mrb[0].mxu0
        %v3493 = vadd.f32 %v653, %v3492
        %v3494 = vpop.f32.mrb[0].mxu0
        %v3495 = vpop.f32.mrb[0].mxu0
        %v3496 = vpop.f32.mrb[0].mxu0
        %3497 = vdwg.mxu0
        %v3498 = vmul.f32 %v3493, %v3311
        %v3499 = vrot.slane %v3498, 4
        %v3500 = vadd.f32 %v3498, %v3499
        %v3501 = vrot.slane %v3500, 2
        %v3502 = vadd.f32 %v3500, %v3501
        %v3503 = vrot.slane %v3502, 1
        %v3504 = vadd.f32 %v3502, %v3503
        %v3505 = vmul.f32 %v3311, 0.2
        %v3506 = vadd.f32 %v3505, 1.0007813
        %v3507 = vmul.f32 %v3307, %v3506
        %v3508 = vmul.f32 %v3309, 1.0004687
        %v3509 = vadd.f32 %v3508, %v3504
        %s3510 = scalar_lea.vmem %s365, 120 [#allocation3]
        %v3511 = vld [vmem:[%s3510] sm:$0xff]
        %s3512 = sadd.s32 %s446, 15
        %s3513 = scvt.s32.f32 %s3512
        %s3514 = smul.f32 %s3513, 0.015625
        %v3515 = vstv %s3514
        %v3516 = vmul.f32 %v3515, %v433
        %v3517 = vmul.f32 %v3515, %v434
        %v3518 = vmul.f32 %v3515, %v435
        %v3519 = vmul.f32 %v3515, %v436
        %v3520 = vadd.f32 %v437, %v3516
        %v3521 = vadd.f32 %v438, %v3517
        %v3522 = vadd.f32 %v439, %v3518
        %v3523 = vadd.f32 %v440, %v3519
        %v3524 = vpack.c.bf16 %v3507, %v3507
        %3526 = vset.pattern.permute.xlu0 0
        %3527 = vperm.xlu0 %3526, %v3520
        %v3528 = vpop.permute.xlu0 %3527
        %3531 = vset.pattern.permute.xlu0 0
        %3532 = vperm.xlu0 %3531, %v3521
        %v3533 = vpop.permute.xlu0 %3532
        %3536 = vset.pattern.permute.xlu0 0
        %3537 = vperm.xlu0 %3536, %v3522
        %v3538 = vpop.permute.xlu0 %3537
        %3541 = vset.pattern.permute.xlu0 0
        %3542 = vperm.xlu0 %3541, %v3523
        %v3543 = vpop.permute.xlu0 %3542
        %v3546 = vsel %vm499, %v3524, 0
        %3548 = vmatprep.subr.bf16.mxu0 0
        %3549 = vmatpush1.bf16.msra.mxu0 %v3546
        %3550 = vmatprep.subr.bf16.mxu0 0
        %3551 = vmatpush1.bf16.msra.mxu0 0
        %3552 = vmatprep.subr.bf16.mxu0 0
        %3553 = vmatpush1.bf16.msra.mxu0 0
        %3554 = vmatprep.subr.bf16.mxu0 0
        %3555 = vmatpush1.bf16.msra.mxu0 0
        %3556 = vmatprep.subr.bf16.mxu0 0
        %3557 = vmatpush1.bf16.msra.mxu0 0
        %3558 = vmatprep.subr.bf16.mxu0 0
        %3559 = vmatpush1.bf16.msra.mxu0 0
        %3560 = vmatprep.subr.bf16.mxu0 0
        %3561 = vmatpush1.bf16.msra.mxu0 0
        %3562 = vmatprep.subr.bf16.mxu0 0
        %3563 = vmatpush1.bf16.msra.mxu0 0
        %3564 = vmatprep.subr.bf16.mxu0 0
        %3565 = vmatpush1.bf16.msra.mxu0 0
        %3566 = vmatprep.subr.bf16.mxu0 0
        %3567 = vmatpush1.bf16.msra.mxu0 0
        %3568 = vmatprep.subr.bf16.mxu0 0
        %3569 = vmatpush1.bf16.msra.mxu0 0
        %3570 = vmatprep.subr.bf16.mxu0 0
        %3571 = vmatpush1.bf16.msra.mxu0 0
        %3572 = vmatprep.subr.bf16.mxu0 0
        %3573 = vmatpush1.bf16.msra.mxu0 0
        %3574 = vmatprep.subr.bf16.mxu0 0
        %3575 = vmatpush1.bf16.msra.mxu0 0
        %3576 = vmatprep.subr.bf16.mxu0 0
        %3577 = vmatpush1.bf16.msra.mxu0 0
        %3578 = vmatprep.subr.bf16.mxu0 0
        %3579 = vmatpush1.bf16.msra.mxu0 0
        %3580 = vmatprep.mubr.bf16.mxu0 0
        %3581 = vmatmul.mubr.bf16.gmra.mrb[0].mxu0 %v494
        %v3582 = vpop.f32.mrb[0].mxu0
        %v3583 = vadd.f32 %v3528, %v3582
        %v3584 = vpop.f32.mrb[0].mxu0
        %v3585 = vpop.f32.mrb[0].mxu0
        %v3586 = vadd.f32 %v3533, %v3585
        %v3587 = vpop.f32.mrb[0].mxu0
        %3588 = vmatprep.mubr.bf16.mxu0 0
        %3589 = vmatmul.mubr.bf16.gmra.mrb[0].mxu0 %v497
        %v3590 = vpop.f32.mrb[0].mxu0
        %v3591 = vadd.f32 %v3538, %v3590
        %v3592 = vpop.f32.mrb[0].mxu0
        %v3593 = vpop.f32.mrb[0].mxu0
        %v3594 = vadd.f32 %v3543, %v3593
        %v3595 = vpop.f32.mrb[0].mxu0
        %3596 = vdwg.mxu0
        %v3597 = vmax.f32 %v3583, 0.0
        %v3598 = vmax.f32 %v3586, 0.0
        %v3599 = vmax.f32 %v3591, 0.0
        %v3600 = vmax.f32 %v3594, 0.0
        %v3601 = vpack.c.bf16 %v3598, %v3597
        %v3602 = vpack.c.bf16 %v3600, %v3599
        %3603 = vmatprep.subr.bf16.mxu0 0
        %3604 = vmatpush1.bf16.msra.mxu0 %v3601
        %3605 = vmatprep.subr.bf16.mxu0 0
        %3606 = vmatpush1.bf16.msra.mxu0 %v3602
        %3607 = vmatprep.subr.bf16.mxu0 0
        %3608 = vmatpush1.bf16.msra.mxu0 0
        %3609 = vmatprep.subr.bf16.mxu0 0
        %3610 = vmatpush1.bf16.msra.mxu0 0
        %3611 = vmatprep.subr.bf16.mxu0 0
        %3612 = vmatpush1.bf16.msra.mxu0 0
        %3613 = vmatprep.subr.bf16.mxu0 0
        %3614 = vmatpush1.bf16.msra.mxu0 0
        %3615 = vmatprep.subr.bf16.mxu0 0
        %3616 = vmatpush1.bf16.msra.mxu0 0
        %3617 = vmatprep.subr.bf16.mxu0 0
        %3618 = vmatpush1.bf16.msra.mxu0 0
        %3619 = vmatprep.subr.bf16.mxu0 0
        %3620 = vmatpush1.bf16.msra.mxu0 0
        %3621 = vmatprep.subr.bf16.mxu0 0
        %3622 = vmatpush1.bf16.msra.mxu0 0
        %3623 = vmatprep.subr.bf16.mxu0 0
        %3624 = vmatpush1.bf16.msra.mxu0 0
        %3625 = vmatprep.subr.bf16.mxu0 0
        %3626 = vmatpush1.bf16.msra.mxu0 0
        %3627 = vmatprep.subr.bf16.mxu0 0
        %3628 = vmatpush1.bf16.msra.mxu0 0
        %3629 = vmatprep.subr.bf16.mxu0 0
        %3630 = vmatpush1.bf16.msra.mxu0 0
        %3631 = vmatprep.subr.bf16.mxu0 0
        %3632 = vmatpush1.bf16.msra.mxu0 0
        %3633 = vmatprep.subr.bf16.mxu0 0
        %3634 = vmatpush1.bf16.msra.mxu0 0
        %3635 = vmatprep.mubr.bf16.mxu0 0
        %3636 = vmatmul.mubr.bf16.gmra.mrb[0].mxu0 %v590
        %v3637 = vpop.f32.mrb[0].mxu0
        %v3638 = vadd.f32 %v561, %v3637
        %v3639 = vpop.f32.mrb[0].mxu0
        %v3640 = vpop.f32.mrb[0].mxu0
        %v3641 = vadd.f32 %v566, %v3640
        %v3642 = vpop.f32.mrb[0].mxu0
        %3643 = vmatprep.mubr.bf16.mxu0 0
        %3644 = vmatmul.mubr.bf16.gmra.mrb[0].mxu0 %v593
        %v3645 = vpop.f32.mrb[0].mxu0
        %v3646 = vadd.f32 %v571, %v3645
        %v3647 = vpop.f32.mrb[0].mxu0
        %v3648 = vpop.f32.mrb[0].mxu0
        %v3649 = vadd.f32 %v576, %v3648
        %v3650 = vpop.f32.mrb[0].mxu0
        %3651 = vdwg.mxu0
        %v3652 = vmax.f32 %v3638, 0.0
        %v3653 = vmax.f32 %v3641, 0.0
        %v3654 = vmax.f32 %v3646, 0.0
        %v3655 = vmax.f32 %v3649, 0.0
        %v3656 = vpack.c.bf16 %v3653, %v3652
        %v3657 = vpack.c.bf16 %v3655, %v3654
        %3658 = vmatprep.subr.bf16.mxu0 0
        %3659 = vmatpush1.bf16.msra.mxu0 %v3656
        %3660 = vmatprep.subr.bf16.mxu0 0
        %3661 = vmatpush1.bf16.msra.mxu0 %v3657
        %3662 = vmatprep.subr.bf16.mxu0 0
        %3663 = vmatpush1.bf16.msra.mxu0 0
        %3664 = vmatprep.subr.bf16.mxu0 0
        %3665 = vmatpush1.bf16.msra.mxu0 0
        %3666 = vmatprep.subr.bf16.mxu0 0
        %3667 = vmatpush1.bf16.msra.mxu0 0
        %3668 = vmatprep.subr.bf16.mxu0 0
        %3669 = vmatpush1.bf16.msra.mxu0 0
        %3670 = vmatprep.subr.bf16.mxu0 0
        %3671 = vmatpush1.bf16.msra.mxu0 0
        %3672 = vmatprep.subr.bf16.mxu0 0
        %3673 = vmatpush1.bf16.msra.mxu0 0
        %3674 = vmatprep.subr.bf16.mxu0 0
        %3675 = vmatpush1.bf16.msra.mxu0 0
        %3676 = vmatprep.subr.bf16.mxu0 0
        %3677 = vmatpush1.bf16.msra.mxu0 0
        %3678 = vmatprep.subr.bf16.mxu0 0
        %3679 = vmatpush1.bf16.msra.mxu0 0
        %3680 = vmatprep.subr.bf16.mxu0 0
        %3681 = vmatpush1.bf16.msra.mxu0 0
        %3682 = vmatprep.subr.bf16.mxu0 0
        %3683 = vmatpush1.bf16.msra.mxu0 0
        %3684 = vmatprep.subr.bf16.mxu0 0
        %3685 = vmatpush1.bf16.msra.mxu0 0
        %3686 = vmatprep.subr.bf16.mxu0 0
        %3687 = vmatpush1.bf16.msra.mxu0 0
        %3688 = vmatprep.subr.bf16.mxu0 0
        %3689 = vmatpush1.bf16.msra.mxu0 0
        %3690 = vmatprep.mubr.bf16.mxu0 0
        %3691 = vmatmul.mubr.bf16.gmra.mrb[0].mxu0 %v656
        %v3692 = vpop.f32.mrb[0].mxu0
        %v3693 = vadd.f32 %v653, %v3692
        %v3694 = vpop.f32.mrb[0].mxu0
        %v3695 = vpop.f32.mrb[0].mxu0
        %v3696 = vpop.f32.mrb[0].mxu0
        %3697 = vdwg.mxu0
        %v3698 = vmul.f32 %v3693, %v3511
        %v3699 = vrot.slane %v3698, 4
        %v3700 = vadd.f32 %v3698, %v3699
        %v3701 = vrot.slane %v3700, 2
        %v3702 = vadd.f32 %v3700, %v3701
        %v3703 = vrot.slane %v3702, 1
        %v3704 = vadd.f32 %v3702, %v3703
        %v3705 = vmul.f32 %v3511, 0.2
        %v3706 = vadd.f32 %v3705, 1.0007813
        %v3707 = vmul.f32 %v3507, %v3706
        %v3708 = vmul.f32 %v3509, 1.0004687
        %v3709 = vadd.f32 %v3708, %v3704
        %s3710 = scalar_lea.vmem %s365, 128 [#allocation3]
        %v3711 = vld [vmem:[%s3710] sm:$0xff]
        %s3712 = sadd.s32 %s446, 16
        %s3713 = scvt.s32.f32 %s3712
        %s3714 = smul.f32 %s3713, 0.015625
        %v3715 = vstv %s3714
        %v3716 = vmul.f32 %v3715, %v433
        %v3717 = vmul.f32 %v3715, %v434
        %v3718 = vmul.f32 %v3715, %v435
        %v3719 = vmul.f32 %v3715, %v436
        %v3720 = vadd.f32 %v437, %v3716
        %v3721 = vadd.f32 %v438, %v3717
        %v3722 = vadd.f32 %v439, %v3718
        %v3723 = vadd.f32 %v440, %v3719
        %v3724 = vpack.c.bf16 %v3707, %v3707
        %3726 = vset.pattern.permute.xlu0 0
        %3727 = vperm.xlu0 %3726, %v3720
        %v3728 = vpop.permute.xlu0 %3727
        %3731 = vset.pattern.permute.xlu0 0
        %3732 = vperm.xlu0 %3731, %v3721
        %v3733 = vpop.permute.xlu0 %3732
        %3736 = vset.pattern.permute.xlu0 0
        %3737 = vperm.xlu0 %3736, %v3722
        %v3738 = vpop.permute.xlu0 %3737
        %3741 = vset.pattern.permute.xlu0 0
        %3742 = vperm.xlu0 %3741, %v3723
        %v3743 = vpop.permute.xlu0 %3742
        %v3746 = vsel %vm499, %v3724, 0
        %3748 = vmatprep.subr.bf16.mxu0 0
        %3749 = vmatpush1.bf16.msra.mxu0 %v3746
        %3750 = vmatprep.subr.bf16.mxu0 0
        %3751 = vmatpush1.bf16.msra.mxu0 0
        %3752 = vmatprep.subr.bf16.mxu0 0
        %3753 = vmatpush1.bf16.msra.mxu0 0
        %3754 = vmatprep.subr.bf16.mxu0 0
        %3755 = vmatpush1.bf16.msra.mxu0 0
        %3756 = vmatprep.subr.bf16.mxu0 0
        %3757 = vmatpush1.bf16.msra.mxu0 0
        %3758 = vmatprep.subr.bf16.mxu0 0
        %3759 = vmatpush1.bf16.msra.mxu0 0
        %3760 = vmatprep.subr.bf16.mxu0 0
        %3761 = vmatpush1.bf16.msra.mxu0 0
        %3762 = vmatprep.subr.bf16.mxu0 0
        %3763 = vmatpush1.bf16.msra.mxu0 0
        %3764 = vmatprep.subr.bf16.mxu0 0
        %3765 = vmatpush1.bf16.msra.mxu0 0
        %3766 = vmatprep.subr.bf16.mxu0 0
        %3767 = vmatpush1.bf16.msra.mxu0 0
        %3768 = vmatprep.subr.bf16.mxu0 0
        %3769 = vmatpush1.bf16.msra.mxu0 0
        %3770 = vmatprep.subr.bf16.mxu0 0
        %3771 = vmatpush1.bf16.msra.mxu0 0
        %3772 = vmatprep.subr.bf16.mxu0 0
        %3773 = vmatpush1.bf16.msra.mxu0 0
        %3774 = vmatprep.subr.bf16.mxu0 0
        %3775 = vmatpush1.bf16.msra.mxu0 0
        %3776 = vmatprep.subr.bf16.mxu0 0
        %3777 = vmatpush1.bf16.msra.mxu0 0
        %3778 = vmatprep.subr.bf16.mxu0 0
        %3779 = vmatpush1.bf16.msra.mxu0 0
        %3780 = vmatprep.mubr.bf16.mxu0 0
        %3781 = vmatmul.mubr.bf16.gmra.mrb[0].mxu0 %v494
        %v3782 = vpop.f32.mrb[0].mxu0
        %v3783 = vadd.f32 %v3728, %v3782
        %v3784 = vpop.f32.mrb[0].mxu0
        %v3785 = vpop.f32.mrb[0].mxu0
        %v3786 = vadd.f32 %v3733, %v3785
        %v3787 = vpop.f32.mrb[0].mxu0
        %3788 = vmatprep.mubr.bf16.mxu0 0
        %3789 = vmatmul.mubr.bf16.gmra.mrb[0].mxu0 %v497
        %v3790 = vpop.f32.mrb[0].mxu0
        %v3791 = vadd.f32 %v3738, %v3790
        %v3792 = vpop.f32.mrb[0].mxu0
        %v3793 = vpop.f32.mrb[0].mxu0
        %v3794 = vadd.f32 %v3743, %v3793
        %v3795 = vpop.f32.mrb[0].mxu0
        %3796 = vdwg.mxu0
        %v3797 = vmax.f32 %v3783, 0.0
        %v3798 = vmax.f32 %v3786, 0.0
        %v3799 = vmax.f32 %v3791, 0.0
        %v3800 = vmax.f32 %v3794, 0.0
        %v3801 = vpack.c.bf16 %v3798, %v3797
        %v3802 = vpack.c.bf16 %v3800, %v3799
        %3803 = vmatprep.subr.bf16.mxu0 0
        %3804 = vmatpush1.bf16.msra.mxu0 %v3801
        %3805 = vmatprep.subr.bf16.mxu0 0
        %3806 = vmatpush1.bf16.msra.mxu0 %v3802
        %3807 = vmatprep.subr.bf16.mxu0 0
        %3808 = vmatpush1.bf16.msra.mxu0 0
        %3809 = vmatprep.subr.bf16.mxu0 0
        %3810 = vmatpush1.bf16.msra.mxu0 0
        %3811 = vmatprep.subr.bf16.mxu0 0
        %3812 = vmatpush1.bf16.msra.mxu0 0
        %3813 = vmatprep.subr.bf16.mxu0 0
        %3814 = vmatpush1.bf16.msra.mxu0 0
        %3815 = vmatprep.subr.bf16.mxu0 0
        %3816 = vmatpush1.bf16.msra.mxu0 0
        %3817 = vmatprep.subr.bf16.mxu0 0
        %3818 = vmatpush1.bf16.msra.mxu0 0
        %3819 = vmatprep.subr.bf16.mxu0 0
        %3820 = vmatpush1.bf16.msra.mxu0 0
        %3821 = vmatprep.subr.bf16.mxu0 0
        %3822 = vmatpush1.bf16.msra.mxu0 0
        %3823 = vmatprep.subr.bf16.mxu0 0
        %3824 = vmatpush1.bf16.msra.mxu0 0
        %3825 = vmatprep.subr.bf16.mxu0 0
        %3826 = vmatpush1.bf16.msra.mxu0 0
        %3827 = vmatprep.subr.bf16.mxu0 0
        %3828 = vmatpush1.bf16.msra.mxu0 0
        %3829 = vmatprep.subr.bf16.mxu0 0
        %3830 = vmatpush1.bf16.msra.mxu0 0
        %3831 = vmatprep.subr.bf16.mxu0 0
        %3832 = vmatpush1.bf16.msra.mxu0 0
        %3833 = vmatprep.subr.bf16.mxu0 0
        %3834 = vmatpush1.bf16.msra.mxu0 0
        %3835 = vmatprep.mubr.bf16.mxu0 0
        %3836 = vmatmul.mubr.bf16.gmra.mrb[0].mxu0 %v590
        %v3837 = vpop.f32.mrb[0].mxu0
        %v3838 = vadd.f32 %v561, %v3837
        %v3839 = vpop.f32.mrb[0].mxu0
        %v3840 = vpop.f32.mrb[0].mxu0
        %v3841 = vadd.f32 %v566, %v3840
        %v3842 = vpop.f32.mrb[0].mxu0
        %3843 = vmatprep.mubr.bf16.mxu0 0
        %3844 = vmatmul.mubr.bf16.gmra.mrb[0].mxu0 %v593
        %v3845 = vpop.f32.mrb[0].mxu0
        %v3846 = vadd.f32 %v571, %v3845
        %v3847 = vpop.f32.mrb[0].mxu0
        %v3848 = vpop.f32.mrb[0].mxu0
        %v3849 = vadd.f32 %v576, %v3848
        %v3850 = vpop.f32.mrb[0].mxu0
        %3851 = vdwg.mxu0
        %v3852 = vmax.f32 %v3838, 0.0
        %v3853 = vmax.f32 %v3841, 0.0
        %v3854 = vmax.f32 %v3846, 0.0
        %v3855 = vmax.f32 %v3849, 0.0
        %v3856 = vpack.c.bf16 %v3853, %v3852
        %v3857 = vpack.c.bf16 %v3855, %v3854
        %3858 = vmatprep.subr.bf16.mxu0 0
        %3859 = vmatpush1.bf16.msra.mxu0 %v3856
        %3860 = vmatprep.subr.bf16.mxu0 0
        %3861 = vmatpush1.bf16.msra.mxu0 %v3857
        %3862 = vmatprep.subr.bf16.mxu0 0
        %3863 = vmatpush1.bf16.msra.mxu0 0
        %3864 = vmatprep.subr.bf16.mxu0 0
        %3865 = vmatpush1.bf16.msra.mxu0 0
        %3866 = vmatprep.subr.bf16.mxu0 0
        %3867 = vmatpush1.bf16.msra.mxu0 0
        %3868 = vmatprep.subr.bf16.mxu0 0
        %3869 = vmatpush1.bf16.msra.mxu0 0
        %3870 = vmatprep.subr.bf16.mxu0 0
        %3871 = vmatpush1.bf16.msra.mxu0 0
        %3872 = vmatprep.subr.bf16.mxu0 0
        %3873 = vmatpush1.bf16.msra.mxu0 0
        %3874 = vmatprep.subr.bf16.mxu0 0
        %3875 = vmatpush1.bf16.msra.mxu0 0
        %3876 = vmatprep.subr.bf16.mxu0 0
        %3877 = vmatpush1.bf16.msra.mxu0 0
        %3878 = vmatprep.subr.bf16.mxu0 0
        %3879 = vmatpush1.bf16.msra.mxu0 0
        %3880 = vmatprep.subr.bf16.mxu0 0
        %3881 = vmatpush1.bf16.msra.mxu0 0
        %3882 = vmatprep.subr.bf16.mxu0 0
        %3883 = vmatpush1.bf16.msra.mxu0 0
        %3884 = vmatprep.subr.bf16.mxu0 0
        %3885 = vmatpush1.bf16.msra.mxu0 0
        %3886 = vmatprep.subr.bf16.mxu0 0
        %3887 = vmatpush1.bf16.msra.mxu0 0
        %3888 = vmatprep.subr.bf16.mxu0 0
        %3889 = vmatpush1.bf16.msra.mxu0 0
        %3890 = vmatprep.mubr.bf16.mxu0 0
        %3891 = vmatmul.mubr.bf16.gmra.mrb[0].mxu0 %v656
        %v3892 = vpop.f32.mrb[0].mxu0
        %v3893 = vadd.f32 %v653, %v3892
        %v3894 = vpop.f32.mrb[0].mxu0
        %v3895 = vpop.f32.mrb[0].mxu0
        %v3896 = vpop.f32.mrb[0].mxu0
        %3897 = vdwg.mxu0
        %v3898 = vmul.f32 %v3893, %v3711
        %v3899 = vrot.slane %v3898, 4
        %v3900 = vadd.f32 %v3898, %v3899
        %v3901 = vrot.slane %v3900, 2
        %v3902 = vadd.f32 %v3900, %v3901
        %v3903 = vrot.slane %v3902, 1
        %v3904 = vadd.f32 %v3902, %v3903
        %v3905 = vmul.f32 %v3711, 0.2
        %v3906 = vadd.f32 %v3905, 1.0007813
        %v3907 = vmul.f32 %v3707, %v3906
        %v3908 = vmul.f32 %v3709, 1.0004687
        %v3909 = vadd.f32 %v3908, %v3904
        %s3910 = scalar_lea.vmem %s365, 136 [#allocation3]
        %v3911 = vld [vmem:[%s3910] sm:$0xff]
        %s3912 = sadd.s32 %s446, 17
        %s3913 = scvt.s32.f32 %s3912
        %s3914 = smul.f32 %s3913, 0.015625
        %v3915 = vstv %s3914
        %v3916 = vmul.f32 %v3915, %v433
        %v3917 = vmul.f32 %v3915, %v434
        %v3918 = vmul.f32 %v3915, %v435
        %v3919 = vmul.f32 %v3915, %v436
        %v3920 = vadd.f32 %v437, %v3916
        %v3921 = vadd.f32 %v438, %v3917
        %v3922 = vadd.f32 %v439, %v3918
        %v3923 = vadd.f32 %v440, %v3919
        %v3924 = vpack.c.bf16 %v3907, %v3907
        %3926 = vset.pattern.permute.xlu0 0
        %3927 = vperm.xlu0 %3926, %v3920
        %v3928 = vpop.permute.xlu0 %3927
        %3931 = vset.pattern.permute.xlu0 0
        %3932 = vperm.xlu0 %3931, %v3921
        %v3933 = vpop.permute.xlu0 %3932
        %3936 = vset.pattern.permute.xlu0 0
        %3937 = vperm.xlu0 %3936, %v3922
        %v3938 = vpop.permute.xlu0 %3937
        %3941 = vset.pattern.permute.xlu0 0
        %3942 = vperm.xlu0 %3941, %v3923
        %v3943 = vpop.permute.xlu0 %3942
        %v3946 = vsel %vm499, %v3924, 0
        %3948 = vmatprep.subr.bf16.mxu0 0
        %3949 = vmatpush1.bf16.msra.mxu0 %v3946
        %3950 = vmatprep.subr.bf16.mxu0 0
        %3951 = vmatpush1.bf16.msra.mxu0 0
        %3952 = vmatprep.subr.bf16.mxu0 0
        %3953 = vmatpush1.bf16.msra.mxu0 0
        %3954 = vmatprep.subr.bf16.mxu0 0
        %3955 = vmatpush1.bf16.msra.mxu0 0
        %3956 = vmatprep.subr.bf16.mxu0 0
        %3957 = vmatpush1.bf16.msra.mxu0 0
        %3958 = vmatprep.subr.bf16.mxu0 0
        %3959 = vmatpush1.bf16.msra.mxu0 0
        %3960 = vmatprep.subr.bf16.mxu0 0
        %3961 = vmatpush1.bf16.msra.mxu0 0
        %3962 = vmatprep.subr.bf16.mxu0 0
        %3963 = vmatpush1.bf16.msra.mxu0 0
        %3964 = vmatprep.subr.bf16.mxu0 0
        %3965 = vmatpush1.bf16.msra.mxu0 0
        %3966 = vmatprep.subr.bf16.mxu0 0
        %3967 = vmatpush1.bf16.msra.mxu0 0
        %3968 = vmatprep.subr.bf16.mxu0 0
        %3969 = vmatpush1.bf16.msra.mxu0 0
        %3970 = vmatprep.subr.bf16.mxu0 0
        %3971 = vmatpush1.bf16.msra.mxu0 0
        %3972 = vmatprep.subr.bf16.mxu0 0
        %3973 = vmatpush1.bf16.msra.mxu0 0
        %3974 = vmatprep.subr.bf16.mxu0 0
        %3975 = vmatpush1.bf16.msra.mxu0 0
        %3976 = vmatprep.subr.bf16.mxu0 0
        %3977 = vmatpush1.bf16.msra.mxu0 0
        %3978 = vmatprep.subr.bf16.mxu0 0
        %3979 = vmatpush1.bf16.msra.mxu0 0
        %3980 = vmatprep.mubr.bf16.mxu0 0
        %3981 = vmatmul.mubr.bf16.gmra.mrb[0].mxu0 %v494
        %v3982 = vpop.f32.mrb[0].mxu0
        %v3983 = vadd.f32 %v3928, %v3982
        %v3984 = vpop.f32.mrb[0].mxu0
        %v3985 = vpop.f32.mrb[0].mxu0
        %v3986 = vadd.f32 %v3933, %v3985
        %v3987 = vpop.f32.mrb[0].mxu0
        %3988 = vmatprep.mubr.bf16.mxu0 0
        %3989 = vmatmul.mubr.bf16.gmra.mrb[0].mxu0 %v497
        %v3990 = vpop.f32.mrb[0].mxu0
        %v3991 = vadd.f32 %v3938, %v3990
        %v3992 = vpop.f32.mrb[0].mxu0
        %v3993 = vpop.f32.mrb[0].mxu0
        %v3994 = vadd.f32 %v3943, %v3993
        %v3995 = vpop.f32.mrb[0].mxu0
        %3996 = vdwg.mxu0
        %v3997 = vmax.f32 %v3983, 0.0
        %v3998 = vmax.f32 %v3986, 0.0
        %v3999 = vmax.f32 %v3991, 0.0
        %v4000 = vmax.f32 %v3994, 0.0
        %v4001 = vpack.c.bf16 %v3998, %v3997
        %v4002 = vpack.c.bf16 %v4000, %v3999
        %4003 = vmatprep.subr.bf16.mxu0 0
        %4004 = vmatpush1.bf16.msra.mxu0 %v4001
        %4005 = vmatprep.subr.bf16.mxu0 0
        %4006 = vmatpush1.bf16.msra.mxu0 %v4002
        %4007 = vmatprep.subr.bf16.mxu0 0
        %4008 = vmatpush1.bf16.msra.mxu0 0
        %4009 = vmatprep.subr.bf16.mxu0 0
        %4010 = vmatpush1.bf16.msra.mxu0 0
        %4011 = vmatprep.subr.bf16.mxu0 0
        %4012 = vmatpush1.bf16.msra.mxu0 0
        %4013 = vmatprep.subr.bf16.mxu0 0
        %4014 = vmatpush1.bf16.msra.mxu0 0
        %4015 = vmatprep.subr.bf16.mxu0 0
        %4016 = vmatpush1.bf16.msra.mxu0 0
        %4017 = vmatprep.subr.bf16.mxu0 0
        %4018 = vmatpush1.bf16.msra.mxu0 0
        %4019 = vmatprep.subr.bf16.mxu0 0
        %4020 = vmatpush1.bf16.msra.mxu0 0
        %4021 = vmatprep.subr.bf16.mxu0 0
        %4022 = vmatpush1.bf16.msra.mxu0 0
        %4023 = vmatprep.subr.bf16.mxu0 0
        %4024 = vmatpush1.bf16.msra.mxu0 0
        %4025 = vmatprep.subr.bf16.mxu0 0
        %4026 = vmatpush1.bf16.msra.mxu0 0
        %4027 = vmatprep.subr.bf16.mxu0 0
        %4028 = vmatpush1.bf16.msra.mxu0 0
        %4029 = vmatprep.subr.bf16.mxu0 0
        %4030 = vmatpush1.bf16.msra.mxu0 0
        %4031 = vmatprep.subr.bf16.mxu0 0
        %4032 = vmatpush1.bf16.msra.mxu0 0
        %4033 = vmatprep.subr.bf16.mxu0 0
        %4034 = vmatpush1.bf16.msra.mxu0 0
        %4035 = vmatprep.mubr.bf16.mxu0 0
        %4036 = vmatmul.mubr.bf16.gmra.mrb[0].mxu0 %v590
        %v4037 = vpop.f32.mrb[0].mxu0
        %v4038 = vadd.f32 %v561, %v4037
        %v4039 = vpop.f32.mrb[0].mxu0
        %v4040 = vpop.f32.mrb[0].mxu0
        %v4041 = vadd.f32 %v566, %v4040
        %v4042 = vpop.f32.mrb[0].mxu0
        %4043 = vmatprep.mubr.bf16.mxu0 0
        %4044 = vmatmul.mubr.bf16.gmra.mrb[0].mxu0 %v593
        %v4045 = vpop.f32.mrb[0].mxu0
        %v4046 = vadd.f32 %v571, %v4045
        %v4047 = vpop.f32.mrb[0].mxu0
        %v4048 = vpop.f32.mrb[0].mxu0
        %v4049 = vadd.f32 %v576, %v4048
        %v4050 = vpop.f32.mrb[0].mxu0
        %4051 = vdwg.mxu0
        %v4052 = vmax.f32 %v4038, 0.0
        %v4053 = vmax.f32 %v4041, 0.0
        %v4054 = vmax.f32 %v4046, 0.0
        %v4055 = vmax.f32 %v4049, 0.0
        %v4056 = vpack.c.bf16 %v4053, %v4052
        %v4057 = vpack.c.bf16 %v4055, %v4054
        %4058 = vmatprep.subr.bf16.mxu0 0
        %4059 = vmatpush1.bf16.msra.mxu0 %v4056
        %4060 = vmatprep.subr.bf16.mxu0 0
        %4061 = vmatpush1.bf16.msra.mxu0 %v4057
        %4062 = vmatprep.subr.bf16.mxu0 0
        %4063 = vmatpush1.bf16.msra.mxu0 0
        %4064 = vmatprep.subr.bf16.mxu0 0
        %4065 = vmatpush1.bf16.msra.mxu0 0
        %4066 = vmatprep.subr.bf16.mxu0 0
        %4067 = vmatpush1.bf16.msra.mxu0 0
        %4068 = vmatprep.subr.bf16.mxu0 0
        %4069 = vmatpush1.bf16.msra.mxu0 0
        %4070 = vmatprep.subr.bf16.mxu0 0
        %4071 = vmatpush1.bf16.msra.mxu0 0
        %4072 = vmatprep.subr.bf16.mxu0 0
        %4073 = vmatpush1.bf16.msra.mxu0 0
        %4074 = vmatprep.subr.bf16.mxu0 0
        %4075 = vmatpush1.bf16.msra.mxu0 0
        %4076 = vmatprep.subr.bf16.mxu0 0
        %4077 = vmatpush1.bf16.msra.mxu0 0
        %4078 = vmatprep.subr.bf16.mxu0 0
        %4079 = vmatpush1.bf16.msra.mxu0 0
        %4080 = vmatprep.subr.bf16.mxu0 0
        %4081 = vmatpush1.bf16.msra.mxu0 0
        %4082 = vmatprep.subr.bf16.mxu0 0
        %4083 = vmatpush1.bf16.msra.mxu0 0
        %4084 = vmatprep.subr.bf16.mxu0 0
        %4085 = vmatpush1.bf16.msra.mxu0 0
        %4086 = vmatprep.subr.bf16.mxu0 0
        %4087 = vmatpush1.bf16.msra.mxu0 0
        %4088 = vmatprep.subr.bf16.mxu0 0
        %4089 = vmatpush1.bf16.msra.mxu0 0
        %4090 = vmatprep.mubr.bf16.mxu0 0
        %4091 = vmatmul.mubr.bf16.gmra.mrb[0].mxu0 %v656
        %v4092 = vpop.f32.mrb[0].mxu0
        %v4093 = vadd.f32 %v653, %v4092
        %v4094 = vpop.f32.mrb[0].mxu0
        %v4095 = vpop.f32.mrb[0].mxu0
        %v4096 = vpop.f32.mrb[0].mxu0
        %4097 = vdwg.mxu0
        %v4098 = vmul.f32 %v4093, %v3911
        %v4099 = vrot.slane %v4098, 4
        %v4100 = vadd.f32 %v4098, %v4099
        %v4101 = vrot.slane %v4100, 2
        %v4102 = vadd.f32 %v4100, %v4101
        %v4103 = vrot.slane %v4102, 1
        %v4104 = vadd.f32 %v4102, %v4103
        %v4105 = vmul.f32 %v3911, 0.2
        %v4106 = vadd.f32 %v4105, 1.0007813
        %v4107 = vmul.f32 %v3907, %v4106
        %v4108 = vmul.f32 %v3909, 1.0004687
        %v4109 = vadd.f32 %v4108, %v4104
        %s4110 = scalar_lea.vmem %s365, 144 [#allocation3]
        %v4111 = vld [vmem:[%s4110] sm:$0xff]
        %s4112 = sadd.s32 %s446, 18
        %s4113 = scvt.s32.f32 %s4112
        %s4114 = smul.f32 %s4113, 0.015625
        %v4115 = vstv %s4114
        %v4116 = vmul.f32 %v4115, %v433
        %v4117 = vmul.f32 %v4115, %v434
        %v4118 = vmul.f32 %v4115, %v435
        %v4119 = vmul.f32 %v4115, %v436
        %v4120 = vadd.f32 %v437, %v4116
        %v4121 = vadd.f32 %v438, %v4117
        %v4122 = vadd.f32 %v439, %v4118
        %v4123 = vadd.f32 %v440, %v4119
        %v4124 = vpack.c.bf16 %v4107, %v4107
        %4126 = vset.pattern.permute.xlu0 0
        %4127 = vperm.xlu0 %4126, %v4120
        %v4128 = vpop.permute.xlu0 %4127
        %4131 = vset.pattern.permute.xlu0 0
        %4132 = vperm.xlu0 %4131, %v4121
        %v4133 = vpop.permute.xlu0 %4132
        %4136 = vset.pattern.permute.xlu0 0
        %4137 = vperm.xlu0 %4136, %v4122
        %v4138 = vpop.permute.xlu0 %4137
        %4141 = vset.pattern.permute.xlu0 0
        %4142 = vperm.xlu0 %4141, %v4123
        %v4143 = vpop.permute.xlu0 %4142
        %v4146 = vsel %vm499, %v4124, 0
        %4148 = vmatprep.subr.bf16.mxu0 0
        %4149 = vmatpush1.bf16.msra.mxu0 %v4146
        %4150 = vmatprep.subr.bf16.mxu0 0
        %4151 = vmatpush1.bf16.msra.mxu0 0
        %4152 = vmatprep.subr.bf16.mxu0 0
        %4153 = vmatpush1.bf16.msra.mxu0 0
        %4154 = vmatprep.subr.bf16.mxu0 0
        %4155 = vmatpush1.bf16.msra.mxu0 0
        %4156 = vmatprep.subr.bf16.mxu0 0
        %4157 = vmatpush1.bf16.msra.mxu0 0
        %4158 = vmatprep.subr.bf16.mxu0 0
        %4159 = vmatpush1.bf16.msra.mxu0 0
        %4160 = vmatprep.subr.bf16.mxu0 0
        %4161 = vmatpush1.bf16.msra.mxu0 0
        %4162 = vmatprep.subr.bf16.mxu0 0
        %4163 = vmatpush1.bf16.msra.mxu0 0
        %4164 = vmatprep.subr.bf16.mxu0 0
        %4165 = vmatpush1.bf16.msra.mxu0 0
        %4166 = vmatprep.subr.bf16.mxu0 0
        %4167 = vmatpush1.bf16.msra.mxu0 0
        %4168 = vmatprep.subr.bf16.mxu0 0
        %4169 = vmatpush1.bf16.msra.mxu0 0
        %4170 = vmatprep.subr.bf16.mxu0 0
        %4171 = vmatpush1.bf16.msra.mxu0 0
        %4172 = vmatprep.subr.bf16.mxu0 0
        %4173 = vmatpush1.bf16.msra.mxu0 0
        %4174 = vmatprep.subr.bf16.mxu0 0
        %4175 = vmatpush1.bf16.msra.mxu0 0
        %4176 = vmatprep.subr.bf16.mxu0 0
        %4177 = vmatpush1.bf16.msra.mxu0 0
        %4178 = vmatprep.subr.bf16.mxu0 0
        %4179 = vmatpush1.bf16.msra.mxu0 0
        %4180 = vmatprep.mubr.bf16.mxu0 0
        %4181 = vmatmul.mubr.bf16.gmra.mrb[0].mxu0 %v494
        %v4182 = vpop.f32.mrb[0].mxu0
        %v4183 = vadd.f32 %v4128, %v4182
        %v4184 = vpop.f32.mrb[0].mxu0
        %v4185 = vpop.f32.mrb[0].mxu0
        %v4186 = vadd.f32 %v4133, %v4185
        %v4187 = vpop.f32.mrb[0].mxu0
        %4188 = vmatprep.mubr.bf16.mxu0 0
        %4189 = vmatmul.mubr.bf16.gmra.mrb[0].mxu0 %v497
        %v4190 = vpop.f32.mrb[0].mxu0
        %v4191 = vadd.f32 %v4138, %v4190
        %v4192 = vpop.f32.mrb[0].mxu0
        %v4193 = vpop.f32.mrb[0].mxu0
        %v4194 = vadd.f32 %v4143, %v4193
        %v4195 = vpop.f32.mrb[0].mxu0
        %4196 = vdwg.mxu0
        %v4197 = vmax.f32 %v4183, 0.0
        %v4198 = vmax.f32 %v4186, 0.0
        %v4199 = vmax.f32 %v4191, 0.0
        %v4200 = vmax.f32 %v4194, 0.0
        %v4201 = vpack.c.bf16 %v4198, %v4197
        %v4202 = vpack.c.bf16 %v4200, %v4199
        %4203 = vmatprep.subr.bf16.mxu0 0
        %4204 = vmatpush1.bf16.msra.mxu0 %v4201
        %4205 = vmatprep.subr.bf16.mxu0 0
        %4206 = vmatpush1.bf16.msra.mxu0 %v4202
        %4207 = vmatprep.subr.bf16.mxu0 0
        %4208 = vmatpush1.bf16.msra.mxu0 0
        %4209 = vmatprep.subr.bf16.mxu0 0
        %4210 = vmatpush1.bf16.msra.mxu0 0
        %4211 = vmatprep.subr.bf16.mxu0 0
        %4212 = vmatpush1.bf16.msra.mxu0 0
        %4213 = vmatprep.subr.bf16.mxu0 0
        %4214 = vmatpush1.bf16.msra.mxu0 0
        %4215 = vmatprep.subr.bf16.mxu0 0
        %4216 = vmatpush1.bf16.msra.mxu0 0
        %4217 = vmatprep.subr.bf16.mxu0 0
        %4218 = vmatpush1.bf16.msra.mxu0 0
        %4219 = vmatprep.subr.bf16.mxu0 0
        %4220 = vmatpush1.bf16.msra.mxu0 0
        %4221 = vmatprep.subr.bf16.mxu0 0
        %4222 = vmatpush1.bf16.msra.mxu0 0
        %4223 = vmatprep.subr.bf16.mxu0 0
        %4224 = vmatpush1.bf16.msra.mxu0 0
        %4225 = vmatprep.subr.bf16.mxu0 0
        %4226 = vmatpush1.bf16.msra.mxu0 0
        %4227 = vmatprep.subr.bf16.mxu0 0
        %4228 = vmatpush1.bf16.msra.mxu0 0
        %4229 = vmatprep.subr.bf16.mxu0 0
        %4230 = vmatpush1.bf16.msra.mxu0 0
        %4231 = vmatprep.subr.bf16.mxu0 0
        %4232 = vmatpush1.bf16.msra.mxu0 0
        %4233 = vmatprep.subr.bf16.mxu0 0
        %4234 = vmatpush1.bf16.msra.mxu0 0
        %4235 = vmatprep.mubr.bf16.mxu0 0
        %4236 = vmatmul.mubr.bf16.gmra.mrb[0].mxu0 %v590
        %v4237 = vpop.f32.mrb[0].mxu0
        %v4238 = vadd.f32 %v561, %v4237
        %v4239 = vpop.f32.mrb[0].mxu0
        %v4240 = vpop.f32.mrb[0].mxu0
        %v4241 = vadd.f32 %v566, %v4240
        %v4242 = vpop.f32.mrb[0].mxu0
        %4243 = vmatprep.mubr.bf16.mxu0 0
        %4244 = vmatmul.mubr.bf16.gmra.mrb[0].mxu0 %v593
        %v4245 = vpop.f32.mrb[0].mxu0
        %v4246 = vadd.f32 %v571, %v4245
        %v4247 = vpop.f32.mrb[0].mxu0
        %v4248 = vpop.f32.mrb[0].mxu0
        %v4249 = vadd.f32 %v576, %v4248
        %v4250 = vpop.f32.mrb[0].mxu0
        %4251 = vdwg.mxu0
        %v4252 = vmax.f32 %v4238, 0.0
        %v4253 = vmax.f32 %v4241, 0.0
        %v4254 = vmax.f32 %v4246, 0.0
        %v4255 = vmax.f32 %v4249, 0.0
        %v4256 = vpack.c.bf16 %v4253, %v4252
        %v4257 = vpack.c.bf16 %v4255, %v4254
        %4258 = vmatprep.subr.bf16.mxu0 0
        %4259 = vmatpush1.bf16.msra.mxu0 %v4256
        %4260 = vmatprep.subr.bf16.mxu0 0
        %4261 = vmatpush1.bf16.msra.mxu0 %v4257
        %4262 = vmatprep.subr.bf16.mxu0 0
        %4263 = vmatpush1.bf16.msra.mxu0 0
        %4264 = vmatprep.subr.bf16.mxu0 0
        %4265 = vmatpush1.bf16.msra.mxu0 0
        %4266 = vmatprep.subr.bf16.mxu0 0
        %4267 = vmatpush1.bf16.msra.mxu0 0
        %4268 = vmatprep.subr.bf16.mxu0 0
        %4269 = vmatpush1.bf16.msra.mxu0 0
        %4270 = vmatprep.subr.bf16.mxu0 0
        %4271 = vmatpush1.bf16.msra.mxu0 0
        %4272 = vmatprep.subr.bf16.mxu0 0
        %4273 = vmatpush1.bf16.msra.mxu0 0
        %4274 = vmatprep.subr.bf16.mxu0 0
        %4275 = vmatpush1.bf16.msra.mxu0 0
        %4276 = vmatprep.subr.bf16.mxu0 0
        %4277 = vmatpush1.bf16.msra.mxu0 0
        %4278 = vmatprep.subr.bf16.mxu0 0
        %4279 = vmatpush1.bf16.msra.mxu0 0
        %4280 = vmatprep.subr.bf16.mxu0 0
        %4281 = vmatpush1.bf16.msra.mxu0 0
        %4282 = vmatprep.subr.bf16.mxu0 0
        %4283 = vmatpush1.bf16.msra.mxu0 0
        %4284 = vmatprep.subr.bf16.mxu0 0
        %4285 = vmatpush1.bf16.msra.mxu0 0
        %4286 = vmatprep.subr.bf16.mxu0 0
        %4287 = vmatpush1.bf16.msra.mxu0 0
        %4288 = vmatprep.subr.bf16.mxu0 0
        %4289 = vmatpush1.bf16.msra.mxu0 0
        %4290 = vmatprep.mubr.bf16.mxu0 0
        %4291 = vmatmul.mubr.bf16.gmra.mrb[0].mxu0 %v656
        %v4292 = vpop.f32.mrb[0].mxu0
        %v4293 = vadd.f32 %v653, %v4292
        %v4294 = vpop.f32.mrb[0].mxu0
        %v4295 = vpop.f32.mrb[0].mxu0
        %v4296 = vpop.f32.mrb[0].mxu0
        %4297 = vdwg.mxu0
        %v4298 = vmul.f32 %v4293, %v4111
        %v4299 = vrot.slane %v4298, 4
        %v4300 = vadd.f32 %v4298, %v4299
        %v4301 = vrot.slane %v4300, 2
        %v4302 = vadd.f32 %v4300, %v4301
        %v4303 = vrot.slane %v4302, 1
        %v4304 = vadd.f32 %v4302, %v4303
        %v4305 = vmul.f32 %v4111, 0.2
        %v4306 = vadd.f32 %v4305, 1.0007813
        %v4307 = vmul.f32 %v4107, %v4306
        %v4308 = vmul.f32 %v4109, 1.0004687
        %v4309 = vadd.f32 %v4308, %v4304
        %s4310 = scalar_lea.vmem %s365, 152 [#allocation3]
        %v4311 = vld [vmem:[%s4310] sm:$0xff]
        %s4312 = sadd.s32 %s446, 19
        %s4313 = scvt.s32.f32 %s4312
        %s4314 = smul.f32 %s4313, 0.015625
        %v4315 = vstv %s4314
        %v4316 = vmul.f32 %v4315, %v433
        %v4317 = vmul.f32 %v4315, %v434
        %v4318 = vmul.f32 %v4315, %v435
        %v4319 = vmul.f32 %v4315, %v436
        %v4320 = vadd.f32 %v437, %v4316
        %v4321 = vadd.f32 %v438, %v4317
        %v4322 = vadd.f32 %v439, %v4318
        %v4323 = vadd.f32 %v440, %v4319
        %v4324 = vpack.c.bf16 %v4307, %v4307
        %4326 = vset.pattern.permute.xlu0 0
        %4327 = vperm.xlu0 %4326, %v4320
        %v4328 = vpop.permute.xlu0 %4327
        %4331 = vset.pattern.permute.xlu0 0
        %4332 = vperm.xlu0 %4331, %v4321
        %v4333 = vpop.permute.xlu0 %4332
        %4336 = vset.pattern.permute.xlu0 0
        %4337 = vperm.xlu0 %4336, %v4322
        %v4338 = vpop.permute.xlu0 %4337
        %4341 = vset.pattern.permute.xlu0 0
        %4342 = vperm.xlu0 %4341, %v4323
        %v4343 = vpop.permute.xlu0 %4342
        %v4346 = vsel %vm499, %v4324, 0
        %4348 = vmatprep.subr.bf16.mxu0 0
        %4349 = vmatpush1.bf16.msra.mxu0 %v4346
        %4350 = vmatprep.subr.bf16.mxu0 0
        %4351 = vmatpush1.bf16.msra.mxu0 0
        %4352 = vmatprep.subr.bf16.mxu0 0
        %4353 = vmatpush1.bf16.msra.mxu0 0
        %4354 = vmatprep.subr.bf16.mxu0 0
        %4355 = vmatpush1.bf16.msra.mxu0 0
        %4356 = vmatprep.subr.bf16.mxu0 0
        %4357 = vmatpush1.bf16.msra.mxu0 0
        %4358 = vmatprep.subr.bf16.mxu0 0
        %4359 = vmatpush1.bf16.msra.mxu0 0
        %4360 = vmatprep.subr.bf16.mxu0 0
        %4361 = vmatpush1.bf16.msra.mxu0 0
        %4362 = vmatprep.subr.bf16.mxu0 0
        %4363 = vmatpush1.bf16.msra.mxu0 0
        %4364 = vmatprep.subr.bf16.mxu0 0
        %4365 = vmatpush1.bf16.msra.mxu0 0
        %4366 = vmatprep.subr.bf16.mxu0 0
        %4367 = vmatpush1.bf16.msra.mxu0 0
        %4368 = vmatprep.subr.bf16.mxu0 0
        %4369 = vmatpush1.bf16.msra.mxu0 0
        %4370 = vmatprep.subr.bf16.mxu0 0
        %4371 = vmatpush1.bf16.msra.mxu0 0
        %4372 = vmatprep.subr.bf16.mxu0 0
        %4373 = vmatpush1.bf16.msra.mxu0 0
        %4374 = vmatprep.subr.bf16.mxu0 0
        %4375 = vmatpush1.bf16.msra.mxu0 0
        %4376 = vmatprep.subr.bf16.mxu0 0
        %4377 = vmatpush1.bf16.msra.mxu0 0
        %4378 = vmatprep.subr.bf16.mxu0 0
        %4379 = vmatpush1.bf16.msra.mxu0 0
        %4380 = vmatprep.mubr.bf16.mxu0 0
        %4381 = vmatmul.mubr.bf16.gmra.mrb[0].mxu0 %v494
        %v4382 = vpop.f32.mrb[0].mxu0
        %v4383 = vadd.f32 %v4328, %v4382
        %v4384 = vpop.f32.mrb[0].mxu0
        %v4385 = vpop.f32.mrb[0].mxu0
        %v4386 = vadd.f32 %v4333, %v4385
        %v4387 = vpop.f32.mrb[0].mxu0
        %4388 = vmatprep.mubr.bf16.mxu0 0
        %4389 = vmatmul.mubr.bf16.gmra.mrb[0].mxu0 %v497
        %v4390 = vpop.f32.mrb[0].mxu0
        %v4391 = vadd.f32 %v4338, %v4390
        %v4392 = vpop.f32.mrb[0].mxu0
        %v4393 = vpop.f32.mrb[0].mxu0
        %v4394 = vadd.f32 %v4343, %v4393
        %v4395 = vpop.f32.mrb[0].mxu0
        %4396 = vdwg.mxu0
        %v4397 = vmax.f32 %v4383, 0.0
        %v4398 = vmax.f32 %v4386, 0.0
        %v4399 = vmax.f32 %v4391, 0.0
        %v4400 = vmax.f32 %v4394, 0.0
        %v4401 = vpack.c.bf16 %v4398, %v4397
        %v4402 = vpack.c.bf16 %v4400, %v4399
        %4403 = vmatprep.subr.bf16.mxu0 0
        %4404 = vmatpush1.bf16.msra.mxu0 %v4401
        %4405 = vmatprep.subr.bf16.mxu0 0
        %4406 = vmatpush1.bf16.msra.mxu0 %v4402
        %4407 = vmatprep.subr.bf16.mxu0 0
        %4408 = vmatpush1.bf16.msra.mxu0 0
        %4409 = vmatprep.subr.bf16.mxu0 0
        %4410 = vmatpush1.bf16.msra.mxu0 0
        %4411 = vmatprep.subr.bf16.mxu0 0
        %4412 = vmatpush1.bf16.msra.mxu0 0
        %4413 = vmatprep.subr.bf16.mxu0 0
        %4414 = vmatpush1.bf16.msra.mxu0 0
        %4415 = vmatprep.subr.bf16.mxu0 0
        %4416 = vmatpush1.bf16.msra.mxu0 0
        %4417 = vmatprep.subr.bf16.mxu0 0
        %4418 = vmatpush1.bf16.msra.mxu0 0
        %4419 = vmatprep.subr.bf16.mxu0 0
        %4420 = vmatpush1.bf16.msra.mxu0 0
        %4421 = vmatprep.subr.bf16.mxu0 0
        %4422 = vmatpush1.bf16.msra.mxu0 0
        %4423 = vmatprep.subr.bf16.mxu0 0
        %4424 = vmatpush1.bf16.msra.mxu0 0
        %4425 = vmatprep.subr.bf16.mxu0 0
        %4426 = vmatpush1.bf16.msra.mxu0 0
        %4427 = vmatprep.subr.bf16.mxu0 0
        %4428 = vmatpush1.bf16.msra.mxu0 0
        %4429 = vmatprep.subr.bf16.mxu0 0
        %4430 = vmatpush1.bf16.msra.mxu0 0
        %4431 = vmatprep.subr.bf16.mxu0 0
        %4432 = vmatpush1.bf16.msra.mxu0 0
        %4433 = vmatprep.subr.bf16.mxu0 0
        %4434 = vmatpush1.bf16.msra.mxu0 0
        %4435 = vmatprep.mubr.bf16.mxu0 0
        %4436 = vmatmul.mubr.bf16.gmra.mrb[0].mxu0 %v590
        %v4437 = vpop.f32.mrb[0].mxu0
        %v4438 = vadd.f32 %v561, %v4437
        %v4439 = vpop.f32.mrb[0].mxu0
        %v4440 = vpop.f32.mrb[0].mxu0
        %v4441 = vadd.f32 %v566, %v4440
        %v4442 = vpop.f32.mrb[0].mxu0
        %4443 = vmatprep.mubr.bf16.mxu0 0
        %4444 = vmatmul.mubr.bf16.gmra.mrb[0].mxu0 %v593
        %v4445 = vpop.f32.mrb[0].mxu0
        %v4446 = vadd.f32 %v571, %v4445
        %v4447 = vpop.f32.mrb[0].mxu0
        %v4448 = vpop.f32.mrb[0].mxu0
        %v4449 = vadd.f32 %v576, %v4448
        %v4450 = vpop.f32.mrb[0].mxu0
        %4451 = vdwg.mxu0
        %v4452 = vmax.f32 %v4438, 0.0
        %v4453 = vmax.f32 %v4441, 0.0
        %v4454 = vmax.f32 %v4446, 0.0
        %v4455 = vmax.f32 %v4449, 0.0
        %v4456 = vpack.c.bf16 %v4453, %v4452
        %v4457 = vpack.c.bf16 %v4455, %v4454
        %4458 = vmatprep.subr.bf16.mxu0 0
        %4459 = vmatpush1.bf16.msra.mxu0 %v4456
        %4460 = vmatprep.subr.bf16.mxu0 0
        %4461 = vmatpush1.bf16.msra.mxu0 %v4457
        %4462 = vmatprep.subr.bf16.mxu0 0
        %4463 = vmatpush1.bf16.msra.mxu0 0
        %4464 = vmatprep.subr.bf16.mxu0 0
        %4465 = vmatpush1.bf16.msra.mxu0 0
        %4466 = vmatprep.subr.bf16.mxu0 0
        %4467 = vmatpush1.bf16.msra.mxu0 0
        %4468 = vmatprep.subr.bf16.mxu0 0
        %4469 = vmatpush1.bf16.msra.mxu0 0
        %4470 = vmatprep.subr.bf16.mxu0 0
        %4471 = vmatpush1.bf16.msra.mxu0 0
        %4472 = vmatprep.subr.bf16.mxu0 0
        %4473 = vmatpush1.bf16.msra.mxu0 0
        %4474 = vmatprep.subr.bf16.mxu0 0
        %4475 = vmatpush1.bf16.msra.mxu0 0
        %4476 = vmatprep.subr.bf16.mxu0 0
        %4477 = vmatpush1.bf16.msra.mxu0 0
        %4478 = vmatprep.subr.bf16.mxu0 0
        %4479 = vmatpush1.bf16.msra.mxu0 0
        %4480 = vmatprep.subr.bf16.mxu0 0
        %4481 = vmatpush1.bf16.msra.mxu0 0
        %4482 = vmatprep.subr.bf16.mxu0 0
        %4483 = vmatpush1.bf16.msra.mxu0 0
        %4484 = vmatprep.subr.bf16.mxu0 0
        %4485 = vmatpush1.bf16.msra.mxu0 0
        %4486 = vmatprep.subr.bf16.mxu0 0
        %4487 = vmatpush1.bf16.msra.mxu0 0
        %4488 = vmatprep.subr.bf16.mxu0 0
        %4489 = vmatpush1.bf16.msra.mxu0 0
        %4490 = vmatprep.mubr.bf16.mxu0 0
        %4491 = vmatmul.mubr.bf16.gmra.mrb[0].mxu0 %v656
        %v4492 = vpop.f32.mrb[0].mxu0
        %v4493 = vadd.f32 %v653, %v4492
        %v4494 = vpop.f32.mrb[0].mxu0
        %v4495 = vpop.f32.mrb[0].mxu0
        %v4496 = vpop.f32.mrb[0].mxu0
        %4497 = vdwg.mxu0
        %v4498 = vmul.f32 %v4493, %v4311
        %v4499 = vrot.slane %v4498, 4
        %v4500 = vadd.f32 %v4498, %v4499
        %v4501 = vrot.slane %v4500, 2
        %v4502 = vadd.f32 %v4500, %v4501
        %v4503 = vrot.slane %v4502, 1
        %v4504 = vadd.f32 %v4502, %v4503
        %v4505 = vmul.f32 %v4311, 0.2
        %v4506 = vadd.f32 %v4505, 1.0007813
        %v4507 = vmul.f32 %v4307, %v4506
        %v4508 = vmul.f32 %v4309, 1.0004687
        %v4509 = vadd.f32 %v4508, %v4504
        %s4510 = scalar_lea.vmem %s365, 160 [#allocation3]
        %v4511 = vld [vmem:[%s4510] sm:$0xff]
        %s4512 = sadd.s32 %s446, 20
        %s4513 = scvt.s32.f32 %s4512
        %s4514 = smul.f32 %s4513, 0.015625
        %v4515 = vstv %s4514
        %v4516 = vmul.f32 %v4515, %v433
        %v4517 = vmul.f32 %v4515, %v434
        %v4518 = vmul.f32 %v4515, %v435
        %v4519 = vmul.f32 %v4515, %v436
        %v4520 = vadd.f32 %v437, %v4516
        %v4521 = vadd.f32 %v438, %v4517
        %v4522 = vadd.f32 %v439, %v4518
        %v4523 = vadd.f32 %v440, %v4519
        %v4524 = vpack.c.bf16 %v4507, %v4507
        %4526 = vset.pattern.permute.xlu0 0
        %4527 = vperm.xlu0 %4526, %v4520
        %v4528 = vpop.permute.xlu0 %4527
        %4531 = vset.pattern.permute.xlu0 0
        %4532 = vperm.xlu0 %4531, %v4521
        %v4533 = vpop.permute.xlu0 %4532
        %4536 = vset.pattern.permute.xlu0 0
        %4537 = vperm.xlu0 %4536, %v4522
        %v4538 = vpop.permute.xlu0 %4537
        %4541 = vset.pattern.permute.xlu0 0
        %4542 = vperm.xlu0 %4541, %v4523
        %v4543 = vpop.permute.xlu0 %4542
        %v4546 = vsel %vm499, %v4524, 0
        %4548 = vmatprep.subr.bf16.mxu0 0
        %4549 = vmatpush1.bf16.msra.mxu0 %v4546
        %4550 = vmatprep.subr.bf16.mxu0 0
        %4551 = vmatpush1.bf16.msra.mxu0 0
        %4552 = vmatprep.subr.bf16.mxu0 0
        %4553 = vmatpush1.bf16.msra.mxu0 0
        %4554 = vmatprep.subr.bf16.mxu0 0
        %4555 = vmatpush1.bf16.msra.mxu0 0
        %4556 = vmatprep.subr.bf16.mxu0 0
        %4557 = vmatpush1.bf16.msra.mxu0 0
        %4558 = vmatprep.subr.bf16.mxu0 0
        %4559 = vmatpush1.bf16.msra.mxu0 0
        %4560 = vmatprep.subr.bf16.mxu0 0
        %4561 = vmatpush1.bf16.msra.mxu0 0
        %4562 = vmatprep.subr.bf16.mxu0 0
        %4563 = vmatpush1.bf16.msra.mxu0 0
        %4564 = vmatprep.subr.bf16.mxu0 0
        %4565 = vmatpush1.bf16.msra.mxu0 0
        %4566 = vmatprep.subr.bf16.mxu0 0
        %4567 = vmatpush1.bf16.msra.mxu0 0
        %4568 = vmatprep.subr.bf16.mxu0 0
        %4569 = vmatpush1.bf16.msra.mxu0 0
        %4570 = vmatprep.subr.bf16.mxu0 0
        %4571 = vmatpush1.bf16.msra.mxu0 0
        %4572 = vmatprep.subr.bf16.mxu0 0
        %4573 = vmatpush1.bf16.msra.mxu0 0
        %4574 = vmatprep.subr.bf16.mxu0 0
        %4575 = vmatpush1.bf16.msra.mxu0 0
        %4576 = vmatprep.subr.bf16.mxu0 0
        %4577 = vmatpush1.bf16.msra.mxu0 0
        %4578 = vmatprep.subr.bf16.mxu0 0
        %4579 = vmatpush1.bf16.msra.mxu0 0
        %4580 = vmatprep.mubr.bf16.mxu0 0
        %4581 = vmatmul.mubr.bf16.gmra.mrb[0].mxu0 %v494
        %v4582 = vpop.f32.mrb[0].mxu0
        %v4583 = vadd.f32 %v4528, %v4582
        %v4584 = vpop.f32.mrb[0].mxu0
        %v4585 = vpop.f32.mrb[0].mxu0
        %v4586 = vadd.f32 %v4533, %v4585
        %v4587 = vpop.f32.mrb[0].mxu0
        %4588 = vmatprep.mubr.bf16.mxu0 0
        %4589 = vmatmul.mubr.bf16.gmra.mrb[0].mxu0 %v497
        %v4590 = vpop.f32.mrb[0].mxu0
        %v4591 = vadd.f32 %v4538, %v4590
        %v4592 = vpop.f32.mrb[0].mxu0
        %v4593 = vpop.f32.mrb[0].mxu0
        %v4594 = vadd.f32 %v4543, %v4593
        %v4595 = vpop.f32.mrb[0].mxu0
        %4596 = vdwg.mxu0
        %v4597 = vmax.f32 %v4583, 0.0
        %v4598 = vmax.f32 %v4586, 0.0
        %v4599 = vmax.f32 %v4591, 0.0
        %v4600 = vmax.f32 %v4594, 0.0
        %v4601 = vpack.c.bf16 %v4598, %v4597
        %v4602 = vpack.c.bf16 %v4600, %v4599
        %4603 = vmatprep.subr.bf16.mxu0 0
        %4604 = vmatpush1.bf16.msra.mxu0 %v4601
        %4605 = vmatprep.subr.bf16.mxu0 0
        %4606 = vmatpush1.bf16.msra.mxu0 %v4602
        %4607 = vmatprep.subr.bf16.mxu0 0
        %4608 = vmatpush1.bf16.msra.mxu0 0
        %4609 = vmatprep.subr.bf16.mxu0 0
        %4610 = vmatpush1.bf16.msra.mxu0 0
        %4611 = vmatprep.subr.bf16.mxu0 0
        %4612 = vmatpush1.bf16.msra.mxu0 0
        %4613 = vmatprep.subr.bf16.mxu0 0
        %4614 = vmatpush1.bf16.msra.mxu0 0
        %4615 = vmatprep.subr.bf16.mxu0 0
        %4616 = vmatpush1.bf16.msra.mxu0 0
        %4617 = vmatprep.subr.bf16.mxu0 0
        %4618 = vmatpush1.bf16.msra.mxu0 0
        %4619 = vmatprep.subr.bf16.mxu0 0
        %4620 = vmatpush1.bf16.msra.mxu0 0
        %4621 = vmatprep.subr.bf16.mxu0 0
        %4622 = vmatpush1.bf16.msra.mxu0 0
        %4623 = vmatprep.subr.bf16.mxu0 0
        %4624 = vmatpush1.bf16.msra.mxu0 0
        %4625 = vmatprep.subr.bf16.mxu0 0
        %4626 = vmatpush1.bf16.msra.mxu0 0
        %4627 = vmatprep.subr.bf16.mxu0 0
        %4628 = vmatpush1.bf16.msra.mxu0 0
        %4629 = vmatprep.subr.bf16.mxu0 0
        %4630 = vmatpush1.bf16.msra.mxu0 0
        %4631 = vmatprep.subr.bf16.mxu0 0
        %4632 = vmatpush1.bf16.msra.mxu0 0
        %4633 = vmatprep.subr.bf16.mxu0 0
        %4634 = vmatpush1.bf16.msra.mxu0 0
        %4635 = vmatprep.mubr.bf16.mxu0 0
        %4636 = vmatmul.mubr.bf16.gmra.mrb[0].mxu0 %v590
        %v4637 = vpop.f32.mrb[0].mxu0
        %v4638 = vadd.f32 %v561, %v4637
        %v4639 = vpop.f32.mrb[0].mxu0
        %v4640 = vpop.f32.mrb[0].mxu0
        %v4641 = vadd.f32 %v566, %v4640
        %v4642 = vpop.f32.mrb[0].mxu0
        %4643 = vmatprep.mubr.bf16.mxu0 0
        %4644 = vmatmul.mubr.bf16.gmra.mrb[0].mxu0 %v593
        %v4645 = vpop.f32.mrb[0].mxu0
        %v4646 = vadd.f32 %v571, %v4645
        %v4647 = vpop.f32.mrb[0].mxu0
        %v4648 = vpop.f32.mrb[0].mxu0
        %v4649 = vadd.f32 %v576, %v4648
        %v4650 = vpop.f32.mrb[0].mxu0
        %4651 = vdwg.mxu0
        %v4652 = vmax.f32 %v4638, 0.0
        %v4653 = vmax.f32 %v4641, 0.0
        %v4654 = vmax.f32 %v4646, 0.0
        %v4655 = vmax.f32 %v4649, 0.0
        %v4656 = vpack.c.bf16 %v4653, %v4652
        %v4657 = vpack.c.bf16 %v4655, %v4654
        %4658 = vmatprep.subr.bf16.mxu0 0
        %4659 = vmatpush1.bf16.msra.mxu0 %v4656
        %4660 = vmatprep.subr.bf16.mxu0 0
        %4661 = vmatpush1.bf16.msra.mxu0 %v4657
        %4662 = vmatprep.subr.bf16.mxu0 0
        %4663 = vmatpush1.bf16.msra.mxu0 0
        %4664 = vmatprep.subr.bf16.mxu0 0
        %4665 = vmatpush1.bf16.msra.mxu0 0
        %4666 = vmatprep.subr.bf16.mxu0 0
        %4667 = vmatpush1.bf16.msra.mxu0 0
        %4668 = vmatprep.subr.bf16.mxu0 0
        %4669 = vmatpush1.bf16.msra.mxu0 0
        %4670 = vmatprep.subr.bf16.mxu0 0
        %4671 = vmatpush1.bf16.msra.mxu0 0
        %4672 = vmatprep.subr.bf16.mxu0 0
        %4673 = vmatpush1.bf16.msra.mxu0 0
        %4674 = vmatprep.subr.bf16.mxu0 0
        %4675 = vmatpush1.bf16.msra.mxu0 0
        %4676 = vmatprep.subr.bf16.mxu0 0
        %4677 = vmatpush1.bf16.msra.mxu0 0
        %4678 = vmatprep.subr.bf16.mxu0 0
        %4679 = vmatpush1.bf16.msra.mxu0 0
        %4680 = vmatprep.subr.bf16.mxu0 0
        %4681 = vmatpush1.bf16.msra.mxu0 0
        %4682 = vmatprep.subr.bf16.mxu0 0
        %4683 = vmatpush1.bf16.msra.mxu0 0
        %4684 = vmatprep.subr.bf16.mxu0 0
        %4685 = vmatpush1.bf16.msra.mxu0 0
        %4686 = vmatprep.subr.bf16.mxu0 0
        %4687 = vmatpush1.bf16.msra.mxu0 0
        %4688 = vmatprep.subr.bf16.mxu0 0
        %4689 = vmatpush1.bf16.msra.mxu0 0
        %4690 = vmatprep.mubr.bf16.mxu0 0
        %4691 = vmatmul.mubr.bf16.gmra.mrb[0].mxu0 %v656
        %v4692 = vpop.f32.mrb[0].mxu0
        %v4693 = vadd.f32 %v653, %v4692
        %v4694 = vpop.f32.mrb[0].mxu0
        %v4695 = vpop.f32.mrb[0].mxu0
        %v4696 = vpop.f32.mrb[0].mxu0
        %4697 = vdwg.mxu0
        %v4698 = vmul.f32 %v4693, %v4511
        %v4699 = vrot.slane %v4698, 4
        %v4700 = vadd.f32 %v4698, %v4699
        %v4701 = vrot.slane %v4700, 2
        %v4702 = vadd.f32 %v4700, %v4701
        %v4703 = vrot.slane %v4702, 1
        %v4704 = vadd.f32 %v4702, %v4703
        %v4705 = vmul.f32 %v4511, 0.2
        %v4706 = vadd.f32 %v4705, 1.0007813
        %v4707 = vmul.f32 %v4507, %v4706
        %v4708 = vmul.f32 %v4509, 1.0004687
        %v4709 = vadd.f32 %v4708, %v4704
        %s4710 = scalar_lea.vmem %s365, 168 [#allocation3]
        %v4711 = vld [vmem:[%s4710] sm:$0xff]
        %s4712 = sadd.s32 %s446, 21
        %s4713 = scvt.s32.f32 %s4712
        %s4714 = smul.f32 %s4713, 0.015625
        %v4715 = vstv %s4714
        %v4716 = vmul.f32 %v4715, %v433
        %v4717 = vmul.f32 %v4715, %v434
        %v4718 = vmul.f32 %v4715, %v435
        %v4719 = vmul.f32 %v4715, %v436
        %v4720 = vadd.f32 %v437, %v4716
        %v4721 = vadd.f32 %v438, %v4717
        %v4722 = vadd.f32 %v439, %v4718
        %v4723 = vadd.f32 %v440, %v4719
        %v4724 = vpack.c.bf16 %v4707, %v4707
        %4726 = vset.pattern.permute.xlu0 0
        %4727 = vperm.xlu0 %4726, %v4720
        %v4728 = vpop.permute.xlu0 %4727
        %4731 = vset.pattern.permute.xlu0 0
        %4732 = vperm.xlu0 %4731, %v4721
        %v4733 = vpop.permute.xlu0 %4732
        %4736 = vset.pattern.permute.xlu0 0
        %4737 = vperm.xlu0 %4736, %v4722
        %v4738 = vpop.permute.xlu0 %4737
        %4741 = vset.pattern.permute.xlu0 0
        %4742 = vperm.xlu0 %4741, %v4723
        %v4743 = vpop.permute.xlu0 %4742
        %v4746 = vsel %vm499, %v4724, 0
        %4748 = vmatprep.subr.bf16.mxu0 0
        %4749 = vmatpush1.bf16.msra.mxu0 %v4746
        %4750 = vmatprep.subr.bf16.mxu0 0
        %4751 = vmatpush1.bf16.msra.mxu0 0
        %4752 = vmatprep.subr.bf16.mxu0 0
        %4753 = vmatpush1.bf16.msra.mxu0 0
        %4754 = vmatprep.subr.bf16.mxu0 0
        %4755 = vmatpush1.bf16.msra.mxu0 0
        %4756 = vmatprep.subr.bf16.mxu0 0
        %4757 = vmatpush1.bf16.msra.mxu0 0
        %4758 = vmatprep.subr.bf16.mxu0 0
        %4759 = vmatpush1.bf16.msra.mxu0 0
        %4760 = vmatprep.subr.bf16.mxu0 0
        %4761 = vmatpush1.bf16.msra.mxu0 0
        %4762 = vmatprep.subr.bf16.mxu0 0
        %4763 = vmatpush1.bf16.msra.mxu0 0
        %4764 = vmatprep.subr.bf16.mxu0 0
        %4765 = vmatpush1.bf16.msra.mxu0 0
        %4766 = vmatprep.subr.bf16.mxu0 0
        %4767 = vmatpush1.bf16.msra.mxu0 0
        %4768 = vmatprep.subr.bf16.mxu0 0
        %4769 = vmatpush1.bf16.msra.mxu0 0
        %4770 = vmatprep.subr.bf16.mxu0 0
        %4771 = vmatpush1.bf16.msra.mxu0 0
        %4772 = vmatprep.subr.bf16.mxu0 0
        %4773 = vmatpush1.bf16.msra.mxu0 0
        %4774 = vmatprep.subr.bf16.mxu0 0
        %4775 = vmatpush1.bf16.msra.mxu0 0
        %4776 = vmatprep.subr.bf16.mxu0 0
        %4777 = vmatpush1.bf16.msra.mxu0 0
        %4778 = vmatprep.subr.bf16.mxu0 0
        %4779 = vmatpush1.bf16.msra.mxu0 0
        %4780 = vmatprep.mubr.bf16.mxu0 0
        %4781 = vmatmul.mubr.bf16.gmra.mrb[0].mxu0 %v494
        %v4782 = vpop.f32.mrb[0].mxu0
        %v4783 = vadd.f32 %v4728, %v4782
        %v4784 = vpop.f32.mrb[0].mxu0
        %v4785 = vpop.f32.mrb[0].mxu0
        %v4786 = vadd.f32 %v4733, %v4785
        %v4787 = vpop.f32.mrb[0].mxu0
        %4788 = vmatprep.mubr.bf16.mxu0 0
        %4789 = vmatmul.mubr.bf16.gmra.mrb[0].mxu0 %v497
        %v4790 = vpop.f32.mrb[0].mxu0
        %v4791 = vadd.f32 %v4738, %v4790
        %v4792 = vpop.f32.mrb[0].mxu0
        %v4793 = vpop.f32.mrb[0].mxu0
        %v4794 = vadd.f32 %v4743, %v4793
        %v4795 = vpop.f32.mrb[0].mxu0
        %4796 = vdwg.mxu0
        %v4797 = vmax.f32 %v4783, 0.0
        %v4798 = vmax.f32 %v4786, 0.0
        %v4799 = vmax.f32 %v4791, 0.0
        %v4800 = vmax.f32 %v4794, 0.0
        %v4801 = vpack.c.bf16 %v4798, %v4797
        %v4802 = vpack.c.bf16 %v4800, %v4799
        %4803 = vmatprep.subr.bf16.mxu0 0
        %4804 = vmatpush1.bf16.msra.mxu0 %v4801
        %4805 = vmatprep.subr.bf16.mxu0 0
        %4806 = vmatpush1.bf16.msra.mxu0 %v4802
        %4807 = vmatprep.subr.bf16.mxu0 0
        %4808 = vmatpush1.bf16.msra.mxu0 0
        %4809 = vmatprep.subr.bf16.mxu0 0
        %4810 = vmatpush1.bf16.msra.mxu0 0
        %4811 = vmatprep.subr.bf16.mxu0 0
        %4812 = vmatpush1.bf16.msra.mxu0 0
        %4813 = vmatprep.subr.bf16.mxu0 0
        %4814 = vmatpush1.bf16.msra.mxu0 0
        %4815 = vmatprep.subr.bf16.mxu0 0
        %4816 = vmatpush1.bf16.msra.mxu0 0
        %4817 = vmatprep.subr.bf16.mxu0 0
        %4818 = vmatpush1.bf16.msra.mxu0 0
        %4819 = vmatprep.subr.bf16.mxu0 0
        %4820 = vmatpush1.bf16.msra.mxu0 0
        %4821 = vmatprep.subr.bf16.mxu0 0
        %4822 = vmatpush1.bf16.msra.mxu0 0
        %4823 = vmatprep.subr.bf16.mxu0 0
        %4824 = vmatpush1.bf16.msra.mxu0 0
        %4825 = vmatprep.subr.bf16.mxu0 0
        %4826 = vmatpush1.bf16.msra.mxu0 0
        %4827 = vmatprep.subr.bf16.mxu0 0
        %4828 = vmatpush1.bf16.msra.mxu0 0
        %4829 = vmatprep.subr.bf16.mxu0 0
        %4830 = vmatpush1.bf16.msra.mxu0 0
        %4831 = vmatprep.subr.bf16.mxu0 0
        %4832 = vmatpush1.bf16.msra.mxu0 0
        %4833 = vmatprep.subr.bf16.mxu0 0
        %4834 = vmatpush1.bf16.msra.mxu0 0
        %4835 = vmatprep.mubr.bf16.mxu0 0
        %4836 = vmatmul.mubr.bf16.gmra.mrb[0].mxu0 %v590
        %v4837 = vpop.f32.mrb[0].mxu0
        %v4838 = vadd.f32 %v561, %v4837
        %v4839 = vpop.f32.mrb[0].mxu0
        %v4840 = vpop.f32.mrb[0].mxu0
        %v4841 = vadd.f32 %v566, %v4840
        %v4842 = vpop.f32.mrb[0].mxu0
        %4843 = vmatprep.mubr.bf16.mxu0 0
        %4844 = vmatmul.mubr.bf16.gmra.mrb[0].mxu0 %v593
        %v4845 = vpop.f32.mrb[0].mxu0
        %v4846 = vadd.f32 %v571, %v4845
        %v4847 = vpop.f32.mrb[0].mxu0
        %v4848 = vpop.f32.mrb[0].mxu0
        %v4849 = vadd.f32 %v576, %v4848
        %v4850 = vpop.f32.mrb[0].mxu0
        %4851 = vdwg.mxu0
        %v4852 = vmax.f32 %v4838, 0.0
        %v4853 = vmax.f32 %v4841, 0.0
        %v4854 = vmax.f32 %v4846, 0.0
        %v4855 = vmax.f32 %v4849, 0.0
        %v4856 = vpack.c.bf16 %v4853, %v4852
        %v4857 = vpack.c.bf16 %v4855, %v4854
        %4858 = vmatprep.subr.bf16.mxu0 0
        %4859 = vmatpush1.bf16.msra.mxu0 %v4856
        %4860 = vmatprep.subr.bf16.mxu0 0
        %4861 = vmatpush1.bf16.msra.mxu0 %v4857
        %4862 = vmatprep.subr.bf16.mxu0 0
        %4863 = vmatpush1.bf16.msra.mxu0 0
        %4864 = vmatprep.subr.bf16.mxu0 0
        %4865 = vmatpush1.bf16.msra.mxu0 0
        %4866 = vmatprep.subr.bf16.mxu0 0
        %4867 = vmatpush1.bf16.msra.mxu0 0
        %4868 = vmatprep.subr.bf16.mxu0 0
        %4869 = vmatpush1.bf16.msra.mxu0 0
        %4870 = vmatprep.subr.bf16.mxu0 0
        %4871 = vmatpush1.bf16.msra.mxu0 0
        %4872 = vmatprep.subr.bf16.mxu0 0
        %4873 = vmatpush1.bf16.msra.mxu0 0
        %4874 = vmatprep.subr.bf16.mxu0 0
        %4875 = vmatpush1.bf16.msra.mxu0 0
        %4876 = vmatprep.subr.bf16.mxu0 0
        %4877 = vmatpush1.bf16.msra.mxu0 0
        %4878 = vmatprep.subr.bf16.mxu0 0
        %4879 = vmatpush1.bf16.msra.mxu0 0
        %4880 = vmatprep.subr.bf16.mxu0 0
        %4881 = vmatpush1.bf16.msra.mxu0 0
        %4882 = vmatprep.subr.bf16.mxu0 0
        %4883 = vmatpush1.bf16.msra.mxu0 0
        %4884 = vmatprep.subr.bf16.mxu0 0
        %4885 = vmatpush1.bf16.msra.mxu0 0
        %4886 = vmatprep.subr.bf16.mxu0 0
        %4887 = vmatpush1.bf16.msra.mxu0 0
        %4888 = vmatprep.subr.bf16.mxu0 0
        %4889 = vmatpush1.bf16.msra.mxu0 0
        %4890 = vmatprep.mubr.bf16.mxu0 0
        %4891 = vmatmul.mubr.bf16.gmra.mrb[0].mxu0 %v656
        %v4892 = vpop.f32.mrb[0].mxu0
        %v4893 = vadd.f32 %v653, %v4892
        %v4894 = vpop.f32.mrb[0].mxu0
        %v4895 = vpop.f32.mrb[0].mxu0
        %v4896 = vpop.f32.mrb[0].mxu0
        %4897 = vdwg.mxu0
        %v4898 = vmul.f32 %v4893, %v4711
        %v4899 = vrot.slane %v4898, 4
        %v4900 = vadd.f32 %v4898, %v4899
        %v4901 = vrot.slane %v4900, 2
        %v4902 = vadd.f32 %v4900, %v4901
        %v4903 = vrot.slane %v4902, 1
        %v4904 = vadd.f32 %v4902, %v4903
        %v4905 = vmul.f32 %v4711, 0.2
        %v4906 = vadd.f32 %v4905, 1.0007813
        %v4907 = vmul.f32 %v4707, %v4906
        %v4908 = vmul.f32 %v4709, 1.0004687
        %v4909 = vadd.f32 %v4908, %v4904
        %s4910 = scalar_lea.vmem %s365, 176 [#allocation3]
        %v4911 = vld [vmem:[%s4910] sm:$0xff]
        %s4912 = sadd.s32 %s446, 22
        %s4913 = scvt.s32.f32 %s4912
        %s4914 = smul.f32 %s4913, 0.015625
        %v4915 = vstv %s4914
        %v4916 = vmul.f32 %v4915, %v433
        %v4917 = vmul.f32 %v4915, %v434
        %v4918 = vmul.f32 %v4915, %v435
        %v4919 = vmul.f32 %v4915, %v436
        %v4920 = vadd.f32 %v437, %v4916
        %v4921 = vadd.f32 %v438, %v4917
        %v4922 = vadd.f32 %v439, %v4918
        %v4923 = vadd.f32 %v440, %v4919
        %v4924 = vpack.c.bf16 %v4907, %v4907
        %4926 = vset.pattern.permute.xlu0 0
        %4927 = vperm.xlu0 %4926, %v4920
        %v4928 = vpop.permute.xlu0 %4927
        %4931 = vset.pattern.permute.xlu0 0
        %4932 = vperm.xlu0 %4931, %v4921
        %v4933 = vpop.permute.xlu0 %4932
        %4936 = vset.pattern.permute.xlu0 0
        %4937 = vperm.xlu0 %4936, %v4922
        %v4938 = vpop.permute.xlu0 %4937
        %4941 = vset.pattern.permute.xlu0 0
        %4942 = vperm.xlu0 %4941, %v4923
        %v4943 = vpop.permute.xlu0 %4942
        %v4946 = vsel %vm499, %v4924, 0
        %4948 = vmatprep.subr.bf16.mxu0 0
        %4949 = vmatpush1.bf16.msra.mxu0 %v4946
        %4950 = vmatprep.subr.bf16.mxu0 0
        %4951 = vmatpush1.bf16.msra.mxu0 0
        %4952 = vmatprep.subr.bf16.mxu0 0
        %4953 = vmatpush1.bf16.msra.mxu0 0
        %4954 = vmatprep.subr.bf16.mxu0 0
        %4955 = vmatpush1.bf16.msra.mxu0 0
        %4956 = vmatprep.subr.bf16.mxu0 0
        %4957 = vmatpush1.bf16.msra.mxu0 0
        %4958 = vmatprep.subr.bf16.mxu0 0
        %4959 = vmatpush1.bf16.msra.mxu0 0
        %4960 = vmatprep.subr.bf16.mxu0 0
        %4961 = vmatpush1.bf16.msra.mxu0 0
        %4962 = vmatprep.subr.bf16.mxu0 0
        %4963 = vmatpush1.bf16.msra.mxu0 0
        %4964 = vmatprep.subr.bf16.mxu0 0
        %4965 = vmatpush1.bf16.msra.mxu0 0
        %4966 = vmatprep.subr.bf16.mxu0 0
        %4967 = vmatpush1.bf16.msra.mxu0 0
        %4968 = vmatprep.subr.bf16.mxu0 0
        %4969 = vmatpush1.bf16.msra.mxu0 0
        %4970 = vmatprep.subr.bf16.mxu0 0
        %4971 = vmatpush1.bf16.msra.mxu0 0
        %4972 = vmatprep.subr.bf16.mxu0 0
        %4973 = vmatpush1.bf16.msra.mxu0 0
        %4974 = vmatprep.subr.bf16.mxu0 0
        %4975 = vmatpush1.bf16.msra.mxu0 0
        %4976 = vmatprep.subr.bf16.mxu0 0
        %4977 = vmatpush1.bf16.msra.mxu0 0
        %4978 = vmatprep.subr.bf16.mxu0 0
        %4979 = vmatpush1.bf16.msra.mxu0 0
        %4980 = vmatprep.mubr.bf16.mxu0 0
        %4981 = vmatmul.mubr.bf16.gmra.mrb[0].mxu0 %v494
        %v4982 = vpop.f32.mrb[0].mxu0
        %v4983 = vadd.f32 %v4928, %v4982
        %v4984 = vpop.f32.mrb[0].mxu0
        %v4985 = vpop.f32.mrb[0].mxu0
        %v4986 = vadd.f32 %v4933, %v4985
        %v4987 = vpop.f32.mrb[0].mxu0
        %4988 = vmatprep.mubr.bf16.mxu0 0
        %4989 = vmatmul.mubr.bf16.gmra.mrb[0].mxu0 %v497
        %v4990 = vpop.f32.mrb[0].mxu0
        %v4991 = vadd.f32 %v4938, %v4990
        %v4992 = vpop.f32.mrb[0].mxu0
        %v4993 = vpop.f32.mrb[0].mxu0
        %v4994 = vadd.f32 %v4943, %v4993
        %v4995 = vpop.f32.mrb[0].mxu0
        %4996 = vdwg.mxu0
        %v4997 = vmax.f32 %v4983, 0.0
        %v4998 = vmax.f32 %v4986, 0.0
        %v4999 = vmax.f32 %v4991, 0.0
        %v5000 = vmax.f32 %v4994, 0.0
        %v5001 = vpack.c.bf16 %v4998, %v4997
        %v5002 = vpack.c.bf16 %v5000, %v4999
        %5003 = vmatprep.subr.bf16.mxu0 0
        %5004 = vmatpush1.bf16.msra.mxu0 %v5001
        %5005 = vmatprep.subr.bf16.mxu0 0
        %5006 = vmatpush1.bf16.msra.mxu0 %v5002
        %5007 = vmatprep.subr.bf16.mxu0 0
        %5008 = vmatpush1.bf16.msra.mxu0 0
        %5009 = vmatprep.subr.bf16.mxu0 0
        %5010 = vmatpush1.bf16.msra.mxu0 0
        %5011 = vmatprep.subr.bf16.mxu0 0
        %5012 = vmatpush1.bf16.msra.mxu0 0
        %5013 = vmatprep.subr.bf16.mxu0 0
        %5014 = vmatpush1.bf16.msra.mxu0 0
        %5015 = vmatprep.subr.bf16.mxu0 0
        %5016 = vmatpush1.bf16.msra.mxu0 0
        %5017 = vmatprep.subr.bf16.mxu0 0
        %5018 = vmatpush1.bf16.msra.mxu0 0
        %5019 = vmatprep.subr.bf16.mxu0 0
        %5020 = vmatpush1.bf16.msra.mxu0 0
        %5021 = vmatprep.subr.bf16.mxu0 0
        %5022 = vmatpush1.bf16.msra.mxu0 0
        %5023 = vmatprep.subr.bf16.mxu0 0
        %5024 = vmatpush1.bf16.msra.mxu0 0
        %5025 = vmatprep.subr.bf16.mxu0 0
        %5026 = vmatpush1.bf16.msra.mxu0 0
        %5027 = vmatprep.subr.bf16.mxu0 0
        %5028 = vmatpush1.bf16.msra.mxu0 0
        %5029 = vmatprep.subr.bf16.mxu0 0
        %5030 = vmatpush1.bf16.msra.mxu0 0
        %5031 = vmatprep.subr.bf16.mxu0 0
        %5032 = vmatpush1.bf16.msra.mxu0 0
        %5033 = vmatprep.subr.bf16.mxu0 0
        %5034 = vmatpush1.bf16.msra.mxu0 0
        %5035 = vmatprep.mubr.bf16.mxu0 0
        %5036 = vmatmul.mubr.bf16.gmra.mrb[0].mxu0 %v590
        %v5037 = vpop.f32.mrb[0].mxu0
        %v5038 = vadd.f32 %v561, %v5037
        %v5039 = vpop.f32.mrb[0].mxu0
        %v5040 = vpop.f32.mrb[0].mxu0
        %v5041 = vadd.f32 %v566, %v5040
        %v5042 = vpop.f32.mrb[0].mxu0
        %5043 = vmatprep.mubr.bf16.mxu0 0
        %5044 = vmatmul.mubr.bf16.gmra.mrb[0].mxu0 %v593
        %v5045 = vpop.f32.mrb[0].mxu0
        %v5046 = vadd.f32 %v571, %v5045
        %v5047 = vpop.f32.mrb[0].mxu0
        %v5048 = vpop.f32.mrb[0].mxu0
        %v5049 = vadd.f32 %v576, %v5048
        %v5050 = vpop.f32.mrb[0].mxu0
        %5051 = vdwg.mxu0
        %v5052 = vmax.f32 %v5038, 0.0
        %v5053 = vmax.f32 %v5041, 0.0
        %v5054 = vmax.f32 %v5046, 0.0
        %v5055 = vmax.f32 %v5049, 0.0
        %v5056 = vpack.c.bf16 %v5053, %v5052
        %v5057 = vpack.c.bf16 %v5055, %v5054
        %5058 = vmatprep.subr.bf16.mxu0 0
        %5059 = vmatpush1.bf16.msra.mxu0 %v5056
        %5060 = vmatprep.subr.bf16.mxu0 0
        %5061 = vmatpush1.bf16.msra.mxu0 %v5057
        %5062 = vmatprep.subr.bf16.mxu0 0
        %5063 = vmatpush1.bf16.msra.mxu0 0
        %5064 = vmatprep.subr.bf16.mxu0 0
        %5065 = vmatpush1.bf16.msra.mxu0 0
        %5066 = vmatprep.subr.bf16.mxu0 0
        %5067 = vmatpush1.bf16.msra.mxu0 0
        %5068 = vmatprep.subr.bf16.mxu0 0
        %5069 = vmatpush1.bf16.msra.mxu0 0
        %5070 = vmatprep.subr.bf16.mxu0 0
        %5071 = vmatpush1.bf16.msra.mxu0 0
        %5072 = vmatprep.subr.bf16.mxu0 0
        %5073 = vmatpush1.bf16.msra.mxu0 0
        %5074 = vmatprep.subr.bf16.mxu0 0
        %5075 = vmatpush1.bf16.msra.mxu0 0
        %5076 = vmatprep.subr.bf16.mxu0 0
        %5077 = vmatpush1.bf16.msra.mxu0 0
        %5078 = vmatprep.subr.bf16.mxu0 0
        %5079 = vmatpush1.bf16.msra.mxu0 0
        %5080 = vmatprep.subr.bf16.mxu0 0
        %5081 = vmatpush1.bf16.msra.mxu0 0
        %5082 = vmatprep.subr.bf16.mxu0 0
        %5083 = vmatpush1.bf16.msra.mxu0 0
        %5084 = vmatprep.subr.bf16.mxu0 0
        %5085 = vmatpush1.bf16.msra.mxu0 0
        %5086 = vmatprep.subr.bf16.mxu0 0
        %5087 = vmatpush1.bf16.msra.mxu0 0
        %5088 = vmatprep.subr.bf16.mxu0 0
        %5089 = vmatpush1.bf16.msra.mxu0 0
        %5090 = vmatprep.mubr.bf16.mxu0 0
        %5091 = vmatmul.mubr.bf16.gmra.mrb[0].mxu0 %v656
        %v5092 = vpop.f32.mrb[0].mxu0
        %v5093 = vadd.f32 %v653, %v5092
        %v5094 = vpop.f32.mrb[0].mxu0
        %v5095 = vpop.f32.mrb[0].mxu0
        %v5096 = vpop.f32.mrb[0].mxu0
        %5097 = vdwg.mxu0
        %v5098 = vmul.f32 %v5093, %v4911
        %v5099 = vrot.slane %v5098, 4
        %v5100 = vadd.f32 %v5098, %v5099
        %v5101 = vrot.slane %v5100, 2
        %v5102 = vadd.f32 %v5100, %v5101
        %v5103 = vrot.slane %v5102, 1
        %v5104 = vadd.f32 %v5102, %v5103
        %v5105 = vmul.f32 %v4911, 0.2
        %v5106 = vadd.f32 %v5105, 1.0007813
        %v5107 = vmul.f32 %v4907, %v5106
        %v5108 = vmul.f32 %v4909, 1.0004687
        %v5109 = vadd.f32 %v5108, %v5104
        %s5110 = scalar_lea.vmem %s365, 184 [#allocation3]
        %v5111 = vld [vmem:[%s5110] sm:$0xff]
        %s5112 = sadd.s32 %s446, 23
        %s5113 = scvt.s32.f32 %s5112
        %s5114 = smul.f32 %s5113, 0.015625
        %v5115 = vstv %s5114
        %v5116 = vmul.f32 %v5115, %v433
        %v5117 = vmul.f32 %v5115, %v434
        %v5118 = vmul.f32 %v5115, %v435
        %v5119 = vmul.f32 %v5115, %v436
        %v5120 = vadd.f32 %v437, %v5116
        %v5121 = vadd.f32 %v438, %v5117
        %v5122 = vadd.f32 %v439, %v5118
        %v5123 = vadd.f32 %v440, %v5119
        %v5124 = vpack.c.bf16 %v5107, %v5107
        %5126 = vset.pattern.permute.xlu0 0
        %5127 = vperm.xlu0 %5126, %v5120
        %v5128 = vpop.permute.xlu0 %5127
        %5131 = vset.pattern.permute.xlu0 0
        %5132 = vperm.xlu0 %5131, %v5121
        %v5133 = vpop.permute.xlu0 %5132
        %5136 = vset.pattern.permute.xlu0 0
        %5137 = vperm.xlu0 %5136, %v5122
        %v5138 = vpop.permute.xlu0 %5137
        %5141 = vset.pattern.permute.xlu0 0
        %5142 = vperm.xlu0 %5141, %v5123
        %v5143 = vpop.permute.xlu0 %5142
        %v5146 = vsel %vm499, %v5124, 0
        %5148 = vmatprep.subr.bf16.mxu0 0
        %5149 = vmatpush1.bf16.msra.mxu0 %v5146
        %5150 = vmatprep.subr.bf16.mxu0 0
        %5151 = vmatpush1.bf16.msra.mxu0 0
        %5152 = vmatprep.subr.bf16.mxu0 0
        %5153 = vmatpush1.bf16.msra.mxu0 0
        %5154 = vmatprep.subr.bf16.mxu0 0
        %5155 = vmatpush1.bf16.msra.mxu0 0
        %5156 = vmatprep.subr.bf16.mxu0 0
        %5157 = vmatpush1.bf16.msra.mxu0 0
        %5158 = vmatprep.subr.bf16.mxu0 0
        %5159 = vmatpush1.bf16.msra.mxu0 0
        %5160 = vmatprep.subr.bf16.mxu0 0
        %5161 = vmatpush1.bf16.msra.mxu0 0
        %5162 = vmatprep.subr.bf16.mxu0 0
        %5163 = vmatpush1.bf16.msra.mxu0 0
        %5164 = vmatprep.subr.bf16.mxu0 0
        %5165 = vmatpush1.bf16.msra.mxu0 0
        %5166 = vmatprep.subr.bf16.mxu0 0
        %5167 = vmatpush1.bf16.msra.mxu0 0
        %5168 = vmatprep.subr.bf16.mxu0 0
        %5169 = vmatpush1.bf16.msra.mxu0 0
        %5170 = vmatprep.subr.bf16.mxu0 0
        %5171 = vmatpush1.bf16.msra.mxu0 0
        %5172 = vmatprep.subr.bf16.mxu0 0
        %5173 = vmatpush1.bf16.msra.mxu0 0
        %5174 = vmatprep.subr.bf16.mxu0 0
        %5175 = vmatpush1.bf16.msra.mxu0 0
        %5176 = vmatprep.subr.bf16.mxu0 0
        %5177 = vmatpush1.bf16.msra.mxu0 0
        %5178 = vmatprep.subr.bf16.mxu0 0
        %5179 = vmatpush1.bf16.msra.mxu0 0
        %5180 = vmatprep.mubr.bf16.mxu0 0
        %5181 = vmatmul.mubr.bf16.gmra.mrb[0].mxu0 %v494
        %v5182 = vpop.f32.mrb[0].mxu0
        %v5183 = vadd.f32 %v5128, %v5182
        %v5184 = vpop.f32.mrb[0].mxu0
        %v5185 = vpop.f32.mrb[0].mxu0
        %v5186 = vadd.f32 %v5133, %v5185
        %v5187 = vpop.f32.mrb[0].mxu0
        %5188 = vmatprep.mubr.bf16.mxu0 0
        %5189 = vmatmul.mubr.bf16.gmra.mrb[0].mxu0 %v497
        %v5190 = vpop.f32.mrb[0].mxu0
        %v5191 = vadd.f32 %v5138, %v5190
        %v5192 = vpop.f32.mrb[0].mxu0
        %v5193 = vpop.f32.mrb[0].mxu0
        %v5194 = vadd.f32 %v5143, %v5193
        %v5195 = vpop.f32.mrb[0].mxu0
        %5196 = vdwg.mxu0
        %v5197 = vmax.f32 %v5183, 0.0
        %v5198 = vmax.f32 %v5186, 0.0
        %v5199 = vmax.f32 %v5191, 0.0
        %v5200 = vmax.f32 %v5194, 0.0
        %v5201 = vpack.c.bf16 %v5198, %v5197
        %v5202 = vpack.c.bf16 %v5200, %v5199
        %5203 = vmatprep.subr.bf16.mxu0 0
        %5204 = vmatpush1.bf16.msra.mxu0 %v5201
        %5205 = vmatprep.subr.bf16.mxu0 0
        %5206 = vmatpush1.bf16.msra.mxu0 %v5202
        %5207 = vmatprep.subr.bf16.mxu0 0
        %5208 = vmatpush1.bf16.msra.mxu0 0
        %5209 = vmatprep.subr.bf16.mxu0 0
        %5210 = vmatpush1.bf16.msra.mxu0 0
        %5211 = vmatprep.subr.bf16.mxu0 0
        %5212 = vmatpush1.bf16.msra.mxu0 0
        %5213 = vmatprep.subr.bf16.mxu0 0
        %5214 = vmatpush1.bf16.msra.mxu0 0
        %5215 = vmatprep.subr.bf16.mxu0 0
        %5216 = vmatpush1.bf16.msra.mxu0 0
        %5217 = vmatprep.subr.bf16.mxu0 0
        %5218 = vmatpush1.bf16.msra.mxu0 0
        %5219 = vmatprep.subr.bf16.mxu0 0
        %5220 = vmatpush1.bf16.msra.mxu0 0
        %5221 = vmatprep.subr.bf16.mxu0 0
        %5222 = vmatpush1.bf16.msra.mxu0 0
        %5223 = vmatprep.subr.bf16.mxu0 0
        %5224 = vmatpush1.bf16.msra.mxu0 0
        %5225 = vmatprep.subr.bf16.mxu0 0
        %5226 = vmatpush1.bf16.msra.mxu0 0
        %5227 = vmatprep.subr.bf16.mxu0 0
        %5228 = vmatpush1.bf16.msra.mxu0 0
        %5229 = vmatprep.subr.bf16.mxu0 0
        %5230 = vmatpush1.bf16.msra.mxu0 0
        %5231 = vmatprep.subr.bf16.mxu0 0
        %5232 = vmatpush1.bf16.msra.mxu0 0
        %5233 = vmatprep.subr.bf16.mxu0 0
        %5234 = vmatpush1.bf16.msra.mxu0 0
        %5235 = vmatprep.mubr.bf16.mxu0 0
        %5236 = vmatmul.mubr.bf16.gmra.mrb[0].mxu0 %v590
        %v5237 = vpop.f32.mrb[0].mxu0
        %v5238 = vadd.f32 %v561, %v5237
        %v5239 = vpop.f32.mrb[0].mxu0
        %v5240 = vpop.f32.mrb[0].mxu0
        %v5241 = vadd.f32 %v566, %v5240
        %v5242 = vpop.f32.mrb[0].mxu0
        %5243 = vmatprep.mubr.bf16.mxu0 0
        %5244 = vmatmul.mubr.bf16.gmra.mrb[0].mxu0 %v593
        %v5245 = vpop.f32.mrb[0].mxu0
        %v5246 = vadd.f32 %v571, %v5245
        %v5247 = vpop.f32.mrb[0].mxu0
        %v5248 = vpop.f32.mrb[0].mxu0
        %v5249 = vadd.f32 %v576, %v5248
        %v5250 = vpop.f32.mrb[0].mxu0
        %5251 = vdwg.mxu0
        %v5252 = vmax.f32 %v5238, 0.0
        %v5253 = vmax.f32 %v5241, 0.0
        %v5254 = vmax.f32 %v5246, 0.0
        %v5255 = vmax.f32 %v5249, 0.0
        %v5256 = vpack.c.bf16 %v5253, %v5252
        %v5257 = vpack.c.bf16 %v5255, %v5254
        %5258 = vmatprep.subr.bf16.mxu0 0
        %5259 = vmatpush1.bf16.msra.mxu0 %v5256
        %5260 = vmatprep.subr.bf16.mxu0 0
        %5261 = vmatpush1.bf16.msra.mxu0 %v5257
        %5262 = vmatprep.subr.bf16.mxu0 0
        %5263 = vmatpush1.bf16.msra.mxu0 0
        %5264 = vmatprep.subr.bf16.mxu0 0
        %5265 = vmatpush1.bf16.msra.mxu0 0
        %5266 = vmatprep.subr.bf16.mxu0 0
        %5267 = vmatpush1.bf16.msra.mxu0 0
        %5268 = vmatprep.subr.bf16.mxu0 0
        %5269 = vmatpush1.bf16.msra.mxu0 0
        %5270 = vmatprep.subr.bf16.mxu0 0
        %5271 = vmatpush1.bf16.msra.mxu0 0
        %5272 = vmatprep.subr.bf16.mxu0 0
        %5273 = vmatpush1.bf16.msra.mxu0 0
        %5274 = vmatprep.subr.bf16.mxu0 0
        %5275 = vmatpush1.bf16.msra.mxu0 0
        %5276 = vmatprep.subr.bf16.mxu0 0
        %5277 = vmatpush1.bf16.msra.mxu0 0
        %5278 = vmatprep.subr.bf16.mxu0 0
        %5279 = vmatpush1.bf16.msra.mxu0 0
        %5280 = vmatprep.subr.bf16.mxu0 0
        %5281 = vmatpush1.bf16.msra.mxu0 0
        %5282 = vmatprep.subr.bf16.mxu0 0
        %5283 = vmatpush1.bf16.msra.mxu0 0
        %5284 = vmatprep.subr.bf16.mxu0 0
        %5285 = vmatpush1.bf16.msra.mxu0 0
        %5286 = vmatprep.subr.bf16.mxu0 0
        %5287 = vmatpush1.bf16.msra.mxu0 0
        %5288 = vmatprep.subr.bf16.mxu0 0
        %5289 = vmatpush1.bf16.msra.mxu0 0
        %5290 = vmatprep.mubr.bf16.mxu0 0
        %5291 = vmatmul.mubr.bf16.gmra.mrb[0].mxu0 %v656
        %v5292 = vpop.f32.mrb[0].mxu0
        %v5293 = vadd.f32 %v653, %v5292
        %v5294 = vpop.f32.mrb[0].mxu0
        %v5295 = vpop.f32.mrb[0].mxu0
        %v5296 = vpop.f32.mrb[0].mxu0
        %5297 = vdwg.mxu0
        %v5298 = vmul.f32 %v5293, %v5111
        %v5299 = vrot.slane %v5298, 4
        %v5300 = vadd.f32 %v5298, %v5299
        %v5301 = vrot.slane %v5300, 2
        %v5302 = vadd.f32 %v5300, %v5301
        %v5303 = vrot.slane %v5302, 1
        %v5304 = vadd.f32 %v5302, %v5303
        %v5305 = vmul.f32 %v5111, 0.2
        %v5306 = vadd.f32 %v5305, 1.0007813
        %v5307 = vmul.f32 %v5107, %v5306
        %v5308 = vmul.f32 %v5109, 1.0004687
        %v5309 = vadd.f32 %v5308, %v5304
        %s5310 = scalar_lea.vmem %s365, 192 [#allocation3]
        %v5311 = vld [vmem:[%s5310] sm:$0xff]
        %s5312 = sadd.s32 %s446, 24
        %s5313 = scvt.s32.f32 %s5312
        %s5314 = smul.f32 %s5313, 0.015625
        %v5315 = vstv %s5314
        %v5316 = vmul.f32 %v5315, %v433
        %v5317 = vmul.f32 %v5315, %v434
        %v5318 = vmul.f32 %v5315, %v435
        %v5319 = vmul.f32 %v5315, %v436
        %v5320 = vadd.f32 %v437, %v5316
        %v5321 = vadd.f32 %v438, %v5317
        %v5322 = vadd.f32 %v439, %v5318
        %v5323 = vadd.f32 %v440, %v5319
        %v5324 = vpack.c.bf16 %v5307, %v5307
        %5326 = vset.pattern.permute.xlu0 0
        %5327 = vperm.xlu0 %5326, %v5320
        %v5328 = vpop.permute.xlu0 %5327
        %5331 = vset.pattern.permute.xlu0 0
        %5332 = vperm.xlu0 %5331, %v5321
        %v5333 = vpop.permute.xlu0 %5332
        %5336 = vset.pattern.permute.xlu0 0
        %5337 = vperm.xlu0 %5336, %v5322
        %v5338 = vpop.permute.xlu0 %5337
        %5341 = vset.pattern.permute.xlu0 0
        %5342 = vperm.xlu0 %5341, %v5323
        %v5343 = vpop.permute.xlu0 %5342
        %v5346 = vsel %vm499, %v5324, 0
        %5348 = vmatprep.subr.bf16.mxu0 0
        %5349 = vmatpush1.bf16.msra.mxu0 %v5346
        %5350 = vmatprep.subr.bf16.mxu0 0
        %5351 = vmatpush1.bf16.msra.mxu0 0
        %5352 = vmatprep.subr.bf16.mxu0 0
        %5353 = vmatpush1.bf16.msra.mxu0 0
        %5354 = vmatprep.subr.bf16.mxu0 0
        %5355 = vmatpush1.bf16.msra.mxu0 0
        %5356 = vmatprep.subr.bf16.mxu0 0
        %5357 = vmatpush1.bf16.msra.mxu0 0
        %5358 = vmatprep.subr.bf16.mxu0 0
        %5359 = vmatpush1.bf16.msra.mxu0 0
        %5360 = vmatprep.subr.bf16.mxu0 0
        %5361 = vmatpush1.bf16.msra.mxu0 0
        %5362 = vmatprep.subr.bf16.mxu0 0
        %5363 = vmatpush1.bf16.msra.mxu0 0
        %5364 = vmatprep.subr.bf16.mxu0 0
        %5365 = vmatpush1.bf16.msra.mxu0 0
        %5366 = vmatprep.subr.bf16.mxu0 0
        %5367 = vmatpush1.bf16.msra.mxu0 0
        %5368 = vmatprep.subr.bf16.mxu0 0
        %5369 = vmatpush1.bf16.msra.mxu0 0
        %5370 = vmatprep.subr.bf16.mxu0 0
        %5371 = vmatpush1.bf16.msra.mxu0 0
        %5372 = vmatprep.subr.bf16.mxu0 0
        %5373 = vmatpush1.bf16.msra.mxu0 0
        %5374 = vmatprep.subr.bf16.mxu0 0
        %5375 = vmatpush1.bf16.msra.mxu0 0
        %5376 = vmatprep.subr.bf16.mxu0 0
        %5377 = vmatpush1.bf16.msra.mxu0 0
        %5378 = vmatprep.subr.bf16.mxu0 0
        %5379 = vmatpush1.bf16.msra.mxu0 0
        %5380 = vmatprep.mubr.bf16.mxu0 0
        %5381 = vmatmul.mubr.bf16.gmra.mrb[0].mxu0 %v494
        %v5382 = vpop.f32.mrb[0].mxu0
        %v5383 = vadd.f32 %v5328, %v5382
        %v5384 = vpop.f32.mrb[0].mxu0
        %v5385 = vpop.f32.mrb[0].mxu0
        %v5386 = vadd.f32 %v5333, %v5385
        %v5387 = vpop.f32.mrb[0].mxu0
        %5388 = vmatprep.mubr.bf16.mxu0 0
        %5389 = vmatmul.mubr.bf16.gmra.mrb[0].mxu0 %v497
        %v5390 = vpop.f32.mrb[0].mxu0
        %v5391 = vadd.f32 %v5338, %v5390
        %v5392 = vpop.f32.mrb[0].mxu0
        %v5393 = vpop.f32.mrb[0].mxu0
        %v5394 = vadd.f32 %v5343, %v5393
        %v5395 = vpop.f32.mrb[0].mxu0
        %5396 = vdwg.mxu0
        %v5397 = vmax.f32 %v5383, 0.0
        %v5398 = vmax.f32 %v5386, 0.0
        %v5399 = vmax.f32 %v5391, 0.0
        %v5400 = vmax.f32 %v5394, 0.0
        %v5401 = vpack.c.bf16 %v5398, %v5397
        %v5402 = vpack.c.bf16 %v5400, %v5399
        %5403 = vmatprep.subr.bf16.mxu0 0
        %5404 = vmatpush1.bf16.msra.mxu0 %v5401
        %5405 = vmatprep.subr.bf16.mxu0 0
        %5406 = vmatpush1.bf16.msra.mxu0 %v5402
        %5407 = vmatprep.subr.bf16.mxu0 0
        %5408 = vmatpush1.bf16.msra.mxu0 0
        %5409 = vmatprep.subr.bf16.mxu0 0
        %5410 = vmatpush1.bf16.msra.mxu0 0
        %5411 = vmatprep.subr.bf16.mxu0 0
        %5412 = vmatpush1.bf16.msra.mxu0 0
        %5413 = vmatprep.subr.bf16.mxu0 0
        %5414 = vmatpush1.bf16.msra.mxu0 0
        %5415 = vmatprep.subr.bf16.mxu0 0
        %5416 = vmatpush1.bf16.msra.mxu0 0
        %5417 = vmatprep.subr.bf16.mxu0 0
        %5418 = vmatpush1.bf16.msra.mxu0 0
        %5419 = vmatprep.subr.bf16.mxu0 0
        %5420 = vmatpush1.bf16.msra.mxu0 0
        %5421 = vmatprep.subr.bf16.mxu0 0
        %5422 = vmatpush1.bf16.msra.mxu0 0
        %5423 = vmatprep.subr.bf16.mxu0 0
        %5424 = vmatpush1.bf16.msra.mxu0 0
        %5425 = vmatprep.subr.bf16.mxu0 0
        %5426 = vmatpush1.bf16.msra.mxu0 0
        %5427 = vmatprep.subr.bf16.mxu0 0
        %5428 = vmatpush1.bf16.msra.mxu0 0
        %5429 = vmatprep.subr.bf16.mxu0 0
        %5430 = vmatpush1.bf16.msra.mxu0 0
        %5431 = vmatprep.subr.bf16.mxu0 0
        %5432 = vmatpush1.bf16.msra.mxu0 0
        %5433 = vmatprep.subr.bf16.mxu0 0
        %5434 = vmatpush1.bf16.msra.mxu0 0
        %5435 = vmatprep.mubr.bf16.mxu0 0
        %5436 = vmatmul.mubr.bf16.gmra.mrb[0].mxu0 %v590
        %v5437 = vpop.f32.mrb[0].mxu0
        %v5438 = vadd.f32 %v561, %v5437
        %v5439 = vpop.f32.mrb[0].mxu0
        %v5440 = vpop.f32.mrb[0].mxu0
        %v5441 = vadd.f32 %v566, %v5440
        %v5442 = vpop.f32.mrb[0].mxu0
        %5443 = vmatprep.mubr.bf16.mxu0 0
        %5444 = vmatmul.mubr.bf16.gmra.mrb[0].mxu0 %v593
        %v5445 = vpop.f32.mrb[0].mxu0
        %v5446 = vadd.f32 %v571, %v5445
        %v5447 = vpop.f32.mrb[0].mxu0
        %v5448 = vpop.f32.mrb[0].mxu0
        %v5449 = vadd.f32 %v576, %v5448
        %v5450 = vpop.f32.mrb[0].mxu0
        %5451 = vdwg.mxu0
        %v5452 = vmax.f32 %v5438, 0.0
        %v5453 = vmax.f32 %v5441, 0.0
        %v5454 = vmax.f32 %v5446, 0.0
        %v5455 = vmax.f32 %v5449, 0.0
        %v5456 = vpack.c.bf16 %v5453, %v5452
        %v5457 = vpack.c.bf16 %v5455, %v5454
        %5458 = vmatprep.subr.bf16.mxu0 0
        %5459 = vmatpush1.bf16.msra.mxu0 %v5456
        %5460 = vmatprep.subr.bf16.mxu0 0
        %5461 = vmatpush1.bf16.msra.mxu0 %v5457
        %5462 = vmatprep.subr.bf16.mxu0 0
        %5463 = vmatpush1.bf16.msra.mxu0 0
        %5464 = vmatprep.subr.bf16.mxu0 0
        %5465 = vmatpush1.bf16.msra.mxu0 0
        %5466 = vmatprep.subr.bf16.mxu0 0
        %5467 = vmatpush1.bf16.msra.mxu0 0
        %5468 = vmatprep.subr.bf16.mxu0 0
        %5469 = vmatpush1.bf16.msra.mxu0 0
        %5470 = vmatprep.subr.bf16.mxu0 0
        %5471 = vmatpush1.bf16.msra.mxu0 0
        %5472 = vmatprep.subr.bf16.mxu0 0
        %5473 = vmatpush1.bf16.msra.mxu0 0
        %5474 = vmatprep.subr.bf16.mxu0 0
        %5475 = vmatpush1.bf16.msra.mxu0 0
        %5476 = vmatprep.subr.bf16.mxu0 0
        %5477 = vmatpush1.bf16.msra.mxu0 0
        %5478 = vmatprep.subr.bf16.mxu0 0
        %5479 = vmatpush1.bf16.msra.mxu0 0
        %5480 = vmatprep.subr.bf16.mxu0 0
        %5481 = vmatpush1.bf16.msra.mxu0 0
        %5482 = vmatprep.subr.bf16.mxu0 0
        %5483 = vmatpush1.bf16.msra.mxu0 0
        %5484 = vmatprep.subr.bf16.mxu0 0
        %5485 = vmatpush1.bf16.msra.mxu0 0
        %5486 = vmatprep.subr.bf16.mxu0 0
        %5487 = vmatpush1.bf16.msra.mxu0 0
        %5488 = vmatprep.subr.bf16.mxu0 0
        %5489 = vmatpush1.bf16.msra.mxu0 0
        %5490 = vmatprep.mubr.bf16.mxu0 0
        %5491 = vmatmul.mubr.bf16.gmra.mrb[0].mxu0 %v656
        %v5492 = vpop.f32.mrb[0].mxu0
        %v5493 = vadd.f32 %v653, %v5492
        %v5494 = vpop.f32.mrb[0].mxu0
        %v5495 = vpop.f32.mrb[0].mxu0
        %v5496 = vpop.f32.mrb[0].mxu0
        %5497 = vdwg.mxu0
        %v5498 = vmul.f32 %v5493, %v5311
        %v5499 = vrot.slane %v5498, 4
        %v5500 = vadd.f32 %v5498, %v5499
        %v5501 = vrot.slane %v5500, 2
        %v5502 = vadd.f32 %v5500, %v5501
        %v5503 = vrot.slane %v5502, 1
        %v5504 = vadd.f32 %v5502, %v5503
        %v5505 = vmul.f32 %v5311, 0.2
        %v5506 = vadd.f32 %v5505, 1.0007813
        %v5507 = vmul.f32 %v5307, %v5506
        %v5508 = vmul.f32 %v5309, 1.0004687
        %v5509 = vadd.f32 %v5508, %v5504
        %s5510 = scalar_lea.vmem %s365, 200 [#allocation3]
        %v5511 = vld [vmem:[%s5510] sm:$0xff]
        %s5512 = sadd.s32 %s446, 25
        %s5513 = scvt.s32.f32 %s5512
        %s5514 = smul.f32 %s5513, 0.015625
        %v5515 = vstv %s5514
        %v5516 = vmul.f32 %v5515, %v433
        %v5517 = vmul.f32 %v5515, %v434
        %v5518 = vmul.f32 %v5515, %v435
        %v5519 = vmul.f32 %v5515, %v436
        %v5520 = vadd.f32 %v437, %v5516
        %v5521 = vadd.f32 %v438, %v5517
        %v5522 = vadd.f32 %v439, %v5518
        %v5523 = vadd.f32 %v440, %v5519
        %v5524 = vpack.c.bf16 %v5507, %v5507
        %5526 = vset.pattern.permute.xlu0 0
        %5527 = vperm.xlu0 %5526, %v5520
        %v5528 = vpop.permute.xlu0 %5527
        %5531 = vset.pattern.permute.xlu0 0
        %5532 = vperm.xlu0 %5531, %v5521
        %v5533 = vpop.permute.xlu0 %5532
        %5536 = vset.pattern.permute.xlu0 0
        %5537 = vperm.xlu0 %5536, %v5522
        %v5538 = vpop.permute.xlu0 %5537
        %5541 = vset.pattern.permute.xlu0 0
        %5542 = vperm.xlu0 %5541, %v5523
        %v5543 = vpop.permute.xlu0 %5542
        %v5546 = vsel %vm499, %v5524, 0
        %5548 = vmatprep.subr.bf16.mxu0 0
        %5549 = vmatpush1.bf16.msra.mxu0 %v5546
        %5550 = vmatprep.subr.bf16.mxu0 0
        %5551 = vmatpush1.bf16.msra.mxu0 0
        %5552 = vmatprep.subr.bf16.mxu0 0
        %5553 = vmatpush1.bf16.msra.mxu0 0
        %5554 = vmatprep.subr.bf16.mxu0 0
        %5555 = vmatpush1.bf16.msra.mxu0 0
        %5556 = vmatprep.subr.bf16.mxu0 0
        %5557 = vmatpush1.bf16.msra.mxu0 0
        %5558 = vmatprep.subr.bf16.mxu0 0
        %5559 = vmatpush1.bf16.msra.mxu0 0
        %5560 = vmatprep.subr.bf16.mxu0 0
        %5561 = vmatpush1.bf16.msra.mxu0 0
        %5562 = vmatprep.subr.bf16.mxu0 0
        %5563 = vmatpush1.bf16.msra.mxu0 0
        %5564 = vmatprep.subr.bf16.mxu0 0
        %5565 = vmatpush1.bf16.msra.mxu0 0
        %5566 = vmatprep.subr.bf16.mxu0 0
        %5567 = vmatpush1.bf16.msra.mxu0 0
        %5568 = vmatprep.subr.bf16.mxu0 0
        %5569 = vmatpush1.bf16.msra.mxu0 0
        %5570 = vmatprep.subr.bf16.mxu0 0
        %5571 = vmatpush1.bf16.msra.mxu0 0
        %5572 = vmatprep.subr.bf16.mxu0 0
        %5573 = vmatpush1.bf16.msra.mxu0 0
        %5574 = vmatprep.subr.bf16.mxu0 0
        %5575 = vmatpush1.bf16.msra.mxu0 0
        %5576 = vmatprep.subr.bf16.mxu0 0
        %5577 = vmatpush1.bf16.msra.mxu0 0
        %5578 = vmatprep.subr.bf16.mxu0 0
        %5579 = vmatpush1.bf16.msra.mxu0 0
        %5580 = vmatprep.mubr.bf16.mxu0 0
        %5581 = vmatmul.mubr.bf16.gmra.mrb[0].mxu0 %v494
        %v5582 = vpop.f32.mrb[0].mxu0
        %v5583 = vadd.f32 %v5528, %v5582
        %v5584 = vpop.f32.mrb[0].mxu0
        %v5585 = vpop.f32.mrb[0].mxu0
        %v5586 = vadd.f32 %v5533, %v5585
        %v5587 = vpop.f32.mrb[0].mxu0
        %5588 = vmatprep.mubr.bf16.mxu0 0
        %5589 = vmatmul.mubr.bf16.gmra.mrb[0].mxu0 %v497
        %v5590 = vpop.f32.mrb[0].mxu0
        %v5591 = vadd.f32 %v5538, %v5590
        %v5592 = vpop.f32.mrb[0].mxu0
        %v5593 = vpop.f32.mrb[0].mxu0
        %v5594 = vadd.f32 %v5543, %v5593
        %v5595 = vpop.f32.mrb[0].mxu0
        %5596 = vdwg.mxu0
        %v5597 = vmax.f32 %v5583, 0.0
        %v5598 = vmax.f32 %v5586, 0.0
        %v5599 = vmax.f32 %v5591, 0.0
        %v5600 = vmax.f32 %v5594, 0.0
        %v5601 = vpack.c.bf16 %v5598, %v5597
        %v5602 = vpack.c.bf16 %v5600, %v5599
        %5603 = vmatprep.subr.bf16.mxu0 0
        %5604 = vmatpush1.bf16.msra.mxu0 %v5601
        %5605 = vmatprep.subr.bf16.mxu0 0
        %5606 = vmatpush1.bf16.msra.mxu0 %v5602
        %5607 = vmatprep.subr.bf16.mxu0 0
        %5608 = vmatpush1.bf16.msra.mxu0 0
        %5609 = vmatprep.subr.bf16.mxu0 0
        %5610 = vmatpush1.bf16.msra.mxu0 0
        %5611 = vmatprep.subr.bf16.mxu0 0
        %5612 = vmatpush1.bf16.msra.mxu0 0
        %5613 = vmatprep.subr.bf16.mxu0 0
        %5614 = vmatpush1.bf16.msra.mxu0 0
        %5615 = vmatprep.subr.bf16.mxu0 0
        %5616 = vmatpush1.bf16.msra.mxu0 0
        %5617 = vmatprep.subr.bf16.mxu0 0
        %5618 = vmatpush1.bf16.msra.mxu0 0
        %5619 = vmatprep.subr.bf16.mxu0 0
        %5620 = vmatpush1.bf16.msra.mxu0 0
        %5621 = vmatprep.subr.bf16.mxu0 0
        %5622 = vmatpush1.bf16.msra.mxu0 0
        %5623 = vmatprep.subr.bf16.mxu0 0
        %5624 = vmatpush1.bf16.msra.mxu0 0
        %5625 = vmatprep.subr.bf16.mxu0 0
        %5626 = vmatpush1.bf16.msra.mxu0 0
        %5627 = vmatprep.subr.bf16.mxu0 0
        %5628 = vmatpush1.bf16.msra.mxu0 0
        %5629 = vmatprep.subr.bf16.mxu0 0
        %5630 = vmatpush1.bf16.msra.mxu0 0
        %5631 = vmatprep.subr.bf16.mxu0 0
        %5632 = vmatpush1.bf16.msra.mxu0 0
        %5633 = vmatprep.subr.bf16.mxu0 0
        %5634 = vmatpush1.bf16.msra.mxu0 0
        %5635 = vmatprep.mubr.bf16.mxu0 0
        %5636 = vmatmul.mubr.bf16.gmra.mrb[0].mxu0 %v590
        %v5637 = vpop.f32.mrb[0].mxu0
        %v5638 = vadd.f32 %v561, %v5637
        %v5639 = vpop.f32.mrb[0].mxu0
        %v5640 = vpop.f32.mrb[0].mxu0
        %v5641 = vadd.f32 %v566, %v5640
        %v5642 = vpop.f32.mrb[0].mxu0
        %5643 = vmatprep.mubr.bf16.mxu0 0
        %5644 = vmatmul.mubr.bf16.gmra.mrb[0].mxu0 %v593
        %v5645 = vpop.f32.mrb[0].mxu0
        %v5646 = vadd.f32 %v571, %v5645
        %v5647 = vpop.f32.mrb[0].mxu0
        %v5648 = vpop.f32.mrb[0].mxu0
        %v5649 = vadd.f32 %v576, %v5648
        %v5650 = vpop.f32.mrb[0].mxu0
        %5651 = vdwg.mxu0
        %v5652 = vmax.f32 %v5638, 0.0
        %v5653 = vmax.f32 %v5641, 0.0
        %v5654 = vmax.f32 %v5646, 0.0
        %v5655 = vmax.f32 %v5649, 0.0
        %v5656 = vpack.c.bf16 %v5653, %v5652
        %v5657 = vpack.c.bf16 %v5655, %v5654
        %5658 = vmatprep.subr.bf16.mxu0 0
        %5659 = vmatpush1.bf16.msra.mxu0 %v5656
        %5660 = vmatprep.subr.bf16.mxu0 0
        %5661 = vmatpush1.bf16.msra.mxu0 %v5657
        %5662 = vmatprep.subr.bf16.mxu0 0
        %5663 = vmatpush1.bf16.msra.mxu0 0
        %5664 = vmatprep.subr.bf16.mxu0 0
        %5665 = vmatpush1.bf16.msra.mxu0 0
        %5666 = vmatprep.subr.bf16.mxu0 0
        %5667 = vmatpush1.bf16.msra.mxu0 0
        %5668 = vmatprep.subr.bf16.mxu0 0
        %5669 = vmatpush1.bf16.msra.mxu0 0
        %5670 = vmatprep.subr.bf16.mxu0 0
        %5671 = vmatpush1.bf16.msra.mxu0 0
        %5672 = vmatprep.subr.bf16.mxu0 0
        %5673 = vmatpush1.bf16.msra.mxu0 0
        %5674 = vmatprep.subr.bf16.mxu0 0
        %5675 = vmatpush1.bf16.msra.mxu0 0
        %5676 = vmatprep.subr.bf16.mxu0 0
        %5677 = vmatpush1.bf16.msra.mxu0 0
        %5678 = vmatprep.subr.bf16.mxu0 0
        %5679 = vmatpush1.bf16.msra.mxu0 0
        %5680 = vmatprep.subr.bf16.mxu0 0
        %5681 = vmatpush1.bf16.msra.mxu0 0
        %5682 = vmatprep.subr.bf16.mxu0 0
        %5683 = vmatpush1.bf16.msra.mxu0 0
        %5684 = vmatprep.subr.bf16.mxu0 0
        %5685 = vmatpush1.bf16.msra.mxu0 0
        %5686 = vmatprep.subr.bf16.mxu0 0
        %5687 = vmatpush1.bf16.msra.mxu0 0
        %5688 = vmatprep.subr.bf16.mxu0 0
        %5689 = vmatpush1.bf16.msra.mxu0 0
        %5690 = vmatprep.mubr.bf16.mxu0 0
        %5691 = vmatmul.mubr.bf16.gmra.mrb[0].mxu0 %v656
        %v5692 = vpop.f32.mrb[0].mxu0
        %v5693 = vadd.f32 %v653, %v5692
        %v5694 = vpop.f32.mrb[0].mxu0
        %v5695 = vpop.f32.mrb[0].mxu0
        %v5696 = vpop.f32.mrb[0].mxu0
        %5697 = vdwg.mxu0
        %v5698 = vmul.f32 %v5693, %v5511
        %v5699 = vrot.slane %v5698, 4
        %v5700 = vadd.f32 %v5698, %v5699
        %v5701 = vrot.slane %v5700, 2
        %v5702 = vadd.f32 %v5700, %v5701
        %v5703 = vrot.slane %v5702, 1
        %v5704 = vadd.f32 %v5702, %v5703
        %v5705 = vmul.f32 %v5511, 0.2
        %v5706 = vadd.f32 %v5705, 1.0007813
        %v5707 = vmul.f32 %v5507, %v5706
        %v5708 = vmul.f32 %v5509, 1.0004687
        %v5709 = vadd.f32 %v5708, %v5704
        %s5710 = scalar_lea.vmem %s365, 208 [#allocation3]
        %v5711 = vld [vmem:[%s5710] sm:$0xff]
        %s5712 = sadd.s32 %s446, 26
        %s5713 = scvt.s32.f32 %s5712
        %s5714 = smul.f32 %s5713, 0.015625
        %v5715 = vstv %s5714
        %v5716 = vmul.f32 %v5715, %v433
        %v5717 = vmul.f32 %v5715, %v434
        %v5718 = vmul.f32 %v5715, %v435
        %v5719 = vmul.f32 %v5715, %v436
        %v5720 = vadd.f32 %v437, %v5716
        %v5721 = vadd.f32 %v438, %v5717
        %v5722 = vadd.f32 %v439, %v5718
        %v5723 = vadd.f32 %v440, %v5719
        %v5724 = vpack.c.bf16 %v5707, %v5707
        %5726 = vset.pattern.permute.xlu0 0
        %5727 = vperm.xlu0 %5726, %v5720
        %v5728 = vpop.permute.xlu0 %5727
        %5731 = vset.pattern.permute.xlu0 0
        %5732 = vperm.xlu0 %5731, %v5721
        %v5733 = vpop.permute.xlu0 %5732
        %5736 = vset.pattern.permute.xlu0 0
        %5737 = vperm.xlu0 %5736, %v5722
        %v5738 = vpop.permute.xlu0 %5737
        %5741 = vset.pattern.permute.xlu0 0
        %5742 = vperm.xlu0 %5741, %v5723
        %v5743 = vpop.permute.xlu0 %5742
        %v5746 = vsel %vm499, %v5724, 0
        %5748 = vmatprep.subr.bf16.mxu0 0
        %5749 = vmatpush1.bf16.msra.mxu0 %v5746
        %5750 = vmatprep.subr.bf16.mxu0 0
        %5751 = vmatpush1.bf16.msra.mxu0 0
        %5752 = vmatprep.subr.bf16.mxu0 0
        %5753 = vmatpush1.bf16.msra.mxu0 0
        %5754 = vmatprep.subr.bf16.mxu0 0
        %5755 = vmatpush1.bf16.msra.mxu0 0
        %5756 = vmatprep.subr.bf16.mxu0 0
        %5757 = vmatpush1.bf16.msra.mxu0 0
        %5758 = vmatprep.subr.bf16.mxu0 0
        %5759 = vmatpush1.bf16.msra.mxu0 0
        %5760 = vmatprep.subr.bf16.mxu0 0
        %5761 = vmatpush1.bf16.msra.mxu0 0
        %5762 = vmatprep.subr.bf16.mxu0 0
        %5763 = vmatpush1.bf16.msra.mxu0 0
        %5764 = vmatprep.subr.bf16.mxu0 0
        %5765 = vmatpush1.bf16.msra.mxu0 0
        %5766 = vmatprep.subr.bf16.mxu0 0
        %5767 = vmatpush1.bf16.msra.mxu0 0
        %5768 = vmatprep.subr.bf16.mxu0 0
        %5769 = vmatpush1.bf16.msra.mxu0 0
        %5770 = vmatprep.subr.bf16.mxu0 0
        %5771 = vmatpush1.bf16.msra.mxu0 0
        %5772 = vmatprep.subr.bf16.mxu0 0
        %5773 = vmatpush1.bf16.msra.mxu0 0
        %5774 = vmatprep.subr.bf16.mxu0 0
        %5775 = vmatpush1.bf16.msra.mxu0 0
        %5776 = vmatprep.subr.bf16.mxu0 0
        %5777 = vmatpush1.bf16.msra.mxu0 0
        %5778 = vmatprep.subr.bf16.mxu0 0
        %5779 = vmatpush1.bf16.msra.mxu0 0
        %5780 = vmatprep.mubr.bf16.mxu0 0
        %5781 = vmatmul.mubr.bf16.gmra.mrb[0].mxu0 %v494
        %v5782 = vpop.f32.mrb[0].mxu0
        %v5783 = vadd.f32 %v5728, %v5782
        %v5784 = vpop.f32.mrb[0].mxu0
        %v5785 = vpop.f32.mrb[0].mxu0
        %v5786 = vadd.f32 %v5733, %v5785
        %v5787 = vpop.f32.mrb[0].mxu0
        %5788 = vmatprep.mubr.bf16.mxu0 0
        %5789 = vmatmul.mubr.bf16.gmra.mrb[0].mxu0 %v497
        %v5790 = vpop.f32.mrb[0].mxu0
        %v5791 = vadd.f32 %v5738, %v5790
        %v5792 = vpop.f32.mrb[0].mxu0
        %v5793 = vpop.f32.mrb[0].mxu0
        %v5794 = vadd.f32 %v5743, %v5793
        %v5795 = vpop.f32.mrb[0].mxu0
        %5796 = vdwg.mxu0
        %v5797 = vmax.f32 %v5783, 0.0
        %v5798 = vmax.f32 %v5786, 0.0
        %v5799 = vmax.f32 %v5791, 0.0
        %v5800 = vmax.f32 %v5794, 0.0
        %v5801 = vpack.c.bf16 %v5798, %v5797
        %v5802 = vpack.c.bf16 %v5800, %v5799
        %5803 = vmatprep.subr.bf16.mxu0 0
        %5804 = vmatpush1.bf16.msra.mxu0 %v5801
        %5805 = vmatprep.subr.bf16.mxu0 0
        %5806 = vmatpush1.bf16.msra.mxu0 %v5802
        %5807 = vmatprep.subr.bf16.mxu0 0
        %5808 = vmatpush1.bf16.msra.mxu0 0
        %5809 = vmatprep.subr.bf16.mxu0 0
        %5810 = vmatpush1.bf16.msra.mxu0 0
        %5811 = vmatprep.subr.bf16.mxu0 0
        %5812 = vmatpush1.bf16.msra.mxu0 0
        %5813 = vmatprep.subr.bf16.mxu0 0
        %5814 = vmatpush1.bf16.msra.mxu0 0
        %5815 = vmatprep.subr.bf16.mxu0 0
        %5816 = vmatpush1.bf16.msra.mxu0 0
        %5817 = vmatprep.subr.bf16.mxu0 0
        %5818 = vmatpush1.bf16.msra.mxu0 0
        %5819 = vmatprep.subr.bf16.mxu0 0
        %5820 = vmatpush1.bf16.msra.mxu0 0
        %5821 = vmatprep.subr.bf16.mxu0 0
        %5822 = vmatpush1.bf16.msra.mxu0 0
        %5823 = vmatprep.subr.bf16.mxu0 0
        %5824 = vmatpush1.bf16.msra.mxu0 0
        %5825 = vmatprep.subr.bf16.mxu0 0
        %5826 = vmatpush1.bf16.msra.mxu0 0
        %5827 = vmatprep.subr.bf16.mxu0 0
        %5828 = vmatpush1.bf16.msra.mxu0 0
        %5829 = vmatprep.subr.bf16.mxu0 0
        %5830 = vmatpush1.bf16.msra.mxu0 0
        %5831 = vmatprep.subr.bf16.mxu0 0
        %5832 = vmatpush1.bf16.msra.mxu0 0
        %5833 = vmatprep.subr.bf16.mxu0 0
        %5834 = vmatpush1.bf16.msra.mxu0 0
        %5835 = vmatprep.mubr.bf16.mxu0 0
        %5836 = vmatmul.mubr.bf16.gmra.mrb[0].mxu0 %v590
        %v5837 = vpop.f32.mrb[0].mxu0
        %v5838 = vadd.f32 %v561, %v5837
        %v5839 = vpop.f32.mrb[0].mxu0
        %v5840 = vpop.f32.mrb[0].mxu0
        %v5841 = vadd.f32 %v566, %v5840
        %v5842 = vpop.f32.mrb[0].mxu0
        %5843 = vmatprep.mubr.bf16.mxu0 0
        %5844 = vmatmul.mubr.bf16.gmra.mrb[0].mxu0 %v593
        %v5845 = vpop.f32.mrb[0].mxu0
        %v5846 = vadd.f32 %v571, %v5845
        %v5847 = vpop.f32.mrb[0].mxu0
        %v5848 = vpop.f32.mrb[0].mxu0
        %v5849 = vadd.f32 %v576, %v5848
        %v5850 = vpop.f32.mrb[0].mxu0
        %5851 = vdwg.mxu0
        %v5852 = vmax.f32 %v5838, 0.0
        %v5853 = vmax.f32 %v5841, 0.0
        %v5854 = vmax.f32 %v5846, 0.0
        %v5855 = vmax.f32 %v5849, 0.0
        %v5856 = vpack.c.bf16 %v5853, %v5852
        %v5857 = vpack.c.bf16 %v5855, %v5854
        %5858 = vmatprep.subr.bf16.mxu0 0
        %5859 = vmatpush1.bf16.msra.mxu0 %v5856
        %5860 = vmatprep.subr.bf16.mxu0 0
        %5861 = vmatpush1.bf16.msra.mxu0 %v5857
        %5862 = vmatprep.subr.bf16.mxu0 0
        %5863 = vmatpush1.bf16.msra.mxu0 0
        %5864 = vmatprep.subr.bf16.mxu0 0
        %5865 = vmatpush1.bf16.msra.mxu0 0
        %5866 = vmatprep.subr.bf16.mxu0 0
        %5867 = vmatpush1.bf16.msra.mxu0 0
        %5868 = vmatprep.subr.bf16.mxu0 0
        %5869 = vmatpush1.bf16.msra.mxu0 0
        %5870 = vmatprep.subr.bf16.mxu0 0
        %5871 = vmatpush1.bf16.msra.mxu0 0
        %5872 = vmatprep.subr.bf16.mxu0 0
        %5873 = vmatpush1.bf16.msra.mxu0 0
        %5874 = vmatprep.subr.bf16.mxu0 0
        %5875 = vmatpush1.bf16.msra.mxu0 0
        %5876 = vmatprep.subr.bf16.mxu0 0
        %5877 = vmatpush1.bf16.msra.mxu0 0
        %5878 = vmatprep.subr.bf16.mxu0 0
        %5879 = vmatpush1.bf16.msra.mxu0 0
        %5880 = vmatprep.subr.bf16.mxu0 0
        %5881 = vmatpush1.bf16.msra.mxu0 0
        %5882 = vmatprep.subr.bf16.mxu0 0
        %5883 = vmatpush1.bf16.msra.mxu0 0
        %5884 = vmatprep.subr.bf16.mxu0 0
        %5885 = vmatpush1.bf16.msra.mxu0 0
        %5886 = vmatprep.subr.bf16.mxu0 0
        %5887 = vmatpush1.bf16.msra.mxu0 0
        %5888 = vmatprep.subr.bf16.mxu0 0
        %5889 = vmatpush1.bf16.msra.mxu0 0
        %5890 = vmatprep.mubr.bf16.mxu0 0
        %5891 = vmatmul.mubr.bf16.gmra.mrb[0].mxu0 %v656
        %v5892 = vpop.f32.mrb[0].mxu0
        %v5893 = vadd.f32 %v653, %v5892
        %v5894 = vpop.f32.mrb[0].mxu0
        %v5895 = vpop.f32.mrb[0].mxu0
        %v5896 = vpop.f32.mrb[0].mxu0
        %5897 = vdwg.mxu0
        %v5898 = vmul.f32 %v5893, %v5711
        %v5899 = vrot.slane %v5898, 4
        %v5900 = vadd.f32 %v5898, %v5899
        %v5901 = vrot.slane %v5900, 2
        %v5902 = vadd.f32 %v5900, %v5901
        %v5903 = vrot.slane %v5902, 1
        %v5904 = vadd.f32 %v5902, %v5903
        %v5905 = vmul.f32 %v5711, 0.2
        %v5906 = vadd.f32 %v5905, 1.0007813
        %v5907 = vmul.f32 %v5707, %v5906
        %v5908 = vmul.f32 %v5709, 1.0004687
        %v5909 = vadd.f32 %v5908, %v5904
        %s5910 = scalar_lea.vmem %s365, 216 [#allocation3]
        %v5911 = vld [vmem:[%s5910] sm:$0xff]
        %s5912 = sadd.s32 %s446, 27
        %s5913 = scvt.s32.f32 %s5912
        %s5914 = smul.f32 %s5913, 0.015625
        %v5915 = vstv %s5914
        %v5916 = vmul.f32 %v5915, %v433
        %v5917 = vmul.f32 %v5915, %v434
        %v5918 = vmul.f32 %v5915, %v435
        %v5919 = vmul.f32 %v5915, %v436
        %v5920 = vadd.f32 %v437, %v5916
        %v5921 = vadd.f32 %v438, %v5917
        %v5922 = vadd.f32 %v439, %v5918
        %v5923 = vadd.f32 %v440, %v5919
        %v5924 = vpack.c.bf16 %v5907, %v5907
        %5926 = vset.pattern.permute.xlu0 0
        %5927 = vperm.xlu0 %5926, %v5920
        %v5928 = vpop.permute.xlu0 %5927
        %5931 = vset.pattern.permute.xlu0 0
        %5932 = vperm.xlu0 %5931, %v5921
        %v5933 = vpop.permute.xlu0 %5932
        %5936 = vset.pattern.permute.xlu0 0
        %5937 = vperm.xlu0 %5936, %v5922
        %v5938 = vpop.permute.xlu0 %5937
        %5941 = vset.pattern.permute.xlu0 0
        %5942 = vperm.xlu0 %5941, %v5923
        %v5943 = vpop.permute.xlu0 %5942
        %v5946 = vsel %vm499, %v5924, 0
        %5948 = vmatprep.subr.bf16.mxu0 0
        %5949 = vmatpush1.bf16.msra.mxu0 %v5946
        %5950 = vmatprep.subr.bf16.mxu0 0
        %5951 = vmatpush1.bf16.msra.mxu0 0
        %5952 = vmatprep.subr.bf16.mxu0 0
        %5953 = vmatpush1.bf16.msra.mxu0 0
        %5954 = vmatprep.subr.bf16.mxu0 0
        %5955 = vmatpush1.bf16.msra.mxu0 0
        %5956 = vmatprep.subr.bf16.mxu0 0
        %5957 = vmatpush1.bf16.msra.mxu0 0
        %5958 = vmatprep.subr.bf16.mxu0 0
        %5959 = vmatpush1.bf16.msra.mxu0 0
        %5960 = vmatprep.subr.bf16.mxu0 0
        %5961 = vmatpush1.bf16.msra.mxu0 0
        %5962 = vmatprep.subr.bf16.mxu0 0
        %5963 = vmatpush1.bf16.msra.mxu0 0
        %5964 = vmatprep.subr.bf16.mxu0 0
        %5965 = vmatpush1.bf16.msra.mxu0 0
        %5966 = vmatprep.subr.bf16.mxu0 0
        %5967 = vmatpush1.bf16.msra.mxu0 0
        %5968 = vmatprep.subr.bf16.mxu0 0
        %5969 = vmatpush1.bf16.msra.mxu0 0
        %5970 = vmatprep.subr.bf16.mxu0 0
        %5971 = vmatpush1.bf16.msra.mxu0 0
        %5972 = vmatprep.subr.bf16.mxu0 0
        %5973 = vmatpush1.bf16.msra.mxu0 0
        %5974 = vmatprep.subr.bf16.mxu0 0
        %5975 = vmatpush1.bf16.msra.mxu0 0
        %5976 = vmatprep.subr.bf16.mxu0 0
        %5977 = vmatpush1.bf16.msra.mxu0 0
        %5978 = vmatprep.subr.bf16.mxu0 0
        %5979 = vmatpush1.bf16.msra.mxu0 0
        %5980 = vmatprep.mubr.bf16.mxu0 0
        %5981 = vmatmul.mubr.bf16.gmra.mrb[0].mxu0 %v494
        %v5982 = vpop.f32.mrb[0].mxu0
        %v5983 = vadd.f32 %v5928, %v5982
        %v5984 = vpop.f32.mrb[0].mxu0
        %v5985 = vpop.f32.mrb[0].mxu0
        %v5986 = vadd.f32 %v5933, %v5985
        %v5987 = vpop.f32.mrb[0].mxu0
        %5988 = vmatprep.mubr.bf16.mxu0 0
        %5989 = vmatmul.mubr.bf16.gmra.mrb[0].mxu0 %v497
        %v5990 = vpop.f32.mrb[0].mxu0
        %v5991 = vadd.f32 %v5938, %v5990
        %v5992 = vpop.f32.mrb[0].mxu0
        %v5993 = vpop.f32.mrb[0].mxu0
        %v5994 = vadd.f32 %v5943, %v5993
        %v5995 = vpop.f32.mrb[0].mxu0
        %5996 = vdwg.mxu0
        %v5997 = vmax.f32 %v5983, 0.0
        %v5998 = vmax.f32 %v5986, 0.0
        %v5999 = vmax.f32 %v5991, 0.0
        %v6000 = vmax.f32 %v5994, 0.0
        %v6001 = vpack.c.bf16 %v5998, %v5997
        %v6002 = vpack.c.bf16 %v6000, %v5999
        %6003 = vmatprep.subr.bf16.mxu0 0
        %6004 = vmatpush1.bf16.msra.mxu0 %v6001
        %6005 = vmatprep.subr.bf16.mxu0 0
        %6006 = vmatpush1.bf16.msra.mxu0 %v6002
        %6007 = vmatprep.subr.bf16.mxu0 0
        %6008 = vmatpush1.bf16.msra.mxu0 0
        %6009 = vmatprep.subr.bf16.mxu0 0
        %6010 = vmatpush1.bf16.msra.mxu0 0
        %6011 = vmatprep.subr.bf16.mxu0 0
        %6012 = vmatpush1.bf16.msra.mxu0 0
        %6013 = vmatprep.subr.bf16.mxu0 0
        %6014 = vmatpush1.bf16.msra.mxu0 0
        %6015 = vmatprep.subr.bf16.mxu0 0
        %6016 = vmatpush1.bf16.msra.mxu0 0
        %6017 = vmatprep.subr.bf16.mxu0 0
        %6018 = vmatpush1.bf16.msra.mxu0 0
        %6019 = vmatprep.subr.bf16.mxu0 0
        %6020 = vmatpush1.bf16.msra.mxu0 0
        %6021 = vmatprep.subr.bf16.mxu0 0
        %6022 = vmatpush1.bf16.msra.mxu0 0
        %6023 = vmatprep.subr.bf16.mxu0 0
        %6024 = vmatpush1.bf16.msra.mxu0 0
        %6025 = vmatprep.subr.bf16.mxu0 0
        %6026 = vmatpush1.bf16.msra.mxu0 0
        %6027 = vmatprep.subr.bf16.mxu0 0
        %6028 = vmatpush1.bf16.msra.mxu0 0
        %6029 = vmatprep.subr.bf16.mxu0 0
        %6030 = vmatpush1.bf16.msra.mxu0 0
        %6031 = vmatprep.subr.bf16.mxu0 0
        %6032 = vmatpush1.bf16.msra.mxu0 0
        %6033 = vmatprep.subr.bf16.mxu0 0
        %6034 = vmatpush1.bf16.msra.mxu0 0
        %6035 = vmatprep.mubr.bf16.mxu0 0
        %6036 = vmatmul.mubr.bf16.gmra.mrb[0].mxu0 %v590
        %v6037 = vpop.f32.mrb[0].mxu0
        %v6038 = vadd.f32 %v561, %v6037
        %v6039 = vpop.f32.mrb[0].mxu0
        %v6040 = vpop.f32.mrb[0].mxu0
        %v6041 = vadd.f32 %v566, %v6040
        %v6042 = vpop.f32.mrb[0].mxu0
        %6043 = vmatprep.mubr.bf16.mxu0 0
        %6044 = vmatmul.mubr.bf16.gmra.mrb[0].mxu0 %v593
        %v6045 = vpop.f32.mrb[0].mxu0
        %v6046 = vadd.f32 %v571, %v6045
        %v6047 = vpop.f32.mrb[0].mxu0
        %v6048 = vpop.f32.mrb[0].mxu0
        %v6049 = vadd.f32 %v576, %v6048
        %v6050 = vpop.f32.mrb[0].mxu0
        %6051 = vdwg.mxu0
        %v6052 = vmax.f32 %v6038, 0.0
        %v6053 = vmax.f32 %v6041, 0.0
        %v6054 = vmax.f32 %v6046, 0.0
        %v6055 = vmax.f32 %v6049, 0.0
        %v6056 = vpack.c.bf16 %v6053, %v6052
        %v6057 = vpack.c.bf16 %v6055, %v6054
        %6058 = vmatprep.subr.bf16.mxu0 0
        %6059 = vmatpush1.bf16.msra.mxu0 %v6056
        %6060 = vmatprep.subr.bf16.mxu0 0
        %6061 = vmatpush1.bf16.msra.mxu0 %v6057
        %6062 = vmatprep.subr.bf16.mxu0 0
        %6063 = vmatpush1.bf16.msra.mxu0 0
        %6064 = vmatprep.subr.bf16.mxu0 0
        %6065 = vmatpush1.bf16.msra.mxu0 0
        %6066 = vmatprep.subr.bf16.mxu0 0
        %6067 = vmatpush1.bf16.msra.mxu0 0
        %6068 = vmatprep.subr.bf16.mxu0 0
        %6069 = vmatpush1.bf16.msra.mxu0 0
        %6070 = vmatprep.subr.bf16.mxu0 0
        %6071 = vmatpush1.bf16.msra.mxu0 0
        %6072 = vmatprep.subr.bf16.mxu0 0
        %6073 = vmatpush1.bf16.msra.mxu0 0
        %6074 = vmatprep.subr.bf16.mxu0 0
        %6075 = vmatpush1.bf16.msra.mxu0 0
        %6076 = vmatprep.subr.bf16.mxu0 0
        %6077 = vmatpush1.bf16.msra.mxu0 0
        %6078 = vmatprep.subr.bf16.mxu0 0
        %6079 = vmatpush1.bf16.msra.mxu0 0
        %6080 = vmatprep.subr.bf16.mxu0 0
        %6081 = vmatpush1.bf16.msra.mxu0 0
        %6082 = vmatprep.subr.bf16.mxu0 0
        %6083 = vmatpush1.bf16.msra.mxu0 0
        %6084 = vmatprep.subr.bf16.mxu0 0
        %6085 = vmatpush1.bf16.msra.mxu0 0
        %6086 = vmatprep.subr.bf16.mxu0 0
        %6087 = vmatpush1.bf16.msra.mxu0 0
        %6088 = vmatprep.subr.bf16.mxu0 0
        %6089 = vmatpush1.bf16.msra.mxu0 0
        %6090 = vmatprep.mubr.bf16.mxu0 0
        %6091 = vmatmul.mubr.bf16.gmra.mrb[0].mxu0 %v656
        %v6092 = vpop.f32.mrb[0].mxu0
        %v6093 = vadd.f32 %v653, %v6092
        %v6094 = vpop.f32.mrb[0].mxu0
        %v6095 = vpop.f32.mrb[0].mxu0
        %v6096 = vpop.f32.mrb[0].mxu0
        %6097 = vdwg.mxu0
        %v6098 = vmul.f32 %v6093, %v5911
        %v6099 = vrot.slane %v6098, 4
        %v6100 = vadd.f32 %v6098, %v6099
        %v6101 = vrot.slane %v6100, 2
        %v6102 = vadd.f32 %v6100, %v6101
        %v6103 = vrot.slane %v6102, 1
        %v6104 = vadd.f32 %v6102, %v6103
        %v6105 = vmul.f32 %v5911, 0.2
        %v6106 = vadd.f32 %v6105, 1.0007813
        %v6107 = vmul.f32 %v5907, %v6106
        %v6108 = vmul.f32 %v5909, 1.0004687
        %v6109 = vadd.f32 %v6108, %v6104
        %s6110 = scalar_lea.vmem %s365, 224 [#allocation3]
        %v6111 = vld [vmem:[%s6110] sm:$0xff]
        %s6112 = sadd.s32 %s446, 28
        %s6113 = scvt.s32.f32 %s6112
        %s6114 = smul.f32 %s6113, 0.015625
        %v6115 = vstv %s6114
        %v6116 = vmul.f32 %v6115, %v433
        %v6117 = vmul.f32 %v6115, %v434
        %v6118 = vmul.f32 %v6115, %v435
        %v6119 = vmul.f32 %v6115, %v436
        %v6120 = vadd.f32 %v437, %v6116
        %v6121 = vadd.f32 %v438, %v6117
        %v6122 = vadd.f32 %v439, %v6118
        %v6123 = vadd.f32 %v440, %v6119
        %v6124 = vpack.c.bf16 %v6107, %v6107
        %6126 = vset.pattern.permute.xlu0 0
        %6127 = vperm.xlu0 %6126, %v6120
        %v6128 = vpop.permute.xlu0 %6127
        %6131 = vset.pattern.permute.xlu0 0
        %6132 = vperm.xlu0 %6131, %v6121
        %v6133 = vpop.permute.xlu0 %6132
        %6136 = vset.pattern.permute.xlu0 0
        %6137 = vperm.xlu0 %6136, %v6122
        %v6138 = vpop.permute.xlu0 %6137
        %6141 = vset.pattern.permute.xlu0 0
        %6142 = vperm.xlu0 %6141, %v6123
        %v6143 = vpop.permute.xlu0 %6142
        %v6146 = vsel %vm499, %v6124, 0
        %6148 = vmatprep.subr.bf16.mxu0 0
        %6149 = vmatpush1.bf16.msra.mxu0 %v6146
        %6150 = vmatprep.subr.bf16.mxu0 0
        %6151 = vmatpush1.bf16.msra.mxu0 0
        %6152 = vmatprep.subr.bf16.mxu0 0
        %6153 = vmatpush1.bf16.msra.mxu0 0
        %6154 = vmatprep.subr.bf16.mxu0 0
        %6155 = vmatpush1.bf16.msra.mxu0 0
        %6156 = vmatprep.subr.bf16.mxu0 0
        %6157 = vmatpush1.bf16.msra.mxu0 0
        %6158 = vmatprep.subr.bf16.mxu0 0
        %6159 = vmatpush1.bf16.msra.mxu0 0
        %6160 = vmatprep.subr.bf16.mxu0 0
        %6161 = vmatpush1.bf16.msra.mxu0 0
        %6162 = vmatprep.subr.bf16.mxu0 0
        %6163 = vmatpush1.bf16.msra.mxu0 0
        %6164 = vmatprep.subr.bf16.mxu0 0
        %6165 = vmatpush1.bf16.msra.mxu0 0
        %6166 = vmatprep.subr.bf16.mxu0 0
        %6167 = vmatpush1.bf16.msra.mxu0 0
        %6168 = vmatprep.subr.bf16.mxu0 0
        %6169 = vmatpush1.bf16.msra.mxu0 0
        %6170 = vmatprep.subr.bf16.mxu0 0
        %6171 = vmatpush1.bf16.msra.mxu0 0
        %6172 = vmatprep.subr.bf16.mxu0 0
        %6173 = vmatpush1.bf16.msra.mxu0 0
        %6174 = vmatprep.subr.bf16.mxu0 0
        %6175 = vmatpush1.bf16.msra.mxu0 0
        %6176 = vmatprep.subr.bf16.mxu0 0
        %6177 = vmatpush1.bf16.msra.mxu0 0
        %6178 = vmatprep.subr.bf16.mxu0 0
        %6179 = vmatpush1.bf16.msra.mxu0 0
        %6180 = vmatprep.mubr.bf16.mxu0 0
        %6181 = vmatmul.mubr.bf16.gmra.mrb[0].mxu0 %v494
        %v6182 = vpop.f32.mrb[0].mxu0
        %v6183 = vadd.f32 %v6128, %v6182
        %v6184 = vpop.f32.mrb[0].mxu0
        %v6185 = vpop.f32.mrb[0].mxu0
        %v6186 = vadd.f32 %v6133, %v6185
        %v6187 = vpop.f32.mrb[0].mxu0
        %6188 = vmatprep.mubr.bf16.mxu0 0
        %6189 = vmatmul.mubr.bf16.gmra.mrb[0].mxu0 %v497
        %v6190 = vpop.f32.mrb[0].mxu0
        %v6191 = vadd.f32 %v6138, %v6190
        %v6192 = vpop.f32.mrb[0].mxu0
        %v6193 = vpop.f32.mrb[0].mxu0
        %v6194 = vadd.f32 %v6143, %v6193
        %v6195 = vpop.f32.mrb[0].mxu0
        %6196 = vdwg.mxu0
        %v6197 = vmax.f32 %v6183, 0.0
        %v6198 = vmax.f32 %v6186, 0.0
        %v6199 = vmax.f32 %v6191, 0.0
        %v6200 = vmax.f32 %v6194, 0.0
        %v6201 = vpack.c.bf16 %v6198, %v6197
        %v6202 = vpack.c.bf16 %v6200, %v6199
        %6203 = vmatprep.subr.bf16.mxu0 0
        %6204 = vmatpush1.bf16.msra.mxu0 %v6201
        %6205 = vmatprep.subr.bf16.mxu0 0
        %6206 = vmatpush1.bf16.msra.mxu0 %v6202
        %6207 = vmatprep.subr.bf16.mxu0 0
        %6208 = vmatpush1.bf16.msra.mxu0 0
        %6209 = vmatprep.subr.bf16.mxu0 0
        %6210 = vmatpush1.bf16.msra.mxu0 0
        %6211 = vmatprep.subr.bf16.mxu0 0
        %6212 = vmatpush1.bf16.msra.mxu0 0
        %6213 = vmatprep.subr.bf16.mxu0 0
        %6214 = vmatpush1.bf16.msra.mxu0 0
        %6215 = vmatprep.subr.bf16.mxu0 0
        %6216 = vmatpush1.bf16.msra.mxu0 0
        %6217 = vmatprep.subr.bf16.mxu0 0
        %6218 = vmatpush1.bf16.msra.mxu0 0
        %6219 = vmatprep.subr.bf16.mxu0 0
        %6220 = vmatpush1.bf16.msra.mxu0 0
        %6221 = vmatprep.subr.bf16.mxu0 0
        %6222 = vmatpush1.bf16.msra.mxu0 0
        %6223 = vmatprep.subr.bf16.mxu0 0
        %6224 = vmatpush1.bf16.msra.mxu0 0
        %6225 = vmatprep.subr.bf16.mxu0 0
        %6226 = vmatpush1.bf16.msra.mxu0 0
        %6227 = vmatprep.subr.bf16.mxu0 0
        %6228 = vmatpush1.bf16.msra.mxu0 0
        %6229 = vmatprep.subr.bf16.mxu0 0
        %6230 = vmatpush1.bf16.msra.mxu0 0
        %6231 = vmatprep.subr.bf16.mxu0 0
        %6232 = vmatpush1.bf16.msra.mxu0 0
        %6233 = vmatprep.subr.bf16.mxu0 0
        %6234 = vmatpush1.bf16.msra.mxu0 0
        %6235 = vmatprep.mubr.bf16.mxu0 0
        %6236 = vmatmul.mubr.bf16.gmra.mrb[0].mxu0 %v590
        %v6237 = vpop.f32.mrb[0].mxu0
        %v6238 = vadd.f32 %v561, %v6237
        %v6239 = vpop.f32.mrb[0].mxu0
        %v6240 = vpop.f32.mrb[0].mxu0
        %v6241 = vadd.f32 %v566, %v6240
        %v6242 = vpop.f32.mrb[0].mxu0
        %6243 = vmatprep.mubr.bf16.mxu0 0
        %6244 = vmatmul.mubr.bf16.gmra.mrb[0].mxu0 %v593
        %v6245 = vpop.f32.mrb[0].mxu0
        %v6246 = vadd.f32 %v571, %v6245
        %v6247 = vpop.f32.mrb[0].mxu0
        %v6248 = vpop.f32.mrb[0].mxu0
        %v6249 = vadd.f32 %v576, %v6248
        %v6250 = vpop.f32.mrb[0].mxu0
        %6251 = vdwg.mxu0
        %v6252 = vmax.f32 %v6238, 0.0
        %v6253 = vmax.f32 %v6241, 0.0
        %v6254 = vmax.f32 %v6246, 0.0
        %v6255 = vmax.f32 %v6249, 0.0
        %v6256 = vpack.c.bf16 %v6253, %v6252
        %v6257 = vpack.c.bf16 %v6255, %v6254
        %6258 = vmatprep.subr.bf16.mxu0 0
        %6259 = vmatpush1.bf16.msra.mxu0 %v6256
        %6260 = vmatprep.subr.bf16.mxu0 0
        %6261 = vmatpush1.bf16.msra.mxu0 %v6257
        %6262 = vmatprep.subr.bf16.mxu0 0
        %6263 = vmatpush1.bf16.msra.mxu0 0
        %6264 = vmatprep.subr.bf16.mxu0 0
        %6265 = vmatpush1.bf16.msra.mxu0 0
        %6266 = vmatprep.subr.bf16.mxu0 0
        %6267 = vmatpush1.bf16.msra.mxu0 0
        %6268 = vmatprep.subr.bf16.mxu0 0
        %6269 = vmatpush1.bf16.msra.mxu0 0
        %6270 = vmatprep.subr.bf16.mxu0 0
        %6271 = vmatpush1.bf16.msra.mxu0 0
        %6272 = vmatprep.subr.bf16.mxu0 0
        %6273 = vmatpush1.bf16.msra.mxu0 0
        %6274 = vmatprep.subr.bf16.mxu0 0
        %6275 = vmatpush1.bf16.msra.mxu0 0
        %6276 = vmatprep.subr.bf16.mxu0 0
        %6277 = vmatpush1.bf16.msra.mxu0 0
        %6278 = vmatprep.subr.bf16.mxu0 0
        %6279 = vmatpush1.bf16.msra.mxu0 0
        %6280 = vmatprep.subr.bf16.mxu0 0
        %6281 = vmatpush1.bf16.msra.mxu0 0
        %6282 = vmatprep.subr.bf16.mxu0 0
        %6283 = vmatpush1.bf16.msra.mxu0 0
        %6284 = vmatprep.subr.bf16.mxu0 0
        %6285 = vmatpush1.bf16.msra.mxu0 0
        %6286 = vmatprep.subr.bf16.mxu0 0
        %6287 = vmatpush1.bf16.msra.mxu0 0
        %6288 = vmatprep.subr.bf16.mxu0 0
        %6289 = vmatpush1.bf16.msra.mxu0 0
        %6290 = vmatprep.mubr.bf16.mxu0 0
        %6291 = vmatmul.mubr.bf16.gmra.mrb[0].mxu0 %v656
        %v6292 = vpop.f32.mrb[0].mxu0
        %v6293 = vadd.f32 %v653, %v6292
        %v6294 = vpop.f32.mrb[0].mxu0
        %v6295 = vpop.f32.mrb[0].mxu0
        %v6296 = vpop.f32.mrb[0].mxu0
        %6297 = vdwg.mxu0
        %v6298 = vmul.f32 %v6293, %v6111
        %v6299 = vrot.slane %v6298, 4
        %v6300 = vadd.f32 %v6298, %v6299
        %v6301 = vrot.slane %v6300, 2
        %v6302 = vadd.f32 %v6300, %v6301
        %v6303 = vrot.slane %v6302, 1
        %v6304 = vadd.f32 %v6302, %v6303
        %v6305 = vmul.f32 %v6111, 0.2
        %v6306 = vadd.f32 %v6305, 1.0007813
        %v6307 = vmul.f32 %v6107, %v6306
        %v6308 = vmul.f32 %v6109, 1.0004687
        %v6309 = vadd.f32 %v6308, %v6304
        %s6310 = scalar_lea.vmem %s365, 232 [#allocation3]
        %v6311 = vld [vmem:[%s6310] sm:$0xff]
        %s6312 = sadd.s32 %s446, 29
        %s6313 = scvt.s32.f32 %s6312
        %s6314 = smul.f32 %s6313, 0.015625
        %v6315 = vstv %s6314
        %v6316 = vmul.f32 %v6315, %v433
        %v6317 = vmul.f32 %v6315, %v434
        %v6318 = vmul.f32 %v6315, %v435
        %v6319 = vmul.f32 %v6315, %v436
        %v6320 = vadd.f32 %v437, %v6316
        %v6321 = vadd.f32 %v438, %v6317
        %v6322 = vadd.f32 %v439, %v6318
        %v6323 = vadd.f32 %v440, %v6319
        %v6324 = vpack.c.bf16 %v6307, %v6307
        %6326 = vset.pattern.permute.xlu0 0
        %6327 = vperm.xlu0 %6326, %v6320
        %v6328 = vpop.permute.xlu0 %6327
        %6331 = vset.pattern.permute.xlu0 0
        %6332 = vperm.xlu0 %6331, %v6321
        %v6333 = vpop.permute.xlu0 %6332
        %6336 = vset.pattern.permute.xlu0 0
        %6337 = vperm.xlu0 %6336, %v6322
        %v6338 = vpop.permute.xlu0 %6337
        %6341 = vset.pattern.permute.xlu0 0
        %6342 = vperm.xlu0 %6341, %v6323
        %v6343 = vpop.permute.xlu0 %6342
        %v6346 = vsel %vm499, %v6324, 0
        %6348 = vmatprep.subr.bf16.mxu0 0
        %6349 = vmatpush1.bf16.msra.mxu0 %v6346
        %6350 = vmatprep.subr.bf16.mxu0 0
        %6351 = vmatpush1.bf16.msra.mxu0 0
        %6352 = vmatprep.subr.bf16.mxu0 0
        %6353 = vmatpush1.bf16.msra.mxu0 0
        %6354 = vmatprep.subr.bf16.mxu0 0
        %6355 = vmatpush1.bf16.msra.mxu0 0
        %6356 = vmatprep.subr.bf16.mxu0 0
        %6357 = vmatpush1.bf16.msra.mxu0 0
        %6358 = vmatprep.subr.bf16.mxu0 0
        %6359 = vmatpush1.bf16.msra.mxu0 0
        %6360 = vmatprep.subr.bf16.mxu0 0
        %6361 = vmatpush1.bf16.msra.mxu0 0
        %6362 = vmatprep.subr.bf16.mxu0 0
        %6363 = vmatpush1.bf16.msra.mxu0 0
        %6364 = vmatprep.subr.bf16.mxu0 0
        %6365 = vmatpush1.bf16.msra.mxu0 0
        %6366 = vmatprep.subr.bf16.mxu0 0
        %6367 = vmatpush1.bf16.msra.mxu0 0
        %6368 = vmatprep.subr.bf16.mxu0 0
        %6369 = vmatpush1.bf16.msra.mxu0 0
        %6370 = vmatprep.subr.bf16.mxu0 0
        %6371 = vmatpush1.bf16.msra.mxu0 0
        %6372 = vmatprep.subr.bf16.mxu0 0
        %6373 = vmatpush1.bf16.msra.mxu0 0
        %6374 = vmatprep.subr.bf16.mxu0 0
        %6375 = vmatpush1.bf16.msra.mxu0 0
        %6376 = vmatprep.subr.bf16.mxu0 0
        %6377 = vmatpush1.bf16.msra.mxu0 0
        %6378 = vmatprep.subr.bf16.mxu0 0
        %6379 = vmatpush1.bf16.msra.mxu0 0
        %6380 = vmatprep.mubr.bf16.mxu0 0
        %6381 = vmatmul.mubr.bf16.gmra.mrb[0].mxu0 %v494
        %v6382 = vpop.f32.mrb[0].mxu0
        %v6383 = vadd.f32 %v6328, %v6382
        %v6384 = vpop.f32.mrb[0].mxu0
        %v6385 = vpop.f32.mrb[0].mxu0
        %v6386 = vadd.f32 %v6333, %v6385
        %v6387 = vpop.f32.mrb[0].mxu0
        %6388 = vmatprep.mubr.bf16.mxu0 0
        %6389 = vmatmul.mubr.bf16.gmra.mrb[0].mxu0 %v497
        %v6390 = vpop.f32.mrb[0].mxu0
        %v6391 = vadd.f32 %v6338, %v6390
        %v6392 = vpop.f32.mrb[0].mxu0
        %v6393 = vpop.f32.mrb[0].mxu0
        %v6394 = vadd.f32 %v6343, %v6393
        %v6395 = vpop.f32.mrb[0].mxu0
        %6396 = vdwg.mxu0
        %v6397 = vmax.f32 %v6383, 0.0
        %v6398 = vmax.f32 %v6386, 0.0
        %v6399 = vmax.f32 %v6391, 0.0
        %v6400 = vmax.f32 %v6394, 0.0
        %v6401 = vpack.c.bf16 %v6398, %v6397
        %v6402 = vpack.c.bf16 %v6400, %v6399
        %6403 = vmatprep.subr.bf16.mxu0 0
        %6404 = vmatpush1.bf16.msra.mxu0 %v6401
        %6405 = vmatprep.subr.bf16.mxu0 0
        %6406 = vmatpush1.bf16.msra.mxu0 %v6402
        %6407 = vmatprep.subr.bf16.mxu0 0
        %6408 = vmatpush1.bf16.msra.mxu0 0
        %6409 = vmatprep.subr.bf16.mxu0 0
        %6410 = vmatpush1.bf16.msra.mxu0 0
        %6411 = vmatprep.subr.bf16.mxu0 0
        %6412 = vmatpush1.bf16.msra.mxu0 0
        %6413 = vmatprep.subr.bf16.mxu0 0
        %6414 = vmatpush1.bf16.msra.mxu0 0
        %6415 = vmatprep.subr.bf16.mxu0 0
        %6416 = vmatpush1.bf16.msra.mxu0 0
        %6417 = vmatprep.subr.bf16.mxu0 0
        %6418 = vmatpush1.bf16.msra.mxu0 0
        %6419 = vmatprep.subr.bf16.mxu0 0
        %6420 = vmatpush1.bf16.msra.mxu0 0
        %6421 = vmatprep.subr.bf16.mxu0 0
        %6422 = vmatpush1.bf16.msra.mxu0 0
        %6423 = vmatprep.subr.bf16.mxu0 0
        %6424 = vmatpush1.bf16.msra.mxu0 0
        %6425 = vmatprep.subr.bf16.mxu0 0
        %6426 = vmatpush1.bf16.msra.mxu0 0
        %6427 = vmatprep.subr.bf16.mxu0 0
        %6428 = vmatpush1.bf16.msra.mxu0 0
        %6429 = vmatprep.subr.bf16.mxu0 0
        %6430 = vmatpush1.bf16.msra.mxu0 0
        %6431 = vmatprep.subr.bf16.mxu0 0
        %6432 = vmatpush1.bf16.msra.mxu0 0
        %6433 = vmatprep.subr.bf16.mxu0 0
        %6434 = vmatpush1.bf16.msra.mxu0 0
        %6435 = vmatprep.mubr.bf16.mxu0 0
        %6436 = vmatmul.mubr.bf16.gmra.mrb[0].mxu0 %v590
        %v6437 = vpop.f32.mrb[0].mxu0
        %v6438 = vadd.f32 %v561, %v6437
        %v6439 = vpop.f32.mrb[0].mxu0
        %v6440 = vpop.f32.mrb[0].mxu0
        %v6441 = vadd.f32 %v566, %v6440
        %v6442 = vpop.f32.mrb[0].mxu0
        %6443 = vmatprep.mubr.bf16.mxu0 0
        %6444 = vmatmul.mubr.bf16.gmra.mrb[0].mxu0 %v593
        %v6445 = vpop.f32.mrb[0].mxu0
        %v6446 = vadd.f32 %v571, %v6445
        %v6447 = vpop.f32.mrb[0].mxu0
        %v6448 = vpop.f32.mrb[0].mxu0
        %v6449 = vadd.f32 %v576, %v6448
        %v6450 = vpop.f32.mrb[0].mxu0
        %6451 = vdwg.mxu0
        %v6452 = vmax.f32 %v6438, 0.0
        %v6453 = vmax.f32 %v6441, 0.0
        %v6454 = vmax.f32 %v6446, 0.0
        %v6455 = vmax.f32 %v6449, 0.0
        %v6456 = vpack.c.bf16 %v6453, %v6452
        %v6457 = vpack.c.bf16 %v6455, %v6454
        %6458 = vmatprep.subr.bf16.mxu0 0
        %6459 = vmatpush1.bf16.msra.mxu0 %v6456
        %6460 = vmatprep.subr.bf16.mxu0 0
        %6461 = vmatpush1.bf16.msra.mxu0 %v6457
        %6462 = vmatprep.subr.bf16.mxu0 0
        %6463 = vmatpush1.bf16.msra.mxu0 0
        %6464 = vmatprep.subr.bf16.mxu0 0
        %6465 = vmatpush1.bf16.msra.mxu0 0
        %6466 = vmatprep.subr.bf16.mxu0 0
        %6467 = vmatpush1.bf16.msra.mxu0 0
        %6468 = vmatprep.subr.bf16.mxu0 0
        %6469 = vmatpush1.bf16.msra.mxu0 0
        %6470 = vmatprep.subr.bf16.mxu0 0
        %6471 = vmatpush1.bf16.msra.mxu0 0
        %6472 = vmatprep.subr.bf16.mxu0 0
        %6473 = vmatpush1.bf16.msra.mxu0 0
        %6474 = vmatprep.subr.bf16.mxu0 0
        %6475 = vmatpush1.bf16.msra.mxu0 0
        %6476 = vmatprep.subr.bf16.mxu0 0
        %6477 = vmatpush1.bf16.msra.mxu0 0
        %6478 = vmatprep.subr.bf16.mxu0 0
        %6479 = vmatpush1.bf16.msra.mxu0 0
        %6480 = vmatprep.subr.bf16.mxu0 0
        %6481 = vmatpush1.bf16.msra.mxu0 0
        %6482 = vmatprep.subr.bf16.mxu0 0
        %6483 = vmatpush1.bf16.msra.mxu0 0
        %6484 = vmatprep.subr.bf16.mxu0 0
        %6485 = vmatpush1.bf16.msra.mxu0 0
        %6486 = vmatprep.subr.bf16.mxu0 0
        %6487 = vmatpush1.bf16.msra.mxu0 0
        %6488 = vmatprep.subr.bf16.mxu0 0
        %6489 = vmatpush1.bf16.msra.mxu0 0
        %6490 = vmatprep.mubr.bf16.mxu0 0
        %6491 = vmatmul.mubr.bf16.gmra.mrb[0].mxu0 %v656
        %v6492 = vpop.f32.mrb[0].mxu0
        %v6493 = vadd.f32 %v653, %v6492
        %v6494 = vpop.f32.mrb[0].mxu0
        %v6495 = vpop.f32.mrb[0].mxu0
        %v6496 = vpop.f32.mrb[0].mxu0
        %6497 = vdwg.mxu0
        %v6498 = vmul.f32 %v6493, %v6311
        %v6499 = vrot.slane %v6498, 4
        %v6500 = vadd.f32 %v6498, %v6499
        %v6501 = vrot.slane %v6500, 2
        %v6502 = vadd.f32 %v6500, %v6501
        %v6503 = vrot.slane %v6502, 1
        %v6504 = vadd.f32 %v6502, %v6503
        %v6505 = vmul.f32 %v6311, 0.2
        %v6506 = vadd.f32 %v6505, 1.0007813
        %v6507 = vmul.f32 %v6307, %v6506
        %v6508 = vmul.f32 %v6309, 1.0004687
        %v6509 = vadd.f32 %v6508, %v6504
        %s6510 = scalar_lea.vmem %s365, 240 [#allocation3]
        %v6511 = vld [vmem:[%s6510] sm:$0xff]
        %s6512 = sadd.s32 %s446, 30
        %s6513 = scvt.s32.f32 %s6512
        %s6514 = smul.f32 %s6513, 0.015625
        %v6515 = vstv %s6514
        %v6516 = vmul.f32 %v6515, %v433
        %v6517 = vmul.f32 %v6515, %v434
        %v6518 = vmul.f32 %v6515, %v435
        %v6519 = vmul.f32 %v6515, %v436
        %v6520 = vadd.f32 %v437, %v6516
        %v6521 = vadd.f32 %v438, %v6517
        %v6522 = vadd.f32 %v439, %v6518
        %v6523 = vadd.f32 %v440, %v6519
        %v6524 = vpack.c.bf16 %v6507, %v6507
        %6526 = vset.pattern.permute.xlu0 0
        %6527 = vperm.xlu0 %6526, %v6520
        %v6528 = vpop.permute.xlu0 %6527
        %6531 = vset.pattern.permute.xlu0 0
        %6532 = vperm.xlu0 %6531, %v6521
        %v6533 = vpop.permute.xlu0 %6532
        %6536 = vset.pattern.permute.xlu0 0
        %6537 = vperm.xlu0 %6536, %v6522
        %v6538 = vpop.permute.xlu0 %6537
        %6541 = vset.pattern.permute.xlu0 0
        %6542 = vperm.xlu0 %6541, %v6523
        %v6543 = vpop.permute.xlu0 %6542
        %v6546 = vsel %vm499, %v6524, 0
        %6548 = vmatprep.subr.bf16.mxu0 0
        %6549 = vmatpush1.bf16.msra.mxu0 %v6546
        %6550 = vmatprep.subr.bf16.mxu0 0
        %6551 = vmatpush1.bf16.msra.mxu0 0
        %6552 = vmatprep.subr.bf16.mxu0 0
        %6553 = vmatpush1.bf16.msra.mxu0 0
        %6554 = vmatprep.subr.bf16.mxu0 0
        %6555 = vmatpush1.bf16.msra.mxu0 0
        %6556 = vmatprep.subr.bf16.mxu0 0
        %6557 = vmatpush1.bf16.msra.mxu0 0
        %6558 = vmatprep.subr.bf16.mxu0 0
        %6559 = vmatpush1.bf16.msra.mxu0 0
        %6560 = vmatprep.subr.bf16.mxu0 0
        %6561 = vmatpush1.bf16.msra.mxu0 0
        %6562 = vmatprep.subr.bf16.mxu0 0
        %6563 = vmatpush1.bf16.msra.mxu0 0
        %6564 = vmatprep.subr.bf16.mxu0 0
        %6565 = vmatpush1.bf16.msra.mxu0 0
        %6566 = vmatprep.subr.bf16.mxu0 0
        %6567 = vmatpush1.bf16.msra.mxu0 0
        %6568 = vmatprep.subr.bf16.mxu0 0
        %6569 = vmatpush1.bf16.msra.mxu0 0
        %6570 = vmatprep.subr.bf16.mxu0 0
        %6571 = vmatpush1.bf16.msra.mxu0 0
        %6572 = vmatprep.subr.bf16.mxu0 0
        %6573 = vmatpush1.bf16.msra.mxu0 0
        %6574 = vmatprep.subr.bf16.mxu0 0
        %6575 = vmatpush1.bf16.msra.mxu0 0
        %6576 = vmatprep.subr.bf16.mxu0 0
        %6577 = vmatpush1.bf16.msra.mxu0 0
        %6578 = vmatprep.subr.bf16.mxu0 0
        %6579 = vmatpush1.bf16.msra.mxu0 0
        %6580 = vmatprep.mubr.bf16.mxu0 0
        %6581 = vmatmul.mubr.bf16.gmra.mrb[0].mxu0 %v494
        %v6582 = vpop.f32.mrb[0].mxu0
        %v6583 = vadd.f32 %v6528, %v6582
        %v6584 = vpop.f32.mrb[0].mxu0
        %v6585 = vpop.f32.mrb[0].mxu0
        %v6586 = vadd.f32 %v6533, %v6585
        %v6587 = vpop.f32.mrb[0].mxu0
        %6588 = vmatprep.mubr.bf16.mxu0 0
        %6589 = vmatmul.mubr.bf16.gmra.mrb[0].mxu0 %v497
        %v6590 = vpop.f32.mrb[0].mxu0
        %v6591 = vadd.f32 %v6538, %v6590
        %v6592 = vpop.f32.mrb[0].mxu0
        %v6593 = vpop.f32.mrb[0].mxu0
        %v6594 = vadd.f32 %v6543, %v6593
        %v6595 = vpop.f32.mrb[0].mxu0
        %6596 = vdwg.mxu0
        %v6597 = vmax.f32 %v6583, 0.0
        %v6598 = vmax.f32 %v6586, 0.0
        %v6599 = vmax.f32 %v6591, 0.0
        %v6600 = vmax.f32 %v6594, 0.0
        %v6601 = vpack.c.bf16 %v6598, %v6597
        %v6602 = vpack.c.bf16 %v6600, %v6599
        %6603 = vmatprep.subr.bf16.mxu0 0
        %6604 = vmatpush1.bf16.msra.mxu0 %v6601
        %6605 = vmatprep.subr.bf16.mxu0 0
        %6606 = vmatpush1.bf16.msra.mxu0 %v6602
        %6607 = vmatprep.subr.bf16.mxu0 0
        %6608 = vmatpush1.bf16.msra.mxu0 0
        %6609 = vmatprep.subr.bf16.mxu0 0
        %6610 = vmatpush1.bf16.msra.mxu0 0
        %6611 = vmatprep.subr.bf16.mxu0 0
        %6612 = vmatpush1.bf16.msra.mxu0 0
        %6613 = vmatprep.subr.bf16.mxu0 0
        %6614 = vmatpush1.bf16.msra.mxu0 0
        %6615 = vmatprep.subr.bf16.mxu0 0
        %6616 = vmatpush1.bf16.msra.mxu0 0
        %6617 = vmatprep.subr.bf16.mxu0 0
        %6618 = vmatpush1.bf16.msra.mxu0 0
        %6619 = vmatprep.subr.bf16.mxu0 0
        %6620 = vmatpush1.bf16.msra.mxu0 0
        %6621 = vmatprep.subr.bf16.mxu0 0
        %6622 = vmatpush1.bf16.msra.mxu0 0
        %6623 = vmatprep.subr.bf16.mxu0 0
        %6624 = vmatpush1.bf16.msra.mxu0 0
        %6625 = vmatprep.subr.bf16.mxu0 0
        %6626 = vmatpush1.bf16.msra.mxu0 0
        %6627 = vmatprep.subr.bf16.mxu0 0
        %6628 = vmatpush1.bf16.msra.mxu0 0
        %6629 = vmatprep.subr.bf16.mxu0 0
        %6630 = vmatpush1.bf16.msra.mxu0 0
        %6631 = vmatprep.subr.bf16.mxu0 0
        %6632 = vmatpush1.bf16.msra.mxu0 0
        %6633 = vmatprep.subr.bf16.mxu0 0
        %6634 = vmatpush1.bf16.msra.mxu0 0
        %6635 = vmatprep.mubr.bf16.mxu0 0
        %6636 = vmatmul.mubr.bf16.gmra.mrb[0].mxu0 %v590
        %v6637 = vpop.f32.mrb[0].mxu0
        %v6638 = vadd.f32 %v561, %v6637
        %v6639 = vpop.f32.mrb[0].mxu0
        %v6640 = vpop.f32.mrb[0].mxu0
        %v6641 = vadd.f32 %v566, %v6640
        %v6642 = vpop.f32.mrb[0].mxu0
        %6643 = vmatprep.mubr.bf16.mxu0 0
        %6644 = vmatmul.mubr.bf16.gmra.mrb[0].mxu0 %v593
        %v6645 = vpop.f32.mrb[0].mxu0
        %v6646 = vadd.f32 %v571, %v6645
        %v6647 = vpop.f32.mrb[0].mxu0
        %v6648 = vpop.f32.mrb[0].mxu0
        %v6649 = vadd.f32 %v576, %v6648
        %v6650 = vpop.f32.mrb[0].mxu0
        %6651 = vdwg.mxu0
        %v6652 = vmax.f32 %v6638, 0.0
        %v6653 = vmax.f32 %v6641, 0.0
        %v6654 = vmax.f32 %v6646, 0.0
        %v6655 = vmax.f32 %v6649, 0.0
        %v6656 = vpack.c.bf16 %v6653, %v6652
        %v6657 = vpack.c.bf16 %v6655, %v6654
        %6658 = vmatprep.subr.bf16.mxu0 0
        %6659 = vmatpush1.bf16.msra.mxu0 %v6656
        %6660 = vmatprep.subr.bf16.mxu0 0
        %6661 = vmatpush1.bf16.msra.mxu0 %v6657
        %6662 = vmatprep.subr.bf16.mxu0 0
        %6663 = vmatpush1.bf16.msra.mxu0 0
        %6664 = vmatprep.subr.bf16.mxu0 0
        %6665 = vmatpush1.bf16.msra.mxu0 0
        %6666 = vmatprep.subr.bf16.mxu0 0
        %6667 = vmatpush1.bf16.msra.mxu0 0
        %6668 = vmatprep.subr.bf16.mxu0 0
        %6669 = vmatpush1.bf16.msra.mxu0 0
        %6670 = vmatprep.subr.bf16.mxu0 0
        %6671 = vmatpush1.bf16.msra.mxu0 0
        %6672 = vmatprep.subr.bf16.mxu0 0
        %6673 = vmatpush1.bf16.msra.mxu0 0
        %6674 = vmatprep.subr.bf16.mxu0 0
        %6675 = vmatpush1.bf16.msra.mxu0 0
        %6676 = vmatprep.subr.bf16.mxu0 0
        %6677 = vmatpush1.bf16.msra.mxu0 0
        %6678 = vmatprep.subr.bf16.mxu0 0
        %6679 = vmatpush1.bf16.msra.mxu0 0
        %6680 = vmatprep.subr.bf16.mxu0 0
        %6681 = vmatpush1.bf16.msra.mxu0 0
        %6682 = vmatprep.subr.bf16.mxu0 0
        %6683 = vmatpush1.bf16.msra.mxu0 0
        %6684 = vmatprep.subr.bf16.mxu0 0
        %6685 = vmatpush1.bf16.msra.mxu0 0
        %6686 = vmatprep.subr.bf16.mxu0 0
        %6687 = vmatpush1.bf16.msra.mxu0 0
        %6688 = vmatprep.subr.bf16.mxu0 0
        %6689 = vmatpush1.bf16.msra.mxu0 0
        %6690 = vmatprep.mubr.bf16.mxu0 0
        %6691 = vmatmul.mubr.bf16.gmra.mrb[0].mxu0 %v656
        %v6692 = vpop.f32.mrb[0].mxu0
        %v6693 = vadd.f32 %v653, %v6692
        %v6694 = vpop.f32.mrb[0].mxu0
        %v6695 = vpop.f32.mrb[0].mxu0
        %v6696 = vpop.f32.mrb[0].mxu0
        %6697 = vdwg.mxu0
        %v6698 = vmul.f32 %v6693, %v6511
        %v6699 = vrot.slane %v6698, 4
        %v6700 = vadd.f32 %v6698, %v6699
        %v6701 = vrot.slane %v6700, 2
        %v6702 = vadd.f32 %v6700, %v6701
        %v6703 = vrot.slane %v6702, 1
        %v6704 = vadd.f32 %v6702, %v6703
        %v6705 = vmul.f32 %v6511, 0.2
        %v6706 = vadd.f32 %v6705, 1.0007813
        %v6707 = vmul.f32 %v6507, %v6706
        %v6708 = vmul.f32 %v6509, 1.0004687
        %v6709 = vadd.f32 %v6708, %v6704
        %s6710 = scalar_lea.vmem %s365, 248 [#allocation3]
        %v6711 = vld [vmem:[%s6710] sm:$0xff]
        %s6712 = sadd.s32 %s446, 31
        %s6713 = scvt.s32.f32 %s6712
        %s6714 = smul.f32 %s6713, 0.015625
        %v6715 = vstv %s6714
        %v6716 = vmul.f32 %v6715, %v433
        %v6717 = vmul.f32 %v6715, %v434
        %v6718 = vmul.f32 %v6715, %v435
        %v6719 = vmul.f32 %v6715, %v436
        %v6720 = vadd.f32 %v437, %v6716
        %v6721 = vadd.f32 %v438, %v6717
        %v6722 = vadd.f32 %v439, %v6718
        %v6723 = vadd.f32 %v440, %v6719
        %v6724 = vpack.c.bf16 %v6707, %v6707
        %6726 = vset.pattern.permute.xlu0 0
        %6727 = vperm.xlu0 %6726, %v6720
        %v6728 = vpop.permute.xlu0 %6727
        %6731 = vset.pattern.permute.xlu0 0
        %6732 = vperm.xlu0 %6731, %v6721
        %v6733 = vpop.permute.xlu0 %6732
        %6736 = vset.pattern.permute.xlu0 0
        %6737 = vperm.xlu0 %6736, %v6722
        %v6738 = vpop.permute.xlu0 %6737
        %6741 = vset.pattern.permute.xlu0 0
        %6742 = vperm.xlu0 %6741, %v6723
        %v6743 = vpop.permute.xlu0 %6742
        %v6746 = vsel %vm499, %v6724, 0
        %6748 = vmatprep.subr.bf16.mxu0 0
        %6749 = vmatpush1.bf16.msra.mxu0 %v6746
        %6750 = vmatprep.subr.bf16.mxu0 0
        %6751 = vmatpush1.bf16.msra.mxu0 0
        %6752 = vmatprep.subr.bf16.mxu0 0
        %6753 = vmatpush1.bf16.msra.mxu0 0
        %6754 = vmatprep.subr.bf16.mxu0 0
        %6755 = vmatpush1.bf16.msra.mxu0 0
        %6756 = vmatprep.subr.bf16.mxu0 0
        %6757 = vmatpush1.bf16.msra.mxu0 0
        %6758 = vmatprep.subr.bf16.mxu0 0
        %6759 = vmatpush1.bf16.msra.mxu0 0
        %6760 = vmatprep.subr.bf16.mxu0 0
        %6761 = vmatpush1.bf16.msra.mxu0 0
        %6762 = vmatprep.subr.bf16.mxu0 0
        %6763 = vmatpush1.bf16.msra.mxu0 0
        %6764 = vmatprep.subr.bf16.mxu0 0
        %6765 = vmatpush1.bf16.msra.mxu0 0
        %6766 = vmatprep.subr.bf16.mxu0 0
        %6767 = vmatpush1.bf16.msra.mxu0 0
        %6768 = vmatprep.subr.bf16.mxu0 0
        %6769 = vmatpush1.bf16.msra.mxu0 0
        %6770 = vmatprep.subr.bf16.mxu0 0
        %6771 = vmatpush1.bf16.msra.mxu0 0
        %6772 = vmatprep.subr.bf16.mxu0 0
        %6773 = vmatpush1.bf16.msra.mxu0 0
        %6774 = vmatprep.subr.bf16.mxu0 0
        %6775 = vmatpush1.bf16.msra.mxu0 0
        %6776 = vmatprep.subr.bf16.mxu0 0
        %6777 = vmatpush1.bf16.msra.mxu0 0
        %6778 = vmatprep.subr.bf16.mxu0 0
        %6779 = vmatpush1.bf16.msra.mxu0 0
        %6780 = vmatprep.mubr.bf16.mxu0 0
        %6781 = vmatmul.mubr.bf16.gmra.mrb[0].mxu0 %v494
        %v6782 = vpop.f32.mrb[0].mxu0
        %v6783 = vadd.f32 %v6728, %v6782
        %v6784 = vpop.f32.mrb[0].mxu0
        %v6785 = vpop.f32.mrb[0].mxu0
        %v6786 = vadd.f32 %v6733, %v6785
        %v6787 = vpop.f32.mrb[0].mxu0
        %6788 = vmatprep.mubr.bf16.mxu0 0
        %6789 = vmatmul.mubr.bf16.gmra.mrb[0].mxu0 %v497
        %v6790 = vpop.f32.mrb[0].mxu0
        %v6791 = vadd.f32 %v6738, %v6790
        %v6792 = vpop.f32.mrb[0].mxu0
        %v6793 = vpop.f32.mrb[0].mxu0
        %v6794 = vadd.f32 %v6743, %v6793
        %v6795 = vpop.f32.mrb[0].mxu0
        %6796 = vdwg.mxu0
        %v6797 = vmax.f32 %v6783, 0.0
        %v6798 = vmax.f32 %v6786, 0.0
        %v6799 = vmax.f32 %v6791, 0.0
        %v6800 = vmax.f32 %v6794, 0.0
        %v6801 = vpack.c.bf16 %v6798, %v6797
        %v6802 = vpack.c.bf16 %v6800, %v6799
        %6803 = vmatprep.subr.bf16.mxu0 0
        %6804 = vmatpush1.bf16.msra.mxu0 %v6801
        %6805 = vmatprep.subr.bf16.mxu0 0
        %6806 = vmatpush1.bf16.msra.mxu0 %v6802
        %6807 = vmatprep.subr.bf16.mxu0 0
        %6808 = vmatpush1.bf16.msra.mxu0 0
        %6809 = vmatprep.subr.bf16.mxu0 0
        %6810 = vmatpush1.bf16.msra.mxu0 0
        %6811 = vmatprep.subr.bf16.mxu0 0
        %6812 = vmatpush1.bf16.msra.mxu0 0
        %6813 = vmatprep.subr.bf16.mxu0 0
        %6814 = vmatpush1.bf16.msra.mxu0 0
        %6815 = vmatprep.subr.bf16.mxu0 0
        %6816 = vmatpush1.bf16.msra.mxu0 0
        %6817 = vmatprep.subr.bf16.mxu0 0
        %6818 = vmatpush1.bf16.msra.mxu0 0
        %6819 = vmatprep.subr.bf16.mxu0 0
        %6820 = vmatpush1.bf16.msra.mxu0 0
        %6821 = vmatprep.subr.bf16.mxu0 0
        %6822 = vmatpush1.bf16.msra.mxu0 0
        %6823 = vmatprep.subr.bf16.mxu0 0
        %6824 = vmatpush1.bf16.msra.mxu0 0
        %6825 = vmatprep.subr.bf16.mxu0 0
        %6826 = vmatpush1.bf16.msra.mxu0 0
        %6827 = vmatprep.subr.bf16.mxu0 0
        %6828 = vmatpush1.bf16.msra.mxu0 0
        %6829 = vmatprep.subr.bf16.mxu0 0
        %6830 = vmatpush1.bf16.msra.mxu0 0
        %6831 = vmatprep.subr.bf16.mxu0 0
        %6832 = vmatpush1.bf16.msra.mxu0 0
        %6833 = vmatprep.subr.bf16.mxu0 0
        %6834 = vmatpush1.bf16.msra.mxu0 0
        %6835 = vmatprep.mubr.bf16.mxu0 0
        %6836 = vmatmul.mubr.bf16.gmra.mrb[0].mxu0 %v590
        %v6837 = vpop.f32.mrb[0].mxu0
        %v6838 = vadd.f32 %v561, %v6837
        %v6839 = vpop.f32.mrb[0].mxu0
        %v6840 = vpop.f32.mrb[0].mxu0
        %v6841 = vadd.f32 %v566, %v6840
        %v6842 = vpop.f32.mrb[0].mxu0
        %6843 = vmatprep.mubr.bf16.mxu0 0
        %6844 = vmatmul.mubr.bf16.gmra.mrb[0].mxu0 %v593
        %v6845 = vpop.f32.mrb[0].mxu0
        %v6846 = vadd.f32 %v571, %v6845
        %v6847 = vpop.f32.mrb[0].mxu0
        %v6848 = vpop.f32.mrb[0].mxu0
        %v6849 = vadd.f32 %v576, %v6848
        %v6850 = vpop.f32.mrb[0].mxu0
        %6851 = vdwg.mxu0
        %v6852 = vmax.f32 %v6838, 0.0
        %v6853 = vmax.f32 %v6841, 0.0
        %v6854 = vmax.f32 %v6846, 0.0
        %v6855 = vmax.f32 %v6849, 0.0
        %v6856 = vpack.c.bf16 %v6853, %v6852
        %v6857 = vpack.c.bf16 %v6855, %v6854
        %6858 = vmatprep.subr.bf16.mxu0 0
        %6859 = vmatpush1.bf16.msra.mxu0 %v6856
        %6860 = vmatprep.subr.bf16.mxu0 0
        %6861 = vmatpush1.bf16.msra.mxu0 %v6857
        %6862 = vmatprep.subr.bf16.mxu0 0
        %6863 = vmatpush1.bf16.msra.mxu0 0
        %6864 = vmatprep.subr.bf16.mxu0 0
        %6865 = vmatpush1.bf16.msra.mxu0 0
        %6866 = vmatprep.subr.bf16.mxu0 0
        %6867 = vmatpush1.bf16.msra.mxu0 0
        %6868 = vmatprep.subr.bf16.mxu0 0
        %6869 = vmatpush1.bf16.msra.mxu0 0
        %6870 = vmatprep.subr.bf16.mxu0 0
        %6871 = vmatpush1.bf16.msra.mxu0 0
        %6872 = vmatprep.subr.bf16.mxu0 0
        %6873 = vmatpush1.bf16.msra.mxu0 0
        %6874 = vmatprep.subr.bf16.mxu0 0
        %6875 = vmatpush1.bf16.msra.mxu0 0
        %6876 = vmatprep.subr.bf16.mxu0 0
        %6877 = vmatpush1.bf16.msra.mxu0 0
        %6878 = vmatprep.subr.bf16.mxu0 0
        %6879 = vmatpush1.bf16.msra.mxu0 0
        %6880 = vmatprep.subr.bf16.mxu0 0
        %6881 = vmatpush1.bf16.msra.mxu0 0
        %6882 = vmatprep.subr.bf16.mxu0 0
        %6883 = vmatpush1.bf16.msra.mxu0 0
        %6884 = vmatprep.subr.bf16.mxu0 0
        %6885 = vmatpush1.bf16.msra.mxu0 0
        %6886 = vmatprep.subr.bf16.mxu0 0
        %6887 = vmatpush1.bf16.msra.mxu0 0
        %6888 = vmatprep.subr.bf16.mxu0 0
        %6889 = vmatpush1.bf16.msra.mxu0 0
        %6890 = vmatprep.mubr.bf16.mxu0 0
        %6891 = vmatmul.mubr.bf16.gmra.mrb[0].mxu0 %v656
        %v6892 = vpop.f32.mrb[0].mxu0
        %v6893 = vadd.f32 %v653, %v6892
        %v6894 = vpop.f32.mrb[0].mxu0
        %v6895 = vpop.f32.mrb[0].mxu0
        %v6896 = vpop.f32.mrb[0].mxu0
        %6897 = vdwg.mxu0
        %v6898 = vmul.f32 %v6893, %v6711
        %v6899 = vrot.slane %v6898, 4
        %v6900 = vadd.f32 %v6898, %v6899
        %v6901 = vrot.slane %v6900, 2
        %v6902 = vadd.f32 %v6900, %v6901
        %v6903 = vrot.slane %v6902, 1
        %v6904 = vadd.f32 %v6902, %v6903
        %v6905 = vmul.f32 %v6711, 0.2
        %v6906 = vadd.f32 %v6905, 1.0007813
        %v6907 = vmul.f32 %v6707, %v6906
        %v6908 = vmul.f32 %v6709, 1.0004687
        %v6909 = vadd.f32 %v6908, %v6904
        %6910 = vst [vmem:[%s399] sm:$0xff] %v6907
        %6911 = vst [vmem:[%s405] sm:$0x1] %v6909
        %s6912 = sand.u32 %s249, 1
        %s6913 = scalar_lea.sflag [#allocation5], %s6912
        %s6914 = sand.u32 %s249, 1
        %s6915 = smul.addr %s6914, 8
        %s6916 = scalar_lea.vmem [#allocation6], %s6915
        %s6917 = sand.u32 %s275, 1
        %s6918 = scalar_lea.sflag [#allocation8], %s6917
        %s6919 = sand.u32 %s275, 1
        %s6920 = scalar_lea.vmem [#allocation7], %s6919
        // Predicated region
        $region65: #{tpu_custom_call.1} parent=55 // pred_check
          %p6921 = pneg %p259
        $region66: #{tpu_custom_call.1} parent=55 // pred_check_branch
          %6923 = sbr.rel (%p6921) target = $region68
        $region67: #{tpu_custom_call.1} parent=55 // pred_region
          %s6925 = ssub.s32 128, 128
          %6926 = vsyncadd %s6913, %s6925
          %s6927 = smul.addr %s37, 128
          %s6928 = scalar_lea.hbm %s9, %s6927
          %s6930 = sshll.u32 %s6916, 4
          %s6931 = int_to_ptr.vmem [resolvable:$true] %s6930
          %6933 = dma.vmem_to_hbm [thread:$0]  %s6931, 128, %s6928, %s6913
        $region68: #{tpu_custom_call.1} parent=55 // pred_fallthru
          _
        // Predicated region
        $region69: #{tpu_custom_call.1} parent=55 // pred_check
          %p6934 = pneg %p285
        $region70: #{tpu_custom_call.1} parent=55 // pred_check_branch
          %6936 = sbr.rel (%p6934) target = $region72
        $region71: #{tpu_custom_call.1} parent=55 // pred_region
          %s6938 = ssub.s32 16, 16
          %6939 = vsyncadd %s6918, %s6938
          %s6940 = smul.addr %s37, 16
          %s6941 = scalar_lea.hbm %s10, %s6940
          %s6943 = sshll.u32 %s6920, 4
          %s6944 = int_to_ptr.vmem [resolvable:$true] %s6943
          %6946 = dma.vmem_to_hbm [thread:$0]  %s6944, 16, %s6941, %s6918
        $region72: #{tpu_custom_call.1} parent=55 // pred_fallthru
          _
      $region56: #{tpu_custom_call.1} parent=5 // pred_fallthru
        _
      %p6947 = scmp.le.s32.totalorder 2, %s28
      // Predicated region
      $region73: #{tpu_custom_call.1} parent=5 // pred_check
        %p6948 = pneg %p6947
      $region74: #{tpu_custom_call.1} parent=5 // pred_check_branch
        %6950 = sbr.rel (%p6948) target = $region76
      $region75: #{tpu_custom_call.1} parent=5 // pred_region
        %s6951 = ssub.s32 %s28, 2
        // Predicated region
        $region77: #{tpu_custom_call.1} parent=75 // pred_check
          %p6952 = pneg %p265
        $region78: #{tpu_custom_call.1} parent=75 // pred_check_branch
          %6954 = sbr.rel (%p6952) target = $region80
        $region79: #{tpu_custom_call.1} parent=75 // pred_region
          %s6955 = sand.u32 %s250, 1
          %s6956 = scalar_lea.sflag [#allocation5], %s6955
          %s6957 = sand.u32 %s250, 1
          %s6958 = smul.addr %s6957, 8
          %s6959 = scalar_lea.vmem [#allocation6], %s6958
          %6960 = dma.done %s6956, 128
        $region80: #{tpu_custom_call.1} parent=75 // pred_fallthru
          _
        // Predicated region
        $region81: #{tpu_custom_call.1} parent=75 // pred_check
          %p6961 = pneg %p291
        $region82: #{tpu_custom_call.1} parent=75 // pred_check_branch
          %6963 = sbr.rel (%p6961) target = $region84
        $region83: #{tpu_custom_call.1} parent=75 // pred_region
          %s6964 = sand.u32 %s276, 1
          %s6965 = scalar_lea.sflag [#allocation8], %s6964
          %s6966 = sand.u32 %s276, 1
          %s6967 = scalar_lea.vmem [#allocation7], %s6966
          %6968 = dma.done %s6965, 16
        $region84: #{tpu_custom_call.1} parent=75 // pred_fallthru
          _
      $region76: #{tpu_custom_call.1} parent=5 // pred_fallthru
        _
    $region6: #{tpu_custom_call.1} parent=1 // loop_footer
      %s32 = sadd.s32 1, %s28
    $region7: #{tpu_custom_call.1} parent=1 // loop_footer_branch
      %27 = sbr.rel target = $region3
    $region8: #{tpu_custom_call.1} parent=1 // loop_exit
      _
    %6969 = vsyncpa [#allocation4], 1
    %s6970 = scalar_lea.sflag [#allocation4], 1
    %6971 = vsyncpa %s6970, 1
    %6972 = vsyncpa [#allocation5], 1
    %s6973 = scalar_lea.sflag [#allocation5], 1
    %6974 = vsyncpa %s6973, 1
    %6975 = vsyncpa [#allocation8], 1
    %s6976 = scalar_lea.sflag [#allocation8], 1
    %6977 = vsyncpa %s6976, 1

</llo_original>
